<compile_context>
chip_gen: v5e
topology: v5e:2x2
jax: 0.10.0
libtpu: 0.0.40
codegen_flags: <defaults>
</compile_context>

<pallas_src>
import functools
import math

import jax
import jax.numpy as jnp
from jax.experimental import pallas as pl
from jax.experimental.pallas import tpu as pltpu


def _round_up(n, m):
    return ((n + m - 1) // m) * m


# --------------------------------- kernel ----------------------------------

def _btc_block_kernel(n_heads, true_c, seq_len,
                      x_ref,
                      ln1_g_ref, ln1_b_ref,
                      qkv_wt_ref, qkv_b_ref,
                      out_wt_ref, out_b_ref,
                      ln2_g_ref, ln2_b_ref,
                      c1_wt_ref, c1_b_ref,
                      c2_wt_ref, c2_b_ref,
                      proj_wl_ref, proj_wr_ref, proj_b_ref,
                      lnf_g_ref, lnf_b_ref,
                      o_ref):
    f32, bf16 = jnp.float32, jnp.bfloat16
    M, Cp = x_ref.shape                       # M = Bt * S rows (flattened batch tile)
    S = seq_len
    Bt = M // S
    H = n_heads
    Cq = qkv_wt_ref.shape[-1] // 3            # per-Q/K/V block width = H * hd_p
    hd_p = Cq // H

    x = x_ref[...]                            # (M, Cp) f32

    # ---- iotas / masks built once, shared by both sub-blocks ----
    gi = jax.lax.broadcasted_iota(jnp.int32, (M, 1), 0)
    pos = (gi % S) if Bt > 1 else gi          # per-batch-element sequence position
    not_first = pos > 0
    not_last = pos < (S - 1)
    row = jax.lax.broadcasted_iota(jnp.int32, (S, S), 0)
    col = jax.lax.broadcasted_iota(jnp.int32, (S, S), 1)

    inv_c = 1.0 / float(true_c)

    def layernorm(v, g, b):
        # padded channels of v are zero; normalize with the true channel count
        # and E[x^2]-mu^2 so the zero padding does not bias the statistics.
        mu = jnp.sum(v, axis=-1, keepdims=True) * inv_c
        var = jnp.sum(v * v, axis=-1, keepdims=True) * inv_c - mu * mu
        return (v - mu) * jax.lax.rsqrt(var + 1e-5) * g + b

    def gelu(v):
        # TODO(synk): exact erf GELU replaced by the tanh approximation (EUP).
        c = 0.7978845608028654  # sqrt(2/pi)
        return 0.5 * v * (1.0 + jnp.tanh(c * (v + 0.044715 * v * v * v)))

    def conv1d(v_bf, w, b):
        # k=3/pad=1 Conv1d as one lane-dense matmul + XLU sublane rolls.
        # Rolls wrap across batch-tile boundaries, but those rows are exactly
        # the ones zeroed by not_first / not_last.
        u = jnp.dot(v_bf, w, preferred_element_type=f32)                # (M, 3Cp)
        u0, u1, u2 = u[:, :Cp], u[:, Cp:2 * Cp], u[:, 2 * Cp:]
        prev = jnp.where(not_first, pltpu.roll(u0, 1, axis=0), 0.0)     # u0[s-1]
        nxt = jnp.where(not_last, pltpu.roll(u2, M - 1, axis=0), 0.0)   # u2[s+1]
        return prev + u1 + nxt + b

    sub_out = []
    for lr in range(2):                       # 0 -> 'left' sub-block, 1 -> 'right'
        # ----------------- multi-head self-attention branch -----------------
        xn = layernorm(x, ln1_g_ref[lr:lr + 1, :], ln1_b_ref[lr:lr + 1, :])
        # single lane-dense QKV matmul; columns = [Q | K | V], each (head, hd_p);
        # 1/sqrt(hd) is folded into the Q columns/bias by the wrapper.
        qkv = (jnp.dot(xn.astype(bf16), qkv_wt_ref[lr],
                       preferred_element_type=f32) + qkv_b_ref[lr]).astype(bf16)
        masked = (col < row) if lr == 0 else (col > row)   # diagonal never masked
        out_w = out_wt_ref[lr]                              # (Cq, Cp)
        msa = None
        for h in range(H):                    # 128-aligned per-head lane slices
            qo = h * hd_p
            q = qkv[:, qo:qo + hd_p].reshape(Bt, S, hd_p)
            k = qkv[:, Cq + qo:Cq + qo + hd_p].reshape(Bt, S, hd_p)
            v = qkv[:, 2 * Cq + qo:2 * Cq + qo + hd_p].reshape(Bt, S, hd_p)
            s = jax.lax.dot_general(q, k, (((2,), (2,)), ((0,), (0,))),
                                    preferred_element_type=f32)          # (Bt,S,S)
            s = jnp.where(masked, -1e30, s)   # finite mask: no inf-inf NaN risk
            m = jnp.max(s, axis=-1, keepdims=True)
            e = jnp.exp(s - m)
            l = jnp.sum(e, axis=-1, keepdims=True)
            p = (e * pl.reciprocal(l, approx=True)).astype(bf16)
            ctx = jax.lax.dot_general(p, v, (((2,), (1,)), ((0,), (0,))),
                                      preferred_element_type=f32)        # (Bt,S,hd_p)
            # per-head slice of the output projection (K = hd_p, N = Cp lane-dense);
            # the head sum is a running f32 accumulation -> no (H,S,C) buffer.
            t = jnp.dot(ctx.reshape(M, hd_p).astype(bf16),
                        out_w[qo:qo + hd_p, :], preferred_element_type=f32)
            msa = t if msa is None else msa + t
        x1 = msa + out_b_ref[lr:lr + 1, :] + x
        # dropout1: identity at inference
        # ------------------------ convolutional branch ----------------------
        xn2 = layernorm(x1, ln2_g_ref[lr:lr + 1, :], ln2_b_ref[lr:lr + 1, :])
        h1 = gelu(conv1d(xn2.astype(bf16), c1_wt_ref[lr], c1_b_ref[lr:lr + 1, :]))
        h2 = gelu(conv1d(h1.astype(bf16), c2_wt_ref[lr], c2_b_ref[lr:lr + 1, :]))
        sub_out.append(h2 + x1)
        # dropout2: identity at inference

    left, right = sub_out
    # projection of [left | right] without materializing the (M, 2Cp) concat
    proj = (jnp.dot(left.astype(bf16), proj_wl_ref[...], preferred_element_type=f32)
            + jnp.dot(right.astype(bf16), proj_wr_ref[...], preferred_element_type=f32)
            + proj_b_ref[...])
    o_ref[...] = layernorm(proj, lnf_g_ref[...], lnf_b_ref[...]).astype(o_ref.dtype)


# --------------------------------- wrapper ---------------------------------

def _pick_batch_tile(batch, seq):
    # Fold batch into the matmul M dimension: smallest tile with Bt*S >= 256
    # (fills the MXU). If the batch can't fill the MXU anyway, keep >= 2 grid
    # steps so the pipeline / megacore has something to overlap.
    divisors = [d for d in range(1, batch + 1) if batch % d == 0]
    ok = [d for d in divisors if (d * seq) % 8 == 0 or d == batch]
    for d in ok:
        if d * seq >= 256:
            return d
    small = [d for d in ok if d < batch]
    return small[-1] if small else batch


def btc_block_forward(x, params, n_heads):
    B, S, C = x.shape
    H = n_heads
    hd = C // H
    Cp = _round_up(C, 128)
    hd_p = _round_up(hd, 128)
    Cq = H * hd_p
    f32, bf16 = jnp.float32, jnp.bfloat16
    factor = 1.0 / math.sqrt(hd)
    pc, phd = Cp - C, hd_p - hd

    # -------- weight prep (all padding / reordering happens at trace time) ---
    def pad_c(v):
        return jnp.pad(v.astype(f32), (0, pc))

    def stack_c(name):                                     # (2, Cp); zero-padded
        return jnp.stack([pad_c(params['left'][name]), pad_c(params['right'][name])])

    def qkv_prep(p):
        # torch qkv Linear: weight (3C, C) rows ordered (head, qkv, hd).
        w = p['qkv_w'].astype(f32).reshape(H, 3, hd, C)
        w = w.at[:, 0].multiply(factor)                    # fold 1/sqrt(hd) into Q
        w = jnp.pad(w, ((0, 0), (0, 0), (0, phd), (0, pc)))
        wt = jnp.transpose(w, (3, 1, 0, 2)).reshape(Cp, 3 * Cq)   # [Q|K|V] blocks
        b = p['qkv_b'].astype(f32).reshape(H, 3, hd)
        b = b.at[:, 0].multiply(factor)
        b = jnp.pad(b, ((0, 0), (0, 0), (0, phd)))
        bt = jnp.transpose(b, (1, 0, 2)).reshape(1, 3 * Cq)
        return wt, bt

    def out_prep(p):
        # torch out Linear weight (C, C); in-features ordered (head, hd).
        w = p['out_w'].astype(f32).T.reshape(H, hd, C)
        return jnp.pad(w, ((0, 0), (0, phd), (0, pc))).reshape(Cq, Cp)

    def conv_prep(w):
        # torch Conv1d weight (C_out, C_in, 3) -> (Cp, 3*Cp) blocks [W0|W1|W2].
        w = jnp.transpose(w.astype(f32), (1, 2, 0))
        return jnp.pad(w, ((0, pc), (0, 0), (0, pc))).reshape(Cp, 3 * Cp)

    qkv_l, qkv_r = qkv_prep(params['left']), qkv_prep(params['right'])
    qkv_wt = jnp.stack([qkv_l[0], qkv_r[0]]).astype(bf16)             # (2, Cp, 3Cq)
    qkv_b = jnp.stack([qkv_l[1], qkv_r[1]])                           # (2, 1, 3Cq)
    out_wt = jnp.stack([out_prep(params['left']),
                        out_prep(params['right'])]).astype(bf16)      # (2, Cq, Cp)
    out_b = stack_c('out_b')
    ln1_g, ln1_b = stack_c('ln1_g'), stack_c('ln1_b')
    ln2_g, ln2_b = stack_c('ln2_g'), stack_c('ln2_b')
    c1_wt = jnp.stack([conv_prep(params['left']['c1_w']),
                       conv_prep(params['right']['c1_w'])]).astype(bf16)
    c1_b = stack_c('c1_b')
    c2_wt = jnp.stack([conv_prep(params['left']['c2_w']),
                       conv_prep(params['right']['c2_w'])]).astype(bf16)
    c2_b = stack_c('c2_b')
    pw = params['proj_w'].astype(f32)                                  # (C, 2C)
    proj_wl = jnp.pad(pw[:, :C].T, ((0, pc), (0, pc))).astype(bf16)    # (Cp, Cp)
    proj_wr = jnp.pad(pw[:, C:].T, ((0, pc), (0, pc))).astype(bf16)
    proj_b = pad_c(params['proj_b'])[None, :]
    lnf_g = pad_c(params['ln_g'])[None, :]
    lnf_b = pad_c(params['ln_b'])[None, :]

    weights = [ln1_g, ln1_b, qkv_wt, qkv_b, out_wt, out_b, ln2_g, ln2_b,
               c1_wt, c1_b, c2_wt, c2_b, proj_wl, proj_wr, proj_b, lnf_g, lnf_b]

    # -------- lane-dense padded input, folded batch/seq rows ------------------
    x2d = jnp.pad(x.astype(f32), ((0, 0), (0, 0), (0, pc))).reshape(B * S, Cp)
    bt = _pick_batch_tile(B, S)
    tile_rows = bt * S
    num_tiles = (B * S) // tile_rows

    # -------- generation-aware VMEM budget ------------------------------------
    try:
        phys_vmem = int(pltpu.get_tpu_info().vmem_capacity_bytes)
    except Exception:
        phys_vmem = 64 * 1024 * 1024
    vmem_cap = max(32 * 1024 * 1024, (phys_vmem * 3) // 4)   # leave scratch headroom
    weight_bytes = sum(int(w.size) * jnp.dtype(w.dtype).itemsize for w in weights)
    io_bytes = 2 * 2 * tile_rows * Cp * 4                    # double-buffered in/out tiles
    act_bytes = 4 * tile_rows * (12 * Cp + 8 * Cq) + 16 * bt * S * S
    vmem_limit = int(min(vmem_cap, 2 * weight_bytes + io_bytes + act_bytes + (8 << 20)))

    def _run(single_buffer_weights):
        def wspec(a):
            nd = a.ndim
            idx = lambda b, _nd=nd: (0,) * _nd
            if single_buffer_weights:
                # constant index_map across the grid -> double-buffering is waste
                return pl.BlockSpec(a.shape, idx, pipeline_mode=pl.Buffered(1))
            return pl.BlockSpec(a.shape, idx)

        in_specs = [pl.BlockSpec((tile_rows, Cp), lambda b: (b, 0))] + \
                   [wspec(w) for w in weights]
        out_specs = pl.BlockSpec((tile_rows, Cp), lambda b: (b, 0))
        fn = pl.pallas_call(
            functools.partial(_btc_block_kernel, H, C, S),
            out_shape=jax.ShapeDtypeStruct((B * S, Cp), jnp.float32),
            grid=(num_tiles,),
            in_specs=in_specs,
            out_specs=out_specs,
            compiler_params=pltpu.CompilerParams(
                dimension_semantics=("parallel",),
                vmem_limit_bytes=vmem_limit,
            ),
        )
        return jax.block_until_ready(fn(x2d, *weights))

    try:
        out2d = _run(True)
    except Exception:
        # TODO(synk): pl.Buffered(1) single-buffered weight specs rejected by
        # this jax/Mosaic version; fall back to default (double) buffering.
        out2d = _run(False)

    return out2d.reshape(B, S, Cp)[:, :, :C]


# --------------------------- pure-JAX reference ----------------------------

def reference_forward(x, params, n_heads):
    def layernorm(v, g, b, eps=1e-5):
        mu = jnp.mean(v, axis=-1, keepdims=True)
        vc = v - mu
        var = jnp.mean(vc * vc, axis=-1, keepdims=True)
        return vc * jax.lax.rsqrt(var + eps) * g + b

    def conv1d(v, w, b):
        B, S, C = v.shape
        vp = jnp.pad(v, ((0, 0), (1, 1), (0, 0)))
        y = sum(jnp.einsum('bsi,oi->bso', vp[:, k:k + S, :], w[:, :, k])
                for k in range(3))
        return y + b

    def msa(v, p, direction):
        B, S, C = v.shape
        hd = C // n_heads
        qkv = v @ p['qkv_w'].T + p['qkv_b']
        qkv = qkv.reshape(B, S, n_heads, 3, hd)
        q = jnp.transpose(qkv[:, :, :, 0, :], (0, 2, 1, 3))
        k = jnp.transpose(qkv[:, :, :, 1, :], (0, 2, 1, 3))
        vv = jnp.transpose(qkv[:, :, :, 2, :], (0, 2, 1, 3))
        scores = jnp.einsum('bhsd,bhtd->bhst', q, k) / math.sqrt(hd)
        r = jnp.arange(S)[:, None]
        c = jnp.arange(S)[None, :]
        masked = (c < r) if direction == 'left' else (c > r)
        scores = jnp.where(masked, -jnp.inf, scores)
        attn = jax.nn.softmax(scores, axis=-1)
        out = jnp.einsum('bhst,bhtd->bhsd', attn, vv)
        out = jnp.transpose(out, (0, 2, 1, 3)).reshape(B, S, C)
        return out @ p['out_w'].T + p['out_b']

    def subblock(v, p, direction):
        v = msa(layernorm(v, p['ln1_g'], p['ln1_b']), p, direction) + v
        vn = layernorm(v, p['ln2_g'], p['ln2_b'])
        h = jax.nn.gelu(conv1d(vn, p['c1_w'], p['c1_b']), approximate=False)
        h = jax.nn.gelu(conv1d(h, p['c2_w'], p['c2_b']), approximate=False)
        return h + v

    left = subblock(x, params['left'], 'left')
    right = subblock(x, params['right'], 'right')
    concat = jnp.concatenate([left, right], axis=-1)
    proj = concat @ params['proj_w'].T + params['proj_b']
    return layernorm(proj, params['ln_g'], params['ln_b'])


# ------------------------------ params / main ------------------------------

def init_params(key, dim):
    ks = iter(jax.random.split(key, 32))

    def w(shape, scale):
        return scale * jax.random.normal(next(ks), shape, dtype=jnp.float32)

    def sub():
        return {
            'qkv_w': w((3 * dim, dim), 0.08), 'qkv_b': w((3 * dim,), 0.02),
            'out_w': w((dim, dim), 0.08),     'out_b': w((dim,), 0.02),
            'c1_w': w((dim, dim, 3), 0.08),   'c1_b': w((dim,), 0.02),
            'c2_w': w((dim, dim, 3), 0.08),   'c2_b': w((dim,), 0.02),
            'ln1_g': 1.0 + w((dim,), 0.05),   'ln1_b': w((dim,), 0.05),
            'ln2_g': 1.0 + w((dim,), 0.05),   'ln2_b': w((dim,), 0.05),
        }

    return {
        'left': sub(),
        'right': sub(),
        'proj_w': w((dim, 2 * dim), 0.08), 'proj_b': w((dim,), 0.02),
        'ln_g': 1.0 + w((dim,), 0.05),     'ln_b': w((dim,), 0.05),
    }


if __name__ == "__main__":
    B, S, dim, n_heads = 2, 8, 32, 4
    key = jax.random.PRNGKey(0)
    kx, kp = jax.random.split(key)
    x = jax.random.normal(kx, (B, S, dim), dtype=jnp.float32)
    params = init_params(kp, dim)

    out = jax.block_until_ready(btc_block_forward(x, params, n_heads))

    ref = reference_forward(x, params, n_heads)
    assert out.shape == (B, S, dim)
    assert bool(jnp.all(jnp.isfinite(out)))
    max_err = float(jnp.max(jnp.abs(out - ref)))
    # bf16 MXU operands + tanh-GELU / approx-reciprocal => looser tolerance than f32.
    assert max_err < 5e-2, f"max abs error {max_err}"
    print("KERNEL_OK")
</pallas_src>

<mosaic_0001>
module attributes {stable_mosaic.version = 11 : i64} {
  func.func @_btc_block_kernel(%arg0: i32, %arg1: memref<8x128xf32, #tpu.memory_space<vmem>>, %arg2: memref<2x128xf32, #tpu.memory_space<vmem>>, %arg3: memref<2x128xf32, #tpu.memory_space<vmem>>, %arg4: memref<2x128x1536xbf16, #tpu.memory_space<vmem>>, %arg5: memref<2x1x1536xf32, #tpu.memory_space<vmem>>, %arg6: memref<2x512x128xbf16, #tpu.memory_space<vmem>>, %arg7: memref<2x128xf32, #tpu.memory_space<vmem>>, %arg8: memref<2x128xf32, #tpu.memory_space<vmem>>, %arg9: memref<2x128xf32, #tpu.memory_space<vmem>>, %arg10: memref<2x128x384xbf16, #tpu.memory_space<vmem>>, %arg11: memref<2x128xf32, #tpu.memory_space<vmem>>, %arg12: memref<2x128x384xbf16, #tpu.memory_space<vmem>>, %arg13: memref<2x128xf32, #tpu.memory_space<vmem>>, %arg14: memref<128x128xbf16, #tpu.memory_space<vmem>>, %arg15: memref<128x128xbf16, #tpu.memory_space<vmem>>, %arg16: memref<1x128xf32, #tpu.memory_space<vmem>>, %arg17: memref<1x128xf32, #tpu.memory_space<vmem>>, %arg18: memref<1x128xf32, #tpu.memory_space<vmem>>, %arg19: memref<8x128xf32, #tpu.memory_space<vmem>>) attributes {dimension_semantics = [#tpu.dimension_semantics<parallel>], iteration_bounds = array<i64: 2>, scalar_prefetch = 0 : i64, scratch_operands = 0 : i64, tpu.core_type = #tpu.core_type<tc>, window_params = [{transform_indices = @transform_0, window_bounds = array<i64: 8, 128>}, {pipeline_mode = #tpu.pipeline_mode<synchronous>, transform_indices = @transform_1, window_bounds = array<i64: 2, 128>}, {pipeline_mode = #tpu.pipeline_mode<synchronous>, transform_indices = @transform_2, window_bounds = array<i64: 2, 128>}, {pipeline_mode = #tpu.pipeline_mode<synchronous>, transform_indices = @transform_3, window_bounds = array<i64: 2, 128, 1536>}, {pipeline_mode = #tpu.pipeline_mode<synchronous>, transform_indices = @transform_4, window_bounds = array<i64: 2, 1, 1536>}, {pipeline_mode = #tpu.pipeline_mode<synchronous>, transform_indices = @transform_5, window_bounds = array<i64: 2, 512, 128>}, {pipeline_mode = #tpu.pipeline_mode<synchronous>, transform_indices = @transform_6, window_bounds = array<i64: 2, 128>}, {pipeline_mode = #tpu.pipeline_mode<synchronous>, transform_indices = @transform_7, window_bounds = array<i64: 2, 128>}, {pipeline_mode = #tpu.pipeline_mode<synchronous>, transform_indices = @transform_8, window_bounds = array<i64: 2, 128>}, {pipeline_mode = #tpu.pipeline_mode<synchronous>, transform_indices = @transform_9, window_bounds = array<i64: 2, 128, 384>}, {pipeline_mode = #tpu.pipeline_mode<synchronous>, transform_indices = @transform_10, window_bounds = array<i64: 2, 128>}, {pipeline_mode = #tpu.pipeline_mode<synchronous>, transform_indices = @transform_11, window_bounds = array<i64: 2, 128, 384>}, {pipeline_mode = #tpu.pipeline_mode<synchronous>, transform_indices = @transform_12, window_bounds = array<i64: 2, 128>}, {pipeline_mode = #tpu.pipeline_mode<synchronous>, transform_indices = @transform_13, window_bounds = array<i64: 128, 128>}, {pipeline_mode = #tpu.pipeline_mode<synchronous>, transform_indices = @transform_14, window_bounds = array<i64: 128, 128>}, {pipeline_mode = #tpu.pipeline_mode<synchronous>, transform_indices = @transform_15, window_bounds = array<i64: 1, 128>}, {pipeline_mode = #tpu.pipeline_mode<synchronous>, transform_indices = @transform_16, window_bounds = array<i64: 1, 128>}, {pipeline_mode = #tpu.pipeline_mode<synchronous>, transform_indices = @transform_17, window_bounds = array<i64: 1, 128>}, {transform_indices = @transform_18, window_bounds = array<i64: 8, 128>}]} {
    %c0 = arith.constant 0 : index
    %c0_0 = arith.constant 0 : index
    %0 = vector.load %arg1[%c0, %c0_0] : memref<8x128xf32, #tpu.memory_space<vmem>>, vector<8x128xf32>
    %1 = tpu.iota {dimensions = array<i32: 0>} : vector<8x1xi32>
    %c0_i32 = arith.constant 0 : i32
    %2 = vector.broadcast %c0_i32 : i32 to vector<8x1xi32>
    %3 = arith.cmpi sgt, %1, %2 : vector<8x1xi32>
    %c7_i32 = arith.constant 7 : i32
    %4 = vector.broadcast %c7_i32 : i32 to vector<8x1xi32>
    %5 = arith.cmpi slt, %1, %4 : vector<8x1xi32>
    %6 = tpu.iota {dimensions = array<i32: 0>} : vector<8x8xi32>
    %7 = tpu.iota {dimensions = array<i32: 1>} : vector<8x8xi32>
    %c0_1 = arith.constant 0 : index
    %c0_2 = arith.constant 0 : index
    %8 = vector.load %arg2[%c0_1, %c0_2] : memref<2x128xf32, #tpu.memory_space<vmem>>, vector<1x128xf32>
    %c0_3 = arith.constant 0 : index
    %c0_4 = arith.constant 0 : index
    %9 = vector.load %arg3[%c0_3, %c0_4] : memref<2x128xf32, #tpu.memory_space<vmem>>, vector<1x128xf32>
    %cst = arith.constant dense<0.000000e+00> : vector<8xf32>
    %10 = vector.multi_reduction <add>, %0, %cst [1] : vector<8x128xf32> to vector<8xf32>
    %11 = vector.shape_cast %10 : vector<8xf32> to vector<8x1xf32>
    %cst_5 = arith.constant 3.125000e-02 : f32
    %12 = vector.broadcast %cst_5 : f32 to vector<8x1xf32>
    %13 = arith.mulf %11, %12 : vector<8x1xf32>
    %14 = arith.mulf %0, %0 : vector<8x128xf32>
    %cst_6 = arith.constant dense<0.000000e+00> : vector<8xf32>
    %15 = vector.multi_reduction <add>, %14, %cst_6 [1] : vector<8x128xf32> to vector<8xf32>
    %16 = vector.shape_cast %15 : vector<8xf32> to vector<8x1xf32>
    %cst_7 = arith.constant 3.125000e-02 : f32
    %17 = vector.broadcast %cst_7 : f32 to vector<8x1xf32>
    %18 = arith.mulf %16, %17 : vector<8x1xf32>
    %19 = arith.mulf %13, %13 : vector<8x1xf32>
    %20 = arith.subf %18, %19 : vector<8x1xf32>
    %21 = vector.broadcast %13 : vector<8x1xf32> to vector<8x128xf32>
    %22 = arith.subf %0, %21 : vector<8x128xf32>
    %cst_8 = arith.constant 9.99999974E-6 : f32
    %23 = vector.broadcast %cst_8 : f32 to vector<8x1xf32>
    %24 = arith.addf %20, %23 : vector<8x1xf32>
    %25 = math.rsqrt %24 : vector<8x1xf32>
    %26 = vector.broadcast %25 : vector<8x1xf32> to vector<8x128xf32>
    %27 = arith.mulf %22, %26 : vector<8x128xf32>
    %28 = vector.broadcast %8 : vector<1x128xf32> to vector<8x128xf32>
    %29 = arith.mulf %27, %28 : vector<8x128xf32>
    %30 = vector.broadcast %9 : vector<1x128xf32> to vector<8x128xf32>
    %31 = arith.addf %29, %30 : vector<8x128xf32>
    %32 = arith.truncf %31 : vector<8x128xf32> to vector<8x128xbf16>
    %c0_9 = arith.constant 0 : index
    %c0_10 = arith.constant 0 : index
    %c0_11 = arith.constant 0 : index
    %33 = vector.load %arg4[%c0_9, %c0_10, %c0_11] : memref<2x128x1536xbf16, #tpu.memory_space<vmem>>, vector<1x128x1536xbf16>
    %34 = vector.shape_cast %33 : vector<1x128x1536xbf16> to vector<128x1536xbf16>
    %cst_12 = arith.constant dense<0.000000e+00> : vector<8x1536xf32>
    %35 = tpu.matmul %32, %34, %cst_12 {dimension_numbers = #tpu.dot_dimension_numbers<[1], [0], [0], [1], [0, 0, 1, 1], [], []>} : vector<8x128xbf16>, vector<128x1536xbf16>, vector<8x1536xf32> -> vector<8x1536xf32>
    %c0_13 = arith.constant 0 : index
    %c0_14 = arith.constant 0 : index
    %c0_15 = arith.constant 0 : index
    %36 = vector.load %arg5[%c0_13, %c0_14, %c0_15] : memref<2x1x1536xf32, #tpu.memory_space<vmem>>, vector<1x1x1536xf32>
    %37 = vector.shape_cast %36 : vector<1x1x1536xf32> to vector<1x1536xf32>
    %38 = vector.broadcast %37 : vector<1x1536xf32> to vector<8x1536xf32>
    %39 = arith.addf %35, %38 : vector<8x1536xf32>
    %40 = arith.truncf %39 : vector<8x1536xf32> to vector<8x1536xbf16>
    %41 = arith.cmpi slt, %7, %6 : vector<8x8xi32>
    %c0_16 = arith.constant 0 : index
    %c0_17 = arith.constant 0 : index
    %c0_18 = arith.constant 0 : index
    %42 = vector.load %arg6[%c0_16, %c0_17, %c0_18] : memref<2x512x128xbf16, #tpu.memory_space<vmem>>, vector<1x512x128xbf16>
    %43 = vector.shape_cast %42 : vector<1x512x128xbf16> to vector<512x128xbf16>
    %44 = vector.extract_strided_slice %40 {offsets = [0, 0], sizes = [8, 128], strides = [1, 1]} : vector<8x1536xbf16> to vector<8x128xbf16>
    %45 = vector.shape_cast %44 : vector<8x128xbf16> to vector<1x8x128xbf16>
    %46 = vector.extract_strided_slice %40 {offsets = [0, 512], sizes = [8, 128], strides = [1, 1]} : vector<8x1536xbf16> to vector<8x128xbf16>
    %47 = vector.shape_cast %46 : vector<8x128xbf16> to vector<1x8x128xbf16>
    %48 = vector.extract_strided_slice %40 {offsets = [0, 1024], sizes = [8, 128], strides = [1, 1]} : vector<8x1536xbf16> to vector<8x128xbf16>
    %49 = vector.shape_cast %48 : vector<8x128xbf16> to vector<1x8x128xbf16>
    %cst_19 = arith.constant dense<0.000000e+00> : vector<1x8x8xf32>
    %50 = tpu.matmul %45, %47, %cst_19 {dimension_numbers = #tpu.dot_dimension_numbers<[2], [2], [1], [1], [0, 0, 0, 1, 1, 1], [0], [0]>} : vector<1x8x128xbf16>, vector<1x8x128xbf16>, vector<1x8x8xf32> -> vector<1x8x8xf32>
    %cst_20 = arith.constant -1.000000e+30 : f32
    %51 = vector.shape_cast %41 : vector<8x8xi1> to vector<1x8x8xi1>
    %52 = vector.broadcast %cst_20 : f32 to vector<1x8x8xf32>
    %53 = arith.select %51, %52, %50 : vector<1x8x8xi1>, vector<1x8x8xf32>
    %cst_21 = arith.constant dense<0xFF800000> : vector<1x8xf32>
    %54 = vector.multi_reduction <maximumf>, %53, %cst_21 [2] : vector<1x8x8xf32> to vector<1x8xf32>
    %55 = vector.shape_cast %54 : vector<1x8xf32> to vector<1x8x1xf32>
    %56 = vector.broadcast %55 : vector<1x8x1xf32> to vector<1x8x8xf32>
    %57 = arith.subf %53, %56 : vector<1x8x8xf32>
    %58 = math.exp %57 : vector<1x8x8xf32>
    %cst_22 = arith.constant dense<0.000000e+00> : vector<1x8xf32>
    %59 = vector.multi_reduction <add>, %58, %cst_22 [2] : vector<1x8x8xf32> to vector<1x8xf32>
    %60 = vector.shape_cast %59 : vector<1x8xf32> to vector<1x8x1xf32>
    %61 = tpu.reciprocal %60 {approx = true} : vector<1x8x1xf32> -> vector<1x8x1xf32>
    %62 = vector.broadcast %61 : vector<1x8x1xf32> to vector<1x8x8xf32>
    %63 = arith.mulf %58, %62 : vector<1x8x8xf32>
    %64 = arith.truncf %63 : vector<1x8x8xf32> to vector<1x8x8xbf16>
    %cst_23 = arith.constant dense<0.000000e+00> : vector<1x8x128xf32>
    %65 = tpu.matmul %64, %49, %cst_23 {dimension_numbers = #tpu.dot_dimension_numbers<[2], [1], [1], [2], [0, 0, 0, 1, 1, 2], [0], [0]>} : vector<1x8x8xbf16>, vector<1x8x128xbf16>, vector<1x8x128xf32> -> vector<1x8x128xf32>
    %66 = vector.shape_cast %65 : vector<1x8x128xf32> to vector<8x128xf32>
    %67 = arith.truncf %66 : vector<8x128xf32> to vector<8x128xbf16>
    %68 = vector.extract_strided_slice %43 {offsets = [0, 0], sizes = [128, 128], strides = [1, 1]} : vector<512x128xbf16> to vector<128x128xbf16>
    %cst_24 = arith.constant dense<0.000000e+00> : vector<8x128xf32>
    %69 = tpu.matmul %67, %68, %cst_24 {dimension_numbers = #tpu.dot_dimension_numbers<[1], [0], [0], [1], [0, 0, 1, 1], [], []>} : vector<8x128xbf16>, vector<128x128xbf16>, vector<8x128xf32> -> vector<8x128xf32>
    %70 = vector.extract_strided_slice %40 {offsets = [0, 128], sizes = [8, 128], strides = [1, 1]} : vector<8x1536xbf16> to vector<8x128xbf16>
    %71 = vector.shape_cast %70 : vector<8x128xbf16> to vector<1x8x128xbf16>
    %72 = vector.extract_strided_slice %40 {offsets = [0, 640], sizes = [8, 128], strides = [1, 1]} : vector<8x1536xbf16> to vector<8x128xbf16>
    %73 = vector.shape_cast %72 : vector<8x128xbf16> to vector<1x8x128xbf16>
    %74 = vector.extract_strided_slice %40 {offsets = [0, 1152], sizes = [8, 128], strides = [1, 1]} : vector<8x1536xbf16> to vector<8x128xbf16>
    %75 = vector.shape_cast %74 : vector<8x128xbf16> to vector<1x8x128xbf16>
    %cst_25 = arith.constant dense<0.000000e+00> : vector<1x8x8xf32>
    %76 = tpu.matmul %71, %73, %cst_25 {dimension_numbers = #tpu.dot_dimension_numbers<[2], [2], [1], [1], [0, 0, 0, 1, 1, 1], [0], [0]>} : vector<1x8x128xbf16>, vector<1x8x128xbf16>, vector<1x8x8xf32> -> vector<1x8x8xf32>
    %cst_26 = arith.constant -1.000000e+30 : f32
    %77 = vector.shape_cast %41 : vector<8x8xi1> to vector<1x8x8xi1>
    %78 = vector.broadcast %cst_26 : f32 to vector<1x8x8xf32>
    %79 = arith.select %77, %78, %76 : vector<1x8x8xi1>, vector<1x8x8xf32>
    %cst_27 = arith.constant dense<0xFF800000> : vector<1x8xf32>
    %80 = vector.multi_reduction <maximumf>, %79, %cst_27 [2] : vector<1x8x8xf32> to vector<1x8xf32>
    %81 = vector.shape_cast %80 : vector<1x8xf32> to vector<1x8x1xf32>
    %82 = vector.broadcast %81 : vector<1x8x1xf32> to vector<1x8x8xf32>
    %83 = arith.subf %79, %82 : vector<1x8x8xf32>
    %84 = math.exp %83 : vector<1x8x8xf32>
    %cst_28 = arith.constant dense<0.000000e+00> : vector<1x8xf32>
    %85 = vector.multi_reduction <add>, %84, %cst_28 [2] : vector<1x8x8xf32> to vector<1x8xf32>
    %86 = vector.shape_cast %85 : vector<1x8xf32> to vector<1x8x1xf32>
    %87 = tpu.reciprocal %86 {approx = true} : vector<1x8x1xf32> -> vector<1x8x1xf32>
    %88 = vector.broadcast %87 : vector<1x8x1xf32> to vector<1x8x8xf32>
    %89 = arith.mulf %84, %88 : vector<1x8x8xf32>
    %90 = arith.truncf %89 : vector<1x8x8xf32> to vector<1x8x8xbf16>
    %cst_29 = arith.constant dense<0.000000e+00> : vector<1x8x128xf32>
    %91 = tpu.matmul %90, %75, %cst_29 {dimension_numbers = #tpu.dot_dimension_numbers<[2], [1], [1], [2], [0, 0, 0, 1, 1, 2], [0], [0]>} : vector<1x8x8xbf16>, vector<1x8x128xbf16>, vector<1x8x128xf32> -> vector<1x8x128xf32>
    %92 = vector.shape_cast %91 : vector<1x8x128xf32> to vector<8x128xf32>
    %93 = arith.truncf %92 : vector<8x128xf32> to vector<8x128xbf16>
    %94 = vector.extract_strided_slice %43 {offsets = [128, 0], sizes = [128, 128], strides = [1, 1]} : vector<512x128xbf16> to vector<128x128xbf16>
    %cst_30 = arith.constant dense<0.000000e+00> : vector<8x128xf32>
    %95 = tpu.matmul %93, %94, %cst_30 {dimension_numbers = #tpu.dot_dimension_numbers<[1], [0], [0], [1], [0, 0, 1, 1], [], []>} : vector<8x128xbf16>, vector<128x128xbf16>, vector<8x128xf32> -> vector<8x128xf32>
    %96 = arith.addf %69, %95 : vector<8x128xf32>
    %97 = vector.extract_strided_slice %40 {offsets = [0, 256], sizes = [8, 128], strides = [1, 1]} : vector<8x1536xbf16> to vector<8x128xbf16>
    %98 = vector.shape_cast %97 : vector<8x128xbf16> to vector<1x8x128xbf16>
    %99 = vector.extract_strided_slice %40 {offsets = [0, 768], sizes = [8, 128], strides = [1, 1]} : vector<8x1536xbf16> to vector<8x128xbf16>
    %100 = vector.shape_cast %99 : vector<8x128xbf16> to vector<1x8x128xbf16>
    %101 = vector.extract_strided_slice %40 {offsets = [0, 1280], sizes = [8, 128], strides = [1, 1]} : vector<8x1536xbf16> to vector<8x128xbf16>
    %102 = vector.shape_cast %101 : vector<8x128xbf16> to vector<1x8x128xbf16>
    %cst_31 = arith.constant dense<0.000000e+00> : vector<1x8x8xf32>
    %103 = tpu.matmul %98, %100, %cst_31 {dimension_numbers = #tpu.dot_dimension_numbers<[2], [2], [1], [1], [0, 0, 0, 1, 1, 1], [0], [0]>} : vector<1x8x128xbf16>, vector<1x8x128xbf16>, vector<1x8x8xf32> -> vector<1x8x8xf32>
    %cst_32 = arith.constant -1.000000e+30 : f32
    %104 = vector.shape_cast %41 : vector<8x8xi1> to vector<1x8x8xi1>
    %105 = vector.broadcast %cst_32 : f32 to vector<1x8x8xf32>
    %106 = arith.select %104, %105, %103 : vector<1x8x8xi1>, vector<1x8x8xf32>
    %cst_33 = arith.constant dense<0xFF800000> : vector<1x8xf32>
    %107 = vector.multi_reduction <maximumf>, %106, %cst_33 [2] : vector<1x8x8xf32> to vector<1x8xf32>
    %108 = vector.shape_cast %107 : vector<1x8xf32> to vector<1x8x1xf32>
    %109 = vector.broadcast %108 : vector<1x8x1xf32> to vector<1x8x8xf32>
    %110 = arith.subf %106, %109 : vector<1x8x8xf32>
    %111 = math.exp %110 : vector<1x8x8xf32>
    %cst_34 = arith.constant dense<0.000000e+00> : vector<1x8xf32>
    %112 = vector.multi_reduction <add>, %111, %cst_34 [2] : vector<1x8x8xf32> to vector<1x8xf32>
    %113 = vector.shape_cast %112 : vector<1x8xf32> to vector<1x8x1xf32>
    %114 = tpu.reciprocal %113 {approx = true} : vector<1x8x1xf32> -> vector<1x8x1xf32>
    %115 = vector.broadcast %114 : vector<1x8x1xf32> to vector<1x8x8xf32>
    %116 = arith.mulf %111, %115 : vector<1x8x8xf32>
    %117 = arith.truncf %116 : vector<1x8x8xf32> to vector<1x8x8xbf16>
    %cst_35 = arith.constant dense<0.000000e+00> : vector<1x8x128xf32>
    %118 = tpu.matmul %117, %102, %cst_35 {dimension_numbers = #tpu.dot_dimension_numbers<[2], [1], [1], [2], [0, 0, 0, 1, 1, 2], [0], [0]>} : vector<1x8x8xbf16>, vector<1x8x128xbf16>, vector<1x8x128xf32> -> vector<1x8x128xf32>
    %119 = vector.shape_cast %118 : vector<1x8x128xf32> to vector<8x128xf32>
    %120 = arith.truncf %119 : vector<8x128xf32> to vector<8x128xbf16>
    %121 = vector.extract_strided_slice %43 {offsets = [256, 0], sizes = [128, 128], strides = [1, 1]} : vector<512x128xbf16> to vector<128x128xbf16>
    %cst_36 = arith.constant dense<0.000000e+00> : vector<8x128xf32>
    %122 = tpu.matmul %120, %121, %cst_36 {dimension_numbers = #tpu.dot_dimension_numbers<[1], [0], [0], [1], [0, 0, 1, 1], [], []>} : vector<8x128xbf16>, vector<128x128xbf16>, vector<8x128xf32> -> vector<8x128xf32>
    %123 = arith.addf %96, %122 : vector<8x128xf32>
    %124 = vector.extract_strided_slice %40 {offsets = [0, 384], sizes = [8, 128], strides = [1, 1]} : vector<8x1536xbf16> to vector<8x128xbf16>
    %125 = vector.shape_cast %124 : vector<8x128xbf16> to vector<1x8x128xbf16>
    %126 = vector.extract_strided_slice %40 {offsets = [0, 896], sizes = [8, 128], strides = [1, 1]} : vector<8x1536xbf16> to vector<8x128xbf16>
    %127 = vector.shape_cast %126 : vector<8x128xbf16> to vector<1x8x128xbf16>
    %128 = vector.extract_strided_slice %40 {offsets = [0, 1408], sizes = [8, 128], strides = [1, 1]} : vector<8x1536xbf16> to vector<8x128xbf16>
    %129 = vector.shape_cast %128 : vector<8x128xbf16> to vector<1x8x128xbf16>
    %cst_37 = arith.constant dense<0.000000e+00> : vector<1x8x8xf32>
    %130 = tpu.matmul %125, %127, %cst_37 {dimension_numbers = #tpu.dot_dimension_numbers<[2], [2], [1], [1], [0, 0, 0, 1, 1, 1], [0], [0]>} : vector<1x8x128xbf16>, vector<1x8x128xbf16>, vector<1x8x8xf32> -> vector<1x8x8xf32>
    %cst_38 = arith.constant -1.000000e+30 : f32
    %131 = vector.shape_cast %41 : vector<8x8xi1> to vector<1x8x8xi1>
    %132 = vector.broadcast %cst_38 : f32 to vector<1x8x8xf32>
    %133 = arith.select %131, %132, %130 : vector<1x8x8xi1>, vector<1x8x8xf32>
    %cst_39 = arith.constant dense<0xFF800000> : vector<1x8xf32>
    %134 = vector.multi_reduction <maximumf>, %133, %cst_39 [2] : vector<1x8x8xf32> to vector<1x8xf32>
    %135 = vector.shape_cast %134 : vector<1x8xf32> to vector<1x8x1xf32>
    %136 = vector.broadcast %135 : vector<1x8x1xf32> to vector<1x8x8xf32>
    %137 = arith.subf %133, %136 : vector<1x8x8xf32>
    %138 = math.exp %137 : vector<1x8x8xf32>
    %cst_40 = arith.constant dense<0.000000e+00> : vector<1x8xf32>
    %139 = vector.multi_reduction <add>, %138, %cst_40 [2] : vector<1x8x8xf32> to vector<1x8xf32>
    %140 = vector.shape_cast %139 : vector<1x8xf32> to vector<1x8x1xf32>
    %141 = tpu.reciprocal %140 {approx = true} : vector<1x8x1xf32> -> vector<1x8x1xf32>
    %142 = vector.broadcast %141 : vector<1x8x1xf32> to vector<1x8x8xf32>
    %143 = arith.mulf %138, %142 : vector<1x8x8xf32>
    %144 = arith.truncf %143 : vector<1x8x8xf32> to vector<1x8x8xbf16>
    %cst_41 = arith.constant dense<0.000000e+00> : vector<1x8x128xf32>
    %145 = tpu.matmul %144, %129, %cst_41 {dimension_numbers = #tpu.dot_dimension_numbers<[2], [1], [1], [2], [0, 0, 0, 1, 1, 2], [0], [0]>} : vector<1x8x8xbf16>, vector<1x8x128xbf16>, vector<1x8x128xf32> -> vector<1x8x128xf32>
    %146 = vector.shape_cast %145 : vector<1x8x128xf32> to vector<8x128xf32>
    %147 = arith.truncf %146 : vector<8x128xf32> to vector<8x128xbf16>
    %148 = vector.extract_strided_slice %43 {offsets = [384, 0], sizes = [128, 128], strides = [1, 1]} : vector<512x128xbf16> to vector<128x128xbf16>
    %cst_42 = arith.constant dense<0.000000e+00> : vector<8x128xf32>
    %149 = tpu.matmul %147, %148, %cst_42 {dimension_numbers = #tpu.dot_dimension_numbers<[1], [0], [0], [1], [0, 0, 1, 1], [], []>} : vector<8x128xbf16>, vector<128x128xbf16>, vector<8x128xf32> -> vector<8x128xf32>
    %150 = arith.addf %123, %149 : vector<8x128xf32>
    %c0_43 = arith.constant 0 : index
    %c0_44 = arith.constant 0 : index
    %151 = vector.load %arg7[%c0_43, %c0_44] : memref<2x128xf32, #tpu.memory_space<vmem>>, vector<1x128xf32>
    %152 = vector.broadcast %151 : vector<1x128xf32> to vector<8x128xf32>
    %153 = arith.addf %150, %152 : vector<8x128xf32>
    %154 = arith.addf %153, %0 : vector<8x128xf32>
    %c0_45 = arith.constant 0 : index
    %c0_46 = arith.constant 0 : index
    %155 = vector.load %arg8[%c0_45, %c0_46] : memref<2x128xf32, #tpu.memory_space<vmem>>, vector<1x128xf32>
    %c0_47 = arith.constant 0 : index
    %c0_48 = arith.constant 0 : index
    %156 = vector.load %arg9[%c0_47, %c0_48] : memref<2x128xf32, #tpu.memory_space<vmem>>, vector<1x128xf32>
    %cst_49 = arith.constant dense<0.000000e+00> : vector<8xf32>
    %157 = vector.multi_reduction <add>, %154, %cst_49 [1] : vector<8x128xf32> to vector<8xf32>
    %158 = vector.shape_cast %157 : vector<8xf32> to vector<8x1xf32>
    %cst_50 = arith.constant 3.125000e-02 : f32
    %159 = vector.broadcast %cst_50 : f32 to vector<8x1xf32>
    %160 = arith.mulf %158, %159 : vector<8x1xf32>
    %161 = arith.mulf %154, %154 : vector<8x128xf32>
    %cst_51 = arith.constant dense<0.000000e+00> : vector<8xf32>
    %162 = vector.multi_reduction <add>, %161, %cst_51 [1] : vector<8x128xf32> to vector<8xf32>
    %163 = vector.shape_cast %162 : vector<8xf32> to vector<8x1xf32>
    %cst_52 = arith.constant 3.125000e-02 : f32
    %164 = vector.broadcast %cst_52 : f32 to vector<8x1xf32>
    %165 = arith.mulf %163, %164 : vector<8x1xf32>
    %166 = arith.mulf %160, %160 : vector<8x1xf32>
    %167 = arith.subf %165, %166 : vector<8x1xf32>
    %168 = vector.broadcast %160 : vector<8x1xf32> to vector<8x128xf32>
    %169 = arith.subf %154, %168 : vector<8x128xf32>
    %cst_53 = arith.constant 9.99999974E-6 : f32
    %170 = vector.broadcast %cst_53 : f32 to vector<8x1xf32>
    %171 = arith.addf %167, %170 : vector<8x1xf32>
    %172 = math.rsqrt %171 : vector<8x1xf32>
    %173 = vector.broadcast %172 : vector<8x1xf32> to vector<8x128xf32>
    %174 = arith.mulf %169, %173 : vector<8x128xf32>
    %175 = vector.broadcast %155 : vector<1x128xf32> to vector<8x128xf32>
    %176 = arith.mulf %174, %175 : vector<8x128xf32>
    %177 = vector.broadcast %156 : vector<1x128xf32> to vector<8x128xf32>
    %178 = arith.addf %176, %177 : vector<8x128xf32>
    %179 = arith.truncf %178 : vector<8x128xf32> to vector<8x128xbf16>
    %c0_54 = arith.constant 0 : index
    %c0_55 = arith.constant 0 : index
    %c0_56 = arith.constant 0 : index
    %180 = vector.load %arg10[%c0_54, %c0_55, %c0_56] : memref<2x128x384xbf16, #tpu.memory_space<vmem>>, vector<1x128x384xbf16>
    %181 = vector.shape_cast %180 : vector<1x128x384xbf16> to vector<128x384xbf16>
    %c0_57 = arith.constant 0 : index
    %c0_58 = arith.constant 0 : index
    %182 = vector.load %arg11[%c0_57, %c0_58] : memref<2x128xf32, #tpu.memory_space<vmem>>, vector<1x128xf32>
    %cst_59 = arith.constant dense<0.000000e+00> : vector<8x384xf32>
    %183 = tpu.matmul %179, %181, %cst_59 {dimension_numbers = #tpu.dot_dimension_numbers<[1], [0], [0], [1], [0, 0, 1, 1], [], []>} : vector<8x128xbf16>, vector<128x384xbf16>, vector<8x384xf32> -> vector<8x384xf32>
    %184 = vector.extract_strided_slice %183 {offsets = [0, 0], sizes = [8, 128], strides = [1, 1]} : vector<8x384xf32> to vector<8x128xf32>
    %185 = vector.extract_strided_slice %183 {offsets = [0, 128], sizes = [8, 128], strides = [1, 1]} : vector<8x384xf32> to vector<8x128xf32>
    %186 = vector.extract_strided_slice %183 {offsets = [0, 256], sizes = [8, 128], strides = [1, 1]} : vector<8x384xf32> to vector<8x128xf32>
    %c1_i32 = arith.constant 1 : i32
    %187 = tpu.dynamic_rotate %184 by %c1_i32 dim 0 : vector<8x128xf32>, i32 -> vector<8x128xf32>
    %cst_60 = arith.constant 0.000000e+00 : f32
    %188 = vector.shape_cast %3 : vector<8x1xi1> to vector<8x1xi1>
    %189 = vector.broadcast %188 : vector<8x1xi1> to vector<8x128xi1>
    %190 = vector.broadcast %cst_60 : f32 to vector<8x128xf32>
    %191 = arith.select %189, %187, %190 : vector<8x128xi1>, vector<8x128xf32>
    %c7_i32_61 = arith.constant 7 : i32
    %192 = tpu.dynamic_rotate %186 by %c7_i32_61 dim 0 : vector<8x128xf32>, i32 -> vector<8x128xf32>
    %cst_62 = arith.constant 0.000000e+00 : f32
    %193 = vector.shape_cast %5 : vector<8x1xi1> to vector<8x1xi1>
    %194 = vector.broadcast %193 : vector<8x1xi1> to vector<8x128xi1>
    %195 = vector.broadcast %cst_62 : f32 to vector<8x128xf32>
    %196 = arith.select %194, %192, %195 : vector<8x128xi1>, vector<8x128xf32>
    %197 = arith.addf %191, %185 : vector<8x128xf32>
    %198 = arith.addf %197, %196 : vector<8x128xf32>
    %199 = vector.broadcast %182 : vector<1x128xf32> to vector<8x128xf32>
    %200 = arith.addf %198, %199 : vector<8x128xf32>
    %cst_63 = arith.constant 5.000000e-01 : f32
    %201 = vector.broadcast %cst_63 : f32 to vector<8x128xf32>
    %202 = arith.mulf %201, %200 : vector<8x128xf32>
    %cst_64 = arith.constant 4.471500e-02 : f32
    %203 = vector.broadcast %cst_64 : f32 to vector<8x128xf32>
    %204 = arith.mulf %203, %200 : vector<8x128xf32>
    %205 = arith.mulf %204, %200 : vector<8x128xf32>
    %206 = arith.mulf %205, %200 : vector<8x128xf32>
    %207 = arith.addf %200, %206 : vector<8x128xf32>
    %cst_65 = arith.constant 0.797884583 : f32
    %208 = vector.broadcast %cst_65 : f32 to vector<8x128xf32>
    %209 = arith.mulf %208, %207 : vector<8x128xf32>
    %210 = math.tanh %209 : vector<8x128xf32>
    %cst_66 = arith.constant 1.000000e+00 : f32
    %211 = vector.broadcast %cst_66 : f32 to vector<8x128xf32>
    %212 = arith.addf %211, %210 : vector<8x128xf32>
    %213 = arith.mulf %202, %212 : vector<8x128xf32>
    %214 = arith.truncf %213 : vector<8x128xf32> to vector<8x128xbf16>
    %c0_67 = arith.constant 0 : index
    %c0_68 = arith.constant 0 : index
    %c0_69 = arith.constant 0 : index
    %215 = vector.load %arg12[%c0_67, %c0_68, %c0_69] : memref<2x128x384xbf16, #tpu.memory_space<vmem>>, vector<1x128x384xbf16>
    %216 = vector.shape_cast %215 : vector<1x128x384xbf16> to vector<128x384xbf16>
    %c0_70 = arith.constant 0 : index
    %c0_71 = arith.constant 0 : index
    %217 = vector.load %arg13[%c0_70, %c0_71] : memref<2x128xf32, #tpu.memory_space<vmem>>, vector<1x128xf32>
    %cst_72 = arith.constant dense<0.000000e+00> : vector<8x384xf32>
    %218 = tpu.matmul %214, %216, %cst_72 {dimension_numbers = #tpu.dot_dimension_numbers<[1], [0], [0], [1], [0, 0, 1, 1], [], []>} : vector<8x128xbf16>, vector<128x384xbf16>, vector<8x384xf32> -> vector<8x384xf32>
    %219 = vector.extract_strided_slice %218 {offsets = [0, 0], sizes = [8, 128], strides = [1, 1]} : vector<8x384xf32> to vector<8x128xf32>
    %220 = vector.extract_strided_slice %218 {offsets = [0, 128], sizes = [8, 128], strides = [1, 1]} : vector<8x384xf32> to vector<8x128xf32>
    %221 = vector.extract_strided_slice %218 {offsets = [0, 256], sizes = [8, 128], strides = [1, 1]} : vector<8x384xf32> to vector<8x128xf32>
    %c1_i32_73 = arith.constant 1 : i32
    %222 = tpu.dynamic_rotate %219 by %c1_i32_73 dim 0 : vector<8x128xf32>, i32 -> vector<8x128xf32>
    %cst_74 = arith.constant 0.000000e+00 : f32
    %223 = vector.shape_cast %3 : vector<8x1xi1> to vector<8x1xi1>
    %224 = vector.broadcast %223 : vector<8x1xi1> to vector<8x128xi1>
    %225 = vector.broadcast %cst_74 : f32 to vector<8x128xf32>
    %226 = arith.select %224, %222, %225 : vector<8x128xi1>, vector<8x128xf32>
    %c7_i32_75 = arith.constant 7 : i32
    %227 = tpu.dynamic_rotate %221 by %c7_i32_75 dim 0 : vector<8x128xf32>, i32 -> vector<8x128xf32>
    %cst_76 = arith.constant 0.000000e+00 : f32
    %228 = vector.shape_cast %5 : vector<8x1xi1> to vector<8x1xi1>
    %229 = vector.broadcast %228 : vector<8x1xi1> to vector<8x128xi1>
    %230 = vector.broadcast %cst_76 : f32 to vector<8x128xf32>
    %231 = arith.select %229, %227, %230 : vector<8x128xi1>, vector<8x128xf32>
    %232 = arith.addf %226, %220 : vector<8x128xf32>
    %233 = arith.addf %232, %231 : vector<8x128xf32>
    %234 = vector.broadcast %217 : vector<1x128xf32> to vector<8x128xf32>
    %235 = arith.addf %233, %234 : vector<8x128xf32>
    %cst_77 = arith.constant 5.000000e-01 : f32
    %236 = vector.broadcast %cst_77 : f32 to vector<8x128xf32>
    %237 = arith.mulf %236, %235 : vector<8x128xf32>
    %cst_78 = arith.constant 4.471500e-02 : f32
    %238 = vector.broadcast %cst_78 : f32 to vector<8x128xf32>
    %239 = arith.mulf %238, %235 : vector<8x128xf32>
    %240 = arith.mulf %239, %235 : vector<8x128xf32>
    %241 = arith.mulf %240, %235 : vector<8x128xf32>
    %242 = arith.addf %235, %241 : vector<8x128xf32>
    %cst_79 = arith.constant 0.797884583 : f32
    %243 = vector.broadcast %cst_79 : f32 to vector<8x128xf32>
    %244 = arith.mulf %243, %242 : vector<8x128xf32>
    %245 = math.tanh %244 : vector<8x128xf32>
    %cst_80 = arith.constant 1.000000e+00 : f32
    %246 = vector.broadcast %cst_80 : f32 to vector<8x128xf32>
    %247 = arith.addf %246, %245 : vector<8x128xf32>
    %248 = arith.mulf %237, %247 : vector<8x128xf32>
    %249 = arith.addf %248, %154 : vector<8x128xf32>
    %c1 = arith.constant 1 : index
    %c0_81 = arith.constant 0 : index
    %250 = vector.load %arg2[%c1, %c0_81] : memref<2x128xf32, #tpu.memory_space<vmem>>, vector<1x128xf32>
    %c1_82 = arith.constant 1 : index
    %c0_83 = arith.constant 0 : index
    %251 = vector.load %arg3[%c1_82, %c0_83] : memref<2x128xf32, #tpu.memory_space<vmem>>, vector<1x128xf32>
    %cst_84 = arith.constant dense<0.000000e+00> : vector<8xf32>
    %252 = vector.multi_reduction <add>, %0, %cst_84 [1] : vector<8x128xf32> to vector<8xf32>
    %253 = vector.shape_cast %252 : vector<8xf32> to vector<8x1xf32>
    %cst_85 = arith.constant 3.125000e-02 : f32
    %254 = vector.broadcast %cst_85 : f32 to vector<8x1xf32>
    %255 = arith.mulf %253, %254 : vector<8x1xf32>
    %256 = arith.mulf %0, %0 : vector<8x128xf32>
    %cst_86 = arith.constant dense<0.000000e+00> : vector<8xf32>
    %257 = vector.multi_reduction <add>, %256, %cst_86 [1] : vector<8x128xf32> to vector<8xf32>
    %258 = vector.shape_cast %257 : vector<8xf32> to vector<8x1xf32>
    %cst_87 = arith.constant 3.125000e-02 : f32
    %259 = vector.broadcast %cst_87 : f32 to vector<8x1xf32>
    %260 = arith.mulf %258, %259 : vector<8x1xf32>
    %261 = arith.mulf %255, %255 : vector<8x1xf32>
    %262 = arith.subf %260, %261 : vector<8x1xf32>
    %263 = vector.broadcast %255 : vector<8x1xf32> to vector<8x128xf32>
    %264 = arith.subf %0, %263 : vector<8x128xf32>
    %cst_88 = arith.constant 9.99999974E-6 : f32
    %265 = vector.broadcast %cst_88 : f32 to vector<8x1xf32>
    %266 = arith.addf %262, %265 : vector<8x1xf32>
    %267 = math.rsqrt %266 : vector<8x1xf32>
    %268 = vector.broadcast %267 : vector<8x1xf32> to vector<8x128xf32>
    %269 = arith.mulf %264, %268 : vector<8x128xf32>
    %270 = vector.broadcast %250 : vector<1x128xf32> to vector<8x128xf32>
    %271 = arith.mulf %269, %270 : vector<8x128xf32>
    %272 = vector.broadcast %251 : vector<1x128xf32> to vector<8x128xf32>
    %273 = arith.addf %271, %272 : vector<8x128xf32>
    %274 = arith.truncf %273 : vector<8x128xf32> to vector<8x128xbf16>
    %c1_89 = arith.constant 1 : index
    %c0_90 = arith.constant 0 : index
    %c0_91 = arith.constant 0 : index
    %275 = vector.load %arg4[%c1_89, %c0_90, %c0_91] : memref<2x128x1536xbf16, #tpu.memory_space<vmem>>, vector<1x128x1536xbf16>
    %276 = vector.shape_cast %275 : vector<1x128x1536xbf16> to vector<128x1536xbf16>
    %cst_92 = arith.constant dense<0.000000e+00> : vector<8x1536xf32>
    %277 = tpu.matmul %274, %276, %cst_92 {dimension_numbers = #tpu.dot_dimension_numbers<[1], [0], [0], [1], [0, 0, 1, 1], [], []>} : vector<8x128xbf16>, vector<128x1536xbf16>, vector<8x1536xf32> -> vector<8x1536xf32>
    %c1_93 = arith.constant 1 : index
    %c0_94 = arith.constant 0 : index
    %c0_95 = arith.constant 0 : index
    %278 = vector.load %arg5[%c1_93, %c0_94, %c0_95] : memref<2x1x1536xf32, #tpu.memory_space<vmem>>, vector<1x1x1536xf32>
    %279 = vector.shape_cast %278 : vector<1x1x1536xf32> to vector<1x1536xf32>
    %280 = vector.broadcast %279 : vector<1x1536xf32> to vector<8x1536xf32>
    %281 = arith.addf %277, %280 : vector<8x1536xf32>
    %282 = arith.truncf %281 : vector<8x1536xf32> to vector<8x1536xbf16>
    %283 = arith.cmpi sgt, %7, %6 : vector<8x8xi32>
    %c1_96 = arith.constant 1 : index
    %c0_97 = arith.constant 0 : index
    %c0_98 = arith.constant 0 : index
    %284 = vector.load %arg6[%c1_96, %c0_97, %c0_98] : memref<2x512x128xbf16, #tpu.memory_space<vmem>>, vector<1x512x128xbf16>
    %285 = vector.shape_cast %284 : vector<1x512x128xbf16> to vector<512x128xbf16>
    %286 = vector.extract_strided_slice %282 {offsets = [0, 0], sizes = [8, 128], strides = [1, 1]} : vector<8x1536xbf16> to vector<8x128xbf16>
    %287 = vector.shape_cast %286 : vector<8x128xbf16> to vector<1x8x128xbf16>
    %288 = vector.extract_strided_slice %282 {offsets = [0, 512], sizes = [8, 128], strides = [1, 1]} : vector<8x1536xbf16> to vector<8x128xbf16>
    %289 = vector.shape_cast %288 : vector<8x128xbf16> to vector<1x8x128xbf16>
    %290 = vector.extract_strided_slice %282 {offsets = [0, 1024], sizes = [8, 128], strides = [1, 1]} : vector<8x1536xbf16> to vector<8x128xbf16>
    %291 = vector.shape_cast %290 : vector<8x128xbf16> to vector<1x8x128xbf16>
    %cst_99 = arith.constant dense<0.000000e+00> : vector<1x8x8xf32>
    %292 = tpu.matmul %287, %289, %cst_99 {dimension_numbers = #tpu.dot_dimension_numbers<[2], [2], [1], [1], [0, 0, 0, 1, 1, 1], [0], [0]>} : vector<1x8x128xbf16>, vector<1x8x128xbf16>, vector<1x8x8xf32> -> vector<1x8x8xf32>
    %cst_100 = arith.constant -1.000000e+30 : f32
    %293 = vector.shape_cast %283 : vector<8x8xi1> to vector<1x8x8xi1>
    %294 = vector.broadcast %cst_100 : f32 to vector<1x8x8xf32>
    %295 = arith.select %293, %294, %292 : vector<1x8x8xi1>, vector<1x8x8xf32>
    %cst_101 = arith.constant dense<0xFF800000> : vector<1x8xf32>
    %296 = vector.multi_reduction <maximumf>, %295, %cst_101 [2] : vector<1x8x8xf32> to vector<1x8xf32>
    %297 = vector.shape_cast %296 : vector<1x8xf32> to vector<1x8x1xf32>
    %298 = vector.broadcast %297 : vector<1x8x1xf32> to vector<1x8x8xf32>
    %299 = arith.subf %295, %298 : vector<1x8x8xf32>
    %300 = math.exp %299 : vector<1x8x8xf32>
    %cst_102 = arith.constant dense<0.000000e+00> : vector<1x8xf32>
    %301 = vector.multi_reduction <add>, %300, %cst_102 [2] : vector<1x8x8xf32> to vector<1x8xf32>
    %302 = vector.shape_cast %301 : vector<1x8xf32> to vector<1x8x1xf32>
    %303 = tpu.reciprocal %302 {approx = true} : vector<1x8x1xf32> -> vector<1x8x1xf32>
    %304 = vector.broadcast %303 : vector<1x8x1xf32> to vector<1x8x8xf32>
    %305 = arith.mulf %300, %304 : vector<1x8x8xf32>
    %306 = arith.truncf %305 : vector<1x8x8xf32> to vector<1x8x8xbf16>
    %cst_103 = arith.constant dense<0.000000e+00> : vector<1x8x128xf32>
    %307 = tpu.matmul %306, %291, %cst_103 {dimension_numbers = #tpu.dot_dimension_numbers<[2], [1], [1], [2], [0, 0, 0, 1, 1, 2], [0], [0]>} : vector<1x8x8xbf16>, vector<1x8x128xbf16>, vector<1x8x128xf32> -> vector<1x8x128xf32>
    %308 = vector.shape_cast %307 : vector<1x8x128xf32> to vector<8x128xf32>
    %309 = arith.truncf %308 : vector<8x128xf32> to vector<8x128xbf16>
    %310 = vector.extract_strided_slice %285 {offsets = [0, 0], sizes = [128, 128], strides = [1, 1]} : vector<512x128xbf16> to vector<128x128xbf16>
    %cst_104 = arith.constant dense<0.000000e+00> : vector<8x128xf32>
    %311 = tpu.matmul %309, %310, %cst_104 {dimension_numbers = #tpu.dot_dimension_numbers<[1], [0], [0], [1], [0, 0, 1, 1], [], []>} : vector<8x128xbf16>, vector<128x128xbf16>, vector<8x128xf32> -> vector<8x128xf32>
    %312 = vector.extract_strided_slice %282 {offsets = [0, 128], sizes = [8, 128], strides = [1, 1]} : vector<8x1536xbf16> to vector<8x128xbf16>
    %313 = vector.shape_cast %312 : vector<8x128xbf16> to vector<1x8x128xbf16>
    %314 = vector.extract_strided_slice %282 {offsets = [0, 640], sizes = [8, 128], strides = [1, 1]} : vector<8x1536xbf16> to vector<8x128xbf16>
    %315 = vector.shape_cast %314 : vector<8x128xbf16> to vector<1x8x128xbf16>
    %316 = vector.extract_strided_slice %282 {offsets = [0, 1152], sizes = [8, 128], strides = [1, 1]} : vector<8x1536xbf16> to vector<8x128xbf16>
    %317 = vector.shape_cast %316 : vector<8x128xbf16> to vector<1x8x128xbf16>
    %cst_105 = arith.constant dense<0.000000e+00> : vector<1x8x8xf32>
    %318 = tpu.matmul %313, %315, %cst_105 {dimension_numbers = #tpu.dot_dimension_numbers<[2], [2], [1], [1], [0, 0, 0, 1, 1, 1], [0], [0]>} : vector<1x8x128xbf16>, vector<1x8x128xbf16>, vector<1x8x8xf32> -> vector<1x8x8xf32>
    %cst_106 = arith.constant -1.000000e+30 : f32
    %319 = vector.shape_cast %283 : vector<8x8xi1> to vector<1x8x8xi1>
    %320 = vector.broadcast %cst_106 : f32 to vector<1x8x8xf32>
    %321 = arith.select %319, %320, %318 : vector<1x8x8xi1>, vector<1x8x8xf32>
    %cst_107 = arith.constant dense<0xFF800000> : vector<1x8xf32>
    %322 = vector.multi_reduction <maximumf>, %321, %cst_107 [2] : vector<1x8x8xf32> to vector<1x8xf32>
    %323 = vector.shape_cast %322 : vector<1x8xf32> to vector<1x8x1xf32>
    %324 = vector.broadcast %323 : vector<1x8x1xf32> to vector<1x8x8xf32>
    %325 = arith.subf %321, %324 : vector<1x8x8xf32>
    %326 = math.exp %325 : vector<1x8x8xf32>
    %cst_108 = arith.constant dense<0.000000e+00> : vector<1x8xf32>
    %327 = vector.multi_reduction <add>, %326, %cst_108 [2] : vector<1x8x8xf32> to vector<1x8xf32>
    %328 = vector.shape_cast %327 : vector<1x8xf32> to vector<1x8x1xf32>
    %329 = tpu.reciprocal %328 {approx = true} : vector<1x8x1xf32> -> vector<1x8x1xf32>
    %330 = vector.broadcast %329 : vector<1x8x1xf32> to vector<1x8x8xf32>
    %331 = arith.mulf %326, %330 : vector<1x8x8xf32>
    %332 = arith.truncf %331 : vector<1x8x8xf32> to vector<1x8x8xbf16>
    %cst_109 = arith.constant dense<0.000000e+00> : vector<1x8x128xf32>
    %333 = tpu.matmul %332, %317, %cst_109 {dimension_numbers = #tpu.dot_dimension_numbers<[2], [1], [1], [2], [0, 0, 0, 1, 1, 2], [0], [0]>} : vector<1x8x8xbf16>, vector<1x8x128xbf16>, vector<1x8x128xf32> -> vector<1x8x128xf32>
    %334 = vector.shape_cast %333 : vector<1x8x128xf32> to vector<8x128xf32>
    %335 = arith.truncf %334 : vector<8x128xf32> to vector<8x128xbf16>
    %336 = vector.extract_strided_slice %285 {offsets = [128, 0], sizes = [128, 128], strides = [1, 1]} : vector<512x128xbf16> to vector<128x128xbf16>
    %cst_110 = arith.constant dense<0.000000e+00> : vector<8x128xf32>
    %337 = tpu.matmul %335, %336, %cst_110 {dimension_numbers = #tpu.dot_dimension_numbers<[1], [0], [0], [1], [0, 0, 1, 1], [], []>} : vector<8x128xbf16>, vector<128x128xbf16>, vector<8x128xf32> -> vector<8x128xf32>
    %338 = arith.addf %311, %337 : vector<8x128xf32>
    %339 = vector.extract_strided_slice %282 {offsets = [0, 256], sizes = [8, 128], strides = [1, 1]} : vector<8x1536xbf16> to vector<8x128xbf16>
    %340 = vector.shape_cast %339 : vector<8x128xbf16> to vector<1x8x128xbf16>
    %341 = vector.extract_strided_slice %282 {offsets = [0, 768], sizes = [8, 128], strides = [1, 1]} : vector<8x1536xbf16> to vector<8x128xbf16>
    %342 = vector.shape_cast %341 : vector<8x128xbf16> to vector<1x8x128xbf16>
    %343 = vector.extract_strided_slice %282 {offsets = [0, 1280], sizes = [8, 128], strides = [1, 1]} : vector<8x1536xbf16> to vector<8x128xbf16>
    %344 = vector.shape_cast %343 : vector<8x128xbf16> to vector<1x8x128xbf16>
    %cst_111 = arith.constant dense<0.000000e+00> : vector<1x8x8xf32>
    %345 = tpu.matmul %340, %342, %cst_111 {dimension_numbers = #tpu.dot_dimension_numbers<[2], [2], [1], [1], [0, 0, 0, 1, 1, 1], [0], [0]>} : vector<1x8x128xbf16>, vector<1x8x128xbf16>, vector<1x8x8xf32> -> vector<1x8x8xf32>
    %cst_112 = arith.constant -1.000000e+30 : f32
    %346 = vector.shape_cast %283 : vector<8x8xi1> to vector<1x8x8xi1>
    %347 = vector.broadcast %cst_112 : f32 to vector<1x8x8xf32>
    %348 = arith.select %346, %347, %345 : vector<1x8x8xi1>, vector<1x8x8xf32>
    %cst_113 = arith.constant dense<0xFF800000> : vector<1x8xf32>
    %349 = vector.multi_reduction <maximumf>, %348, %cst_113 [2] : vector<1x8x8xf32> to vector<1x8xf32>
    %350 = vector.shape_cast %349 : vector<1x8xf32> to vector<1x8x1xf32>
    %351 = vector.broadcast %350 : vector<1x8x1xf32> to vector<1x8x8xf32>
    %352 = arith.subf %348, %351 : vector<1x8x8xf32>
    %353 = math.exp %352 : vector<1x8x8xf32>
    %cst_114 = arith.constant dense<0.000000e+00> : vector<1x8xf32>
    %354 = vector.multi_reduction <add>, %353, %cst_114 [2] : vector<1x8x8xf32> to vector<1x8xf32>
    %355 = vector.shape_cast %354 : vector<1x8xf32> to vector<1x8x1xf32>
    %356 = tpu.reciprocal %355 {approx = true} : vector<1x8x1xf32> -> vector<1x8x1xf32>
    %357 = vector.broadcast %356 : vector<1x8x1xf32> to vector<1x8x8xf32>
    %358 = arith.mulf %353, %357 : vector<1x8x8xf32>
    %359 = arith.truncf %358 : vector<1x8x8xf32> to vector<1x8x8xbf16>
    %cst_115 = arith.constant dense<0.000000e+00> : vector<1x8x128xf32>
    %360 = tpu.matmul %359, %344, %cst_115 {dimension_numbers = #tpu.dot_dimension_numbers<[2], [1], [1], [2], [0, 0, 0, 1, 1, 2], [0], [0]>} : vector<1x8x8xbf16>, vector<1x8x128xbf16>, vector<1x8x128xf32> -> vector<1x8x128xf32>
    %361 = vector.shape_cast %360 : vector<1x8x128xf32> to vector<8x128xf32>
    %362 = arith.truncf %361 : vector<8x128xf32> to vector<8x128xbf16>
    %363 = vector.extract_strided_slice %285 {offsets = [256, 0], sizes = [128, 128], strides = [1, 1]} : vector<512x128xbf16> to vector<128x128xbf16>
    %cst_116 = arith.constant dense<0.000000e+00> : vector<8x128xf32>
    %364 = tpu.matmul %362, %363, %cst_116 {dimension_numbers = #tpu.dot_dimension_numbers<[1], [0], [0], [1], [0, 0, 1, 1], [], []>} : vector<8x128xbf16>, vector<128x128xbf16>, vector<8x128xf32> -> vector<8x128xf32>
    %365 = arith.addf %338, %364 : vector<8x128xf32>
    %366 = vector.extract_strided_slice %282 {offsets = [0, 384], sizes = [8, 128], strides = [1, 1]} : vector<8x1536xbf16> to vector<8x128xbf16>
    %367 = vector.shape_cast %366 : vector<8x128xbf16> to vector<1x8x128xbf16>
    %368 = vector.extract_strided_slice %282 {offsets = [0, 896], sizes = [8, 128], strides = [1, 1]} : vector<8x1536xbf16> to vector<8x128xbf16>
    %369 = vector.shape_cast %368 : vector<8x128xbf16> to vector<1x8x128xbf16>
    %370 = vector.extract_strided_slice %282 {offsets = [0, 1408], sizes = [8, 128], strides = [1, 1]} : vector<8x1536xbf16> to vector<8x128xbf16>
    %371 = vector.shape_cast %370 : vector<8x128xbf16> to vector<1x8x128xbf16>
    %cst_117 = arith.constant dense<0.000000e+00> : vector<1x8x8xf32>
    %372 = tpu.matmul %367, %369, %cst_117 {dimension_numbers = #tpu.dot_dimension_numbers<[2], [2], [1], [1], [0, 0, 0, 1, 1, 1], [0], [0]>} : vector<1x8x128xbf16>, vector<1x8x128xbf16>, vector<1x8x8xf32> -> vector<1x8x8xf32>
    %cst_118 = arith.constant -1.000000e+30 : f32
    %373 = vector.shape_cast %283 : vector<8x8xi1> to vector<1x8x8xi1>
    %374 = vector.broadcast %cst_118 : f32 to vector<1x8x8xf32>
    %375 = arith.select %373, %374, %372 : vector<1x8x8xi1>, vector<1x8x8xf32>
    %cst_119 = arith.constant dense<0xFF800000> : vector<1x8xf32>
    %376 = vector.multi_reduction <maximumf>, %375, %cst_119 [2] : vector<1x8x8xf32> to vector<1x8xf32>
    %377 = vector.shape_cast %376 : vector<1x8xf32> to vector<1x8x1xf32>
    %378 = vector.broadcast %377 : vector<1x8x1xf32> to vector<1x8x8xf32>
    %379 = arith.subf %375, %378 : vector<1x8x8xf32>
    %380 = math.exp %379 : vector<1x8x8xf32>
    %cst_120 = arith.constant dense<0.000000e+00> : vector<1x8xf32>
    %381 = vector.multi_reduction <add>, %380, %cst_120 [2] : vector<1x8x8xf32> to vector<1x8xf32>
    %382 = vector.shape_cast %381 : vector<1x8xf32> to vector<1x8x1xf32>
    %383 = tpu.reciprocal %382 {approx = true} : vector<1x8x1xf32> -> vector<1x8x1xf32>
    %384 = vector.broadcast %383 : vector<1x8x1xf32> to vector<1x8x8xf32>
    %385 = arith.mulf %380, %384 : vector<1x8x8xf32>
    %386 = arith.truncf %385 : vector<1x8x8xf32> to vector<1x8x8xbf16>
    %cst_121 = arith.constant dense<0.000000e+00> : vector<1x8x128xf32>
    %387 = tpu.matmul %386, %371, %cst_121 {dimension_numbers = #tpu.dot_dimension_numbers<[2], [1], [1], [2], [0, 0, 0, 1, 1, 2], [0], [0]>} : vector<1x8x8xbf16>, vector<1x8x128xbf16>, vector<1x8x128xf32> -> vector<1x8x128xf32>
    %388 = vector.shape_cast %387 : vector<1x8x128xf32> to vector<8x128xf32>
    %389 = arith.truncf %388 : vector<8x128xf32> to vector<8x128xbf16>
    %390 = vector.extract_strided_slice %285 {offsets = [384, 0], sizes = [128, 128], strides = [1, 1]} : vector<512x128xbf16> to vector<128x128xbf16>
    %cst_122 = arith.constant dense<0.000000e+00> : vector<8x128xf32>
    %391 = tpu.matmul %389, %390, %cst_122 {dimension_numbers = #tpu.dot_dimension_numbers<[1], [0], [0], [1], [0, 0, 1, 1], [], []>} : vector<8x128xbf16>, vector<128x128xbf16>, vector<8x128xf32> -> vector<8x128xf32>
    %392 = arith.addf %365, %391 : vector<8x128xf32>
    %c1_123 = arith.constant 1 : index
    %c0_124 = arith.constant 0 : index
    %393 = vector.load %arg7[%c1_123, %c0_124] : memref<2x128xf32, #tpu.memory_space<vmem>>, vector<1x128xf32>
    %394 = vector.broadcast %393 : vector<1x128xf32> to vector<8x128xf32>
    %395 = arith.addf %392, %394 : vector<8x128xf32>
    %396 = arith.addf %395, %0 : vector<8x128xf32>
    %c1_125 = arith.constant 1 : index
    %c0_126 = arith.constant 0 : index
    %397 = vector.load %arg8[%c1_125, %c0_126] : memref<2x128xf32, #tpu.memory_space<vmem>>, vector<1x128xf32>
    %c1_127 = arith.constant 1 : index
    %c0_128 = arith.constant 0 : index
    %398 = vector.load %arg9[%c1_127, %c0_128] : memref<2x128xf32, #tpu.memory_space<vmem>>, vector<1x128xf32>
    %cst_129 = arith.constant dense<0.000000e+00> : vector<8xf32>
    %399 = vector.multi_reduction <add>, %396, %cst_129 [1] : vector<8x128xf32> to vector<8xf32>
    %400 = vector.shape_cast %399 : vector<8xf32> to vector<8x1xf32>
    %cst_130 = arith.constant 3.125000e-02 : f32
    %401 = vector.broadcast %cst_130 : f32 to vector<8x1xf32>
    %402 = arith.mulf %400, %401 : vector<8x1xf32>
    %403 = arith.mulf %396, %396 : vector<8x128xf32>
    %cst_131 = arith.constant dense<0.000000e+00> : vector<8xf32>
    %404 = vector.multi_reduction <add>, %403, %cst_131 [1] : vector<8x128xf32> to vector<8xf32>
    %405 = vector.shape_cast %404 : vector<8xf32> to vector<8x1xf32>
    %cst_132 = arith.constant 3.125000e-02 : f32
    %406 = vector.broadcast %cst_132 : f32 to vector<8x1xf32>
    %407 = arith.mulf %405, %406 : vector<8x1xf32>
    %408 = arith.mulf %402, %402 : vector<8x1xf32>
    %409 = arith.subf %407, %408 : vector<8x1xf32>
    %410 = vector.broadcast %402 : vector<8x1xf32> to vector<8x128xf32>
    %411 = arith.subf %396, %410 : vector<8x128xf32>
    %cst_133 = arith.constant 9.99999974E-6 : f32
    %412 = vector.broadcast %cst_133 : f32 to vector<8x1xf32>
    %413 = arith.addf %409, %412 : vector<8x1xf32>
    %414 = math.rsqrt %413 : vector<8x1xf32>
    %415 = vector.broadcast %414 : vector<8x1xf32> to vector<8x128xf32>
    %416 = arith.mulf %411, %415 : vector<8x128xf32>
    %417 = vector.broadcast %397 : vector<1x128xf32> to vector<8x128xf32>
    %418 = arith.mulf %416, %417 : vector<8x128xf32>
    %419 = vector.broadcast %398 : vector<1x128xf32> to vector<8x128xf32>
    %420 = arith.addf %418, %419 : vector<8x128xf32>
    %421 = arith.truncf %420 : vector<8x128xf32> to vector<8x128xbf16>
    %c1_134 = arith.constant 1 : index
    %c0_135 = arith.constant 0 : index
    %c0_136 = arith.constant 0 : index
    %422 = vector.load %arg10[%c1_134, %c0_135, %c0_136] : memref<2x128x384xbf16, #tpu.memory_space<vmem>>, vector<1x128x384xbf16>
    %423 = vector.shape_cast %422 : vector<1x128x384xbf16> to vector<128x384xbf16>
    %c1_137 = arith.constant 1 : index
    %c0_138 = arith.constant 0 : index
    %424 = vector.load %arg11[%c1_137, %c0_138] : memref<2x128xf32, #tpu.memory_space<vmem>>, vector<1x128xf32>
    %cst_139 = arith.constant dense<0.000000e+00> : vector<8x384xf32>
    %425 = tpu.matmul %421, %423, %cst_139 {dimension_numbers = #tpu.dot_dimension_numbers<[1], [0], [0], [1], [0, 0, 1, 1], [], []>} : vector<8x128xbf16>, vector<128x384xbf16>, vector<8x384xf32> -> vector<8x384xf32>
    %426 = vector.extract_strided_slice %425 {offsets = [0, 0], sizes = [8, 128], strides = [1, 1]} : vector<8x384xf32> to vector<8x128xf32>
    %427 = vector.extract_strided_slice %425 {offsets = [0, 128], sizes = [8, 128], strides = [1, 1]} : vector<8x384xf32> to vector<8x128xf32>
    %428 = vector.extract_strided_slice %425 {offsets = [0, 256], sizes = [8, 128], strides = [1, 1]} : vector<8x384xf32> to vector<8x128xf32>
    %c1_i32_140 = arith.constant 1 : i32
    %429 = tpu.dynamic_rotate %426 by %c1_i32_140 dim 0 : vector<8x128xf32>, i32 -> vector<8x128xf32>
    %cst_141 = arith.constant 0.000000e+00 : f32
    %430 = vector.shape_cast %3 : vector<8x1xi1> to vector<8x1xi1>
    %431 = vector.broadcast %430 : vector<8x1xi1> to vector<8x128xi1>
    %432 = vector.broadcast %cst_141 : f32 to vector<8x128xf32>
    %433 = arith.select %431, %429, %432 : vector<8x128xi1>, vector<8x128xf32>
    %c7_i32_142 = arith.constant 7 : i32
    %434 = tpu.dynamic_rotate %428 by %c7_i32_142 dim 0 : vector<8x128xf32>, i32 -> vector<8x128xf32>
    %cst_143 = arith.constant 0.000000e+00 : f32
    %435 = vector.shape_cast %5 : vector<8x1xi1> to vector<8x1xi1>
    %436 = vector.broadcast %435 : vector<8x1xi1> to vector<8x128xi1>
    %437 = vector.broadcast %cst_143 : f32 to vector<8x128xf32>
    %438 = arith.select %436, %434, %437 : vector<8x128xi1>, vector<8x128xf32>
    %439 = arith.addf %433, %427 : vector<8x128xf32>
    %440 = arith.addf %439, %438 : vector<8x128xf32>
    %441 = vector.broadcast %424 : vector<1x128xf32> to vector<8x128xf32>
    %442 = arith.addf %440, %441 : vector<8x128xf32>
    %cst_144 = arith.constant 5.000000e-01 : f32
    %443 = vector.broadcast %cst_144 : f32 to vector<8x128xf32>
    %444 = arith.mulf %443, %442 : vector<8x128xf32>
    %cst_145 = arith.constant 4.471500e-02 : f32
    %445 = vector.broadcast %cst_145 : f32 to vector<8x128xf32>
    %446 = arith.mulf %445, %442 : vector<8x128xf32>
    %447 = arith.mulf %446, %442 : vector<8x128xf32>
    %448 = arith.mulf %447, %442 : vector<8x128xf32>
    %449 = arith.addf %442, %448 : vector<8x128xf32>
    %cst_146 = arith.constant 0.797884583 : f32
    %450 = vector.broadcast %cst_146 : f32 to vector<8x128xf32>
    %451 = arith.mulf %450, %449 : vector<8x128xf32>
    %452 = math.tanh %451 : vector<8x128xf32>
    %cst_147 = arith.constant 1.000000e+00 : f32
    %453 = vector.broadcast %cst_147 : f32 to vector<8x128xf32>
    %454 = arith.addf %453, %452 : vector<8x128xf32>
    %455 = arith.mulf %444, %454 : vector<8x128xf32>
    %456 = arith.truncf %455 : vector<8x128xf32> to vector<8x128xbf16>
    %c1_148 = arith.constant 1 : index
    %c0_149 = arith.constant 0 : index
    %c0_150 = arith.constant 0 : index
    %457 = vector.load %arg12[%c1_148, %c0_149, %c0_150] : memref<2x128x384xbf16, #tpu.memory_space<vmem>>, vector<1x128x384xbf16>
    %458 = vector.shape_cast %457 : vector<1x128x384xbf16> to vector<128x384xbf16>
    %c1_151 = arith.constant 1 : index
    %c0_152 = arith.constant 0 : index
    %459 = vector.load %arg13[%c1_151, %c0_152] : memref<2x128xf32, #tpu.memory_space<vmem>>, vector<1x128xf32>
    %cst_153 = arith.constant dense<0.000000e+00> : vector<8x384xf32>
    %460 = tpu.matmul %456, %458, %cst_153 {dimension_numbers = #tpu.dot_dimension_numbers<[1], [0], [0], [1], [0, 0, 1, 1], [], []>} : vector<8x128xbf16>, vector<128x384xbf16>, vector<8x384xf32> -> vector<8x384xf32>
    %461 = vector.extract_strided_slice %460 {offsets = [0, 0], sizes = [8, 128], strides = [1, 1]} : vector<8x384xf32> to vector<8x128xf32>
    %462 = vector.extract_strided_slice %460 {offsets = [0, 128], sizes = [8, 128], strides = [1, 1]} : vector<8x384xf32> to vector<8x128xf32>
    %463 = vector.extract_strided_slice %460 {offsets = [0, 256], sizes = [8, 128], strides = [1, 1]} : vector<8x384xf32> to vector<8x128xf32>
    %c1_i32_154 = arith.constant 1 : i32
    %464 = tpu.dynamic_rotate %461 by %c1_i32_154 dim 0 : vector<8x128xf32>, i32 -> vector<8x128xf32>
    %cst_155 = arith.constant 0.000000e+00 : f32
    %465 = vector.shape_cast %3 : vector<8x1xi1> to vector<8x1xi1>
    %466 = vector.broadcast %465 : vector<8x1xi1> to vector<8x128xi1>
    %467 = vector.broadcast %cst_155 : f32 to vector<8x128xf32>
    %468 = arith.select %466, %464, %467 : vector<8x128xi1>, vector<8x128xf32>
    %c7_i32_156 = arith.constant 7 : i32
    %469 = tpu.dynamic_rotate %463 by %c7_i32_156 dim 0 : vector<8x128xf32>, i32 -> vector<8x128xf32>
    %cst_157 = arith.constant 0.000000e+00 : f32
    %470 = vector.shape_cast %5 : vector<8x1xi1> to vector<8x1xi1>
    %471 = vector.broadcast %470 : vector<8x1xi1> to vector<8x128xi1>
    %472 = vector.broadcast %cst_157 : f32 to vector<8x128xf32>
    %473 = arith.select %471, %469, %472 : vector<8x128xi1>, vector<8x128xf32>
    %474 = arith.addf %468, %462 : vector<8x128xf32>
    %475 = arith.addf %474, %473 : vector<8x128xf32>
    %476 = vector.broadcast %459 : vector<1x128xf32> to vector<8x128xf32>
    %477 = arith.addf %475, %476 : vector<8x128xf32>
    %cst_158 = arith.constant 5.000000e-01 : f32
    %478 = vector.broadcast %cst_158 : f32 to vector<8x128xf32>
    %479 = arith.mulf %478, %477 : vector<8x128xf32>
    %cst_159 = arith.constant 4.471500e-02 : f32
    %480 = vector.broadcast %cst_159 : f32 to vector<8x128xf32>
    %481 = arith.mulf %480, %477 : vector<8x128xf32>
    %482 = arith.mulf %481, %477 : vector<8x128xf32>
    %483 = arith.mulf %482, %477 : vector<8x128xf32>
    %484 = arith.addf %477, %483 : vector<8x128xf32>
    %cst_160 = arith.constant 0.797884583 : f32
    %485 = vector.broadcast %cst_160 : f32 to vector<8x128xf32>
    %486 = arith.mulf %485, %484 : vector<8x128xf32>
    %487 = math.tanh %486 : vector<8x128xf32>
    %cst_161 = arith.constant 1.000000e+00 : f32
    %488 = vector.broadcast %cst_161 : f32 to vector<8x128xf32>
    %489 = arith.addf %488, %487 : vector<8x128xf32>
    %490 = arith.mulf %479, %489 : vector<8x128xf32>
    %491 = arith.addf %490, %396 : vector<8x128xf32>
    %492 = arith.truncf %249 : vector<8x128xf32> to vector<8x128xbf16>
    %c0_162 = arith.constant 0 : index
    %c0_163 = arith.constant 0 : index
    %493 = vector.load %arg14[%c0_162, %c0_163] : memref<128x128xbf16, #tpu.memory_space<vmem>>, vector<128x128xbf16>
    %cst_164 = arith.constant dense<0.000000e+00> : vector<8x128xf32>
    %494 = tpu.matmul %492, %493, %cst_164 {dimension_numbers = #tpu.dot_dimension_numbers<[1], [0], [0], [1], [0, 0, 1, 1], [], []>} : vector<8x128xbf16>, vector<128x128xbf16>, vector<8x128xf32> -> vector<8x128xf32>
    %495 = arith.truncf %491 : vector<8x128xf32> to vector<8x128xbf16>
    %c0_165 = arith.constant 0 : index
    %c0_166 = arith.constant 0 : index
    %496 = vector.load %arg15[%c0_165, %c0_166] : memref<128x128xbf16, #tpu.memory_space<vmem>>, vector<128x128xbf16>
    %cst_167 = arith.constant dense<0.000000e+00> : vector<8x128xf32>
    %497 = tpu.matmul %495, %496, %cst_167 {dimension_numbers = #tpu.dot_dimension_numbers<[1], [0], [0], [1], [0, 0, 1, 1], [], []>} : vector<8x128xbf16>, vector<128x128xbf16>, vector<8x128xf32> -> vector<8x128xf32>
    %498 = arith.addf %494, %497 : vector<8x128xf32>
    %c0_168 = arith.constant 0 : index
    %c0_169 = arith.constant 0 : index
    %499 = vector.load %arg16[%c0_168, %c0_169] : memref<1x128xf32, #tpu.memory_space<vmem>>, vector<1x128xf32>
    %500 = vector.broadcast %499 : vector<1x128xf32> to vector<8x128xf32>
    %501 = arith.addf %498, %500 : vector<8x128xf32>
    %c0_170 = arith.constant 0 : index
    %c0_171 = arith.constant 0 : index
    %502 = vector.load %arg17[%c0_170, %c0_171] : memref<1x128xf32, #tpu.memory_space<vmem>>, vector<1x128xf32>
    %c0_172 = arith.constant 0 : index
    %c0_173 = arith.constant 0 : index
    %503 = vector.load %arg18[%c0_172, %c0_173] : memref<1x128xf32, #tpu.memory_space<vmem>>, vector<1x128xf32>
    %cst_174 = arith.constant dense<0.000000e+00> : vector<8xf32>
    %504 = vector.multi_reduction <add>, %501, %cst_174 [1] : vector<8x128xf32> to vector<8xf32>
    %505 = vector.shape_cast %504 : vector<8xf32> to vector<8x1xf32>
    %cst_175 = arith.constant 3.125000e-02 : f32
    %506 = vector.broadcast %cst_175 : f32 to vector<8x1xf32>
    %507 = arith.mulf %505, %506 : vector<8x1xf32>
    %508 = arith.mulf %501, %501 : vector<8x128xf32>
    %cst_176 = arith.constant dense<0.000000e+00> : vector<8xf32>
    %509 = vector.multi_reduction <add>, %508, %cst_176 [1] : vector<8x128xf32> to vector<8xf32>
    %510 = vector.shape_cast %509 : vector<8xf32> to vector<8x1xf32>
    %cst_177 = arith.constant 3.125000e-02 : f32
    %511 = vector.broadcast %cst_177 : f32 to vector<8x1xf32>
    %512 = arith.mulf %510, %511 : vector<8x1xf32>
    %513 = arith.mulf %507, %507 : vector<8x1xf32>
    %514 = arith.subf %512, %513 : vector<8x1xf32>
    %515 = vector.broadcast %507 : vector<8x1xf32> to vector<8x128xf32>
    %516 = arith.subf %501, %515 : vector<8x128xf32>
    %cst_178 = arith.constant 9.99999974E-6 : f32
    %517 = vector.broadcast %cst_178 : f32 to vector<8x1xf32>
    %518 = arith.addf %514, %517 : vector<8x1xf32>
    %519 = math.rsqrt %518 : vector<8x1xf32>
    %520 = vector.broadcast %519 : vector<8x1xf32> to vector<8x128xf32>
    %521 = arith.mulf %516, %520 : vector<8x128xf32>
    %522 = vector.broadcast %502 : vector<1x128xf32> to vector<8x128xf32>
    %523 = arith.mulf %521, %522 : vector<8x128xf32>
    %524 = vector.broadcast %503 : vector<1x128xf32> to vector<8x128xf32>
    %525 = arith.addf %523, %524 : vector<8x128xf32>
    %c0_179 = arith.constant 0 : index
    %c0_180 = arith.constant 0 : index
    %526 = vector.load %arg19[%c0_179, %c0_180] : memref<8x128xf32, #tpu.memory_space<vmem>>, vector<8x128xf32>
    tpu.vector_store %arg19[%c0_179, %c0_180], %525 {strides = array<i32>} : memref<8x128xf32, #tpu.memory_space<vmem>>, vector<8x128xf32>,
    return
  }
  func.func @transform_0(%arg0: i32) -> (i32, i32) {
    %c0_i32 = arith.constant 0 : i32
    %c0_i32_0 = arith.constant 0 : i32
    return %arg0, %c0_i32 : i32, i32
  }
  func.func @transform_1(%arg0: i32) -> (i32, i32) {
    %c0_i32 = arith.constant 0 : i32
    %c0_i32_0 = arith.constant 0 : i32
    %c0_i32_1 = arith.constant 0 : i32
    return %c0_i32, %c0_i32_0 : i32, i32
  }
  func.func @transform_2(%arg0: i32) -> (i32, i32) {
    %c0_i32 = arith.constant 0 : i32
    %c0_i32_0 = arith.constant 0 : i32
    %c0_i32_1 = arith.constant 0 : i32
    return %c0_i32, %c0_i32_0 : i32, i32
  }
  func.func @transform_3(%arg0: i32) -> (i32, i32, i32) {
    %c0_i32 = arith.constant 0 : i32
    %c0_i32_0 = arith.constant 0 : i32
    %c0_i32_1 = arith.constant 0 : i32
    %c0_i32_2 = arith.constant 0 : i32
    return %c0_i32, %c0_i32_0, %c0_i32_1 : i32, i32, i32
  }
  func.func @transform_4(%arg0: i32) -> (i32, i32, i32) {
    %c0_i32 = arith.constant 0 : i32
    %c0_i32_0 = arith.constant 0 : i32
    %c0_i32_1 = arith.constant 0 : i32
    %c0_i32_2 = arith.constant 0 : i32
    return %c0_i32, %c0_i32_0, %c0_i32_1 : i32, i32, i32
  }
  func.func @transform_5(%arg0: i32) -> (i32, i32, i32) {
    %c0_i32 = arith.constant 0 : i32
    %c0_i32_0 = arith.constant 0 : i32
    %c0_i32_1 = arith.constant 0 : i32
    %c0_i32_2 = arith.constant 0 : i32
    return %c0_i32, %c0_i32_0, %c0_i32_1 : i32, i32, i32
  }
  func.func @transform_6(%arg0: i32) -> (i32, i32) {
    %c0_i32 = arith.constant 0 : i32
    %c0_i32_0 = arith.constant 0 : i32
    %c0_i32_1 = arith.constant 0 : i32
    return %c0_i32, %c0_i32_0 : i32, i32
  }
  func.func @transform_7(%arg0: i32) -> (i32, i32) {
    %c0_i32 = arith.constant 0 : i32
    %c0_i32_0 = arith.constant 0 : i32
    %c0_i32_1 = arith.constant 0 : i32
    return %c0_i32, %c0_i32_0 : i32, i32
  }
  func.func @transform_8(%arg0: i32) -> (i32, i32) {
    %c0_i32 = arith.constant 0 : i32
    %c0_i32_0 = arith.constant 0 : i32
    %c0_i32_1 = arith.constant 0 : i32
    return %c0_i32, %c0_i32_0 : i32, i32
  }
  func.func @transform_9(%arg0: i32) -> (i32, i32, i32) {
    %c0_i32 = arith.constant 0 : i32
    %c0_i32_0 = arith.constant 0 : i32
    %c0_i32_1 = arith.constant 0 : i32
    %c0_i32_2 = arith.constant 0 : i32
    return %c0_i32, %c0_i32_0, %c0_i32_1 : i32, i32, i32
  }
  func.func @transform_10(%arg0: i32) -> (i32, i32) {
    %c0_i32 = arith.constant 0 : i32
    %c0_i32_0 = arith.constant 0 : i32
    %c0_i32_1 = arith.constant 0 : i32
    return %c0_i32, %c0_i32_0 : i32, i32
  }
  func.func @transform_11(%arg0: i32) -> (i32, i32, i32) {
    %c0_i32 = arith.constant 0 : i32
    %c0_i32_0 = arith.constant 0 : i32
    %c0_i32_1 = arith.constant 0 : i32
    %c0_i32_2 = arith.constant 0 : i32
    return %c0_i32, %c0_i32_0, %c0_i32_1 : i32, i32, i32
  }
  func.func @transform_12(%arg0: i32) -> (i32, i32) {
    %c0_i32 = arith.constant 0 : i32
    %c0_i32_0 = arith.constant 0 : i32
    %c0_i32_1 = arith.constant 0 : i32
    return %c0_i32, %c0_i32_0 : i32, i32
  }
  func.func @transform_13(%arg0: i32) -> (i32, i32) {
    %c0_i32 = arith.constant 0 : i32
    %c0_i32_0 = arith.constant 0 : i32
    %c0_i32_1 = arith.constant 0 : i32
    return %c0_i32, %c0_i32_0 : i32, i32
  }
  func.func @transform_14(%arg0: i32) -> (i32, i32) {
    %c0_i32 = arith.constant 0 : i32
    %c0_i32_0 = arith.constant 0 : i32
    %c0_i32_1 = arith.constant 0 : i32
    return %c0_i32, %c0_i32_0 : i32, i32
  }
  func.func @transform_15(%arg0: i32) -> (i32, i32) {
    %c0_i32 = arith.constant 0 : i32
    %c0_i32_0 = arith.constant 0 : i32
    %c0_i32_1 = arith.constant 0 : i32
    return %c0_i32, %c0_i32_0 : i32, i32
  }
  func.func @transform_16(%arg0: i32) -> (i32, i32) {
    %c0_i32 = arith.constant 0 : i32
    %c0_i32_0 = arith.constant 0 : i32
    %c0_i32_1 = arith.constant 0 : i32
    return %c0_i32, %c0_i32_0 : i32, i32
  }
  func.func @transform_17(%arg0: i32) -> (i32, i32) {
    %c0_i32 = arith.constant 0 : i32
    %c0_i32_0 = arith.constant 0 : i32
    %c0_i32_1 = arith.constant 0 : i32
    return %c0_i32, %c0_i32_0 : i32, i32
  }
  func.func @transform_18(%arg0: i32) -> (i32, i32) {
    %c0_i32 = arith.constant 0 : i32
    %c0_i32_0 = arith.constant 0 : i32
    return %arg0, %c0_i32 : i32, i32
  }
}

module attributes {stable_mosaic.version = 11 : i64} {
  func.func @_btc_block_kernel(%arg0: i32, %arg1: memref<8x128xf32, #tpu.memory_space<vmem>>, %arg2: memref<2x128xf32, #tpu.memory_space<vmem>>, %arg3: memref<2x128xf32, #tpu.memory_space<vmem>>, %arg4: memref<2x128x1536xbf16, #tpu.memory_space<vmem>>, %arg5: memref<2x1x1536xf32, #tpu.memory_space<vmem>>, %arg6: memref<2x512x128xbf16, #tpu.memory_space<vmem>>, %arg7: memref<2x128xf32, #tpu.memory_space<vmem>>, %arg8: memref<2x128xf32, #tpu.memory_space<vmem>>, %arg9: memref<2x128xf32, #tpu.memory_space<vmem>>, %arg10: memref<2x128x384xbf16, #tpu.memory_space<vmem>>, %arg11: memref<2x128xf32, #tpu.memory_space<vmem>>, %arg12: memref<2x128x384xbf16, #tpu.memory_space<vmem>>, %arg13: memref<2x128xf32, #tpu.memory_space<vmem>>, %arg14: memref<128x128xbf16, #tpu.memory_space<vmem>>, %arg15: memref<128x128xbf16, #tpu.memory_space<vmem>>, %arg16: memref<1x128xf32, #tpu.memory_space<vmem>>, %arg17: memref<1x128xf32, #tpu.memory_space<vmem>>, %arg18: memref<1x128xf32, #tpu.memory_space<vmem>>, %arg19: memref<8x128xf32, #tpu.memory_space<vmem>>) attributes {dimension_semantics = [#tpu.dimension_semantics<parallel>], iteration_bounds = array<i64: 2>, scalar_prefetch = 0 : i64, scratch_operands = 0 : i64, tpu.core_type = #tpu.core_type<tc>, window_params = [{transform_indices = @transform_0, window_bounds = array<i64: 8, 128>}, {pipeline_mode = #tpu.pipeline_mode<synchronous>, transform_indices = @transform_1, window_bounds = array<i64: 2, 128>}, {pipeline_mode = #tpu.pipeline_mode<synchronous>, transform_indices = @transform_2, window_bounds = array<i64: 2, 128>}, {pipeline_mode = #tpu.pipeline_mode<synchronous>, transform_indices = @transform_3, window_bounds = array<i64: 2, 128, 1536>}, {pipeline_mode = #tpu.pipeline_mode<synchronous>, transform_indices = @transform_4, window_bounds = array<i64: 2, 1, 1536>}, {pipeline_mode = #tpu.pipeline_mode<synchronous>, transform_indices = @transform_5, window_bounds = array<i64: 2, 512, 128>}, {pipeline_mode = #tpu.pipeline_mode<synchronous>, transform_indices = @transform_6, window_bounds = array<i64: 2, 128>}, {pipeline_mode = #tpu.pipeline_mode<synchronous>, transform_indices = @transform_7, window_bounds = array<i64: 2, 128>}, {pipeline_mode = #tpu.pipeline_mode<synchronous>, transform_indices = @transform_8, window_bounds = array<i64: 2, 128>}, {pipeline_mode = #tpu.pipeline_mode<synchronous>, transform_indices = @transform_9, window_bounds = array<i64: 2, 128, 384>}, {pipeline_mode = #tpu.pipeline_mode<synchronous>, transform_indices = @transform_10, window_bounds = array<i64: 2, 128>}, {pipeline_mode = #tpu.pipeline_mode<synchronous>, transform_indices = @transform_11, window_bounds = array<i64: 2, 128, 384>}, {pipeline_mode = #tpu.pipeline_mode<synchronous>, transform_indices = @transform_12, window_bounds = array<i64: 2, 128>}, {pipeline_mode = #tpu.pipeline_mode<synchronous>, transform_indices = @transform_13, window_bounds = array<i64: 128, 128>}, {pipeline_mode = #tpu.pipeline_mode<synchronous>, transform_indices = @transform_14, window_bounds = array<i64: 128, 128>}, {pipeline_mode = #tpu.pipeline_mode<synchronous>, transform_indices = @transform_15, window_bounds = array<i64: 1, 128>}, {pipeline_mode = #tpu.pipeline_mode<synchronous>, transform_indices = @transform_16, window_bounds = array<i64: 1, 128>}, {pipeline_mode = #tpu.pipeline_mode<synchronous>, transform_indices = @transform_17, window_bounds = array<i64: 1, 128>}, {transform_indices = @transform_18, window_bounds = array<i64: 8, 128>}]} {
    %c0 = arith.constant 0 : index
    %c0_0 = arith.constant 0 : index
    %0 = vector.load %arg1[%c0, %c0_0] : memref<8x128xf32, #tpu.memory_space<vmem>>, vector<8x128xf32>
    %1 = tpu.iota {dimensions = array<i32: 0>} : vector<8x1xi32>
    %c0_i32 = arith.constant 0 : i32
    %2 = vector.broadcast %c0_i32 : i32 to vector<8x1xi32>
    %3 = arith.cmpi sgt, %1, %2 : vector<8x1xi32>
    %c7_i32 = arith.constant 7 : i32
    %4 = vector.broadcast %c7_i32 : i32 to vector<8x1xi32>
    %5 = arith.cmpi slt, %1, %4 : vector<8x1xi32>
    %6 = tpu.iota {dimensions = array<i32: 0>} : vector<8x8xi32>
    %7 = tpu.iota {dimensions = array<i32: 1>} : vector<8x8xi32>
    %c0_1 = arith.constant 0 : index
    %c0_2 = arith.constant 0 : index
    %8 = vector.load %arg2[%c0_1, %c0_2] : memref<2x128xf32, #tpu.memory_space<vmem>>, vector<1x128xf32>
    %c0_3 = arith.constant 0 : index
    %c0_4 = arith.constant 0 : index
    %9 = vector.load %arg3[%c0_3, %c0_4] : memref<2x128xf32, #tpu.memory_space<vmem>>, vector<1x128xf32>
    %cst = arith.constant dense<0.000000e+00> : vector<8xf32>
    %10 = vector.multi_reduction <add>, %0, %cst [1] : vector<8x128xf32> to vector<8xf32>
    %11 = vector.shape_cast %10 : vector<8xf32> to vector<8x1xf32>
    %cst_5 = arith.constant 3.125000e-02 : f32
    %12 = vector.broadcast %cst_5 : f32 to vector<8x1xf32>
    %13 = arith.mulf %11, %12 : vector<8x1xf32>
    %14 = arith.mulf %0, %0 : vector<8x128xf32>
    %cst_6 = arith.constant dense<0.000000e+00> : vector<8xf32>
    %15 = vector.multi_reduction <add>, %14, %cst_6 [1] : vector<8x128xf32> to vector<8xf32>
    %16 = vector.shape_cast %15 : vector<8xf32> to vector<8x1xf32>
    %cst_7 = arith.constant 3.125000e-02 : f32
    %17 = vector.broadcast %cst_7 : f32 to vector<8x1xf32>
    %18 = arith.mulf %16, %17 : vector<8x1xf32>
    %19 = arith.mulf %13, %13 : vector<8x1xf32>
    %20 = arith.subf %18, %19 : vector<8x1xf32>
    %21 = vector.broadcast %13 : vector<8x1xf32> to vector<8x128xf32>
    %22 = arith.subf %0, %21 : vector<8x128xf32>
    %cst_8 = arith.constant 9.99999974E-6 : f32
    %23 = vector.broadcast %cst_8 : f32 to vector<8x1xf32>
    %24 = arith.addf %20, %23 : vector<8x1xf32>
    %25 = math.rsqrt %24 : vector<8x1xf32>
    %26 = vector.broadcast %25 : vector<8x1xf32> to vector<8x128xf32>
    %27 = arith.mulf %22, %26 : vector<8x128xf32>
    %28 = vector.broadcast %8 : vector<1x128xf32> to vector<8x128xf32>
    %29 = arith.mulf %27, %28 : vector<8x128xf32>
    %30 = vector.broadcast %9 : vector<1x128xf32> to vector<8x128xf32>
    %31 = arith.addf %29, %30 : vector<8x128xf32>
    %32 = arith.truncf %31 : vector<8x128xf32> to vector<8x128xbf16>
    %c0_9 = arith.constant 0 : index
    %c0_10 = arith.constant 0 : index
    %c0_11 = arith.constant 0 : index
    %33 = vector.load %arg4[%c0_9, %c0_10, %c0_11] : memref<2x128x1536xbf16, #tpu.memory_space<vmem>>, vector<1x128x1536xbf16>
    %34 = vector.shape_cast %33 : vector<1x128x1536xbf16> to vector<128x1536xbf16>
    %cst_12 = arith.constant dense<0.000000e+00> : vector<8x1536xf32>
    %35 = tpu.matmul %32, %34, %cst_12 {dimension_numbers = #tpu.dot_dimension_numbers<[1], [0], [0], [1], [0, 0, 1, 1], [], []>} : vector<8x128xbf16>, vector<128x1536xbf16>, vector<8x1536xf32> -> vector<8x1536xf32>
    %c0_13 = arith.constant 0 : index
    %c0_14 = arith.constant 0 : index
    %c0_15 = arith.constant 0 : index
    %36 = vector.load %arg5[%c0_13, %c0_14, %c0_15] : memref<2x1x1536xf32, #tpu.memory_space<vmem>>, vector<1x1x1536xf32>
    %37 = vector.shape_cast %36 : vector<1x1x1536xf32> to vector<1x1536xf32>
    %38 = vector.broadcast %37 : vector<1x1536xf32> to vector<8x1536xf32>
    %39 = arith.addf %35, %38 : vector<8x1536xf32>
    %40 = arith.truncf %39 : vector<8x1536xf32> to vector<8x1536xbf16>
    %41 = arith.cmpi slt, %7, %6 : vector<8x8xi32>
    %c0_16 = arith.constant 0 : index
    %c0_17 = arith.constant 0 : index
    %c0_18 = arith.constant 0 : index
    %42 = vector.load %arg6[%c0_16, %c0_17, %c0_18] : memref<2x512x128xbf16, #tpu.memory_space<vmem>>, vector<1x512x128xbf16>
    %43 = vector.shape_cast %42 : vector<1x512x128xbf16> to vector<512x128xbf16>
    %44 = vector.extract_strided_slice %40 {offsets = [0, 0], sizes = [8, 128], strides = [1, 1]} : vector<8x1536xbf16> to vector<8x128xbf16>
    %45 = vector.shape_cast %44 : vector<8x128xbf16> to vector<1x8x128xbf16>
    %46 = vector.extract_strided_slice %40 {offsets = [0, 512], sizes = [8, 128], strides = [1, 1]} : vector<8x1536xbf16> to vector<8x128xbf16>
    %47 = vector.shape_cast %46 : vector<8x128xbf16> to vector<1x8x128xbf16>
    %48 = vector.extract_strided_slice %40 {offsets = [0, 1024], sizes = [8, 128], strides = [1, 1]} : vector<8x1536xbf16> to vector<8x128xbf16>
    %49 = vector.shape_cast %48 : vector<8x128xbf16> to vector<1x8x128xbf16>
    %cst_19 = arith.constant dense<0.000000e+00> : vector<1x8x8xf32>
    %50 = tpu.matmul %45, %47, %cst_19 {dimension_numbers = #tpu.dot_dimension_numbers<[2], [2], [1], [1], [0, 0, 0, 1, 1, 1], [0], [0]>} : vector<1x8x128xbf16>, vector<1x8x128xbf16>, vector<1x8x8xf32> -> vector<1x8x8xf32>
    %cst_20 = arith.constant -1.000000e+30 : f32
    %51 = vector.shape_cast %41 : vector<8x8xi1> to vector<1x8x8xi1>
    %52 = vector.broadcast %cst_20 : f32 to vector<1x8x8xf32>
    %53 = arith.select %51, %52, %50 : vector<1x8x8xi1>, vector<1x8x8xf32>
    %cst_21 = arith.constant dense<0xFF800000> : vector<1x8xf32>
    %54 = vector.multi_reduction <maximumf>, %53, %cst_21 [2] : vector<1x8x8xf32> to vector<1x8xf32>
    %55 = vector.shape_cast %54 : vector<1x8xf32> to vector<1x8x1xf32>
    %56 = vector.broadcast %55 : vector<1x8x1xf32> to vector<1x8x8xf32>
    %57 = arith.subf %53, %56 : vector<1x8x8xf32>
    %58 = math.exp %57 : vector<1x8x8xf32>
    %cst_22 = arith.constant dense<0.000000e+00> : vector<1x8xf32>
    %59 = vector.multi_reduction <add>, %58, %cst_22 [2] : vector<1x8x8xf32> to vector<1x8xf32>
    %60 = vector.shape_cast %59 : vector<1x8xf32> to vector<1x8x1xf32>
    %61 = tpu.reciprocal %60 {approx = true} : vector<1x8x1xf32> -> vector<1x8x1xf32>
    %62 = vector.broadcast %61 : vector<1x8x1xf32> to vector<1x8x8xf32>
    %63 = arith.mulf %58, %62 : vector<1x8x8xf32>
    %64 = arith.truncf %63 : vector<1x8x8xf32> to vector<1x8x8xbf16>
    %cst_23 = arith.constant dense<0.000000e+00> : vector<1x8x128xf32>
    %65 = tpu.matmul %64, %49, %cst_23 {dimension_numbers = #tpu.dot_dimension_numbers<[2], [1], [1], [2], [0, 0, 0, 1, 1, 2], [0], [0]>} : vector<1x8x8xbf16>, vector<1x8x128xbf16>, vector<1x8x128xf32> -> vector<1x8x128xf32>
    %66 = vector.shape_cast %65 : vector<1x8x128xf32> to vector<8x128xf32>
    %67 = arith.truncf %66 : vector<8x128xf32> to vector<8x128xbf16>
    %68 = vector.extract_strided_slice %43 {offsets = [0, 0], sizes = [128, 128], strides = [1, 1]} : vector<512x128xbf16> to vector<128x128xbf16>
    %cst_24 = arith.constant dense<0.000000e+00> : vector<8x128xf32>
    %69 = tpu.matmul %67, %68, %cst_24 {dimension_numbers = #tpu.dot_dimension_numbers<[1], [0], [0], [1], [0, 0, 1, 1], [], []>} : vector<8x128xbf16>, vector<128x128xbf16>, vector<8x128xf32> -> vector<8x128xf32>
    %70 = vector.extract_strided_slice %40 {offsets = [0, 128], sizes = [8, 128], strides = [1, 1]} : vector<8x1536xbf16> to vector<8x128xbf16>
    %71 = vector.shape_cast %70 : vector<8x128xbf16> to vector<1x8x128xbf16>
    %72 = vector.extract_strided_slice %40 {offsets = [0, 640], sizes = [8, 128], strides = [1, 1]} : vector<8x1536xbf16> to vector<8x128xbf16>
    %73 = vector.shape_cast %72 : vector<8x128xbf16> to vector<1x8x128xbf16>
    %74 = vector.extract_strided_slice %40 {offsets = [0, 1152], sizes = [8, 128], strides = [1, 1]} : vector<8x1536xbf16> to vector<8x128xbf16>
    %75 = vector.shape_cast %74 : vector<8x128xbf16> to vector<1x8x128xbf16>
    %cst_25 = arith.constant dense<0.000000e+00> : vector<1x8x8xf32>
    %76 = tpu.matmul %71, %73, %cst_25 {dimension_numbers = #tpu.dot_dimension_numbers<[2], [2], [1], [1], [0, 0, 0, 1, 1, 1], [0], [0]>} : vector<1x8x128xbf16>, vector<1x8x128xbf16>, vector<1x8x8xf32> -> vector<1x8x8xf32>
    %cst_26 = arith.constant -1.000000e+30 : f32
    %77 = vector.shape_cast %41 : vector<8x8xi1> to vector<1x8x8xi1>
    %78 = vector.broadcast %cst_26 : f32 to vector<1x8x8xf32>
    %79 = arith.select %77, %78, %76 : vector<1x8x8xi1>, vector<1x8x8xf32>
    %cst_27 = arith.constant dense<0xFF800000> : vector<1x8xf32>
    %80 = vector.multi_reduction <maximumf>, %79, %cst_27 [2] : vector<1x8x8xf32> to vector<1x8xf32>
    %81 = vector.shape_cast %80 : vector<1x8xf32> to vector<1x8x1xf32>
    %82 = vector.broadcast %81 : vector<1x8x1xf32> to vector<1x8x8xf32>
    %83 = arith.subf %79, %82 : vector<1x8x8xf32>
    %84 = math.exp %83 : vector<1x8x8xf32>
    %cst_28 = arith.constant dense<0.000000e+00> : vector<1x8xf32>
    %85 = vector.multi_reduction <add>, %84, %cst_28 [2] : vector<1x8x8xf32> to vector<1x8xf32>
    %86 = vector.shape_cast %85 : vector<1x8xf32> to vector<1x8x1xf32>
    %87 = tpu.reciprocal %86 {approx = true} : vector<1x8x1xf32> -> vector<1x8x1xf32>
    %88 = vector.broadcast %87 : vector<1x8x1xf32> to vector<1x8x8xf32>
    %89 = arith.mulf %84, %88 : vector<1x8x8xf32>
    %90 = arith.truncf %89 : vector<1x8x8xf32> to vector<1x8x8xbf16>
    %cst_29 = arith.constant dense<0.000000e+00> : vector<1x8x128xf32>
    %91 = tpu.matmul %90, %75, %cst_29 {dimension_numbers = #tpu.dot_dimension_numbers<[2], [1], [1], [2], [0, 0, 0, 1, 1, 2], [0], [0]>} : vector<1x8x8xbf16>, vector<1x8x128xbf16>, vector<1x8x128xf32> -> vector<1x8x128xf32>
    %92 = vector.shape_cast %91 : vector<1x8x128xf32> to vector<8x128xf32>
    %93 = arith.truncf %92 : vector<8x128xf32> to vector<8x128xbf16>
    %94 = vector.extract_strided_slice %43 {offsets = [128, 0], sizes = [128, 128], strides = [1, 1]} : vector<512x128xbf16> to vector<128x128xbf16>
    %cst_30 = arith.constant dense<0.000000e+00> : vector<8x128xf32>
    %95 = tpu.matmul %93, %94, %cst_30 {dimension_numbers = #tpu.dot_dimension_numbers<[1], [0], [0], [1], [0, 0, 1, 1], [], []>} : vector<8x128xbf16>, vector<128x128xbf16>, vector<8x128xf32> -> vector<8x128xf32>
    %96 = arith.addf %69, %95 : vector<8x128xf32>
    %97 = vector.extract_strided_slice %40 {offsets = [0, 256], sizes = [8, 128], strides = [1, 1]} : vector<8x1536xbf16> to vector<8x128xbf16>
    %98 = vector.shape_cast %97 : vector<8x128xbf16> to vector<1x8x128xbf16>
    %99 = vector.extract_strided_slice %40 {offsets = [0, 768], sizes = [8, 128], strides = [1, 1]} : vector<8x1536xbf16> to vector<8x128xbf16>
    %100 = vector.shape_cast %99 : vector<8x128xbf16> to vector<1x8x128xbf16>
    %101 = vector.extract_strided_slice %40 {offsets = [0, 1280], sizes = [8, 128], strides = [1, 1]} : vector<8x1536xbf16> to vector<8x128xbf16>
    %102 = vector.shape_cast %101 : vector<8x128xbf16> to vector<1x8x128xbf16>
    %cst_31 = arith.constant dense<0.000000e+00> : vector<1x8x8xf32>
    %103 = tpu.matmul %98, %100, %cst_31 {dimension_numbers = #tpu.dot_dimension_numbers<[2], [2], [1], [1], [0, 0, 0, 1, 1, 1], [0], [0]>} : vector<1x8x128xbf16>, vector<1x8x128xbf16>, vector<1x8x8xf32> -> vector<1x8x8xf32>
    %cst_32 = arith.constant -1.000000e+30 : f32
    %104 = vector.shape_cast %41 : vector<8x8xi1> to vector<1x8x8xi1>
    %105 = vector.broadcast %cst_32 : f32 to vector<1x8x8xf32>
    %106 = arith.select %104, %105, %103 : vector<1x8x8xi1>, vector<1x8x8xf32>
    %cst_33 = arith.constant dense<0xFF800000> : vector<1x8xf32>
    %107 = vector.multi_reduction <maximumf>, %106, %cst_33 [2] : vector<1x8x8xf32> to vector<1x8xf32>
    %108 = vector.shape_cast %107 : vector<1x8xf32> to vector<1x8x1xf32>
    %109 = vector.broadcast %108 : vector<1x8x1xf32> to vector<1x8x8xf32>
    %110 = arith.subf %106, %109 : vector<1x8x8xf32>
    %111 = math.exp %110 : vector<1x8x8xf32>
    %cst_34 = arith.constant dense<0.000000e+00> : vector<1x8xf32>
    %112 = vector.multi_reduction <add>, %111, %cst_34 [2] : vector<1x8x8xf32> to vector<1x8xf32>
    %113 = vector.shape_cast %112 : vector<1x8xf32> to vector<1x8x1xf32>
    %114 = tpu.reciprocal %113 {approx = true} : vector<1x8x1xf32> -> vector<1x8x1xf32>
    %115 = vector.broadcast %114 : vector<1x8x1xf32> to vector<1x8x8xf32>
    %116 = arith.mulf %111, %115 : vector<1x8x8xf32>
    %117 = arith.truncf %116 : vector<1x8x8xf32> to vector<1x8x8xbf16>
    %cst_35 = arith.constant dense<0.000000e+00> : vector<1x8x128xf32>
    %118 = tpu.matmul %117, %102, %cst_35 {dimension_numbers = #tpu.dot_dimension_numbers<[2], [1], [1], [2], [0, 0, 0, 1, 1, 2], [0], [0]>} : vector<1x8x8xbf16>, vector<1x8x128xbf16>, vector<1x8x128xf32> -> vector<1x8x128xf32>
    %119 = vector.shape_cast %118 : vector<1x8x128xf32> to vector<8x128xf32>
    %120 = arith.truncf %119 : vector<8x128xf32> to vector<8x128xbf16>
    %121 = vector.extract_strided_slice %43 {offsets = [256, 0], sizes = [128, 128], strides = [1, 1]} : vector<512x128xbf16> to vector<128x128xbf16>
    %cst_36 = arith.constant dense<0.000000e+00> : vector<8x128xf32>
    %122 = tpu.matmul %120, %121, %cst_36 {dimension_numbers = #tpu.dot_dimension_numbers<[1], [0], [0], [1], [0, 0, 1, 1], [], []>} : vector<8x128xbf16>, vector<128x128xbf16>, vector<8x128xf32> -> vector<8x128xf32>
    %123 = arith.addf %96, %122 : vector<8x128xf32>
    %124 = vector.extract_strided_slice %40 {offsets = [0, 384], sizes = [8, 128], strides = [1, 1]} : vector<8x1536xbf16> to vector<8x128xbf16>
    %125 = vector.shape_cast %124 : vector<8x128xbf16> to vector<1x8x128xbf16>
    %126 = vector.extract_strided_slice %40 {offsets = [0, 896], sizes = [8, 128], strides = [1, 1]} : vector<8x1536xbf16> to vector<8x128xbf16>
    %127 = vector.shape_cast %126 : vector<8x128xbf16> to vector<1x8x128xbf16>
    %128 = vector.extract_strided_slice %40 {offsets = [0, 1408], sizes = [8, 128], strides = [1, 1]} : vector<8x1536xbf16> to vector<8x128xbf16>
    %129 = vector.shape_cast %128 : vector<8x128xbf16> to vector<1x8x128xbf16>
    %cst_37 = arith.constant dense<0.000000e+00> : vector<1x8x8xf32>
    %130 = tpu.matmul %125, %127, %cst_37 {dimension_numbers = #tpu.dot_dimension_numbers<[2], [2], [1], [1], [0, 0, 0, 1, 1, 1], [0], [0]>} : vector<1x8x128xbf16>, vector<1x8x128xbf16>, vector<1x8x8xf32> -> vector<1x8x8xf32>
    %cst_38 = arith.constant -1.000000e+30 : f32
    %131 = vector.shape_cast %41 : vector<8x8xi1> to vector<1x8x8xi1>
    %132 = vector.broadcast %cst_38 : f32 to vector<1x8x8xf32>
    %133 = arith.select %131, %132, %130 : vector<1x8x8xi1>, vector<1x8x8xf32>
    %cst_39 = arith.constant dense<0xFF800000> : vector<1x8xf32>
    %134 = vector.multi_reduction <maximumf>, %133, %cst_39 [2] : vector<1x8x8xf32> to vector<1x8xf32>
    %135 = vector.shape_cast %134 : vector<1x8xf32> to vector<1x8x1xf32>
    %136 = vector.broadcast %135 : vector<1x8x1xf32> to vector<1x8x8xf32>
    %137 = arith.subf %133, %136 : vector<1x8x8xf32>
    %138 = math.exp %137 : vector<1x8x8xf32>
    %cst_40 = arith.constant dense<0.000000e+00> : vector<1x8xf32>
    %139 = vector.multi_reduction <add>, %138, %cst_40 [2] : vector<1x8x8xf32> to vector<1x8xf32>
    %140 = vector.shape_cast %139 : vector<1x8xf32> to vector<1x8x1xf32>
    %141 = tpu.reciprocal %140 {approx = true} : vector<1x8x1xf32> -> vector<1x8x1xf32>
    %142 = vector.broadcast %141 : vector<1x8x1xf32> to vector<1x8x8xf32>
    %143 = arith.mulf %138, %142 : vector<1x8x8xf32>
    %144 = arith.truncf %143 : vector<1x8x8xf32> to vector<1x8x8xbf16>
    %cst_41 = arith.constant dense<0.000000e+00> : vector<1x8x128xf32>
    %145 = tpu.matmul %144, %129, %cst_41 {dimension_numbers = #tpu.dot_dimension_numbers<[2], [1], [1], [2], [0, 0, 0, 1, 1, 2], [0], [0]>} : vector<1x8x8xbf16>, vector<1x8x128xbf16>, vector<1x8x128xf32> -> vector<1x8x128xf32>
    %146 = vector.shape_cast %145 : vector<1x8x128xf32> to vector<8x128xf32>
    %147 = arith.truncf %146 : vector<8x128xf32> to vector<8x128xbf16>
    %148 = vector.extract_strided_slice %43 {offsets = [384, 0], sizes = [128, 128], strides = [1, 1]} : vector<512x128xbf16> to vector<128x128xbf16>
    %cst_42 = arith.constant dense<0.000000e+00> : vector<8x128xf32>
    %149 = tpu.matmul %147, %148, %cst_42 {dimension_numbers = #tpu.dot_dimension_numbers<[1], [0], [0], [1], [0, 0, 1, 1], [], []>} : vector<8x128xbf16>, vector<128x128xbf16>, vector<8x128xf32> -> vector<8x128xf32>
    %150 = arith.addf %123, %149 : vector<8x128xf32>
    %c0_43 = arith.constant 0 : index
    %c0_44 = arith.constant 0 : index
    %151 = vector.load %arg7[%c0_43, %c0_44] : memref<2x128xf32, #tpu.memory_space<vmem>>, vector<1x128xf32>
    %152 = vector.broadcast %151 : vector<1x128xf32> to vector<8x128xf32>
    %153 = arith.addf %150, %152 : vector<8x128xf32>
    %154 = arith.addf %153, %0 : vector<8x128xf32>
    %c0_45 = arith.constant 0 : index
    %c0_46 = arith.constant 0 : index
    %155 = vector.load %arg8[%c0_45, %c0_46] : memref<2x128xf32, #tpu.memory_space<vmem>>, vector<1x128xf32>
    %c0_47 = arith.constant 0 : index
    %c0_48 = arith.constant 0 : index
    %156 = vector.load %arg9[%c0_47, %c0_48] : memref<2x128xf32, #tpu.memory_space<vmem>>, vector<1x128xf32>
    %cst_49 = arith.constant dense<0.000000e+00> : vector<8xf32>
    %157 = vector.multi_reduction <add>, %154, %cst_49 [1] : vector<8x128xf32> to vector<8xf32>
    %158 = vector.shape_cast %157 : vector<8xf32> to vector<8x1xf32>
    %cst_50 = arith.constant 3.125000e-02 : f32
    %159 = vector.broadcast %cst_50 : f32 to vector<8x1xf32>
    %160 = arith.mulf %158, %159 : vector<8x1xf32>
    %161 = arith.mulf %154, %154 : vector<8x128xf32>
    %cst_51 = arith.constant dense<0.000000e+00> : vector<8xf32>
    %162 = vector.multi_reduction <add>, %161, %cst_51 [1] : vector<8x128xf32> to vector<8xf32>
    %163 = vector.shape_cast %162 : vector<8xf32> to vector<8x1xf32>
    %cst_52 = arith.constant 3.125000e-02 : f32
    %164 = vector.broadcast %cst_52 : f32 to vector<8x1xf32>
    %165 = arith.mulf %163, %164 : vector<8x1xf32>
    %166 = arith.mulf %160, %160 : vector<8x1xf32>
    %167 = arith.subf %165, %166 : vector<8x1xf32>
    %168 = vector.broadcast %160 : vector<8x1xf32> to vector<8x128xf32>
    %169 = arith.subf %154, %168 : vector<8x128xf32>
    %cst_53 = arith.constant 9.99999974E-6 : f32
    %170 = vector.broadcast %cst_53 : f32 to vector<8x1xf32>
    %171 = arith.addf %167, %170 : vector<8x1xf32>
    %172 = math.rsqrt %171 : vector<8x1xf32>
    %173 = vector.broadcast %172 : vector<8x1xf32> to vector<8x128xf32>
    %174 = arith.mulf %169, %173 : vector<8x128xf32>
    %175 = vector.broadcast %155 : vector<1x128xf32> to vector<8x128xf32>
    %176 = arith.mulf %174, %175 : vector<8x128xf32>
    %177 = vector.broadcast %156 : vector<1x128xf32> to vector<8x128xf32>
    %178 = arith.addf %176, %177 : vector<8x128xf32>
    %179 = arith.truncf %178 : vector<8x128xf32> to vector<8x128xbf16>
    %c0_54 = arith.constant 0 : index
    %c0_55 = arith.constant 0 : index
    %c0_56 = arith.constant 0 : index
    %180 = vector.load %arg10[%c0_54, %c0_55, %c0_56] : memref<2x128x384xbf16, #tpu.memory_space<vmem>>, vector<1x128x384xbf16>
    %181 = vector.shape_cast %180 : vector<1x128x384xbf16> to vector<128x384xbf16>
    %c0_57 = arith.constant 0 : index
    %c0_58 = arith.constant 0 : index
    %182 = vector.load %arg11[%c0_57, %c0_58] : memref<2x128xf32, #tpu.memory_space<vmem>>, vector<1x128xf32>
    %cst_59 = arith.constant dense<0.000000e+00> : vector<8x384xf32>
    %183 = tpu.matmul %179, %181, %cst_59 {dimension_numbers = #tpu.dot_dimension_numbers<[1], [0], [0], [1], [0, 0, 1, 1], [], []>} : vector<8x128xbf16>, vector<128x384xbf16>, vector<8x384xf32> -> vector<8x384xf32>
    %184 = vector.extract_strided_slice %183 {offsets = [0, 0], sizes = [8, 128], strides = [1, 1]} : vector<8x384xf32> to vector<8x128xf32>
    %185 = vector.extract_strided_slice %183 {offsets = [0, 128], sizes = [8, 128], strides = [1, 1]} : vector<8x384xf32> to vector<8x128xf32>
    %186 = vector.extract_strided_slice %183 {offsets = [0, 256], sizes = [8, 128], strides = [1, 1]} : vector<8x384xf32> to vector<8x128xf32>
    %c1_i32 = arith.constant 1 : i32
    %187 = tpu.dynamic_rotate %184 by %c1_i32 dim 0 : vector<8x128xf32>, i32 -> vector<8x128xf32>
    %cst_60 = arith.constant 0.000000e+00 : f32
    %188 = vector.shape_cast %3 : vector<8x1xi1> to vector<8x1xi1>
    %189 = vector.broadcast %188 : vector<8x1xi1> to vector<8x128xi1>
    %190 = vector.broadcast %cst_60 : f32 to vector<8x128xf32>
    %191 = arith.select %189, %187, %190 : vector<8x128xi1>, vector<8x128xf32>
    %c7_i32_61 = arith.constant 7 : i32
    %192 = tpu.dynamic_rotate %186 by %c7_i32_61 dim 0 : vector<8x128xf32>, i32 -> vector<8x128xf32>
    %cst_62 = arith.constant 0.000000e+00 : f32
    %193 = vector.shape_cast %5 : vector<8x1xi1> to vector<8x1xi1>
    %194 = vector.broadcast %193 : vector<8x1xi1> to vector<8x128xi1>
    %195 = vector.broadcast %cst_62 : f32 to vector<8x128xf32>
    %196 = arith.select %194, %192, %195 : vector<8x128xi1>, vector<8x128xf32>
    %197 = arith.addf %191, %185 : vector<8x128xf32>
    %198 = arith.addf %197, %196 : vector<8x128xf32>
    %199 = vector.broadcast %182 : vector<1x128xf32> to vector<8x128xf32>
    %200 = arith.addf %198, %199 : vector<8x128xf32>
    %cst_63 = arith.constant 5.000000e-01 : f32
    %201 = vector.broadcast %cst_63 : f32 to vector<8x128xf32>
    %202 = arith.mulf %201, %200 : vector<8x128xf32>
    %cst_64 = arith.constant 4.471500e-02 : f32
    %203 = vector.broadcast %cst_64 : f32 to vector<8x128xf32>
    %204 = arith.mulf %203, %200 : vector<8x128xf32>
    %205 = arith.mulf %204, %200 : vector<8x128xf32>
    %206 = arith.mulf %205, %200 : vector<8x128xf32>
    %207 = arith.addf %200, %206 : vector<8x128xf32>
    %cst_65 = arith.constant 0.797884583 : f32
    %208 = vector.broadcast %cst_65 : f32 to vector<8x128xf32>
    %209 = arith.mulf %208, %207 : vector<8x128xf32>
    %210 = math.tanh %209 : vector<8x128xf32>
    %cst_66 = arith.constant 1.000000e+00 : f32
    %211 = vector.broadcast %cst_66 : f32 to vector<8x128xf32>
    %212 = arith.addf %211, %210 : vector<8x128xf32>
    %213 = arith.mulf %202, %212 : vector<8x128xf32>
    %214 = arith.truncf %213 : vector<8x128xf32> to vector<8x128xbf16>
    %c0_67 = arith.constant 0 : index
    %c0_68 = arith.constant 0 : index
    %c0_69 = arith.constant 0 : index
    %215 = vector.load %arg12[%c0_67, %c0_68, %c0_69] : memref<2x128x384xbf16, #tpu.memory_space<vmem>>, vector<1x128x384xbf16>
    %216 = vector.shape_cast %215 : vector<1x128x384xbf16> to vector<128x384xbf16>
    %c0_70 = arith.constant 0 : index
    %c0_71 = arith.constant 0 : index
    %217 = vector.load %arg13[%c0_70, %c0_71] : memref<2x128xf32, #tpu.memory_space<vmem>>, vector<1x128xf32>
    %cst_72 = arith.constant dense<0.000000e+00> : vector<8x384xf32>
    %218 = tpu.matmul %214, %216, %cst_72 {dimension_numbers = #tpu.dot_dimension_numbers<[1], [0], [0], [1], [0, 0, 1, 1], [], []>} : vector<8x128xbf16>, vector<128x384xbf16>, vector<8x384xf32> -> vector<8x384xf32>
    %219 = vector.extract_strided_slice %218 {offsets = [0, 0], sizes = [8, 128], strides = [1, 1]} : vector<8x384xf32> to vector<8x128xf32>
    %220 = vector.extract_strided_slice %218 {offsets = [0, 128], sizes = [8, 128], strides = [1, 1]} : vector<8x384xf32> to vector<8x128xf32>
    %221 = vector.extract_strided_slice %218 {offsets = [0, 256], sizes = [8, 128], strides = [1, 1]} : vector<8x384xf32> to vector<8x128xf32>
    %c1_i32_73 = arith.constant 1 : i32
    %222 = tpu.dynamic_rotate %219 by %c1_i32_73 dim 0 : vector<8x128xf32>, i32 -> vector<8x128xf32>
    %cst_74 = arith.constant 0.000000e+00 : f32
    %223 = vector.shape_cast %3 : vector<8x1xi1> to vector<8x1xi1>
    %224 = vector.broadcast %223 : vector<8x1xi1> to vector<8x128xi1>
    %225 = vector.broadcast %cst_74 : f32 to vector<8x128xf32>
    %226 = arith.select %224, %222, %225 : vector<8x128xi1>, vector<8x128xf32>
    %c7_i32_75 = arith.constant 7 : i32
    %227 = tpu.dynamic_rotate %221 by %c7_i32_75 dim 0 : vector<8x128xf32>, i32 -> vector<8x128xf32>
    %cst_76 = arith.constant 0.000000e+00 : f32
    %228 = vector.shape_cast %5 : vector<8x1xi1> to vector<8x1xi1>
    %229 = vector.broadcast %228 : vector<8x1xi1> to vector<8x128xi1>
    %230 = vector.broadcast %cst_76 : f32 to vector<8x128xf32>
    %231 = arith.select %229, %227, %230 : vector<8x128xi1>, vector<8x128xf32>
    %232 = arith.addf %226, %220 : vector<8x128xf32>
    %233 = arith.addf %232, %231 : vector<8x128xf32>
    %234 = vector.broadcast %217 : vector<1x128xf32> to vector<8x128xf32>
    %235 = arith.addf %233, %234 : vector<8x128xf32>
    %cst_77 = arith.constant 5.000000e-01 : f32
    %236 = vector.broadcast %cst_77 : f32 to vector<8x128xf32>
    %237 = arith.mulf %236, %235 : vector<8x128xf32>
    %cst_78 = arith.constant 4.471500e-02 : f32
    %238 = vector.broadcast %cst_78 : f32 to vector<8x128xf32>
    %239 = arith.mulf %238, %235 : vector<8x128xf32>
    %240 = arith.mulf %239, %235 : vector<8x128xf32>
    %241 = arith.mulf %240, %235 : vector<8x128xf32>
    %242 = arith.addf %235, %241 : vector<8x128xf32>
    %cst_79 = arith.constant 0.797884583 : f32
    %243 = vector.broadcast %cst_79 : f32 to vector<8x128xf32>
    %244 = arith.mulf %243, %242 : vector<8x128xf32>
    %245 = math.tanh %244 : vector<8x128xf32>
    %cst_80 = arith.constant 1.000000e+00 : f32
    %246 = vector.broadcast %cst_80 : f32 to vector<8x128xf32>
    %247 = arith.addf %246, %245 : vector<8x128xf32>
    %248 = arith.mulf %237, %247 : vector<8x128xf32>
    %249 = arith.addf %248, %154 : vector<8x128xf32>
    %c1 = arith.constant 1 : index
    %c0_81 = arith.constant 0 : index
    %250 = vector.load %arg2[%c1, %c0_81] : memref<2x128xf32, #tpu.memory_space<vmem>>, vector<1x128xf32>
    %c1_82 = arith.constant 1 : index
    %c0_83 = arith.constant 0 : index
    %251 = vector.load %arg3[%c1_82, %c0_83] : memref<2x128xf32, #tpu.memory_space<vmem>>, vector<1x128xf32>
    %cst_84 = arith.constant dense<0.000000e+00> : vector<8xf32>
    %252 = vector.multi_reduction <add>, %0, %cst_84 [1] : vector<8x128xf32> to vector<8xf32>
    %253 = vector.shape_cast %252 : vector<8xf32> to vector<8x1xf32>
    %cst_85 = arith.constant 3.125000e-02 : f32
    %254 = vector.broadcast %cst_85 : f32 to vector<8x1xf32>
    %255 = arith.mulf %253, %254 : vector<8x1xf32>
    %256 = arith.mulf %0, %0 : vector<8x128xf32>
    %cst_86 = arith.constant dense<0.000000e+00> : vector<8xf32>
    %257 = vector.multi_reduction <add>, %256, %cst_86 [1] : vector<8x128xf32> to vector<8xf32>
    %258 = vector.shape_cast %257 : vector<8xf32> to vector<8x1xf32>
    %cst_87 = arith.constant 3.125000e-02 : f32
    %259 = vector.broadcast %cst_87 : f32 to vector<8x1xf32>
    %260 = arith.mulf %258, %259 : vector<8x1xf32>
    %261 = arith.mulf %255, %255 : vector<8x1xf32>
    %262 = arith.subf %260, %261 : vector<8x1xf32>
    %263 = vector.broadcast %255 : vector<8x1xf32> to vector<8x128xf32>
    %264 = arith.subf %0, %263 : vector<8x128xf32>
    %cst_88 = arith.constant 9.99999974E-6 : f32
    %265 = vector.broadcast %cst_88 : f32 to vector<8x1xf32>
    %266 = arith.addf %262, %265 : vector<8x1xf32>
    %267 = math.rsqrt %266 : vector<8x1xf32>
    %268 = vector.broadcast %267 : vector<8x1xf32> to vector<8x128xf32>
    %269 = arith.mulf %264, %268 : vector<8x128xf32>
    %270 = vector.broadcast %250 : vector<1x128xf32> to vector<8x128xf32>
    %271 = arith.mulf %269, %270 : vector<8x128xf32>
    %272 = vector.broadcast %251 : vector<1x128xf32> to vector<8x128xf32>
    %273 = arith.addf %271, %272 : vector<8x128xf32>
    %274 = arith.truncf %273 : vector<8x128xf32> to vector<8x128xbf16>
    %c1_89 = arith.constant 1 : index
    %c0_90 = arith.constant 0 : index
    %c0_91 = arith.constant 0 : index
    %275 = vector.load %arg4[%c1_89, %c0_90, %c0_91] : memref<2x128x1536xbf16, #tpu.memory_space<vmem>>, vector<1x128x1536xbf16>
    %276 = vector.shape_cast %275 : vector<1x128x1536xbf16> to vector<128x1536xbf16>
    %cst_92 = arith.constant dense<0.000000e+00> : vector<8x1536xf32>
    %277 = tpu.matmul %274, %276, %cst_92 {dimension_numbers = #tpu.dot_dimension_numbers<[1], [0], [0], [1], [0, 0, 1, 1], [], []>} : vector<8x128xbf16>, vector<128x1536xbf16>, vector<8x1536xf32> -> vector<8x1536xf32>
    %c1_93 = arith.constant 1 : index
    %c0_94 = arith.constant 0 : index
    %c0_95 = arith.constant 0 : index
    %278 = vector.load %arg5[%c1_93, %c0_94, %c0_95] : memref<2x1x1536xf32, #tpu.memory_space<vmem>>, vector<1x1x1536xf32>
    %279 = vector.shape_cast %278 : vector<1x1x1536xf32> to vector<1x1536xf32>
    %280 = vector.broadcast %279 : vector<1x1536xf32> to vector<8x1536xf32>
    %281 = arith.addf %277, %280 : vector<8x1536xf32>
    %282 = arith.truncf %281 : vector<8x1536xf32> to vector<8x1536xbf16>
    %283 = arith.cmpi sgt, %7, %6 : vector<8x8xi32>
    %c1_96 = arith.constant 1 : index
    %c0_97 = arith.constant 0 : index
    %c0_98 = arith.constant 0 : index
    %284 = vector.load %arg6[%c1_96, %c0_97, %c0_98] : memref<2x512x128xbf16, #tpu.memory_space<vmem>>, vector<1x512x128xbf16>
    %285 = vector.shape_cast %284 : vector<1x512x128xbf16> to vector<512x128xbf16>
    %286 = vector.extract_strided_slice %282 {offsets = [0, 0], sizes = [8, 128], strides = [1, 1]} : vector<8x1536xbf16> to vector<8x128xbf16>
    %287 = vector.shape_cast %286 : vector<8x128xbf16> to vector<1x8x128xbf16>
    %288 = vector.extract_strided_slice %282 {offsets = [0, 512], sizes = [8, 128], strides = [1, 1]} : vector<8x1536xbf16> to vector<8x128xbf16>
    %289 = vector.shape_cast %288 : vector<8x128xbf16> to vector<1x8x128xbf16>
    %290 = vector.extract_strided_slice %282 {offsets = [0, 1024], sizes = [8, 128], strides = [1, 1]} : vector<8x1536xbf16> to vector<8x128xbf16>
    %291 = vector.shape_cast %290 : vector<8x128xbf16> to vector<1x8x128xbf16>
    %cst_99 = arith.constant dense<0.000000e+00> : vector<1x8x8xf32>
    %292 = tpu.matmul %287, %289, %cst_99 {dimension_numbers = #tpu.dot_dimension_numbers<[2], [2], [1], [1], [0, 0, 0, 1, 1, 1], [0], [0]>} : vector<1x8x128xbf16>, vector<1x8x128xbf16>, vector<1x8x8xf32> -> vector<1x8x8xf32>
    %cst_100 = arith.constant -1.000000e+30 : f32
    %293 = vector.shape_cast %283 : vector<8x8xi1> to vector<1x8x8xi1>
    %294 = vector.broadcast %cst_100 : f32 to vector<1x8x8xf32>
    %295 = arith.select %293, %294, %292 : vector<1x8x8xi1>, vector<1x8x8xf32>
    %cst_101 = arith.constant dense<0xFF800000> : vector<1x8xf32>
    %296 = vector.multi_reduction <maximumf>, %295, %cst_101 [2] : vector<1x8x8xf32> to vector<1x8xf32>
    %297 = vector.shape_cast %296 : vector<1x8xf32> to vector<1x8x1xf32>
    %298 = vector.broadcast %297 : vector<1x8x1xf32> to vector<1x8x8xf32>
    %299 = arith.subf %295, %298 : vector<1x8x8xf32>
    %300 = math.exp %299 : vector<1x8x8xf32>
    %cst_102 = arith.constant dense<0.000000e+00> : vector<1x8xf32>
    %301 = vector.multi_reduction <add>, %300, %cst_102 [2] : vector<1x8x8xf32> to vector<1x8xf32>
    %302 = vector.shape_cast %301 : vector<1x8xf32> to vector<1x8x1xf32>
    %303 = tpu.reciprocal %302 {approx = true} : vector<1x8x1xf32> -> vector<1x8x1xf32>
    %304 = vector.broadcast %303 : vector<1x8x1xf32> to vector<1x8x8xf32>
    %305 = arith.mulf %300, %304 : vector<1x8x8xf32>
    %306 = arith.truncf %305 : vector<1x8x8xf32> to vector<1x8x8xbf16>
    %cst_103 = arith.constant dense<0.000000e+00> : vector<1x8x128xf32>
    %307 = tpu.matmul %306, %291, %cst_103 {dimension_numbers = #tpu.dot_dimension_numbers<[2], [1], [1], [2], [0, 0, 0, 1, 1, 2], [0], [0]>} : vector<1x8x8xbf16>, vector<1x8x128xbf16>, vector<1x8x128xf32> -> vector<1x8x128xf32>
    %308 = vector.shape_cast %307 : vector<1x8x128xf32> to vector<8x128xf32>
    %309 = arith.truncf %308 : vector<8x128xf32> to vector<8x128xbf16>
    %310 = vector.extract_strided_slice %285 {offsets = [0, 0], sizes = [128, 128], strides = [1, 1]} : vector<512x128xbf16> to vector<128x128xbf16>
    %cst_104 = arith.constant dense<0.000000e+00> : vector<8x128xf32>
    %311 = tpu.matmul %309, %310, %cst_104 {dimension_numbers = #tpu.dot_dimension_numbers<[1], [0], [0], [1], [0, 0, 1, 1], [], []>} : vector<8x128xbf16>, vector<128x128xbf16>, vector<8x128xf32> -> vector<8x128xf32>
    %312 = vector.extract_strided_slice %282 {offsets = [0, 128], sizes = [8, 128], strides = [1, 1]} : vector<8x1536xbf16> to vector<8x128xbf16>
    %313 = vector.shape_cast %312 : vector<8x128xbf16> to vector<1x8x128xbf16>
    %314 = vector.extract_strided_slice %282 {offsets = [0, 640], sizes = [8, 128], strides = [1, 1]} : vector<8x1536xbf16> to vector<8x128xbf16>
    %315 = vector.shape_cast %314 : vector<8x128xbf16> to vector<1x8x128xbf16>
    %316 = vector.extract_strided_slice %282 {offsets = [0, 1152], sizes = [8, 128], strides = [1, 1]} : vector<8x1536xbf16> to vector<8x128xbf16>
    %317 = vector.shape_cast %316 : vector<8x128xbf16> to vector<1x8x128xbf16>
    %cst_105 = arith.constant dense<0.000000e+00> : vector<1x8x8xf32>
    %318 = tpu.matmul %313, %315, %cst_105 {dimension_numbers = #tpu.dot_dimension_numbers<[2], [2], [1], [1], [0, 0, 0, 1, 1, 1], [0], [0]>} : vector<1x8x128xbf16>, vector<1x8x128xbf16>, vector<1x8x8xf32> -> vector<1x8x8xf32>
    %cst_106 = arith.constant -1.000000e+30 : f32
    %319 = vector.shape_cast %283 : vector<8x8xi1> to vector<1x8x8xi1>
    %320 = vector.broadcast %cst_106 : f32 to vector<1x8x8xf32>
    %321 = arith.select %319, %320, %318 : vector<1x8x8xi1>, vector<1x8x8xf32>
    %cst_107 = arith.constant dense<0xFF800000> : vector<1x8xf32>
    %322 = vector.multi_reduction <maximumf>, %321, %cst_107 [2] : vector<1x8x8xf32> to vector<1x8xf32>
    %323 = vector.shape_cast %322 : vector<1x8xf32> to vector<1x8x1xf32>
    %324 = vector.broadcast %323 : vector<1x8x1xf32> to vector<1x8x8xf32>
    %325 = arith.subf %321, %324 : vector<1x8x8xf32>
    %326 = math.exp %325 : vector<1x8x8xf32>
    %cst_108 = arith.constant dense<0.000000e+00> : vector<1x8xf32>
    %327 = vector.multi_reduction <add>, %326, %cst_108 [2] : vector<1x8x8xf32> to vector<1x8xf32>
    %328 = vector.shape_cast %327 : vector<1x8xf32> to vector<1x8x1xf32>
    %329 = tpu.reciprocal %328 {approx = true} : vector<1x8x1xf32> -> vector<1x8x1xf32>
    %330 = vector.broadcast %329 : vector<1x8x1xf32> to vector<1x8x8xf32>
    %331 = arith.mulf %326, %330 : vector<1x8x8xf32>
    %332 = arith.truncf %331 : vector<1x8x8xf32> to vector<1x8x8xbf16>
    %cst_109 = arith.constant dense<0.000000e+00> : vector<1x8x128xf32>
    %333 = tpu.matmul %332, %317, %cst_109 {dimension_numbers = #tpu.dot_dimension_numbers<[2], [1], [1], [2], [0, 0, 0, 1, 1, 2], [0], [0]>} : vector<1x8x8xbf16>, vector<1x8x128xbf16>, vector<1x8x128xf32> -> vector<1x8x128xf32>
    %334 = vector.shape_cast %333 : vector<1x8x128xf32> to vector<8x128xf32>
    %335 = arith.truncf %334 : vector<8x128xf32> to vector<8x128xbf16>
    %336 = vector.extract_strided_slice %285 {offsets = [128, 0], sizes = [128, 128], strides = [1, 1]} : vector<512x128xbf16> to vector<128x128xbf16>
    %cst_110 = arith.constant dense<0.000000e+00> : vector<8x128xf32>
    %337 = tpu.matmul %335, %336, %cst_110 {dimension_numbers = #tpu.dot_dimension_numbers<[1], [0], [0], [1], [0, 0, 1, 1], [], []>} : vector<8x128xbf16>, vector<128x128xbf16>, vector<8x128xf32> -> vector<8x128xf32>
    %338 = arith.addf %311, %337 : vector<8x128xf32>
    %339 = vector.extract_strided_slice %282 {offsets = [0, 256], sizes = [8, 128], strides = [1, 1]} : vector<8x1536xbf16> to vector<8x128xbf16>
    %340 = vector.shape_cast %339 : vector<8x128xbf16> to vector<1x8x128xbf16>
    %341 = vector.extract_strided_slice %282 {offsets = [0, 768], sizes = [8, 128], strides = [1, 1]} : vector<8x1536xbf16> to vector<8x128xbf16>
    %342 = vector.shape_cast %341 : vector<8x128xbf16> to vector<1x8x128xbf16>
    %343 = vector.extract_strided_slice %282 {offsets = [0, 1280], sizes = [8, 128], strides = [1, 1]} : vector<8x1536xbf16> to vector<8x128xbf16>
    %344 = vector.shape_cast %343 : vector<8x128xbf16> to vector<1x8x128xbf16>
    %cst_111 = arith.constant dense<0.000000e+00> : vector<1x8x8xf32>
    %345 = tpu.matmul %340, %342, %cst_111 {dimension_numbers = #tpu.dot_dimension_numbers<[2], [2], [1], [1], [0, 0, 0, 1, 1, 1], [0], [0]>} : vector<1x8x128xbf16>, vector<1x8x128xbf16>, vector<1x8x8xf32> -> vector<1x8x8xf32>
    %cst_112 = arith.constant -1.000000e+30 : f32
    %346 = vector.shape_cast %283 : vector<8x8xi1> to vector<1x8x8xi1>
    %347 = vector.broadcast %cst_112 : f32 to vector<1x8x8xf32>
    %348 = arith.select %346, %347, %345 : vector<1x8x8xi1>, vector<1x8x8xf32>
    %cst_113 = arith.constant dense<0xFF800000> : vector<1x8xf32>
    %349 = vector.multi_reduction <maximumf>, %348, %cst_113 [2] : vector<1x8x8xf32> to vector<1x8xf32>
    %350 = vector.shape_cast %349 : vector<1x8xf32> to vector<1x8x1xf32>
    %351 = vector.broadcast %350 : vector<1x8x1xf32> to vector<1x8x8xf32>
    %352 = arith.subf %348, %351 : vector<1x8x8xf32>
    %353 = math.exp %352 : vector<1x8x8xf32>
    %cst_114 = arith.constant dense<0.000000e+00> : vector<1x8xf32>
    %354 = vector.multi_reduction <add>, %353, %cst_114 [2] : vector<1x8x8xf32> to vector<1x8xf32>
    %355 = vector.shape_cast %354 : vector<1x8xf32> to vector<1x8x1xf32>
    %356 = tpu.reciprocal %355 {approx = true} : vector<1x8x1xf32> -> vector<1x8x1xf32>
    %357 = vector.broadcast %356 : vector<1x8x1xf32> to vector<1x8x8xf32>
    %358 = arith.mulf %353, %357 : vector<1x8x8xf32>
    %359 = arith.truncf %358 : vector<1x8x8xf32> to vector<1x8x8xbf16>
    %cst_115 = arith.constant dense<0.000000e+00> : vector<1x8x128xf32>
    %360 = tpu.matmul %359, %344, %cst_115 {dimension_numbers = #tpu.dot_dimension_numbers<[2], [1], [1], [2], [0, 0, 0, 1, 1, 2], [0], [0]>} : vector<1x8x8xbf16>, vector<1x8x128xbf16>, vector<1x8x128xf32> -> vector<1x8x128xf32>
    %361 = vector.shape_cast %360 : vector<1x8x128xf32> to vector<8x128xf32>
    %362 = arith.truncf %361 : vector<8x128xf32> to vector<8x128xbf16>
    %363 = vector.extract_strided_slice %285 {offsets = [256, 0], sizes = [128, 128], strides = [1, 1]} : vector<512x128xbf16> to vector<128x128xbf16>
    %cst_116 = arith.constant dense<0.000000e+00> : vector<8x128xf32>
    %364 = tpu.matmul %362, %363, %cst_116 {dimension_numbers = #tpu.dot_dimension_numbers<[1], [0], [0], [1], [0, 0, 1, 1], [], []>} : vector<8x128xbf16>, vector<128x128xbf16>, vector<8x128xf32> -> vector<8x128xf32>
    %365 = arith.addf %338, %364 : vector<8x128xf32>
    %366 = vector.extract_strided_slice %282 {offsets = [0, 384], sizes = [8, 128], strides = [1, 1]} : vector<8x1536xbf16> to vector<8x128xbf16>
    %367 = vector.shape_cast %366 : vector<8x128xbf16> to vector<1x8x128xbf16>
    %368 = vector.extract_strided_slice %282 {offsets = [0, 896], sizes = [8, 128], strides = [1, 1]} : vector<8x1536xbf16> to vector<8x128xbf16>
    %369 = vector.shape_cast %368 : vector<8x128xbf16> to vector<1x8x128xbf16>
    %370 = vector.extract_strided_slice %282 {offsets = [0, 1408], sizes = [8, 128], strides = [1, 1]} : vector<8x1536xbf16> to vector<8x128xbf16>
    %371 = vector.shape_cast %370 : vector<8x128xbf16> to vector<1x8x128xbf16>
    %cst_117 = arith.constant dense<0.000000e+00> : vector<1x8x8xf32>
    %372 = tpu.matmul %367, %369, %cst_117 {dimension_numbers = #tpu.dot_dimension_numbers<[2], [2], [1], [1], [0, 0, 0, 1, 1, 1], [0], [0]>} : vector<1x8x128xbf16>, vector<1x8x128xbf16>, vector<1x8x8xf32> -> vector<1x8x8xf32>
    %cst_118 = arith.constant -1.000000e+30 : f32
    %373 = vector.shape_cast %283 : vector<8x8xi1> to vector<1x8x8xi1>
    %374 = vector.broadcast %cst_118 : f32 to vector<1x8x8xf32>
    %375 = arith.select %373, %374, %372 : vector<1x8x8xi1>, vector<1x8x8xf32>
    %cst_119 = arith.constant dense<0xFF800000> : vector<1x8xf32>
    %376 = vector.multi_reduction <maximumf>, %375, %cst_119 [2] : vector<1x8x8xf32> to vector<1x8xf32>
    %377 = vector.shape_cast %376 : vector<1x8xf32> to vector<1x8x1xf32>
    %378 = vector.broadcast %377 : vector<1x8x1xf32> to vector<1x8x8xf32>
    %379 = arith.subf %375, %378 : vector<1x8x8xf32>
    %380 = math.exp %379 : vector<1x8x8xf32>
    %cst_120 = arith.constant dense<0.000000e+00> : vector<1x8xf32>
    %381 = vector.multi_reduction <add>, %380, %cst_120 [2] : vector<1x8x8xf32> to vector<1x8xf32>
    %382 = vector.shape_cast %381 : vector<1x8xf32> to vector<1x8x1xf32>
    %383 = tpu.reciprocal %382 {approx = true} : vector<1x8x1xf32> -> vector<1x8x1xf32>
    %384 = vector.broadcast %383 : vector<1x8x1xf32> to vector<1x8x8xf32>
    %385 = arith.mulf %380, %384 : vector<1x8x8xf32>
    %386 = arith.truncf %385 : vector<1x8x8xf32> to vector<1x8x8xbf16>
    %cst_121 = arith.constant dense<0.000000e+00> : vector<1x8x128xf32>
    %387 = tpu.matmul %386, %371, %cst_121 {dimension_numbers = #tpu.dot_dimension_numbers<[2], [1], [1], [2], [0, 0, 0, 1, 1, 2], [0], [0]>} : vector<1x8x8xbf16>, vector<1x8x128xbf16>, vector<1x8x128xf32> -> vector<1x8x128xf32>
    %388 = vector.shape_cast %387 : vector<1x8x128xf32> to vector<8x128xf32>
    %389 = arith.truncf %388 : vector<8x128xf32> to vector<8x128xbf16>
    %390 = vector.extract_strided_slice %285 {offsets = [384, 0], sizes = [128, 128], strides = [1, 1]} : vector<512x128xbf16> to vector<128x128xbf16>
    %cst_122 = arith.constant dense<0.000000e+00> : vector<8x128xf32>
    %391 = tpu.matmul %389, %390, %cst_122 {dimension_numbers = #tpu.dot_dimension_numbers<[1], [0], [0], [1], [0, 0, 1, 1], [], []>} : vector<8x128xbf16>, vector<128x128xbf16>, vector<8x128xf32> -> vector<8x128xf32>
    %392 = arith.addf %365, %391 : vector<8x128xf32>
    %c1_123 = arith.constant 1 : index
    %c0_124 = arith.constant 0 : index
    %393 = vector.load %arg7[%c1_123, %c0_124] : memref<2x128xf32, #tpu.memory_space<vmem>>, vector<1x128xf32>
    %394 = vector.broadcast %393 : vector<1x128xf32> to vector<8x128xf32>
    %395 = arith.addf %392, %394 : vector<8x128xf32>
    %396 = arith.addf %395, %0 : vector<8x128xf32>
    %c1_125 = arith.constant 1 : index
    %c0_126 = arith.constant 0 : index
    %397 = vector.load %arg8[%c1_125, %c0_126] : memref<2x128xf32, #tpu.memory_space<vmem>>, vector<1x128xf32>
    %c1_127 = arith.constant 1 : index
    %c0_128 = arith.constant 0 : index
    %398 = vector.load %arg9[%c1_127, %c0_128] : memref<2x128xf32, #tpu.memory_space<vmem>>, vector<1x128xf32>
    %cst_129 = arith.constant dense<0.000000e+00> : vector<8xf32>
    %399 = vector.multi_reduction <add>, %396, %cst_129 [1] : vector<8x128xf32> to vector<8xf32>
    %400 = vector.shape_cast %399 : vector<8xf32> to vector<8x1xf32>
    %cst_130 = arith.constant 3.125000e-02 : f32
    %401 = vector.broadcast %cst_130 : f32 to vector<8x1xf32>
    %402 = arith.mulf %400, %401 : vector<8x1xf32>
    %403 = arith.mulf %396, %396 : vector<8x128xf32>
    %cst_131 = arith.constant dense<0.000000e+00> : vector<8xf32>
    %404 = vector.multi_reduction <add>, %403, %cst_131 [1] : vector<8x128xf32> to vector<8xf32>
    %405 = vector.shape_cast %404 : vector<8xf32> to vector<8x1xf32>
    %cst_132 = arith.constant 3.125000e-02 : f32
    %406 = vector.broadcast %cst_132 : f32 to vector<8x1xf32>
    %407 = arith.mulf %405, %406 : vector<8x1xf32>
    %408 = arith.mulf %402, %402 : vector<8x1xf32>
    %409 = arith.subf %407, %408 : vector<8x1xf32>
    %410 = vector.broadcast %402 : vector<8x1xf32> to vector<8x128xf32>
    %411 = arith.subf %396, %410 : vector<8x128xf32>
    %cst_133 = arith.constant 9.99999974E-6 : f32
    %412 = vector.broadcast %cst_133 : f32 to vector<8x1xf32>
    %413 = arith.addf %409, %412 : vector<8x1xf32>
    %414 = math.rsqrt %413 : vector<8x1xf32>
    %415 = vector.broadcast %414 : vector<8x1xf32> to vector<8x128xf32>
    %416 = arith.mulf %411, %415 : vector<8x128xf32>
    %417 = vector.broadcast %397 : vector<1x128xf32> to vector<8x128xf32>
    %418 = arith.mulf %416, %417 : vector<8x128xf32>
    %419 = vector.broadcast %398 : vector<1x128xf32> to vector<8x128xf32>
    %420 = arith.addf %418, %419 : vector<8x128xf32>
    %421 = arith.truncf %420 : vector<8x128xf32> to vector<8x128xbf16>
    %c1_134 = arith.constant 1 : index
    %c0_135 = arith.constant 0 : index
    %c0_136 = arith.constant 0 : index
    %422 = vector.load %arg10[%c1_134, %c0_135, %c0_136] : memref<2x128x384xbf16, #tpu.memory_space<vmem>>, vector<1x128x384xbf16>
    %423 = vector.shape_cast %422 : vector<1x128x384xbf16> to vector<128x384xbf16>
    %c1_137 = arith.constant 1 : index
    %c0_138 = arith.constant 0 : index
    %424 = vector.load %arg11[%c1_137, %c0_138] : memref<2x128xf32, #tpu.memory_space<vmem>>, vector<1x128xf32>
    %cst_139 = arith.constant dense<0.000000e+00> : vector<8x384xf32>
    %425 = tpu.matmul %421, %423, %cst_139 {dimension_numbers = #tpu.dot_dimension_numbers<[1], [0], [0], [1], [0, 0, 1, 1], [], []>} : vector<8x128xbf16>, vector<128x384xbf16>, vector<8x384xf32> -> vector<8x384xf32>
    %426 = vector.extract_strided_slice %425 {offsets = [0, 0], sizes = [8, 128], strides = [1, 1]} : vector<8x384xf32> to vector<8x128xf32>
    %427 = vector.extract_strided_slice %425 {offsets = [0, 128], sizes = [8, 128], strides = [1, 1]} : vector<8x384xf32> to vector<8x128xf32>
    %428 = vector.extract_strided_slice %425 {offsets = [0, 256], sizes = [8, 128], strides = [1, 1]} : vector<8x384xf32> to vector<8x128xf32>
    %c1_i32_140 = arith.constant 1 : i32
    %429 = tpu.dynamic_rotate %426 by %c1_i32_140 dim 0 : vector<8x128xf32>, i32 -> vector<8x128xf32>
    %cst_141 = arith.constant 0.000000e+00 : f32
    %430 = vector.shape_cast %3 : vector<8x1xi1> to vector<8x1xi1>
    %431 = vector.broadcast %430 : vector<8x1xi1> to vector<8x128xi1>
    %432 = vector.broadcast %cst_141 : f32 to vector<8x128xf32>
    %433 = arith.select %431, %429, %432 : vector<8x128xi1>, vector<8x128xf32>
    %c7_i32_142 = arith.constant 7 : i32
    %434 = tpu.dynamic_rotate %428 by %c7_i32_142 dim 0 : vector<8x128xf32>, i32 -> vector<8x128xf32>
    %cst_143 = arith.constant 0.000000e+00 : f32
    %435 = vector.shape_cast %5 : vector<8x1xi1> to vector<8x1xi1>
    %436 = vector.broadcast %435 : vector<8x1xi1> to vector<8x128xi1>
    %437 = vector.broadcast %cst_143 : f32 to vector<8x128xf32>
    %438 = arith.select %436, %434, %437 : vector<8x128xi1>, vector<8x128xf32>
    %439 = arith.addf %433, %427 : vector<8x128xf32>
    %440 = arith.addf %439, %438 : vector<8x128xf32>
    %441 = vector.broadcast %424 : vector<1x128xf32> to vector<8x128xf32>
    %442 = arith.addf %440, %441 : vector<8x128xf32>
    %cst_144 = arith.constant 5.000000e-01 : f32
    %443 = vector.broadcast %cst_144 : f32 to vector<8x128xf32>
    %444 = arith.mulf %443, %442 : vector<8x128xf32>
    %cst_145 = arith.constant 4.471500e-02 : f32
    %445 = vector.broadcast %cst_145 : f32 to vector<8x128xf32>
    %446 = arith.mulf %445, %442 : vector<8x128xf32>
    %447 = arith.mulf %446, %442 : vector<8x128xf32>
    %448 = arith.mulf %447, %442 : vector<8x128xf32>
    %449 = arith.addf %442, %448 : vector<8x128xf32>
    %cst_146 = arith.constant 0.797884583 : f32
    %450 = vector.broadcast %cst_146 : f32 to vector<8x128xf32>
    %451 = arith.mulf %450, %449 : vector<8x128xf32>
    %452 = math.tanh %451 : vector<8x128xf32>
    %cst_147 = arith.constant 1.000000e+00 : f32
    %453 = vector.broadcast %cst_147 : f32 to vector<8x128xf32>
    %454 = arith.addf %453, %452 : vector<8x128xf32>
    %455 = arith.mulf %444, %454 : vector<8x128xf32>
    %456 = arith.truncf %455 : vector<8x128xf32> to vector<8x128xbf16>
    %c1_148 = arith.constant 1 : index
    %c0_149 = arith.constant 0 : index
    %c0_150 = arith.constant 0 : index
    %457 = vector.load %arg12[%c1_148, %c0_149, %c0_150] : memref<2x128x384xbf16, #tpu.memory_space<vmem>>, vector<1x128x384xbf16>
    %458 = vector.shape_cast %457 : vector<1x128x384xbf16> to vector<128x384xbf16>
    %c1_151 = arith.constant 1 : index
    %c0_152 = arith.constant 0 : index
    %459 = vector.load %arg13[%c1_151, %c0_152] : memref<2x128xf32, #tpu.memory_space<vmem>>, vector<1x128xf32>
    %cst_153 = arith.constant dense<0.000000e+00> : vector<8x384xf32>
    %460 = tpu.matmul %456, %458, %cst_153 {dimension_numbers = #tpu.dot_dimension_numbers<[1], [0], [0], [1], [0, 0, 1, 1], [], []>} : vector<8x128xbf16>, vector<128x384xbf16>, vector<8x384xf32> -> vector<8x384xf32>
    %461 = vector.extract_strided_slice %460 {offsets = [0, 0], sizes = [8, 128], strides = [1, 1]} : vector<8x384xf32> to vector<8x128xf32>
    %462 = vector.extract_strided_slice %460 {offsets = [0, 128], sizes = [8, 128], strides = [1, 1]} : vector<8x384xf32> to vector<8x128xf32>
    %463 = vector.extract_strided_slice %460 {offsets = [0, 256], sizes = [8, 128], strides = [1, 1]} : vector<8x384xf32> to vector<8x128xf32>
    %c1_i32_154 = arith.constant 1 : i32
    %464 = tpu.dynamic_rotate %461 by %c1_i32_154 dim 0 : vector<8x128xf32>, i32 -> vector<8x128xf32>
    %cst_155 = arith.constant 0.000000e+00 : f32
    %465 = vector.shape_cast %3 : vector<8x1xi1> to vector<8x1xi1>
    %466 = vector.broadcast %465 : vector<8x1xi1> to vector<8x128xi1>
    %467 = vector.broadcast %cst_155 : f32 to vector<8x128xf32>
    %468 = arith.select %466, %464, %467 : vector<8x128xi1>, vector<8x128xf32>
    %c7_i32_156 = arith.constant 7 : i32
    %469 = tpu.dynamic_rotate %463 by %c7_i32_156 dim 0 : vector<8x128xf32>, i32 -> vector<8x128xf32>
    %cst_157 = arith.constant 0.000000e+00 : f32
    %470 = vector.shape_cast %5 : vector<8x1xi1> to vector<8x1xi1>
    %471 = vector.broadcast %470 : vector<8x1xi1> to vector<8x128xi1>
    %472 = vector.broadcast %cst_157 : f32 to vector<8x128xf32>
    %473 = arith.select %471, %469, %472 : vector<8x128xi1>, vector<8x128xf32>
    %474 = arith.addf %468, %462 : vector<8x128xf32>
    %475 = arith.addf %474, %473 : vector<8x128xf32>
    %476 = vector.broadcast %459 : vector<1x128xf32> to vector<8x128xf32>
    %477 = arith.addf %475, %476 : vector<8x128xf32>
    %cst_158 = arith.constant 5.000000e-01 : f32
    %478 = vector.broadcast %cst_158 : f32 to vector<8x128xf32>
    %479 = arith.mulf %478, %477 : vector<8x128xf32>
    %cst_159 = arith.constant 4.471500e-02 : f32
    %480 = vector.broadcast %cst_159 : f32 to vector<8x128xf32>
    %481 = arith.mulf %480, %477 : vector<8x128xf32>
    %482 = arith.mulf %481, %477 : vector<8x128xf32>
    %483 = arith.mulf %482, %477 : vector<8x128xf32>
    %484 = arith.addf %477, %483 : vector<8x128xf32>
    %cst_160 = arith.constant 0.797884583 : f32
    %485 = vector.broadcast %cst_160 : f32 to vector<8x128xf32>
    %486 = arith.mulf %485, %484 : vector<8x128xf32>
    %487 = math.tanh %486 : vector<8x128xf32>
    %cst_161 = arith.constant 1.000000e+00 : f32
    %488 = vector.broadcast %cst_161 : f32 to vector<8x128xf32>
    %489 = arith.addf %488, %487 : vector<8x128xf32>
    %490 = arith.mulf %479, %489 : vector<8x128xf32>
    %491 = arith.addf %490, %396 : vector<8x128xf32>
    %492 = arith.truncf %249 : vector<8x128xf32> to vector<8x128xbf16>
    %c0_162 = arith.constant 0 : index
    %c0_163 = arith.constant 0 : index
    %493 = vector.load %arg14[%c0_162, %c0_163] : memref<128x128xbf16, #tpu.memory_space<vmem>>, vector<128x128xbf16>
    %cst_164 = arith.constant dense<0.000000e+00> : vector<8x128xf32>
    %494 = tpu.matmul %492, %493, %cst_164 {dimension_numbers = #tpu.dot_dimension_numbers<[1], [0], [0], [1], [0, 0, 1, 1], [], []>} : vector<8x128xbf16>, vector<128x128xbf16>, vector<8x128xf32> -> vector<8x128xf32>
    %495 = arith.truncf %491 : vector<8x128xf32> to vector<8x128xbf16>
    %c0_165 = arith.constant 0 : index
    %c0_166 = arith.constant 0 : index
    %496 = vector.load %arg15[%c0_165, %c0_166] : memref<128x128xbf16, #tpu.memory_space<vmem>>, vector<128x128xbf16>
    %cst_167 = arith.constant dense<0.000000e+00> : vector<8x128xf32>
    %497 = tpu.matmul %495, %496, %cst_167 {dimension_numbers = #tpu.dot_dimension_numbers<[1], [0], [0], [1], [0, 0, 1, 1], [], []>} : vector<8x128xbf16>, vector<128x128xbf16>, vector<8x128xf32> -> vector<8x128xf32>
    %498 = arith.addf %494, %497 : vector<8x128xf32>
    %c0_168 = arith.constant 0 : index
    %c0_169 = arith.constant 0 : index
    %499 = vector.load %arg16[%c0_168, %c0_169] : memref<1x128xf32, #tpu.memory_space<vmem>>, vector<1x128xf32>
    %500 = vector.broadcast %499 : vector<1x128xf32> to vector<8x128xf32>
    %501 = arith.addf %498, %500 : vector<8x128xf32>
    %c0_170 = arith.constant 0 : index
    %c0_171 = arith.constant 0 : index
    %502 = vector.load %arg17[%c0_170, %c0_171] : memref<1x128xf32, #tpu.memory_space<vmem>>, vector<1x128xf32>
    %c0_172 = arith.constant 0 : index
    %c0_173 = arith.constant 0 : index
    %503 = vector.load %arg18[%c0_172, %c0_173] : memref<1x128xf32, #tpu.memory_space<vmem>>, vector<1x128xf32>
    %cst_174 = arith.constant dense<0.000000e+00> : vector<8xf32>
    %504 = vector.multi_reduction <add>, %501, %cst_174 [1] : vector<8x128xf32> to vector<8xf32>
    %505 = vector.shape_cast %504 : vector<8xf32> to vector<8x1xf32>
    %cst_175 = arith.constant 3.125000e-02 : f32
    %506 = vector.broadcast %cst_175 : f32 to vector<8x1xf32>
    %507 = arith.mulf %505, %506 : vector<8x1xf32>
    %508 = arith.mulf %501, %501 : vector<8x128xf32>
    %cst_176 = arith.constant dense<0.000000e+00> : vector<8xf32>
    %509 = vector.multi_reduction <add>, %508, %cst_176 [1] : vector<8x128xf32> to vector<8xf32>
    %510 = vector.shape_cast %509 : vector<8xf32> to vector<8x1xf32>
    %cst_177 = arith.constant 3.125000e-02 : f32
    %511 = vector.broadcast %cst_177 : f32 to vector<8x1xf32>
    %512 = arith.mulf %510, %511 : vector<8x1xf32>
    %513 = arith.mulf %507, %507 : vector<8x1xf32>
    %514 = arith.subf %512, %513 : vector<8x1xf32>
    %515 = vector.broadcast %507 : vector<8x1xf32> to vector<8x128xf32>
    %516 = arith.subf %501, %515 : vector<8x128xf32>
    %cst_178 = arith.constant 9.99999974E-6 : f32
    %517 = vector.broadcast %cst_178 : f32 to vector<8x1xf32>
    %518 = arith.addf %514, %517 : vector<8x1xf32>
    %519 = math.rsqrt %518 : vector<8x1xf32>
    %520 = vector.broadcast %519 : vector<8x1xf32> to vector<8x128xf32>
    %521 = arith.mulf %516, %520 : vector<8x128xf32>
    %522 = vector.broadcast %502 : vector<1x128xf32> to vector<8x128xf32>
    %523 = arith.mulf %521, %522 : vector<8x128xf32>
    %524 = vector.broadcast %503 : vector<1x128xf32> to vector<8x128xf32>
    %525 = arith.addf %523, %524 : vector<8x128xf32>
    %c0_179 = arith.constant 0 : index
    %c0_180 = arith.constant 0 : index
    %526 = vector.load %arg19[%c0_179, %c0_180] : memref<8x128xf32, #tpu.memory_space<vmem>>, vector<8x128xf32>
    tpu.vector_store %arg19[%c0_179, %c0_180], %525 {strides = array<i32>} : memref<8x128xf32, #tpu.memory_space<vmem>>, vector<8x128xf32>,
    return
  }
  func.func @transform_0(%arg0: i32) -> (i32, i32) {
    %c0_i32 = arith.constant 0 : i32
    %c0_i32_0 = arith.constant 0 : i32
    return %arg0, %c0_i32 : i32, i32
  }
  func.func @transform_1(%arg0: i32) -> (i32, i32) {
    %c0_i32 = arith.constant 0 : i32
    %c0_i32_0 = arith.constant 0 : i32
    %c0_i32_1 = arith.constant 0 : i32
    return %c0_i32, %c0_i32_0 : i32, i32
  }
  func.func @transform_2(%arg0: i32) -> (i32, i32) {
    %c0_i32 = arith.constant 0 : i32
    %c0_i32_0 = arith.constant 0 : i32
    %c0_i32_1 = arith.constant 0 : i32
    return %c0_i32, %c0_i32_0 : i32, i32
  }
  func.func @transform_3(%arg0: i32) -> (i32, i32, i32) {
    %c0_i32 = arith.constant 0 : i32
    %c0_i32_0 = arith.constant 0 : i32
    %c0_i32_1 = arith.constant 0 : i32
    %c0_i32_2 = arith.constant 0 : i32
    return %c0_i32, %c0_i32_0, %c0_i32_1 : i32, i32, i32
  }
  func.func @transform_4(%arg0: i32) -> (i32, i32, i32) {
    %c0_i32 = arith.constant 0 : i32
    %c0_i32_0 = arith.constant 0 : i32
    %c0_i32_1 = arith.constant 0 : i32
    %c0_i32_2 = arith.constant 0 : i32
    return %c0_i32, %c0_i32_0, %c0_i32_1 : i32, i32, i32
  }
  func.func @transform_5(%arg0: i32) -> (i32, i32, i32) {
    %c0_i32 = arith.constant 0 : i32
    %c0_i32_0 = arith.constant 0 : i32
    %c0_i32_1 = arith.constant 0 : i32
    %c0_i32_2 = arith.constant 0 : i32
    return %c0_i32, %c0_i32_0, %c0_i32_1 : i32, i32, i32
  }
  func.func @transform_6(%arg0: i32) -> (i32, i32) {
    %c0_i32 = arith.constant 0 : i32
    %c0_i32_0 = arith.constant 0 : i32
    %c0_i32_1 = arith.constant 0 : i32
    return %c0_i32, %c0_i32_0 : i32, i32
  }
  func.func @transform_7(%arg0: i32) -> (i32, i32) {
    %c0_i32 = arith.constant 0 : i32
    %c0_i32_0 = arith.constant 0 : i32
    %c0_i32_1 = arith.constant 0 : i32
    return %c0_i32, %c0_i32_0 : i32, i32
  }
  func.func @transform_8(%arg0: i32) -> (i32, i32) {
    %c0_i32 = arith.constant 0 : i32
    %c0_i32_0 = arith.constant 0 : i32
    %c0_i32_1 = arith.constant 0 : i32
    return %c0_i32, %c0_i32_0 : i32, i32
  }
  func.func @transform_9(%arg0: i32) -> (i32, i32, i32) {
    %c0_i32 = arith.constant 0 : i32
    %c0_i32_0 = arith.constant 0 : i32
    %c0_i32_1 = arith.constant 0 : i32
    %c0_i32_2 = arith.constant 0 : i32
    return %c0_i32, %c0_i32_0, %c0_i32_1 : i32, i32, i32
  }
  func.func @transform_10(%arg0: i32) -> (i32, i32) {
    %c0_i32 = arith.constant 0 : i32
    %c0_i32_0 = arith.constant 0 : i32
    %c0_i32_1 = arith.constant 0 : i32
    return %c0_i32, %c0_i32_0 : i32, i32
  }
  func.func @transform_11(%arg0: i32) -> (i32, i32, i32) {
    %c0_i32 = arith.constant 0 : i32
    %c0_i32_0 = arith.constant 0 : i32
    %c0_i32_1 = arith.constant 0 : i32
    %c0_i32_2 = arith.constant 0 : i32
    return %c0_i32, %c0_i32_0, %c0_i32_1 : i32, i32, i32
  }
  func.func @transform_12(%arg0: i32) -> (i32, i32) {
    %c0_i32 = arith.constant 0 : i32
    %c0_i32_0 = arith.constant 0 : i32
    %c0_i32_1 = arith.constant 0 : i32
    return %c0_i32, %c0_i32_0 : i32, i32
  }
  func.func @transform_13(%arg0: i32) -> (i32, i32) {
    %c0_i32 = arith.constant 0 : i32
    %c0_i32_0 = arith.constant 0 : i32
    %c0_i32_1 = arith.constant 0 : i32
    return %c0_i32, %c0_i32_0 : i32, i32
  }
  func.func @transform_14(%arg0: i32) -> (i32, i32) {
    %c0_i32 = arith.constant 0 : i32
    %c0_i32_0 = arith.constant 0 : i32
    %c0_i32_1 = arith.constant 0 : i32
    return %c0_i32, %c0_i32_0 : i32, i32
  }
  func.func @transform_15(%arg0: i32) -> (i32, i32) {
    %c0_i32 = arith.constant 0 : i32
    %c0_i32_0 = arith.constant 0 : i32
    %c0_i32_1 = arith.constant 0 : i32
    return %c0_i32, %c0_i32_0 : i32, i32
  }
  func.func @transform_16(%arg0: i32) -> (i32, i32) {
    %c0_i32 = arith.constant 0 : i32
    %c0_i32_0 = arith.constant 0 : i32
    %c0_i32_1 = arith.constant 0 : i32
    return %c0_i32, %c0_i32_0 : i32, i32
  }
  func.func @transform_17(%arg0: i32) -> (i32, i32) {
    %c0_i32 = arith.constant 0 : i32
    %c0_i32_0 = arith.constant 0 : i32
    %c0_i32_1 = arith.constant 0 : i32
    return %c0_i32, %c0_i32_0 : i32, i32
  }
  func.func @transform_18(%arg0: i32) -> (i32, i32) {
    %c0_i32 = arith.constant 0 : i32
    %c0_i32_0 = arith.constant 0 : i32
    return %arg0, %c0_i32 : i32, i32
  }
}

</mosaic_0001>

<llo_original>
// kernel: tpu_custom_call.1
$region0: #{tpu_custom_call.1}
  #allocation0 [shape = 'u32[]', space=smem, size = 0x4, offset = 0x4, fixed_abs, tag = 'smem constant byte address 0x4 - core index']
  #allocation1 [shape = 'u32[72,128]{1,0:T(1,128)}', space=vmem, size = 0x9000, scoped, tag = 'internal scratch']
  %s0 = inlined_call_operand.hbm [shape: f32[16,128], index: 0, kind: input, shape index: {}]
  %s1 = inlined_call_operand.hbm [shape: f32[2,128], index: 1, kind: input, shape index: {}]
  %s2 = inlined_call_operand.hbm [shape: f32[2,128], index: 2, kind: input, shape index: {}]
  %s3 = inlined_call_operand.hbm [shape: bf16[2,128,1536], index: 3, kind: input, shape index: {}]
  %s4 = inlined_call_operand.hbm [shape: f32[2,1,1536], index: 4, kind: input, shape index: {}]
  %s5 = inlined_call_operand.hbm [shape: bf16[2,512,128], index: 5, kind: input, shape index: {}]
  %s6 = inlined_call_operand.vmem [shape: f32[2,128], index: 6, kind: input, shape index: {}]
  %s7 = inlined_call_operand.vmem [shape: f32[2,128], index: 7, kind: input, shape index: {}]
  %s8 = inlined_call_operand.vmem [shape: f32[2,128], index: 8, kind: input, shape index: {}]
  %s9 = inlined_call_operand.hbm [shape: bf16[2,128,384], index: 9, kind: input, shape index: {}]
  %s10 = inlined_call_operand.vmem [shape: f32[2,128], index: 10, kind: input, shape index: {}]
  %s11 = inlined_call_operand.hbm [shape: bf16[2,128,384], index: 11, kind: input, shape index: {}]
  %s12 = inlined_call_operand.vmem [shape: f32[2,128], index: 12, kind: input, shape index: {}]
  %s13 = inlined_call_operand.hbm [shape: bf16[128,128], index: 13, kind: input, shape index: {}]
  %s14 = inlined_call_operand.hbm [shape: bf16[128,128], index: 14, kind: input, shape index: {}]
  %s15 = inlined_call_operand.vmem [shape: f32[1,128], index: 15, kind: input, shape index: {}]
  %s16 = inlined_call_operand.vmem [shape: f32[1,128], index: 16, kind: input, shape index: {}]
  %s17 = inlined_call_operand.vmem [shape: f32[1,128], index: 17, kind: input, shape index: {}]
  %s18 = inlined_call_operand.hbm [shape: f32[16,128], index: 18, kind: output, shape index: {}]
  %s19 = sld [smem:[#allocation0]]
  $region145: #{tpu_custom_call.1} parent=0
    _
  %s21 = ssub.s32 1, %s19
  %s22 = scalar_select 0, %s21, %s19
  $region1: #{tpu_custom_call.1} parent=0
    #allocation2 [shape = 'u8[8192]{0}', space=vmem, size = 0x2000, scoped, tag = 'input window, operand 0']
    #allocation3 [shape = 's32[2]{0}', space=sflag, size = 0x8, scoped, tag = 'scoped memory for tpu_custom_call.1']
    #allocation4 [shape = 's32[2]{0}', space=sflag, size = 0x8, scoped, tag = 'scoped memory for tpu_custom_call.1']
    #allocation5 [shape = 'u8[1024]{0}', space=vmem, size = 0x400, scoped, tag = 'input window, operand 1, single buffered']
    #allocation6 [shape = 's32[1]{0}', space=sflag, size = 0x4, scoped, tag = 'scoped memory for tpu_custom_call.1']
    #allocation7 [shape = 'u8[1024]{0}', space=vmem, size = 0x400, scoped, tag = 'input window, operand 2, single buffered']
    #allocation8 [shape = 'u8[786432]{0}', space=vmem, size = 0xc0000, scoped, tag = 'input window, operand 3, single buffered']
    #allocation9 [shape = 's32[1]{0}', space=sflag, size = 0x4, scoped, tag = 'scoped memory for tpu_custom_call.1']
    #allocation10 [shape = 'u8[12288]{0}', space=vmem, size = 0x3000, scoped, tag = 'input window, operand 4, single buffered']
    #allocation11 [shape = 'u8[262144]{0}', space=vmem, size = 0x40000, scoped, tag = 'input window, operand 5, single buffered']
    #allocation12 [shape = 's32[1]{0}', space=sflag, size = 0x4, scoped, tag = 'scoped memory for tpu_custom_call.1']
    #allocation13 [shape = 'u8[196608]{0}', space=vmem, size = 0x30000, scoped, tag = 'input window, operand 9, single buffered']
    #allocation14 [shape = 'u8[196608]{0}', space=vmem, size = 0x30000, scoped, tag = 'input window, operand 11, single buffered']
    #allocation15 [shape = 's32[1]{0}', space=sflag, size = 0x4, scoped, tag = 'scoped memory for tpu_custom_call.1']
    #allocation16 [shape = 'u8[32768]{0}', space=vmem, size = 0x8000, scoped, tag = 'input window, operand 13, single buffered']
    #allocation17 [shape = 'u8[32768]{0}', space=vmem, size = 0x8000, scoped, tag = 'input window, operand 14, single buffered']
    #allocation18 [shape = 's32[1]{0}', space=sflag, size = 0x4, scoped, tag = 'scoped memory for tpu_custom_call.1']
    #allocation19 [shape = 'u8[8192]{0}', space=vmem, size = 0x2000, scoped, tag = 'output window, operand 0']
    %23 = vsyncpa [#allocation3], 0
    %s24 = scalar_lea.sflag [#allocation3], 1
    %25 = vsyncpa %s24, 0
    %26 = vsyncpa [#allocation6], 0
    %27 = vsyncpa [#allocation9], 0
    %28 = vsyncpa [#allocation12], 0
    %29 = vsyncpa [#allocation15], 0
    %30 = vsyncpa [#allocation18], 0
    %31 = vsyncpa [#allocation4], 0
    %s32 = scalar_lea.sflag [#allocation4], 1
    %33 = vsyncpa %s32, 0
    loop: start=0, step=1, limit=4
    $region2: #{tpu_custom_call.1} parent=1 // loop_pre_header
      _
    $region3: #{tpu_custom_call.1} parent=1 // loop_header
      %s35 = sphi 0, %s39
      %p36 = scmp.ge.s32.totalorder %s35, 4
      %s45 = sphi 0, %s47
      %s48 = sphi 0, %s45
      %s49 = sphi 0, %s48
      %s65 = sphi 0, %s49
      %s69 = sphi 0, %s69
      %s71 = sphi 0, %s69
      %s72 = sphi 0, %s71
      %s86 = sphi 0, %s72
      %s90 = sphi 0, %s90
      %s92 = sphi 0, %s90
      %s93 = sphi 0, %s92
      %s107 = sphi 0, %s93
      %s111 = sphi 0, %s111
      %s113 = sphi 0, %s111
      %s114 = sphi 0, %s113
      %s128 = sphi 0, %s114
      %s132 = sphi 0, %s132
      %s134 = sphi 0, %s132
      %s135 = sphi 0, %s134
      %s149 = sphi 0, %s135
      %s153 = sphi 0, %s153
      %s155 = sphi 0, %s153
      %s156 = sphi 0, %s155
      %s170 = sphi 0, %s156
      %s174 = sphi 0, %s174
      %s176 = sphi 0, %s174
      %s177 = sphi 0, %s176
      %s191 = sphi 0, %s177
      %s195 = sphi 0, %s195
      %s197 = sphi 0, %s195
      %s198 = sphi 0, %s197
      %s212 = sphi 0, %s198
      %s216 = sphi 0, %s216
      %s218 = sphi 0, %s216
      %s219 = sphi 0, %s218
      %s233 = sphi 0, %s219
      %s237 = sphi 0, %s237
      %s239 = sphi 0, %s237
      %s240 = sphi 0, %s239
      %s254 = sphi 0, %s240
      %s258 = sphi 0, %s258
      %s260 = sphi 0, %s258
      %s261 = sphi 0, %s260
      %s275 = sphi 0, %s261
      %s279 = sphi 0, %s279
      %s281 = sphi 0, %s279
      %s282 = sphi 0, %s281
      %s296 = sphi 0, %s282
      %s300 = sphi 0, %s300
      %s302 = sphi 0, %s300
      %s303 = sphi 0, %s302
      %s317 = sphi 0, %s303
      %s321 = sphi 0, %s321
      %s323 = sphi 0, %s321
      %s324 = sphi 0, %s323
      %s338 = sphi 0, %s324
      %s342 = sphi 0, %s342
      %s344 = sphi 0, %s342
      %s345 = sphi 0, %s344
      %s359 = sphi 0, %s345
      %s363 = sphi 0, %s363
      %s365 = sphi 0, %s363
      %s366 = sphi 0, %s365
      %s380 = sphi 0, %s366
      %s384 = sphi 0, %s384
      %s386 = sphi 0, %s384
      %s387 = sphi 0, %s386
      %s401 = sphi 0, %s387
      %s405 = sphi 0, %s405
      %s407 = sphi 0, %s405
      %s408 = sphi 0, %s407
      %s422 = sphi 0, %s408
      %s428 = sphi 0, %s430
      %s431 = sphi 0, %s428
      %s432 = sphi 0, %s431
      %s448 = sphi 0, %s432
    $region4: #{tpu_custom_call.1} parent=1 // loop_header_branch
      %38 = sbr.rel (%p36) target = $region8
    $region5: #{tpu_custom_call.1} parent=1 // loop_body
      %s40 = ssub.s32 %s35, 1
      %s41 = ssub.s32 %s35, 2
      %s42 = sadd.s32 %s35, 1
      %s43 = ssub.s32 %s35, %s42
      %p44 = scmp.eq.s32.totalorder %s43, 0
      %s46 = sadd.s32 %s45, 1
      %s47 = scalar_select %p44, %s45, %s46
      %p50 = pneg %p44
      %p51 = scmp.eq.s32.totalorder %s35, 1
      %p52 = por %p50, %p51
      %p53 = scmp.ne.s32.totalorder %s45, %s48
      %p54 = scmp.eq.s32.totalorder %s35, 0
      %p55 = por %p53, %p54
      %p56 = scmp.ne.s32.totalorder %s45, %s48
      %p57 = scmp.eq.s32.totalorder %s40, 1
      %p58 = por %p56, %p57
      %p59 = scmp.ne.s32.totalorder %s48, %s49
      %p60 = scmp.eq.s32.totalorder %s40, 0
      %p61 = por %p59, %p60
      %p62 = scmp.ne.s32.totalorder %s48, %s49
      %p63 = scmp.eq.s32.totalorder %s41, 1
      %p64 = por %p62, %p63
      %p66 = scmp.ne.s32.totalorder %s49, %s65
      %p67 = scmp.eq.s32.totalorder %s41, 0
      %p68 = por %p66, %p67
      %s70 = sadd.s32 %s69, 1
      %p73 = scmp.eq.s32.totalorder %s35, 1
      %p74 = scmp.ne.s32.totalorder %s69, %s71
      %p75 = scmp.eq.s32.totalorder %s35, 0
      %p76 = por %p74, %p75
      %p77 = scmp.ne.s32.totalorder %s69, %s71
      %p78 = scmp.eq.s32.totalorder %s40, 1
      %p79 = por %p77, %p78
      %p80 = scmp.ne.s32.totalorder %s71, %s72
      %p81 = scmp.eq.s32.totalorder %s40, 0
      %p82 = por %p80, %p81
      %p83 = scmp.ne.s32.totalorder %s71, %s72
      %p84 = scmp.eq.s32.totalorder %s41, 1
      %p85 = por %p83, %p84
      %p87 = scmp.ne.s32.totalorder %s72, %s86
      %p88 = scmp.eq.s32.totalorder %s41, 0
      %p89 = por %p87, %p88
      %s91 = sadd.s32 %s90, 1
      %p94 = scmp.eq.s32.totalorder %s35, 1
      %p95 = scmp.ne.s32.totalorder %s90, %s92
      %p96 = scmp.eq.s32.totalorder %s35, 0
      %p97 = por %p95, %p96
      %p98 = scmp.ne.s32.totalorder %s90, %s92
      %p99 = scmp.eq.s32.totalorder %s40, 1
      %p100 = por %p98, %p99
      %p101 = scmp.ne.s32.totalorder %s92, %s93
      %p102 = scmp.eq.s32.totalorder %s40, 0
      %p103 = por %p101, %p102
      %p104 = scmp.ne.s32.totalorder %s92, %s93
      %p105 = scmp.eq.s32.totalorder %s41, 1
      %p106 = por %p104, %p105
      %p108 = scmp.ne.s32.totalorder %s93, %s107
      %p109 = scmp.eq.s32.totalorder %s41, 0
      %p110 = por %p108, %p109
      %s112 = sadd.s32 %s111, 1
      %p115 = scmp.eq.s32.totalorder %s35, 1
      %p116 = scmp.ne.s32.totalorder %s111, %s113
      %p117 = scmp.eq.s32.totalorder %s35, 0
      %p118 = por %p116, %p117
      %p119 = scmp.ne.s32.totalorder %s111, %s113
      %p120 = scmp.eq.s32.totalorder %s40, 1
      %p121 = por %p119, %p120
      %p122 = scmp.ne.s32.totalorder %s113, %s114
      %p123 = scmp.eq.s32.totalorder %s40, 0
      %p124 = por %p122, %p123
      %p125 = scmp.ne.s32.totalorder %s113, %s114
      %p126 = scmp.eq.s32.totalorder %s41, 1
      %p127 = por %p125, %p126
      %p129 = scmp.ne.s32.totalorder %s114, %s128
      %p130 = scmp.eq.s32.totalorder %s41, 0
      %p131 = por %p129, %p130
      %s133 = sadd.s32 %s132, 1
      %p136 = scmp.eq.s32.totalorder %s35, 1
      %p137 = scmp.ne.s32.totalorder %s132, %s134
      %p138 = scmp.eq.s32.totalorder %s35, 0
      %p139 = por %p137, %p138
      %p140 = scmp.ne.s32.totalorder %s132, %s134
      %p141 = scmp.eq.s32.totalorder %s40, 1
      %p142 = por %p140, %p141
      %p143 = scmp.ne.s32.totalorder %s134, %s135
      %p144 = scmp.eq.s32.totalorder %s40, 0
      %p145 = por %p143, %p144
      %p146 = scmp.ne.s32.totalorder %s134, %s135
      %p147 = scmp.eq.s32.totalorder %s41, 1
      %p148 = por %p146, %p147
      %p150 = scmp.ne.s32.totalorder %s135, %s149
      %p151 = scmp.eq.s32.totalorder %s41, 0
      %p152 = por %p150, %p151
      %s154 = sadd.s32 %s153, 1
      %p157 = scmp.eq.s32.totalorder %s35, 1
      %p158 = scmp.ne.s32.totalorder %s153, %s155
      %p159 = scmp.eq.s32.totalorder %s35, 0
      %p160 = por %p158, %p159
      %p161 = scmp.ne.s32.totalorder %s153, %s155
      %p162 = scmp.eq.s32.totalorder %s40, 1
      %p163 = por %p161, %p162
      %p164 = scmp.ne.s32.totalorder %s155, %s156
      %p165 = scmp.eq.s32.totalorder %s40, 0
      %p166 = por %p164, %p165
      %p167 = scmp.ne.s32.totalorder %s155, %s156
      %p168 = scmp.eq.s32.totalorder %s41, 1
      %p169 = por %p167, %p168
      %p171 = scmp.ne.s32.totalorder %s156, %s170
      %p172 = scmp.eq.s32.totalorder %s41, 0
      %p173 = por %p171, %p172
      %s175 = sadd.s32 %s174, 1
      %p178 = scmp.eq.s32.totalorder %s35, 1
      %p179 = scmp.ne.s32.totalorder %s174, %s176
      %p180 = scmp.eq.s32.totalorder %s35, 0
      %p181 = por %p179, %p180
      %p182 = scmp.ne.s32.totalorder %s174, %s176
      %p183 = scmp.eq.s32.totalorder %s40, 1
      %p184 = por %p182, %p183
      %p185 = scmp.ne.s32.totalorder %s176, %s177
      %p186 = scmp.eq.s32.totalorder %s40, 0
      %p187 = por %p185, %p186
      %p188 = scmp.ne.s32.totalorder %s176, %s177
      %p189 = scmp.eq.s32.totalorder %s41, 1
      %p190 = por %p188, %p189
      %p192 = scmp.ne.s32.totalorder %s177, %s191
      %p193 = scmp.eq.s32.totalorder %s41, 0
      %p194 = por %p192, %p193
      %s196 = sadd.s32 %s195, 1
      %p199 = scmp.eq.s32.totalorder %s35, 1
      %p200 = scmp.ne.s32.totalorder %s195, %s197
      %p201 = scmp.eq.s32.totalorder %s35, 0
      %p202 = por %p200, %p201
      %p203 = scmp.ne.s32.totalorder %s195, %s197
      %p204 = scmp.eq.s32.totalorder %s40, 1
      %p205 = por %p203, %p204
      %p206 = scmp.ne.s32.totalorder %s197, %s198
      %p207 = scmp.eq.s32.totalorder %s40, 0
      %p208 = por %p206, %p207
      %p209 = scmp.ne.s32.totalorder %s197, %s198
      %p210 = scmp.eq.s32.totalorder %s41, 1
      %p211 = por %p209, %p210
      %p213 = scmp.ne.s32.totalorder %s198, %s212
      %p214 = scmp.eq.s32.totalorder %s41, 0
      %p215 = por %p213, %p214
      %s217 = sadd.s32 %s216, 1
      %p220 = scmp.eq.s32.totalorder %s35, 1
      %p221 = scmp.ne.s32.totalorder %s216, %s218
      %p222 = scmp.eq.s32.totalorder %s35, 0
      %p223 = por %p221, %p222
      %p224 = scmp.ne.s32.totalorder %s216, %s218
      %p225 = scmp.eq.s32.totalorder %s40, 1
      %p226 = por %p224, %p225
      %p227 = scmp.ne.s32.totalorder %s218, %s219
      %p228 = scmp.eq.s32.totalorder %s40, 0
      %p229 = por %p227, %p228
      %p230 = scmp.ne.s32.totalorder %s218, %s219
      %p231 = scmp.eq.s32.totalorder %s41, 1
      %p232 = por %p230, %p231
      %p234 = scmp.ne.s32.totalorder %s219, %s233
      %p235 = scmp.eq.s32.totalorder %s41, 0
      %p236 = por %p234, %p235
      %s238 = sadd.s32 %s237, 1
      %p241 = scmp.eq.s32.totalorder %s35, 1
      %p242 = scmp.ne.s32.totalorder %s237, %s239
      %p243 = scmp.eq.s32.totalorder %s35, 0
      %p244 = por %p242, %p243
      %p245 = scmp.ne.s32.totalorder %s237, %s239
      %p246 = scmp.eq.s32.totalorder %s40, 1
      %p247 = por %p245, %p246
      %p248 = scmp.ne.s32.totalorder %s239, %s240
      %p249 = scmp.eq.s32.totalorder %s40, 0
      %p250 = por %p248, %p249
      %p251 = scmp.ne.s32.totalorder %s239, %s240
      %p252 = scmp.eq.s32.totalorder %s41, 1
      %p253 = por %p251, %p252
      %p255 = scmp.ne.s32.totalorder %s240, %s254
      %p256 = scmp.eq.s32.totalorder %s41, 0
      %p257 = por %p255, %p256
      %s259 = sadd.s32 %s258, 1
      %p262 = scmp.eq.s32.totalorder %s35, 1
      %p263 = scmp.ne.s32.totalorder %s258, %s260
      %p264 = scmp.eq.s32.totalorder %s35, 0
      %p265 = por %p263, %p264
      %p266 = scmp.ne.s32.totalorder %s258, %s260
      %p267 = scmp.eq.s32.totalorder %s40, 1
      %p268 = por %p266, %p267
      %p269 = scmp.ne.s32.totalorder %s260, %s261
      %p270 = scmp.eq.s32.totalorder %s40, 0
      %p271 = por %p269, %p270
      %p272 = scmp.ne.s32.totalorder %s260, %s261
      %p273 = scmp.eq.s32.totalorder %s41, 1
      %p274 = por %p272, %p273
      %p276 = scmp.ne.s32.totalorder %s261, %s275
      %p277 = scmp.eq.s32.totalorder %s41, 0
      %p278 = por %p276, %p277
      %s280 = sadd.s32 %s279, 1
      %p283 = scmp.eq.s32.totalorder %s35, 1
      %p284 = scmp.ne.s32.totalorder %s279, %s281
      %p285 = scmp.eq.s32.totalorder %s35, 0
      %p286 = por %p284, %p285
      %p287 = scmp.ne.s32.totalorder %s279, %s281
      %p288 = scmp.eq.s32.totalorder %s40, 1
      %p289 = por %p287, %p288
      %p290 = scmp.ne.s32.totalorder %s281, %s282
      %p291 = scmp.eq.s32.totalorder %s40, 0
      %p292 = por %p290, %p291
      %p293 = scmp.ne.s32.totalorder %s281, %s282
      %p294 = scmp.eq.s32.totalorder %s41, 1
      %p295 = por %p293, %p294
      %p297 = scmp.ne.s32.totalorder %s282, %s296
      %p298 = scmp.eq.s32.totalorder %s41, 0
      %p299 = por %p297, %p298
      %s301 = sadd.s32 %s300, 1
      %p304 = scmp.eq.s32.totalorder %s35, 1
      %p305 = scmp.ne.s32.totalorder %s300, %s302
      %p306 = scmp.eq.s32.totalorder %s35, 0
      %p307 = por %p305, %p306
      %p308 = scmp.ne.s32.totalorder %s300, %s302
      %p309 = scmp.eq.s32.totalorder %s40, 1
      %p310 = por %p308, %p309
      %p311 = scmp.ne.s32.totalorder %s302, %s303
      %p312 = scmp.eq.s32.totalorder %s40, 0
      %p313 = por %p311, %p312
      %p314 = scmp.ne.s32.totalorder %s302, %s303
      %p315 = scmp.eq.s32.totalorder %s41, 1
      %p316 = por %p314, %p315
      %p318 = scmp.ne.s32.totalorder %s303, %s317
      %p319 = scmp.eq.s32.totalorder %s41, 0
      %p320 = por %p318, %p319
      %s322 = sadd.s32 %s321, 1
      %p325 = scmp.eq.s32.totalorder %s35, 1
      %p326 = scmp.ne.s32.totalorder %s321, %s323
      %p327 = scmp.eq.s32.totalorder %s35, 0
      %p328 = por %p326, %p327
      %p329 = scmp.ne.s32.totalorder %s321, %s323
      %p330 = scmp.eq.s32.totalorder %s40, 1
      %p331 = por %p329, %p330
      %p332 = scmp.ne.s32.totalorder %s323, %s324
      %p333 = scmp.eq.s32.totalorder %s40, 0
      %p334 = por %p332, %p333
      %p335 = scmp.ne.s32.totalorder %s323, %s324
      %p336 = scmp.eq.s32.totalorder %s41, 1
      %p337 = por %p335, %p336
      %p339 = scmp.ne.s32.totalorder %s324, %s338
      %p340 = scmp.eq.s32.totalorder %s41, 0
      %p341 = por %p339, %p340
      %s343 = sadd.s32 %s342, 1
      %p346 = scmp.eq.s32.totalorder %s35, 1
      %p347 = scmp.ne.s32.totalorder %s342, %s344
      %p348 = scmp.eq.s32.totalorder %s35, 0
      %p349 = por %p347, %p348
      %p350 = scmp.ne.s32.totalorder %s342, %s344
      %p351 = scmp.eq.s32.totalorder %s40, 1
      %p352 = por %p350, %p351
      %p353 = scmp.ne.s32.totalorder %s344, %s345
      %p354 = scmp.eq.s32.totalorder %s40, 0
      %p355 = por %p353, %p354
      %p356 = scmp.ne.s32.totalorder %s344, %s345
      %p357 = scmp.eq.s32.totalorder %s41, 1
      %p358 = por %p356, %p357
      %p360 = scmp.ne.s32.totalorder %s345, %s359
      %p361 = scmp.eq.s32.totalorder %s41, 0
      %p362 = por %p360, %p361
      %s364 = sadd.s32 %s363, 1
      %p367 = scmp.eq.s32.totalorder %s35, 1
      %p368 = scmp.ne.s32.totalorder %s363, %s365
      %p369 = scmp.eq.s32.totalorder %s35, 0
      %p370 = por %p368, %p369
      %p371 = scmp.ne.s32.totalorder %s363, %s365
      %p372 = scmp.eq.s32.totalorder %s40, 1
      %p373 = por %p371, %p372
      %p374 = scmp.ne.s32.totalorder %s365, %s366
      %p375 = scmp.eq.s32.totalorder %s40, 0
      %p376 = por %p374, %p375
      %p377 = scmp.ne.s32.totalorder %s365, %s366
      %p378 = scmp.eq.s32.totalorder %s41, 1
      %p379 = por %p377, %p378
      %p381 = scmp.ne.s32.totalorder %s366, %s380
      %p382 = scmp.eq.s32.totalorder %s41, 0
      %p383 = por %p381, %p382
      %s385 = sadd.s32 %s384, 1
      %p388 = scmp.eq.s32.totalorder %s35, 1
      %p389 = scmp.ne.s32.totalorder %s384, %s386
      %p390 = scmp.eq.s32.totalorder %s35, 0
      %p391 = por %p389, %p390
      %p392 = scmp.ne.s32.totalorder %s384, %s386
      %p393 = scmp.eq.s32.totalorder %s40, 1
      %p394 = por %p392, %p393
      %p395 = scmp.ne.s32.totalorder %s386, %s387
      %p396 = scmp.eq.s32.totalorder %s40, 0
      %p397 = por %p395, %p396
      %p398 = scmp.ne.s32.totalorder %s386, %s387
      %p399 = scmp.eq.s32.totalorder %s41, 1
      %p400 = por %p398, %p399
      %p402 = scmp.ne.s32.totalorder %s387, %s401
      %p403 = scmp.eq.s32.totalorder %s41, 0
      %p404 = por %p402, %p403
      %s406 = sadd.s32 %s405, 1
      %p409 = scmp.eq.s32.totalorder %s35, 1
      %p410 = scmp.ne.s32.totalorder %s405, %s407
      %p411 = scmp.eq.s32.totalorder %s35, 0
      %p412 = por %p410, %p411
      %p413 = scmp.ne.s32.totalorder %s405, %s407
      %p414 = scmp.eq.s32.totalorder %s40, 1
      %p415 = por %p413, %p414
      %p416 = scmp.ne.s32.totalorder %s407, %s408
      %p417 = scmp.eq.s32.totalorder %s40, 0
      %p418 = por %p416, %p417
      %p419 = scmp.ne.s32.totalorder %s407, %s408
      %p420 = scmp.eq.s32.totalorder %s41, 1
      %p421 = por %p419, %p420
      %p423 = scmp.ne.s32.totalorder %s408, %s422
      %p424 = scmp.eq.s32.totalorder %s41, 0
      %p425 = por %p423, %p424
      %s426 = ssub.s32 %s35, %s42
      %p427 = scmp.eq.s32.totalorder %s426, 0
      %s429 = sadd.s32 %s428, 1
      %s430 = scalar_select %p427, %s428, %s429
      %p433 = pneg %p427
      %p434 = scmp.eq.s32.totalorder %s35, 1
      %p435 = por %p433, %p434
      %p436 = scmp.ne.s32.totalorder %s428, %s431
      %p437 = scmp.eq.s32.totalorder %s35, 0
      %p438 = por %p436, %p437
      %p439 = scmp.ne.s32.totalorder %s428, %s431
      %p440 = scmp.eq.s32.totalorder %s40, 1
      %p441 = por %p439, %p440
      %p442 = scmp.ne.s32.totalorder %s431, %s432
      %p443 = scmp.eq.s32.totalorder %s40, 0
      %p444 = por %p442, %p443
      %p445 = scmp.ne.s32.totalorder %s431, %s432
      %p446 = scmp.eq.s32.totalorder %s41, 1
      %p447 = por %p445, %p446
      %p449 = scmp.ne.s32.totalorder %s432, %s448
      %p450 = scmp.eq.s32.totalorder %s41, 0
      %p451 = por %p449, %p450
      %p452 = scmp.le.s32.totalorder 1, %s35
      %p453 = scmp.lt.s32.totalorder %s35, 3
      %p454 = pnand %p452, %p453
      %p455 = pneg %p454
      // Predicated region
      $region9: #{tpu_custom_call.1} parent=5 // pred_check
        _
      $region10: #{tpu_custom_call.1} parent=5 // pred_check_branch
        %457 = sbr.rel (%p454) target = $region12
      $region11: #{tpu_custom_call.1} parent=5 // pred_region
        %s458 = ssub.s32 %s35, 1
        // Predicated region
        $region13: #{tpu_custom_call.1} parent=11 // pred_check
          %p459 = pneg %p82
        $region14: #{tpu_custom_call.1} parent=11 // pred_check_branch
          %461 = sbr.rel (%p459) target = $region16
        $region15: #{tpu_custom_call.1} parent=11 // pred_region
          %463 = vsyncadd [#allocation6], 0
          %s465 = sshll.u32 %s1, 4
          %s466 = int_to_ptr.hbm [resolvable:$true] %s465
          %s467 = sshll.u32 [#allocation5], 4
          %s468 = int_to_ptr.vmem [resolvable:$true] %s467
          %470 = dma.hbm_to_vmem [thread:$0]  %s466, 32, %s468, [#allocation6]
        $region16: #{tpu_custom_call.1} parent=11 // pred_fallthru
          _
        // Predicated region
        $region17: #{tpu_custom_call.1} parent=11 // pred_check
          %p471 = pneg %p103
        $region18: #{tpu_custom_call.1} parent=11 // pred_check_branch
          %473 = sbr.rel (%p471) target = $region20
        $region19: #{tpu_custom_call.1} parent=11 // pred_region
          %475 = vsyncadd [#allocation6], 0
          %s477 = sshll.u32 %s2, 4
          %s478 = int_to_ptr.hbm [resolvable:$true] %s477
          %s479 = sshll.u32 [#allocation7], 4
          %s480 = int_to_ptr.vmem [resolvable:$true] %s479
          %482 = dma.hbm_to_vmem [thread:$0]  %s478, 32, %s480, [#allocation6]
        $region20: #{tpu_custom_call.1} parent=11 // pred_fallthru
          _
        // Predicated region
        $region21: #{tpu_custom_call.1} parent=11 // pred_check
          %p483 = pneg %p124
        $region22: #{tpu_custom_call.1} parent=11 // pred_check_branch
          %485 = sbr.rel (%p483) target = $region24
        $region23: #{tpu_custom_call.1} parent=11 // pred_region
          %487 = vsyncadd [#allocation9], 0
          %s488 = sshll.u32 %s3, 4
          %s489 = int_to_ptr.hbm [resolvable:$true] %s488
          %s490 = sshll.u32 [#allocation8], 4
          %s491 = int_to_ptr.vmem [resolvable:$true] %s490
          %496 = dma.hbm_to_vmem [thread:$0]  %s489, 24576, %s491, [#allocation9], 768, 768, 48
        $region24: #{tpu_custom_call.1} parent=11 // pred_fallthru
          _
        // Predicated region
        $region25: #{tpu_custom_call.1} parent=11 // pred_check
          %p497 = pneg %p145
        $region26: #{tpu_custom_call.1} parent=11 // pred_check_branch
          %499 = sbr.rel (%p497) target = $region28
        $region27: #{tpu_custom_call.1} parent=11 // pred_region
          %501 = vsyncadd [#allocation9], 0
          %s502 = sshll.u32 %s4, 4
          %s503 = int_to_ptr.hbm [resolvable:$true] %s502
          %s504 = sshll.u32 [#allocation10], 4
          %s505 = int_to_ptr.vmem [resolvable:$true] %s504
          %510 = dma.hbm_to_vmem [thread:$0]  %s503, 384, %s505, [#allocation9], 192, 192, 12
        $region28: #{tpu_custom_call.1} parent=11 // pred_fallthru
          _
        // Predicated region
        $region29: #{tpu_custom_call.1} parent=11 // pred_check
          %p511 = pneg %p166
        $region30: #{tpu_custom_call.1} parent=11 // pred_check_branch
          %513 = sbr.rel (%p511) target = $region32
        $region31: #{tpu_custom_call.1} parent=11 // pred_region
          %515 = vsyncadd [#allocation12], 0
          %s516 = sshll.u32 %s5, 4
          %s517 = int_to_ptr.hbm [resolvable:$true] %s516
          %s518 = sshll.u32 [#allocation11], 4
          %s519 = int_to_ptr.vmem [resolvable:$true] %s518
          %524 = dma.hbm_to_vmem [thread:$0]  %s517, 8192, %s519, [#allocation12], 64, 64, 4
        $region32: #{tpu_custom_call.1} parent=11 // pred_fallthru
          _
        // Predicated region
        $region33: #{tpu_custom_call.1} parent=11 // pred_check
          %p525 = pneg %p187
        $region34: #{tpu_custom_call.1} parent=11 // pred_check_branch
          %527 = sbr.rel (%p525) target = $region36
        $region35: #{tpu_custom_call.1} parent=11 // pred_region
          _
        $region36: #{tpu_custom_call.1} parent=11 // pred_fallthru
          _
        // Predicated region
        $region37: #{tpu_custom_call.1} parent=11 // pred_check
          %p528 = pneg %p208
        $region38: #{tpu_custom_call.1} parent=11 // pred_check_branch
          %530 = sbr.rel (%p528) target = $region40
        $region39: #{tpu_custom_call.1} parent=11 // pred_region
          _
        $region40: #{tpu_custom_call.1} parent=11 // pred_fallthru
          _
        // Predicated region
        $region41: #{tpu_custom_call.1} parent=11 // pred_check
          %p531 = pneg %p229
        $region42: #{tpu_custom_call.1} parent=11 // pred_check_branch
          %533 = sbr.rel (%p531) target = $region44
        $region43: #{tpu_custom_call.1} parent=11 // pred_region
          _
        $region44: #{tpu_custom_call.1} parent=11 // pred_fallthru
          _
        // Predicated region
        $region45: #{tpu_custom_call.1} parent=11 // pred_check
          %p534 = pneg %p250
        $region46: #{tpu_custom_call.1} parent=11 // pred_check_branch
          %536 = sbr.rel (%p534) target = $region48
        $region47: #{tpu_custom_call.1} parent=11 // pred_region
          %538 = vsyncadd [#allocation12], 0
          %s539 = sshll.u32 %s9, 4
          %s540 = int_to_ptr.hbm [resolvable:$true] %s539
          %s541 = sshll.u32 [#allocation13], 4
          %s542 = int_to_ptr.vmem [resolvable:$true] %s541
          %547 = dma.hbm_to_vmem [thread:$0]  %s540, 6144, %s542, [#allocation12], 192, 192, 12
        $region48: #{tpu_custom_call.1} parent=11 // pred_fallthru
          _
        // Predicated region
        $region49: #{tpu_custom_call.1} parent=11 // pred_check
          %p548 = pneg %p271
        $region50: #{tpu_custom_call.1} parent=11 // pred_check_branch
          %550 = sbr.rel (%p548) target = $region52
        $region51: #{tpu_custom_call.1} parent=11 // pred_region
          _
        $region52: #{tpu_custom_call.1} parent=11 // pred_fallthru
          _
        // Predicated region
        $region53: #{tpu_custom_call.1} parent=11 // pred_check
          %p551 = pneg %p292
        $region54: #{tpu_custom_call.1} parent=11 // pred_check_branch
          %553 = sbr.rel (%p551) target = $region56
        $region55: #{tpu_custom_call.1} parent=11 // pred_region
          %555 = vsyncadd [#allocation15], 0
          %s556 = sshll.u32 %s11, 4
          %s557 = int_to_ptr.hbm [resolvable:$true] %s556
          %s558 = sshll.u32 [#allocation14], 4
          %s559 = int_to_ptr.vmem [resolvable:$true] %s558
          %564 = dma.hbm_to_vmem [thread:$0]  %s557, 6144, %s559, [#allocation15], 192, 192, 12
        $region56: #{tpu_custom_call.1} parent=11 // pred_fallthru
          _
        // Predicated region
        $region57: #{tpu_custom_call.1} parent=11 // pred_check
          %p565 = pneg %p313
        $region58: #{tpu_custom_call.1} parent=11 // pred_check_branch
          %567 = sbr.rel (%p565) target = $region60
        $region59: #{tpu_custom_call.1} parent=11 // pred_region
          _
        $region60: #{tpu_custom_call.1} parent=11 // pred_fallthru
          _
        // Predicated region
        $region61: #{tpu_custom_call.1} parent=11 // pred_check
          %p568 = pneg %p334
        $region62: #{tpu_custom_call.1} parent=11 // pred_check_branch
          %570 = sbr.rel (%p568) target = $region64
        $region63: #{tpu_custom_call.1} parent=11 // pred_region
          %572 = vsyncadd [#allocation15], 0
          %s573 = sshll.u32 %s13, 4
          %s574 = int_to_ptr.hbm [resolvable:$true] %s573
          %s575 = sshll.u32 [#allocation16], 4
          %s576 = int_to_ptr.vmem [resolvable:$true] %s575
          %581 = dma.hbm_to_vmem [thread:$0]  %s574, 1024, %s576, [#allocation15], 64, 64, 4
        $region64: #{tpu_custom_call.1} parent=11 // pred_fallthru
          _
        // Predicated region
        $region65: #{tpu_custom_call.1} parent=11 // pred_check
          %p582 = pneg %p355
        $region66: #{tpu_custom_call.1} parent=11 // pred_check_branch
          %584 = sbr.rel (%p582) target = $region68
        $region67: #{tpu_custom_call.1} parent=11 // pred_region
          %586 = vsyncadd [#allocation18], 0
          %s587 = sshll.u32 %s14, 4
          %s588 = int_to_ptr.hbm [resolvable:$true] %s587
          %s589 = sshll.u32 [#allocation17], 4
          %s590 = int_to_ptr.vmem [resolvable:$true] %s589
          %595 = dma.hbm_to_vmem [thread:$0]  %s588, 1024, %s590, [#allocation18], 64, 64, 4
        $region68: #{tpu_custom_call.1} parent=11 // pred_fallthru
          _
        // Predicated region
        $region69: #{tpu_custom_call.1} parent=11 // pred_check
          %p596 = pneg %p376
        $region70: #{tpu_custom_call.1} parent=11 // pred_check_branch
          %598 = sbr.rel (%p596) target = $region72
        $region71: #{tpu_custom_call.1} parent=11 // pred_region
          _
        $region72: #{tpu_custom_call.1} parent=11 // pred_fallthru
          _
        // Predicated region
        $region73: #{tpu_custom_call.1} parent=11 // pred_check
          %p599 = pneg %p397
        $region74: #{tpu_custom_call.1} parent=11 // pred_check_branch
          %601 = sbr.rel (%p599) target = $region76
        $region75: #{tpu_custom_call.1} parent=11 // pred_region
          _
        $region76: #{tpu_custom_call.1} parent=11 // pred_fallthru
          _
        // Predicated region
        $region77: #{tpu_custom_call.1} parent=11 // pred_check
          %p602 = pneg %p418
        $region78: #{tpu_custom_call.1} parent=11 // pred_check_branch
          %604 = sbr.rel (%p602) target = $region80
        $region79: #{tpu_custom_call.1} parent=11 // pred_region
          _
        $region80: #{tpu_custom_call.1} parent=11 // pred_fallthru
          _
      $region12: #{tpu_custom_call.1} parent=5 // pred_fallthru
        _
      %p605 = scmp.lt.s32.totalorder %s35, 2
      // Predicated region
      $region81: #{tpu_custom_call.1} parent=5 // pred_check
        %p606 = pneg %p605
      $region82: #{tpu_custom_call.1} parent=5 // pred_check_branch
        %608 = sbr.rel (%p606) target = $region84
      $region83: #{tpu_custom_call.1} parent=5 // pred_region
        // Predicated region
        $region85: #{tpu_custom_call.1} parent=83 // pred_check
          %p609 = pneg %p55
        $region86: #{tpu_custom_call.1} parent=83 // pred_check_branch
          %611 = sbr.rel (%p609) target = $region88
        $region87: #{tpu_custom_call.1} parent=83 // pred_region
          %s612 = sand.u32 %s45, 1
          %s613 = scalar_lea.sflag [#allocation3], %s612
          %s614 = sand.u32 %s45, 1
          %s615 = smul.addr %s614, 8
          %s616 = scalar_lea.vmem [#allocation2], %s615
          %618 = vsyncadd %s613, 0
          %s619 = smul.addr %s35, 8
          %s620 = scalar_lea.hbm %s0, %s619
          %s622 = sshll.u32 %s620, 4
          %s623 = int_to_ptr.hbm [resolvable:$true] %s622
          %s624 = sshll.u32 %s616, 4
          %s625 = int_to_ptr.vmem [resolvable:$true] %s624
          %627 = dma.hbm_to_vmem [thread:$0]  %s623, 128, %s625, %s613
        $region88: #{tpu_custom_call.1} parent=83 // pred_fallthru
          _
      $region84: #{tpu_custom_call.1} parent=5 // pred_fallthru
        _
      %p628 = scmp.le.s32.totalorder 1, %s35
      %p629 = scmp.lt.s32.totalorder %s35, 3
      %p630 = pnand %p628, %p629
      %p631 = pneg %p630
      // Predicated region
      $region89: #{tpu_custom_call.1} parent=5 // pred_check
        _
      $region90: #{tpu_custom_call.1} parent=5 // pred_check_branch
        %633 = sbr.rel (%p630) target = $region92
      $region91: #{tpu_custom_call.1} parent=5 // pred_region
        %s634 = ssub.s32 %s35, 1
        %s635 = sand.u32 %s48, 1
        %s636 = scalar_lea.sflag [#allocation3], %s635
        %s637 = sand.u32 %s48, 1
        %s638 = smul.addr %s637, 8
        %s639 = scalar_lea.vmem [#allocation2], %s638
        // Predicated region
        $region93: #{tpu_custom_call.1} parent=91 // pred_check
          %p640 = pneg %p61
        $region94: #{tpu_custom_call.1} parent=91 // pred_check_branch
          %642 = sbr.rel (%p640) target = $region96
        $region95: #{tpu_custom_call.1} parent=91 // pred_region
          %644 = dma.done %s636, 128
        $region96: #{tpu_custom_call.1} parent=91 // pred_fallthru
          _
        // Predicated region
        $region97: #{tpu_custom_call.1} parent=91 // pred_check
          %p645 = pneg %p82
        $region98: #{tpu_custom_call.1} parent=91 // pred_check_branch
          %647 = sbr.rel (%p645) target = $region100
        $region99: #{tpu_custom_call.1} parent=91 // pred_region
          %649 = dma.done [#allocation6], 32
        $region100: #{tpu_custom_call.1} parent=91 // pred_fallthru
          _
        // Predicated region
        $region101: #{tpu_custom_call.1} parent=91 // pred_check
          %p650 = pneg %p103
        $region102: #{tpu_custom_call.1} parent=91 // pred_check_branch
          %652 = sbr.rel (%p650) target = $region104
        $region103: #{tpu_custom_call.1} parent=91 // pred_region
          %654 = dma.done [#allocation6], 32
        $region104: #{tpu_custom_call.1} parent=91 // pred_fallthru
          _
        // Predicated region
        $region105: #{tpu_custom_call.1} parent=91 // pred_check
          %p655 = pneg %p124
        $region106: #{tpu_custom_call.1} parent=91 // pred_check_branch
          %657 = sbr.rel (%p655) target = $region108
        $region107: #{tpu_custom_call.1} parent=91 // pred_region
          %659 = dma.done [#allocation9], 24576
        $region108: #{tpu_custom_call.1} parent=91 // pred_fallthru
          _
        // Predicated region
        $region109: #{tpu_custom_call.1} parent=91 // pred_check
          %p660 = pneg %p145
        $region110: #{tpu_custom_call.1} parent=91 // pred_check_branch
          %662 = sbr.rel (%p660) target = $region112
        $region111: #{tpu_custom_call.1} parent=91 // pred_region
          %664 = dma.done [#allocation9], 384
        $region112: #{tpu_custom_call.1} parent=91 // pred_fallthru
          _
        // Predicated region
        $region113: #{tpu_custom_call.1} parent=91 // pred_check
          %p665 = pneg %p166
        $region114: #{tpu_custom_call.1} parent=91 // pred_check_branch
          %667 = sbr.rel (%p665) target = $region116
        $region115: #{tpu_custom_call.1} parent=91 // pred_region
          %669 = dma.done [#allocation12], 8192
        $region116: #{tpu_custom_call.1} parent=91 // pred_fallthru
          _
        // Predicated region
        $region117: #{tpu_custom_call.1} parent=91 // pred_check
          %p670 = pneg %p250
        $region118: #{tpu_custom_call.1} parent=91 // pred_check_branch
          %672 = sbr.rel (%p670) target = $region120
        $region119: #{tpu_custom_call.1} parent=91 // pred_region
          %674 = dma.done [#allocation12], 6144
        $region120: #{tpu_custom_call.1} parent=91 // pred_fallthru
          _
        // Predicated region
        $region121: #{tpu_custom_call.1} parent=91 // pred_check
          %p675 = pneg %p292
        $region122: #{tpu_custom_call.1} parent=91 // pred_check_branch
          %677 = sbr.rel (%p675) target = $region124
        $region123: #{tpu_custom_call.1} parent=91 // pred_region
          %679 = dma.done [#allocation15], 6144
        $region124: #{tpu_custom_call.1} parent=91 // pred_fallthru
          _
        // Predicated region
        $region125: #{tpu_custom_call.1} parent=91 // pred_check
          %p680 = pneg %p334
        $region126: #{tpu_custom_call.1} parent=91 // pred_check_branch
          %682 = sbr.rel (%p680) target = $region128
        $region127: #{tpu_custom_call.1} parent=91 // pred_region
          %684 = dma.done [#allocation15], 1024
        $region128: #{tpu_custom_call.1} parent=91 // pred_fallthru
          _
        // Predicated region
        $region129: #{tpu_custom_call.1} parent=91 // pred_check
          %p685 = pneg %p355
        $region130: #{tpu_custom_call.1} parent=91 // pred_check_branch
          %687 = sbr.rel (%p685) target = $region132
        $region131: #{tpu_custom_call.1} parent=91 // pred_region
          %689 = dma.done [#allocation18], 1024
        $region132: #{tpu_custom_call.1} parent=91 // pred_fallthru
          _
        %s690 = sand.u32 %s48, 1
        %s691 = scalar_lea.sflag [#allocation3], %s690
        %s692 = sand.u32 %s48, 1
        %s693 = smul.addr %s692, 8
        %s694 = scalar_lea.vmem [#allocation2], %s693
        %p695 = pneg %p61
        %p696 = pneg %p58
        %p697 = pneg %p82
        %p698 = pneg %p79
        %p699 = pneg %p103
        %p700 = pneg %p100
        %p701 = pneg %p124
        %p702 = pneg %p121
        %p703 = pneg %p145
        %p704 = pneg %p142
        %p705 = pneg %p166
        %p706 = pneg %p163
        %p707 = pneg %p187
        %p708 = pneg %p184
        %p709 = pneg %p208
        %p710 = pneg %p205
        %p711 = pneg %p229
        %p712 = pneg %p226
        %p713 = pneg %p250
        %p714 = pneg %p247
        %p715 = pneg %p271
        %p716 = pneg %p268
        %p717 = pneg %p292
        %p718 = pneg %p289
        %p719 = pneg %p313
        %p720 = pneg %p310
        %p721 = pneg %p334
        %p722 = pneg %p331
        %p723 = pneg %p355
        %p724 = pneg %p352
        %p725 = pneg %p376
        %p726 = pneg %p373
        %p727 = pneg %p397
        %p728 = pneg %p394
        %p729 = pneg %p418
        %p730 = pneg %p415
        %p731 = pneg %p444
        %p732 = pneg %p441
        %s733 = sand.u32 %s431, 1
        %s734 = scalar_lea.sflag [#allocation4], %s733
        %s735 = sand.u32 %s431, 1
        %s736 = smul.addr %s735, 8
        %s737 = scalar_lea.vmem [#allocation19], %s736
        %v739 = vld [vmem:[%s639] sm:$0xff]
        %v740 = vlaneseq
        %v741 = vshrl.u32 %v740, 7
        %vm742 = vcmp.gt.s32.totalorder %v741, 0
        %vm743 = vcmp.lt.s32.totalorder %v741, 7
        %v744 = vlaneseq
        %v745 = vand.u32 %v744, 127
        %v746 = vld [vmem:[#allocation5] sm:$0x1]
        %v747 = vld [vmem:[#allocation7] sm:$0x1]
        %748 = vadd.xlane.f32.xlu0 %v739
        %v749 = vpop.xlane.xlu0 %748
        %v750 = vmul.f32 %v749, 0.03125
        %v751 = vmul.f32 %v739, %v739
        %752 = vadd.xlane.f32.xlu0 %v751
        %v753 = vpop.xlane.xlu0 %752
        %v754 = vmul.f32 %v753, 0.03125
        %v755 = vmul.f32 %v750, %v750
        %v756 = vsub.f32 %v754, %v755
        %v757 = vsub.f32 %v739, %v750
        %v758 = vadd.f32 %v756, 1e-05
        %v759 = vrsqrt.pop %v758
        %v760 = vmul.f32 %v759, %v758
        %v761 = vmul.f32 %v760, %v759
        %v762 = vmul.f32 0.5, %v761
        %v763 = vsub.f32 1.5, %v762
        %v764 = vmul.f32 %v759, %v763
        %vm765 = vweird.f32 %v758
        %vm766 = vweird.f32 %v759
        %vm767 = vmor %vm765, %vm766
        %v768 = vsel %vm767, %v759, %v764
        %v769 = vmul.f32 %v757, %v768
        %v770 = vperm.slane %v746, 0
        %v771 = vmul.f32 %v769, %v770
        %v772 = vperm.slane %v747, 0
        %v773 = vadd.f32 %v771, %v772
        %v774 = vpack.c.bf16 %v773, %v773
        %v775 = vld [vmem:[#allocation8] sm:$0xff]
        %v776 = vld [vmem:[#allocation8 + $0x8] sm:$0xff]
        %v777 = vld [vmem:[#allocation8 + $0x10] sm:$0xff]
        %v778 = vld [vmem:[#allocation8 + $0x18] sm:$0xff]
        %v779 = vld [vmem:[#allocation8 + $0x20] sm:$0xff]
        %v780 = vld [vmem:[#allocation8 + $0x28] sm:$0xff]
        %v781 = vld [vmem:[#allocation8 + $0x30] sm:$0xff]
        %v782 = vld [vmem:[#allocation8 + $0x38] sm:$0xff]
        %v783 = vld [vmem:[#allocation8 + $0x40] sm:$0xff]
        %v784 = vld [vmem:[#allocation8 + $0x48] sm:$0xff]
        %v785 = vld [vmem:[#allocation8 + $0x50] sm:$0xff]
        %v786 = vld [vmem:[#allocation8 + $0x58] sm:$0xff]
        %v787 = vld [vmem:[#allocation8 + $0x60] sm:$0xff]
        %v788 = vld [vmem:[#allocation8 + $0x68] sm:$0xff]
        %v789 = vld [vmem:[#allocation8 + $0x70] sm:$0xff]
        %v790 = vld [vmem:[#allocation8 + $0x78] sm:$0xff]
        %v791 = vld [vmem:[#allocation8 + $0x80] sm:$0xff]
        %v792 = vld [vmem:[#allocation8 + $0x88] sm:$0xff]
        %v793 = vld [vmem:[#allocation8 + $0x90] sm:$0xff]
        %v794 = vld [vmem:[#allocation8 + $0x98] sm:$0xff]
        %v795 = vld [vmem:[#allocation8 + $0xa0] sm:$0xff]
        %v796 = vld [vmem:[#allocation8 + $0xa8] sm:$0xff]
        %v797 = vld [vmem:[#allocation8 + $0xb0] sm:$0xff]
        %v798 = vld [vmem:[#allocation8 + $0xb8] sm:$0xff]
        %v799 = vld [vmem:[#allocation8 + $0xc0] sm:$0xff]
        %v800 = vld [vmem:[#allocation8 + $0xc8] sm:$0xff]
        %v801 = vld [vmem:[#allocation8 + $0xd0] sm:$0xff]
        %v802 = vld [vmem:[#allocation8 + $0xd8] sm:$0xff]
        %v803 = vld [vmem:[#allocation8 + $0xe0] sm:$0xff]
        %v804 = vld [vmem:[#allocation8 + $0xe8] sm:$0xff]
        %v805 = vld [vmem:[#allocation8 + $0xf0] sm:$0xff]
        %v806 = vld [vmem:[#allocation8 + $0xf8] sm:$0xff]
        %v807 = vld [vmem:[#allocation8 + $0x100] sm:$0xff]
        %v808 = vld [vmem:[#allocation8 + $0x108] sm:$0xff]
        %v809 = vld [vmem:[#allocation8 + $0x110] sm:$0xff]
        %v810 = vld [vmem:[#allocation8 + $0x118] sm:$0xff]
        %v811 = vld [vmem:[#allocation8 + $0x120] sm:$0xff]
        %v812 = vld [vmem:[#allocation8 + $0x128] sm:$0xff]
        %v813 = vld [vmem:[#allocation8 + $0x130] sm:$0xff]
        %v814 = vld [vmem:[#allocation8 + $0x138] sm:$0xff]
        %v815 = vld [vmem:[#allocation8 + $0x140] sm:$0xff]
        %v816 = vld [vmem:[#allocation8 + $0x148] sm:$0xff]
        %v817 = vld [vmem:[#allocation8 + $0x150] sm:$0xff]
        %v818 = vld [vmem:[#allocation8 + $0x158] sm:$0xff]
        %v819 = vld [vmem:[#allocation8 + $0x160] sm:$0xff]
        %v820 = vld [vmem:[#allocation8 + $0x168] sm:$0xff]
        %v821 = vld [vmem:[#allocation8 + $0x170] sm:$0xff]
        %v822 = vld [vmem:[#allocation8 + $0x178] sm:$0xff]
        %v823 = vld [vmem:[#allocation8 + $0x180] sm:$0xff]
        %v824 = vld [vmem:[#allocation8 + $0x188] sm:$0xff]
        %v825 = vld [vmem:[#allocation8 + $0x190] sm:$0xff]
        %v826 = vld [vmem:[#allocation8 + $0x198] sm:$0xff]
        %v827 = vld [vmem:[#allocation8 + $0x1a0] sm:$0xff]
        %v828 = vld [vmem:[#allocation8 + $0x1a8] sm:$0xff]
        %v829 = vld [vmem:[#allocation8 + $0x1b0] sm:$0xff]
        %v830 = vld [vmem:[#allocation8 + $0x1b8] sm:$0xff]
        %v831 = vld [vmem:[#allocation8 + $0x1c0] sm:$0xff]
        %v832 = vld [vmem:[#allocation8 + $0x1c8] sm:$0xff]
        %v833 = vld [vmem:[#allocation8 + $0x1d0] sm:$0xff]
        %v834 = vld [vmem:[#allocation8 + $0x1d8] sm:$0xff]
        %v835 = vld [vmem:[#allocation8 + $0x1e0] sm:$0xff]
        %v836 = vld [vmem:[#allocation8 + $0x1e8] sm:$0xff]
        %v837 = vld [vmem:[#allocation8 + $0x1f0] sm:$0xff]
        %v838 = vld [vmem:[#allocation8 + $0x1f8] sm:$0xff]
        %v839 = vld [vmem:[#allocation8 + $0x200] sm:$0xff]
        %v840 = vld [vmem:[#allocation8 + $0x208] sm:$0xff]
        %v841 = vld [vmem:[#allocation8 + $0x210] sm:$0xff]
        %v842 = vld [vmem:[#allocation8 + $0x218] sm:$0xff]
        %v843 = vld [vmem:[#allocation8 + $0x220] sm:$0xff]
        %v844 = vld [vmem:[#allocation8 + $0x228] sm:$0xff]
        %v845 = vld [vmem:[#allocation8 + $0x230] sm:$0xff]
        %v846 = vld [vmem:[#allocation8 + $0x238] sm:$0xff]
        %v847 = vld [vmem:[#allocation8 + $0x240] sm:$0xff]
        %v848 = vld [vmem:[#allocation8 + $0x248] sm:$0xff]
        %v849 = vld [vmem:[#allocation8 + $0x250] sm:$0xff]
        %v850 = vld [vmem:[#allocation8 + $0x258] sm:$0xff]
        %v851 = vld [vmem:[#allocation8 + $0x260] sm:$0xff]
        %v852 = vld [vmem:[#allocation8 + $0x268] sm:$0xff]
        %v853 = vld [vmem:[#allocation8 + $0x270] sm:$0xff]
        %v854 = vld [vmem:[#allocation8 + $0x278] sm:$0xff]
        %v855 = vld [vmem:[#allocation8 + $0x280] sm:$0xff]
        %v856 = vld [vmem:[#allocation8 + $0x288] sm:$0xff]
        %v857 = vld [vmem:[#allocation8 + $0x290] sm:$0xff]
        %v858 = vld [vmem:[#allocation8 + $0x298] sm:$0xff]
        %v859 = vld [vmem:[#allocation8 + $0x2a0] sm:$0xff]
        %v860 = vld [vmem:[#allocation8 + $0x2a8] sm:$0xff]
        %v861 = vld [vmem:[#allocation8 + $0x2b0] sm:$0xff]
        %v862 = vld [vmem:[#allocation8 + $0x2b8] sm:$0xff]
        %v863 = vld [vmem:[#allocation8 + $0x2c0] sm:$0xff]
        %v864 = vld [vmem:[#allocation8 + $0x2c8] sm:$0xff]
        %v865 = vld [vmem:[#allocation8 + $0x2d0] sm:$0xff]
        %v866 = vld [vmem:[#allocation8 + $0x2d8] sm:$0xff]
        %v867 = vld [vmem:[#allocation8 + $0x2e0] sm:$0xff]
        %v868 = vld [vmem:[#allocation8 + $0x2e8] sm:$0xff]
        %v869 = vld [vmem:[#allocation8 + $0x2f0] sm:$0xff]
        %v870 = vld [vmem:[#allocation8 + $0x2f8] sm:$0xff]
        %v871 = vld [vmem:[#allocation10] sm:$0xff]
        %v872 = vld [vmem:[#allocation10 + $0x8] sm:$0xf]
        %v875 = vperm.slane %v871, 0
        %v876 = vperm.slane %v871, 1
        %v877 = vperm.slane %v871, 2
        %v878 = vperm.slane %v871, 3
        %v879 = vperm.slane %v871, 4
        %v880 = vperm.slane %v871, 5
        %v881 = vperm.slane %v871, 6
        %v882 = vperm.slane %v871, 7
        %v883 = vperm.slane %v872, 0
        %v884 = vperm.slane %v872, 1
        %v885 = vperm.slane %v872, 2
        %v886 = vperm.slane %v872, 3
        %v995 = vunpack.c.l.b16 %v775
        %v996 = vunpack.c.h.b16 %v775
        %v997 = vunpack.c.l.b16 %v776
        %v998 = vunpack.c.h.b16 %v776
        %v999 = vunpack.c.l.b16 %v777
        %v1000 = vunpack.c.h.b16 %v777
        %v1001 = vunpack.c.l.b16 %v778
        %v1002 = vunpack.c.h.b16 %v778
        %v1003 = vunpack.c.l.b16 %v779
        %v1004 = vunpack.c.h.b16 %v779
        %v1005 = vunpack.c.l.b16 %v780
        %v1006 = vunpack.c.h.b16 %v780
        %v1007 = vunpack.c.l.b16 %v781
        %v1008 = vunpack.c.h.b16 %v781
        %v1009 = vunpack.c.l.b16 %v782
        %v1010 = vunpack.c.h.b16 %v782
        %v1011 = vunpack.c.l.b16 %v783
        %v1012 = vunpack.c.h.b16 %v783
        %v1013 = vunpack.c.l.b16 %v784
        %v1014 = vunpack.c.h.b16 %v784
        %v1015 = vunpack.c.l.b16 %v785
        %v1016 = vunpack.c.h.b16 %v785
        %v1017 = vunpack.c.l.b16 %v786
        %v1018 = vunpack.c.h.b16 %v786
        %v1019 = vunpack.c.l.b16 %v787
        %v1020 = vunpack.c.h.b16 %v787
        %v1021 = vunpack.c.l.b16 %v788
        %v1022 = vunpack.c.h.b16 %v788
        %v1023 = vunpack.c.l.b16 %v789
        %v1024 = vunpack.c.h.b16 %v789
        %v1025 = vunpack.c.l.b16 %v790
        %v1026 = vunpack.c.h.b16 %v790
        %v1027 = vunpack.c.l.b16 %v791
        %v1028 = vunpack.c.h.b16 %v791
        %v1029 = vunpack.c.l.b16 %v792
        %v1030 = vunpack.c.h.b16 %v792
        %v1031 = vunpack.c.l.b16 %v793
        %v1032 = vunpack.c.h.b16 %v793
        %v1033 = vunpack.c.l.b16 %v794
        %v1034 = vunpack.c.h.b16 %v794
        %v1035 = vunpack.c.l.b16 %v795
        %v1036 = vunpack.c.h.b16 %v795
        %v1037 = vunpack.c.l.b16 %v796
        %v1038 = vunpack.c.h.b16 %v796
        %v1039 = vunpack.c.l.b16 %v797
        %v1040 = vunpack.c.h.b16 %v797
        %v1041 = vunpack.c.l.b16 %v798
        %v1042 = vunpack.c.h.b16 %v798
        %v1043 = vunpack.c.l.b16 %v799
        %v1044 = vunpack.c.h.b16 %v799
        %v1045 = vunpack.c.l.b16 %v800
        %v1046 = vunpack.c.h.b16 %v800
        %v1047 = vunpack.c.l.b16 %v801
        %v1048 = vunpack.c.h.b16 %v801
        %v1049 = vunpack.c.l.b16 %v802
        %v1050 = vunpack.c.h.b16 %v802
        %v1051 = vunpack.c.l.b16 %v803
        %v1052 = vunpack.c.h.b16 %v803
        %v1053 = vunpack.c.l.b16 %v804
        %v1054 = vunpack.c.h.b16 %v804
        %v1055 = vunpack.c.l.b16 %v805
        %v1056 = vunpack.c.h.b16 %v805
        %v1057 = vunpack.c.l.b16 %v806
        %v1058 = vunpack.c.h.b16 %v806
        %v1059 = vunpack.c.l.b16 %v807
        %v1060 = vunpack.c.h.b16 %v807
        %v1061 = vunpack.c.l.b16 %v808
        %v1062 = vunpack.c.h.b16 %v808
        %v1063 = vunpack.c.l.b16 %v809
        %v1064 = vunpack.c.h.b16 %v809
        %v1065 = vunpack.c.l.b16 %v810
        %v1066 = vunpack.c.h.b16 %v810
        %v1067 = vunpack.c.l.b16 %v811
        %v1068 = vunpack.c.h.b16 %v811
        %v1069 = vunpack.c.l.b16 %v812
        %v1070 = vunpack.c.h.b16 %v812
        %v1071 = vunpack.c.l.b16 %v813
        %v1072 = vunpack.c.h.b16 %v813
        %v1073 = vunpack.c.l.b16 %v814
        %v1074 = vunpack.c.h.b16 %v814
        %v1075 = vunpack.c.l.b16 %v815
        %v1076 = vunpack.c.h.b16 %v815
        %v1077 = vunpack.c.l.b16 %v816
        %v1078 = vunpack.c.h.b16 %v816
        %v1079 = vunpack.c.l.b16 %v817
        %v1080 = vunpack.c.h.b16 %v817
        %v1081 = vunpack.c.l.b16 %v818
        %v1082 = vunpack.c.h.b16 %v818
        %v1083 = vunpack.c.l.b16 %v819
        %v1084 = vunpack.c.h.b16 %v819
        %v1085 = vunpack.c.l.b16 %v820
        %v1086 = vunpack.c.h.b16 %v820
        %v1087 = vunpack.c.l.b16 %v821
        %v1088 = vunpack.c.h.b16 %v821
        %v1089 = vunpack.c.l.b16 %v822
        %v1090 = vunpack.c.h.b16 %v822
        %v1091 = vunpack.c.l.b16 %v823
        %v1092 = vunpack.c.h.b16 %v823
        %v1093 = vunpack.c.l.b16 %v824
        %v1094 = vunpack.c.h.b16 %v824
        %v1095 = vunpack.c.l.b16 %v825
        %v1096 = vunpack.c.h.b16 %v825
        %v1097 = vunpack.c.l.b16 %v826
        %v1098 = vunpack.c.h.b16 %v826
        %v1099 = vunpack.c.l.b16 %v827
        %v1100 = vunpack.c.h.b16 %v827
        %v1101 = vunpack.c.l.b16 %v828
        %v1102 = vunpack.c.h.b16 %v828
        %v1103 = vunpack.c.l.b16 %v829
        %v1104 = vunpack.c.h.b16 %v829
        %v1105 = vunpack.c.l.b16 %v830
        %v1106 = vunpack.c.h.b16 %v830
        %v1107 = vunpack.c.l.b16 %v831
        %v1108 = vunpack.c.h.b16 %v831
        %v1109 = vunpack.c.l.b16 %v832
        %v1110 = vunpack.c.h.b16 %v832
        %v1111 = vunpack.c.l.b16 %v833
        %v1112 = vunpack.c.h.b16 %v833
        %v1113 = vunpack.c.l.b16 %v834
        %v1114 = vunpack.c.h.b16 %v834
        %v1115 = vunpack.c.l.b16 %v835
        %v1116 = vunpack.c.h.b16 %v835
        %v1117 = vunpack.c.l.b16 %v836
        %v1118 = vunpack.c.h.b16 %v836
        %v1119 = vunpack.c.l.b16 %v837
        %v1120 = vunpack.c.h.b16 %v837
        %v1121 = vunpack.c.l.b16 %v838
        %v1122 = vunpack.c.h.b16 %v838
        %v1123 = vunpack.c.l.b16 %v839
        %v1124 = vunpack.c.h.b16 %v839
        %v1125 = vunpack.c.l.b16 %v840
        %v1126 = vunpack.c.h.b16 %v840
        %v1127 = vunpack.c.l.b16 %v841
        %v1128 = vunpack.c.h.b16 %v841
        %v1129 = vunpack.c.l.b16 %v842
        %v1130 = vunpack.c.h.b16 %v842
        %v1131 = vunpack.c.l.b16 %v843
        %v1132 = vunpack.c.h.b16 %v843
        %v1133 = vunpack.c.l.b16 %v844
        %v1134 = vunpack.c.h.b16 %v844
        %v1135 = vunpack.c.l.b16 %v845
        %v1136 = vunpack.c.h.b16 %v845
        %v1137 = vunpack.c.l.b16 %v846
        %v1138 = vunpack.c.h.b16 %v846
        %v1139 = vunpack.c.l.b16 %v847
        %v1140 = vunpack.c.h.b16 %v847
        %v1141 = vunpack.c.l.b16 %v848
        %v1142 = vunpack.c.h.b16 %v848
        %v1143 = vunpack.c.l.b16 %v849
        %v1144 = vunpack.c.h.b16 %v849
        %v1145 = vunpack.c.l.b16 %v850
        %v1146 = vunpack.c.h.b16 %v850
        %v1147 = vunpack.c.l.b16 %v851
        %v1148 = vunpack.c.h.b16 %v851
        %v1149 = vunpack.c.l.b16 %v852
        %v1150 = vunpack.c.h.b16 %v852
        %v1151 = vunpack.c.l.b16 %v853
        %v1152 = vunpack.c.h.b16 %v853
        %v1153 = vunpack.c.l.b16 %v854
        %v1154 = vunpack.c.h.b16 %v854
        %v1155 = vunpack.c.l.b16 %v855
        %v1156 = vunpack.c.h.b16 %v855
        %v1157 = vunpack.c.l.b16 %v856
        %v1158 = vunpack.c.h.b16 %v856
        %v1159 = vunpack.c.l.b16 %v857
        %v1160 = vunpack.c.h.b16 %v857
        %v1161 = vunpack.c.l.b16 %v858
        %v1162 = vunpack.c.h.b16 %v858
        %v1163 = vunpack.c.l.b16 %v859
        %v1164 = vunpack.c.h.b16 %v859
        %v1165 = vunpack.c.l.b16 %v860
        %v1166 = vunpack.c.h.b16 %v860
        %v1167 = vunpack.c.l.b16 %v861
        %v1168 = vunpack.c.h.b16 %v861
        %v1169 = vunpack.c.l.b16 %v862
        %v1170 = vunpack.c.h.b16 %v862
        %v1171 = vunpack.c.l.b16 %v863
        %v1172 = vunpack.c.h.b16 %v863
        %v1173 = vunpack.c.l.b16 %v864
        %v1174 = vunpack.c.h.b16 %v864
        %v1175 = vunpack.c.l.b16 %v865
        %v1176 = vunpack.c.h.b16 %v865
        %v1177 = vunpack.c.l.b16 %v866
        %v1178 = vunpack.c.h.b16 %v866
        %v1179 = vunpack.c.l.b16 %v867
        %v1180 = vunpack.c.h.b16 %v867
        %v1181 = vunpack.c.l.b16 %v868
        %v1182 = vunpack.c.h.b16 %v868
        %v1183 = vunpack.c.l.b16 %v869
        %v1184 = vunpack.c.h.b16 %v869
        %v1185 = vunpack.c.l.b16 %v870
        %v1186 = vunpack.c.h.b16 %v870
        %v1187 = vpack.c.b16 %v1007, %v995
        %v1188 = vpack.c.b16 %v1008, %v996
        %v1189 = vpack.c.b16 %v1009, %v997
        %v1190 = vpack.c.b16 %v1010, %v998
        %v1191 = vpack.c.b16 %v1011, %v999
        %v1192 = vpack.c.b16 %v1012, %v1000
        %v1193 = vpack.c.b16 %v1013, %v1001
        %v1194 = vpack.c.b16 %v1014, %v1002
        %v1195 = vpack.c.b16 %v1015, %v1003
        %v1196 = vpack.c.b16 %v1016, %v1004
        %v1197 = vpack.c.b16 %v1017, %v1005
        %v1198 = vpack.c.b16 %v1018, %v1006
        %v1199 = vpack.c.b16 %v1031, %v1019
        %v1200 = vpack.c.b16 %v1032, %v1020
        %v1201 = vpack.c.b16 %v1033, %v1021
        %v1202 = vpack.c.b16 %v1034, %v1022
        %v1203 = vpack.c.b16 %v1035, %v1023
        %v1204 = vpack.c.b16 %v1036, %v1024
        %v1205 = vpack.c.b16 %v1037, %v1025
        %v1206 = vpack.c.b16 %v1038, %v1026
        %v1207 = vpack.c.b16 %v1039, %v1027
        %v1208 = vpack.c.b16 %v1040, %v1028
        %v1209 = vpack.c.b16 %v1041, %v1029
        %v1210 = vpack.c.b16 %v1042, %v1030
        %v1211 = vpack.c.b16 %v1055, %v1043
        %v1212 = vpack.c.b16 %v1056, %v1044
        %v1213 = vpack.c.b16 %v1057, %v1045
        %v1214 = vpack.c.b16 %v1058, %v1046
        %v1215 = vpack.c.b16 %v1059, %v1047
        %v1216 = vpack.c.b16 %v1060, %v1048
        %v1217 = vpack.c.b16 %v1061, %v1049
        %v1218 = vpack.c.b16 %v1062, %v1050
        %v1219 = vpack.c.b16 %v1063, %v1051
        %v1220 = vpack.c.b16 %v1064, %v1052
        %v1221 = vpack.c.b16 %v1065, %v1053
        %v1222 = vpack.c.b16 %v1066, %v1054
        %v1223 = vpack.c.b16 %v1079, %v1067
        %v1224 = vpack.c.b16 %v1080, %v1068
        %v1225 = vpack.c.b16 %v1081, %v1069
        %v1226 = vpack.c.b16 %v1082, %v1070
        %v1227 = vpack.c.b16 %v1083, %v1071
        %v1228 = vpack.c.b16 %v1084, %v1072
        %v1229 = vpack.c.b16 %v1085, %v1073
        %v1230 = vpack.c.b16 %v1086, %v1074
        %v1231 = vpack.c.b16 %v1087, %v1075
        %v1232 = vpack.c.b16 %v1088, %v1076
        %v1233 = vpack.c.b16 %v1089, %v1077
        %v1234 = vpack.c.b16 %v1090, %v1078
        %v1235 = vpack.c.b16 %v1103, %v1091
        %v1236 = vpack.c.b16 %v1104, %v1092
        %v1237 = vpack.c.b16 %v1105, %v1093
        %v1238 = vpack.c.b16 %v1106, %v1094
        %v1239 = vpack.c.b16 %v1107, %v1095
        %v1240 = vpack.c.b16 %v1108, %v1096
        %v1241 = vpack.c.b16 %v1109, %v1097
        %v1242 = vpack.c.b16 %v1110, %v1098
        %v1243 = vpack.c.b16 %v1111, %v1099
        %v1244 = vpack.c.b16 %v1112, %v1100
        %v1245 = vpack.c.b16 %v1113, %v1101
        %v1246 = vpack.c.b16 %v1114, %v1102
        %v1247 = vpack.c.b16 %v1127, %v1115
        %v1248 = vpack.c.b16 %v1128, %v1116
        %v1249 = vpack.c.b16 %v1129, %v1117
        %v1250 = vpack.c.b16 %v1130, %v1118
        %v1251 = vpack.c.b16 %v1131, %v1119
        %v1252 = vpack.c.b16 %v1132, %v1120
        %v1253 = vpack.c.b16 %v1133, %v1121
        %v1254 = vpack.c.b16 %v1134, %v1122
        %v1255 = vpack.c.b16 %v1135, %v1123
        %v1256 = vpack.c.b16 %v1136, %v1124
        %v1257 = vpack.c.b16 %v1137, %v1125
        %v1258 = vpack.c.b16 %v1138, %v1126
        %v1259 = vpack.c.b16 %v1151, %v1139
        %v1260 = vpack.c.b16 %v1152, %v1140
        %v1261 = vpack.c.b16 %v1153, %v1141
        %v1262 = vpack.c.b16 %v1154, %v1142
        %v1263 = vpack.c.b16 %v1155, %v1143
        %v1264 = vpack.c.b16 %v1156, %v1144
        %v1265 = vpack.c.b16 %v1157, %v1145
        %v1266 = vpack.c.b16 %v1158, %v1146
        %v1267 = vpack.c.b16 %v1159, %v1147
        %v1268 = vpack.c.b16 %v1160, %v1148
        %v1269 = vpack.c.b16 %v1161, %v1149
        %v1270 = vpack.c.b16 %v1162, %v1150
        %v1271 = vpack.c.b16 %v1175, %v1163
        %v1272 = vpack.c.b16 %v1176, %v1164
        %v1273 = vpack.c.b16 %v1177, %v1165
        %v1274 = vpack.c.b16 %v1178, %v1166
        %v1275 = vpack.c.b16 %v1179, %v1167
        %v1276 = vpack.c.b16 %v1180, %v1168
        %v1277 = vpack.c.b16 %v1181, %v1169
        %v1278 = vpack.c.b16 %v1182, %v1170
        %v1279 = vpack.c.b16 %v1183, %v1171
        %v1280 = vpack.c.b16 %v1184, %v1172
        %v1281 = vpack.c.b16 %v1185, %v1173
        %v1282 = vpack.c.b16 %v1186, %v1174
        %1379 = vmatpush.bf16.msra.mxu0 %v1271
        %1380 = vmatpush.bf16.msra.mxu0 %v1259
        %1381 = vmatpush.bf16.msra.mxu0 %v1247
        %1382 = vmatpush.bf16.msra.mxu0 %v1235
        %1383 = vmatpush.bf16.msra.mxu0 %v1223
        %1384 = vmatpush.bf16.msra.mxu0 %v1211
        %1385 = vmatpush.bf16.msra.mxu0 %v1199
        %1386 = vmatpush.bf16.msra.mxu0 %v1187
        %1387 = vmatmul.bf16.gmra.mxu0 %v774
        %v1388 = vpop.f32.mrf.mxu0
        %v1389 = vadd.f32 %v875, %v1388
        %v1390 = vpop.f32.mrf.mxu0
        %1391 = vdwg.mxu0
        %1392 = vmatpush.bf16.msra.mxu0 %v1272
        %1393 = vmatpush.bf16.msra.mxu0 %v1260
        %1394 = vmatpush.bf16.msra.mxu0 %v1248
        %1395 = vmatpush.bf16.msra.mxu0 %v1236
        %1396 = vmatpush.bf16.msra.mxu0 %v1224
        %1397 = vmatpush.bf16.msra.mxu0 %v1212
        %1398 = vmatpush.bf16.msra.mxu0 %v1200
        %1399 = vmatpush.bf16.msra.mxu0 %v1188
        %1400 = vmatmul.bf16.gmra.mxu0 %v774
        %v1401 = vpop.f32.mrf.mxu0
        %v1402 = vadd.f32 %v876, %v1401
        %v1403 = vpop.f32.mrf.mxu0
        %1404 = vdwg.mxu0
        %1405 = vmatpush.bf16.msra.mxu0 %v1273
        %1406 = vmatpush.bf16.msra.mxu0 %v1261
        %1407 = vmatpush.bf16.msra.mxu0 %v1249
        %1408 = vmatpush.bf16.msra.mxu0 %v1237
        %1409 = vmatpush.bf16.msra.mxu0 %v1225
        %1410 = vmatpush.bf16.msra.mxu0 %v1213
        %1411 = vmatpush.bf16.msra.mxu0 %v1201
        %1412 = vmatpush.bf16.msra.mxu0 %v1189
        %1413 = vmatmul.bf16.gmra.mxu0 %v774
        %v1414 = vpop.f32.mrf.mxu0
        %v1415 = vadd.f32 %v877, %v1414
        %v1416 = vpop.f32.mrf.mxu0
        %1417 = vdwg.mxu0
        %1418 = vmatpush.bf16.msra.mxu0 %v1274
        %1419 = vmatpush.bf16.msra.mxu0 %v1262
        %1420 = vmatpush.bf16.msra.mxu0 %v1250
        %1421 = vmatpush.bf16.msra.mxu0 %v1238
        %1422 = vmatpush.bf16.msra.mxu0 %v1226
        %1423 = vmatpush.bf16.msra.mxu0 %v1214
        %1424 = vmatpush.bf16.msra.mxu0 %v1202
        %1425 = vmatpush.bf16.msra.mxu0 %v1190
        %1426 = vmatmul.bf16.gmra.mxu0 %v774
        %v1427 = vpop.f32.mrf.mxu0
        %v1428 = vadd.f32 %v878, %v1427
        %v1429 = vpop.f32.mrf.mxu0
        %1430 = vdwg.mxu0
        %1431 = vmatpush.bf16.msra.mxu0 %v1275
        %1432 = vmatpush.bf16.msra.mxu0 %v1263
        %1433 = vmatpush.bf16.msra.mxu0 %v1251
        %1434 = vmatpush.bf16.msra.mxu0 %v1239
        %1435 = vmatpush.bf16.msra.mxu0 %v1227
        %1436 = vmatpush.bf16.msra.mxu0 %v1215
        %1437 = vmatpush.bf16.msra.mxu0 %v1203
        %1438 = vmatpush.bf16.msra.mxu0 %v1191
        %1439 = vmatmul.bf16.gmra.mxu0 %v774
        %v1440 = vpop.f32.mrf.mxu0
        %v1441 = vadd.f32 %v879, %v1440
        %v1442 = vpop.f32.mrf.mxu0
        %1443 = vdwg.mxu0
        %1444 = vmatpush.bf16.msra.mxu0 %v1276
        %1445 = vmatpush.bf16.msra.mxu0 %v1264
        %1446 = vmatpush.bf16.msra.mxu0 %v1252
        %1447 = vmatpush.bf16.msra.mxu0 %v1240
        %1448 = vmatpush.bf16.msra.mxu0 %v1228
        %1449 = vmatpush.bf16.msra.mxu0 %v1216
        %1450 = vmatpush.bf16.msra.mxu0 %v1204
        %1451 = vmatpush.bf16.msra.mxu0 %v1192
        %1452 = vmatmul.bf16.gmra.mxu0 %v774
        %v1453 = vpop.f32.mrf.mxu0
        %v1454 = vadd.f32 %v880, %v1453
        %v1455 = vpop.f32.mrf.mxu0
        %1456 = vdwg.mxu0
        %1457 = vmatpush.bf16.msra.mxu0 %v1277
        %1458 = vmatpush.bf16.msra.mxu0 %v1265
        %1459 = vmatpush.bf16.msra.mxu0 %v1253
        %1460 = vmatpush.bf16.msra.mxu0 %v1241
        %1461 = vmatpush.bf16.msra.mxu0 %v1229
        %1462 = vmatpush.bf16.msra.mxu0 %v1217
        %1463 = vmatpush.bf16.msra.mxu0 %v1205
        %1464 = vmatpush.bf16.msra.mxu0 %v1193
        %1465 = vmatmul.bf16.gmra.mxu0 %v774
        %v1466 = vpop.f32.mrf.mxu0
        %v1467 = vadd.f32 %v881, %v1466
        %v1468 = vpop.f32.mrf.mxu0
        %1469 = vdwg.mxu0
        %1470 = vmatpush.bf16.msra.mxu0 %v1278
        %1471 = vmatpush.bf16.msra.mxu0 %v1266
        %1472 = vmatpush.bf16.msra.mxu0 %v1254
        %1473 = vmatpush.bf16.msra.mxu0 %v1242
        %1474 = vmatpush.bf16.msra.mxu0 %v1230
        %1475 = vmatpush.bf16.msra.mxu0 %v1218
        %1476 = vmatpush.bf16.msra.mxu0 %v1206
        %1477 = vmatpush.bf16.msra.mxu0 %v1194
        %1478 = vmatmul.bf16.gmra.mxu0 %v774
        %v1479 = vpop.f32.mrf.mxu0
        %v1480 = vadd.f32 %v882, %v1479
        %v1481 = vpop.f32.mrf.mxu0
        %1482 = vdwg.mxu0
        %1483 = vmatpush.bf16.msra.mxu0 %v1279
        %1484 = vmatpush.bf16.msra.mxu0 %v1267
        %1485 = vmatpush.bf16.msra.mxu0 %v1255
        %1486 = vmatpush.bf16.msra.mxu0 %v1243
        %1487 = vmatpush.bf16.msra.mxu0 %v1231
        %1488 = vmatpush.bf16.msra.mxu0 %v1219
        %1489 = vmatpush.bf16.msra.mxu0 %v1207
        %1490 = vmatpush.bf16.msra.mxu0 %v1195
        %1491 = vmatmul.bf16.gmra.mxu0 %v774
        %v1492 = vpop.f32.mrf.mxu0
        %v1493 = vadd.f32 %v883, %v1492
        %v1494 = vpop.f32.mrf.mxu0
        %1495 = vdwg.mxu0
        %1496 = vmatpush.bf16.msra.mxu0 %v1280
        %1497 = vmatpush.bf16.msra.mxu0 %v1268
        %1498 = vmatpush.bf16.msra.mxu0 %v1256
        %1499 = vmatpush.bf16.msra.mxu0 %v1244
        %1500 = vmatpush.bf16.msra.mxu0 %v1232
        %1501 = vmatpush.bf16.msra.mxu0 %v1220
        %1502 = vmatpush.bf16.msra.mxu0 %v1208
        %1503 = vmatpush.bf16.msra.mxu0 %v1196
        %1504 = vmatmul.bf16.gmra.mxu0 %v774
        %v1505 = vpop.f32.mrf.mxu0
        %v1506 = vadd.f32 %v884, %v1505
        %v1507 = vpop.f32.mrf.mxu0
        %1508 = vdwg.mxu0
        %1509 = vmatpush.bf16.msra.mxu0 %v1281
        %1510 = vmatpush.bf16.msra.mxu0 %v1269
        %1511 = vmatpush.bf16.msra.mxu0 %v1257
        %1512 = vmatpush.bf16.msra.mxu0 %v1245
        %1513 = vmatpush.bf16.msra.mxu0 %v1233
        %1514 = vmatpush.bf16.msra.mxu0 %v1221
        %1515 = vmatpush.bf16.msra.mxu0 %v1209
        %1516 = vmatpush.bf16.msra.mxu0 %v1197
        %1517 = vmatmul.bf16.gmra.mxu0 %v774
        %v1518 = vpop.f32.mrf.mxu0
        %v1519 = vadd.f32 %v885, %v1518
        %v1520 = vpop.f32.mrf.mxu0
        %1521 = vdwg.mxu0
        %1522 = vmatpush.bf16.msra.mxu0 %v1282
        %1523 = vmatpush.bf16.msra.mxu0 %v1270
        %1524 = vmatpush.bf16.msra.mxu0 %v1258
        %1525 = vmatpush.bf16.msra.mxu0 %v1246
        %1526 = vmatpush.bf16.msra.mxu0 %v1234
        %1527 = vmatpush.bf16.msra.mxu0 %v1222
        %1528 = vmatpush.bf16.msra.mxu0 %v1210
        %1529 = vmatpush.bf16.msra.mxu0 %v1198
        %1530 = vmatmul.bf16.gmra.mxu0 %v774
        %v1531 = vpop.f32.mrf.mxu0
        %v1532 = vadd.f32 %v886, %v1531
        %v1533 = vpop.f32.mrf.mxu0
        %1534 = vdwg.mxu0
        %v1535 = vpack.c.bf16 %v1402, %v1389
        %v1536 = vpack.c.bf16 %v1428, %v1415
        %v1537 = vpack.c.bf16 %v1454, %v1441
        %v1538 = vpack.c.bf16 %v1480, %v1467
        %v1539 = vpack.c.bf16 %v1506, %v1493
        %v1540 = vpack.c.bf16 %v1532, %v1519
        %vm1541 = vcmp.lt.s32.totalorder %v745, %v741
        %v1542 = vld [vmem:[#allocation11] sm:$0xf]
        %v1543 = vld [vmem:[#allocation11 + $0x4] sm:$0xf]
        %v1544 = vld [vmem:[#allocation11 + $0x8] sm:$0xf]
        %v1545 = vld [vmem:[#allocation11 + $0xc] sm:$0xf]
        %v1546 = vld [vmem:[#allocation11 + $0x10] sm:$0xf]
        %v1547 = vld [vmem:[#allocation11 + $0x14] sm:$0xf]
        %v1548 = vld [vmem:[#allocation11 + $0x18] sm:$0xf]
        %v1549 = vld [vmem:[#allocation11 + $0x1c] sm:$0xf]
        %v1550 = vld [vmem:[#allocation11 + $0x20] sm:$0xf]
        %v1551 = vld [vmem:[#allocation11 + $0x24] sm:$0xf]
        %v1552 = vld [vmem:[#allocation11 + $0x28] sm:$0xf]
        %v1553 = vld [vmem:[#allocation11 + $0x2c] sm:$0xf]
        %v1554 = vld [vmem:[#allocation11 + $0x30] sm:$0xf]
        %v1555 = vld [vmem:[#allocation11 + $0x34] sm:$0xf]
        %v1556 = vld [vmem:[#allocation11 + $0x38] sm:$0xf]
        %v1557 = vld [vmem:[#allocation11 + $0x3c] sm:$0xf]
        %v1558 = vld [vmem:[#allocation11 + $0x40] sm:$0xf]
        %v1559 = vld [vmem:[#allocation11 + $0x44] sm:$0xf]
        %v1560 = vld [vmem:[#allocation11 + $0x48] sm:$0xf]
        %v1561 = vld [vmem:[#allocation11 + $0x4c] sm:$0xf]
        %v1562 = vld [vmem:[#allocation11 + $0x50] sm:$0xf]
        %v1563 = vld [vmem:[#allocation11 + $0x54] sm:$0xf]
        %v1564 = vld [vmem:[#allocation11 + $0x58] sm:$0xf]
        %v1565 = vld [vmem:[#allocation11 + $0x5c] sm:$0xf]
        %v1566 = vld [vmem:[#allocation11 + $0x60] sm:$0xf]
        %v1567 = vld [vmem:[#allocation11 + $0x64] sm:$0xf]
        %v1568 = vld [vmem:[#allocation11 + $0x68] sm:$0xf]
        %v1569 = vld [vmem:[#allocation11 + $0x6c] sm:$0xf]
        %v1570 = vld [vmem:[#allocation11 + $0x70] sm:$0xf]
        %v1571 = vld [vmem:[#allocation11 + $0x74] sm:$0xf]
        %v1572 = vld [vmem:[#allocation11 + $0x78] sm:$0xf]
        %v1573 = vld [vmem:[#allocation11 + $0x7c] sm:$0xf]
        %v1574 = vld [vmem:[#allocation11 + $0x80] sm:$0xf]
        %v1575 = vld [vmem:[#allocation11 + $0x84] sm:$0xf]
        %v1576 = vld [vmem:[#allocation11 + $0x88] sm:$0xf]
        %v1577 = vld [vmem:[#allocation11 + $0x8c] sm:$0xf]
        %v1578 = vld [vmem:[#allocation11 + $0x90] sm:$0xf]
        %v1579 = vld [vmem:[#allocation11 + $0x94] sm:$0xf]
        %v1580 = vld [vmem:[#allocation11 + $0x98] sm:$0xf]
        %v1581 = vld [vmem:[#allocation11 + $0x9c] sm:$0xf]
        %v1582 = vld [vmem:[#allocation11 + $0xa0] sm:$0xf]
        %v1583 = vld [vmem:[#allocation11 + $0xa4] sm:$0xf]
        %v1584 = vld [vmem:[#allocation11 + $0xa8] sm:$0xf]
        %v1585 = vld [vmem:[#allocation11 + $0xac] sm:$0xf]
        %v1586 = vld [vmem:[#allocation11 + $0xb0] sm:$0xf]
        %v1587 = vld [vmem:[#allocation11 + $0xb4] sm:$0xf]
        %v1588 = vld [vmem:[#allocation11 + $0xb8] sm:$0xf]
        %v1589 = vld [vmem:[#allocation11 + $0xbc] sm:$0xf]
        %v1590 = vld [vmem:[#allocation11 + $0xc0] sm:$0xf]
        %v1591 = vld [vmem:[#allocation11 + $0xc4] sm:$0xf]
        %v1592 = vld [vmem:[#allocation11 + $0xc8] sm:$0xf]
        %v1593 = vld [vmem:[#allocation11 + $0xcc] sm:$0xf]
        %v1594 = vld [vmem:[#allocation11 + $0xd0] sm:$0xf]
        %v1595 = vld [vmem:[#allocation11 + $0xd4] sm:$0xf]
        %v1596 = vld [vmem:[#allocation11 + $0xd8] sm:$0xf]
        %v1597 = vld [vmem:[#allocation11 + $0xdc] sm:$0xf]
        %v1598 = vld [vmem:[#allocation11 + $0xe0] sm:$0xf]
        %v1599 = vld [vmem:[#allocation11 + $0xe4] sm:$0xf]
        %v1600 = vld [vmem:[#allocation11 + $0xe8] sm:$0xf]
        %v1601 = vld [vmem:[#allocation11 + $0xec] sm:$0xf]
        %v1602 = vld [vmem:[#allocation11 + $0xf0] sm:$0xf]
        %v1603 = vld [vmem:[#allocation11 + $0xf4] sm:$0xf]
        %v1604 = vld [vmem:[#allocation11 + $0xf8] sm:$0xf]
        %v1605 = vld [vmem:[#allocation11 + $0xfc] sm:$0xf]
        %1606 = vmatpush.bf16.xpose.msra.mxu0 0
        %1607 = vmatpush.bf16.xpose.msra.mxu0 0
        %1608 = vmatpush.bf16.xpose.msra.mxu0 0
        %1609 = vmatpush.bf16.xpose.msra.mxu0 0
        %1610 = vmatpush.bf16.xpose.msra.mxu0 0
        %1611 = vmatpush.bf16.xpose.msra.mxu0 0
        %1612 = vmatpush.bf16.xpose.msra.mxu0 0
        %1613 = vmatpush.bf16.xpose.msra.mxu0 %v1537
        %1614 = vmatmul.bf16.gmra.mxu0 %v1535
        %v1615 = vpop.f32.mrf.mxu0
        %v1616 = vadd.f32 0.0, %v1615
        %v1617 = vpop.f32.mrf.mxu0
        %1618 = vdwg.mxu0
        %v1619 = vsel %vm1541, -1e+30, %v1616
        %vm1620 = vcmask 64512
        %v1621 = vsel %vm1620, %v1619, -inf
        %1622 = vmax.xlane.f32.xlu0 %v1621
        %v1623 = vpop.xlane.xlu0 %1622
        %v1624 = vsub.f32 %v1619, %v1623
        %v1625 = vmul.f32 %v1624, 1.442695
        %v1626 = vpow.pop %v1625
        %v1627 = vsel %vm1620, %v1626, 0.0
        %1628 = vadd.xlane.f32.xlu0 %v1627
        %v1629 = vpop.xlane.xlu0 %1628
        %v1630 = vrcp.pop %v1629
        %v1631 = vmul.f32 %v1626, %v1630
        %v1632 = vpack.c.bf16 %v1631, %v1631
        %v1634 = vsel %vm1620, %v1632, 0
        %vm1636 = vcmask 1043456
        %v1638 = vsel %vm1636, %v1539, 0
        %1640 = vmatpush.bf16.msra.mxu0 0
        %1641 = vmatpush.bf16.msra.mxu0 0
        %1642 = vmatpush.bf16.msra.mxu0 0
        %1643 = vmatpush.bf16.msra.mxu0 0
        %1644 = vmatpush.bf16.msra.mxu0 0
        %1645 = vmatpush.bf16.msra.mxu0 0
        %1646 = vmatpush.bf16.msra.mxu0 0
        %1647 = vmatpush.bf16.msra.mxu0 %v1638
        %1648 = vmatmul.bf16.gmra.mxu0 %v1634
        %v1649 = vpop.f32.mrf.mxu0
        %v1650 = vadd.f32 0.0, %v1649
        %v1651 = vpop.f32.mrf.mxu0
        %1652 = vdwg.mxu0
        %v1653 = vpack.c.bf16 %v1650, %v1650
        %v1655 = vrot.slane %v1535, 4
        %v1658 = vrot.slane %v1537, 4
        %v1661 = vrot.slane %v1539, 4
        %1662 = vmatpush.bf16.xpose.msra.mxu0 0
        %1663 = vmatpush.bf16.xpose.msra.mxu0 0
        %1664 = vmatpush.bf16.xpose.msra.mxu0 0
        %1665 = vmatpush.bf16.xpose.msra.mxu0 0
        %1666 = vmatpush.bf16.xpose.msra.mxu0 0
        %1667 = vmatpush.bf16.xpose.msra.mxu0 0
        %1668 = vmatpush.bf16.xpose.msra.mxu0 0
        %1669 = vmatpush.bf16.xpose.msra.mxu0 %v1658
        %1670 = vmatmul.bf16.gmra.mxu0 %v1655
        %v1671 = vpop.f32.mrf.mxu0
        %v1672 = vadd.f32 0.0, %v1671
        %v1673 = vpop.f32.mrf.mxu0
        %1674 = vdwg.mxu0
        %v1675 = vsel %vm1541, -1e+30, %v1672
        %v1676 = vsel %vm1620, %v1675, -inf
        %1677 = vmax.xlane.f32.xlu0 %v1676
        %v1678 = vpop.xlane.xlu0 %1677
        %v1679 = vsub.f32 %v1675, %v1678
        %v1680 = vmul.f32 %v1679, 1.442695
        %v1681 = vpow.pop %v1680
        %v1682 = vsel %vm1620, %v1681, 0.0
        %1683 = vadd.xlane.f32.xlu0 %v1682
        %v1684 = vpop.xlane.xlu0 %1683
        %v1685 = vrcp.pop %v1684
        %v1686 = vmul.f32 %v1681, %v1685
        %v1687 = vpack.c.bf16 %v1686, %v1686
        %v1689 = vsel %vm1620, %v1687, 0
        %v1692 = vsel %vm1636, %v1661, 0
        %1694 = vmatpush.bf16.msra.mxu0 0
        %1695 = vmatpush.bf16.msra.mxu0 0
        %1696 = vmatpush.bf16.msra.mxu0 0
        %1697 = vmatpush.bf16.msra.mxu0 0
        %1698 = vmatpush.bf16.msra.mxu0 0
        %1699 = vmatpush.bf16.msra.mxu0 0
        %1700 = vmatpush.bf16.msra.mxu0 0
        %1701 = vmatpush.bf16.msra.mxu0 %v1692
        %1702 = vmatmul.bf16.gmra.mxu0 %v1689
        %v1703 = vpop.f32.mrf.mxu0
        %v1704 = vadd.f32 0.0, %v1703
        %v1705 = vpop.f32.mrf.mxu0
        %1706 = vdwg.mxu0
        %v1707 = vpack.c.bf16 %v1704, %v1704
        %v1724 = vunpack.c.l.b16 %v1558
        %v1725 = vunpack.c.l.b16 %v1559
        %v1726 = vunpack.c.l.b16 %v1560
        %v1727 = vunpack.c.l.b16 %v1561
        %v1728 = vunpack.c.l.b16 %v1562
        %v1729 = vunpack.c.l.b16 %v1563
        %v1730 = vunpack.c.l.b16 %v1564
        %v1731 = vunpack.c.l.b16 %v1565
        %v1732 = vunpack.c.l.b16 %v1566
        %v1733 = vunpack.c.l.b16 %v1567
        %v1734 = vunpack.c.l.b16 %v1568
        %v1735 = vunpack.c.l.b16 %v1569
        %v1736 = vunpack.c.l.b16 %v1570
        %v1737 = vunpack.c.l.b16 %v1571
        %v1738 = vunpack.c.l.b16 %v1572
        %v1739 = vunpack.c.l.b16 %v1573
        %v1740 = vpack.c.b16 %v1725, %v1724
        %v1741 = vpack.c.b16 %v1727, %v1726
        %v1742 = vpack.c.b16 %v1729, %v1728
        %v1743 = vpack.c.b16 %v1731, %v1730
        %v1744 = vpack.c.b16 %v1733, %v1732
        %v1745 = vpack.c.b16 %v1735, %v1734
        %v1746 = vpack.c.b16 %v1737, %v1736
        %v1747 = vpack.c.b16 %v1739, %v1738
        %1756 = vmatpush.bf16.msra.mxu0 %v1747
        %1757 = vmatpush.bf16.msra.mxu0 %v1746
        %1758 = vmatpush.bf16.msra.mxu0 %v1745
        %1759 = vmatpush.bf16.msra.mxu0 %v1744
        %1760 = vmatpush.bf16.msra.mxu0 %v1743
        %1761 = vmatpush.bf16.msra.mxu0 %v1742
        %1762 = vmatpush.bf16.msra.mxu0 %v1741
        %1763 = vmatpush.bf16.msra.mxu0 %v1740
        %1764 = vmatmul.bf16.gmra.mxu0 %v1707
        %v1765 = vpop.f32.mrf.mxu0
        %v1766 = vadd.f32 0.0, %v1765
        %v1767 = vpop.f32.mrf.mxu0
        %1768 = vdwg.mxu0
        %v1785 = vunpack.c.l.b16 %v1542
        %v1786 = vunpack.c.l.b16 %v1543
        %v1787 = vunpack.c.l.b16 %v1544
        %v1788 = vunpack.c.l.b16 %v1545
        %v1789 = vunpack.c.l.b16 %v1546
        %v1790 = vunpack.c.l.b16 %v1547
        %v1791 = vunpack.c.l.b16 %v1548
        %v1792 = vunpack.c.l.b16 %v1549
        %v1793 = vunpack.c.l.b16 %v1550
        %v1794 = vunpack.c.l.b16 %v1551
        %v1795 = vunpack.c.l.b16 %v1552
        %v1796 = vunpack.c.l.b16 %v1553
        %v1797 = vunpack.c.l.b16 %v1554
        %v1798 = vunpack.c.l.b16 %v1555
        %v1799 = vunpack.c.l.b16 %v1556
        %v1800 = vunpack.c.l.b16 %v1557
        %v1801 = vpack.c.b16 %v1786, %v1785
        %v1802 = vpack.c.b16 %v1788, %v1787
        %v1803 = vpack.c.b16 %v1790, %v1789
        %v1804 = vpack.c.b16 %v1792, %v1791
        %v1805 = vpack.c.b16 %v1794, %v1793
        %v1806 = vpack.c.b16 %v1796, %v1795
        %v1807 = vpack.c.b16 %v1798, %v1797
        %v1808 = vpack.c.b16 %v1800, %v1799
        %1817 = vmatpush.bf16.msra.mxu0 %v1808
        %1818 = vmatpush.bf16.msra.mxu0 %v1807
        %1819 = vmatpush.bf16.msra.mxu0 %v1806
        %1820 = vmatpush.bf16.msra.mxu0 %v1805
        %1821 = vmatpush.bf16.msra.mxu0 %v1804
        %1822 = vmatpush.bf16.msra.mxu0 %v1803
        %1823 = vmatpush.bf16.msra.mxu0 %v1802
        %1824 = vmatpush.bf16.msra.mxu0 %v1801
        %1825 = vmatmul.bf16.gmra.mxu0 %v1653
        %v1826 = vpop.f32.mrf.mxu0
        %v1827 = vadd.f32 %v1766, %v1826
        %v1828 = vpop.f32.mrf.mxu0
        %1829 = vdwg.mxu0
        %1830 = vmatpush.bf16.xpose.msra.mxu0 0
        %1831 = vmatpush.bf16.xpose.msra.mxu0 0
        %1832 = vmatpush.bf16.xpose.msra.mxu0 0
        %1833 = vmatpush.bf16.xpose.msra.mxu0 0
        %1834 = vmatpush.bf16.xpose.msra.mxu0 0
        %1835 = vmatpush.bf16.xpose.msra.mxu0 0
        %1836 = vmatpush.bf16.xpose.msra.mxu0 0
        %1837 = vmatpush.bf16.xpose.msra.mxu0 %v1538
        %1838 = vmatmul.bf16.gmra.mxu0 %v1536
        %v1839 = vpop.f32.mrf.mxu0
        %v1840 = vadd.f32 0.0, %v1839
        %v1841 = vpop.f32.mrf.mxu0
        %1842 = vdwg.mxu0
        %v1843 = vsel %vm1541, -1e+30, %v1840
        %v1844 = vsel %vm1620, %v1843, -inf
        %1845 = vmax.xlane.f32.xlu0 %v1844
        %v1846 = vpop.xlane.xlu0 %1845
        %v1847 = vsub.f32 %v1843, %v1846
        %v1848 = vmul.f32 %v1847, 1.442695
        %v1849 = vpow.pop %v1848
        %v1850 = vsel %vm1620, %v1849, 0.0
        %1851 = vadd.xlane.f32.xlu0 %v1850
        %v1852 = vpop.xlane.xlu0 %1851
        %v1853 = vrcp.pop %v1852
        %v1854 = vmul.f32 %v1849, %v1853
        %v1855 = vpack.c.bf16 %v1854, %v1854
        %v1857 = vsel %vm1620, %v1855, 0
        %v1860 = vsel %vm1636, %v1540, 0
        %1862 = vmatpush.bf16.msra.mxu0 0
        %1863 = vmatpush.bf16.msra.mxu0 0
        %1864 = vmatpush.bf16.msra.mxu0 0
        %1865 = vmatpush.bf16.msra.mxu0 0
        %1866 = vmatpush.bf16.msra.mxu0 0
        %1867 = vmatpush.bf16.msra.mxu0 0
        %1868 = vmatpush.bf16.msra.mxu0 0
        %1869 = vmatpush.bf16.msra.mxu0 %v1860
        %1870 = vmatmul.bf16.gmra.mxu0 %v1857
        %v1871 = vpop.f32.mrf.mxu0
        %v1872 = vadd.f32 0.0, %v1871
        %v1873 = vpop.f32.mrf.mxu0
        %1874 = vdwg.mxu0
        %v1875 = vpack.c.bf16 %v1872, %v1872
        %v1892 = vunpack.c.l.b16 %v1574
        %v1893 = vunpack.c.l.b16 %v1575
        %v1894 = vunpack.c.l.b16 %v1576
        %v1895 = vunpack.c.l.b16 %v1577
        %v1896 = vunpack.c.l.b16 %v1578
        %v1897 = vunpack.c.l.b16 %v1579
        %v1898 = vunpack.c.l.b16 %v1580
        %v1899 = vunpack.c.l.b16 %v1581
        %v1900 = vunpack.c.l.b16 %v1582
        %v1901 = vunpack.c.l.b16 %v1583
        %v1902 = vunpack.c.l.b16 %v1584
        %v1903 = vunpack.c.l.b16 %v1585
        %v1904 = vunpack.c.l.b16 %v1586
        %v1905 = vunpack.c.l.b16 %v1587
        %v1906 = vunpack.c.l.b16 %v1588
        %v1907 = vunpack.c.l.b16 %v1589
        %v1908 = vpack.c.b16 %v1893, %v1892
        %v1909 = vpack.c.b16 %v1895, %v1894
        %v1910 = vpack.c.b16 %v1897, %v1896
        %v1911 = vpack.c.b16 %v1899, %v1898
        %v1912 = vpack.c.b16 %v1901, %v1900
        %v1913 = vpack.c.b16 %v1903, %v1902
        %v1914 = vpack.c.b16 %v1905, %v1904
        %v1915 = vpack.c.b16 %v1907, %v1906
        %1924 = vmatpush.bf16.msra.mxu0 %v1915
        %1925 = vmatpush.bf16.msra.mxu0 %v1914
        %1926 = vmatpush.bf16.msra.mxu0 %v1913
        %1927 = vmatpush.bf16.msra.mxu0 %v1912
        %1928 = vmatpush.bf16.msra.mxu0 %v1911
        %1929 = vmatpush.bf16.msra.mxu0 %v1910
        %1930 = vmatpush.bf16.msra.mxu0 %v1909
        %1931 = vmatpush.bf16.msra.mxu0 %v1908
        %1932 = vmatmul.bf16.gmra.mxu0 %v1875
        %v1933 = vpop.f32.mrf.mxu0
        %v1934 = vadd.f32 0.0, %v1933
        %v1935 = vpop.f32.mrf.mxu0
        %1936 = vdwg.mxu0
        %v1937 = vadd.f32 %v1827, %v1934
        %v1939 = vrot.slane %v1536, 4
        %v1942 = vrot.slane %v1538, 4
        %v1945 = vrot.slane %v1540, 4
        %1946 = vmatpush.bf16.xpose.msra.mxu0 0
        %1947 = vmatpush.bf16.xpose.msra.mxu0 0
        %1948 = vmatpush.bf16.xpose.msra.mxu0 0
        %1949 = vmatpush.bf16.xpose.msra.mxu0 0
        %1950 = vmatpush.bf16.xpose.msra.mxu0 0
        %1951 = vmatpush.bf16.xpose.msra.mxu0 0
        %1952 = vmatpush.bf16.xpose.msra.mxu0 0
        %1953 = vmatpush.bf16.xpose.msra.mxu0 %v1942
        %1954 = vmatmul.bf16.gmra.mxu0 %v1939
        %v1955 = vpop.f32.mrf.mxu0
        %v1956 = vadd.f32 0.0, %v1955
        %v1957 = vpop.f32.mrf.mxu0
        %1958 = vdwg.mxu0
        %v1959 = vsel %vm1541, -1e+30, %v1956
        %v1960 = vsel %vm1620, %v1959, -inf
        %1961 = vmax.xlane.f32.xlu0 %v1960
        %v1962 = vpop.xlane.xlu0 %1961
        %v1963 = vsub.f32 %v1959, %v1962
        %v1964 = vmul.f32 %v1963, 1.442695
        %v1965 = vpow.pop %v1964
        %v1966 = vsel %vm1620, %v1965, 0.0
        %1967 = vadd.xlane.f32.xlu0 %v1966
        %v1968 = vpop.xlane.xlu0 %1967
        %v1969 = vrcp.pop %v1968
        %v1970 = vmul.f32 %v1965, %v1969
        %v1971 = vpack.c.bf16 %v1970, %v1970
        %v1973 = vsel %vm1620, %v1971, 0
        %v1976 = vsel %vm1636, %v1945, 0
        %1978 = vmatpush.bf16.msra.mxu0 0
        %1979 = vmatpush.bf16.msra.mxu0 0
        %1980 = vmatpush.bf16.msra.mxu0 0
        %1981 = vmatpush.bf16.msra.mxu0 0
        %1982 = vmatpush.bf16.msra.mxu0 0
        %1983 = vmatpush.bf16.msra.mxu0 0
        %1984 = vmatpush.bf16.msra.mxu0 0
        %1985 = vmatpush.bf16.msra.mxu0 %v1976
        %1986 = vmatmul.bf16.gmra.mxu0 %v1973
        %v1987 = vpop.f32.mrf.mxu0
        %v1988 = vadd.f32 0.0, %v1987
        %v1989 = vpop.f32.mrf.mxu0
        %1990 = vdwg.mxu0
        %v1991 = vpack.c.bf16 %v1988, %v1988
        %v2008 = vunpack.c.l.b16 %v1590
        %v2009 = vunpack.c.l.b16 %v1591
        %v2010 = vunpack.c.l.b16 %v1592
        %v2011 = vunpack.c.l.b16 %v1593
        %v2012 = vunpack.c.l.b16 %v1594
        %v2013 = vunpack.c.l.b16 %v1595
        %v2014 = vunpack.c.l.b16 %v1596
        %v2015 = vunpack.c.l.b16 %v1597
        %v2016 = vunpack.c.l.b16 %v1598
        %v2017 = vunpack.c.l.b16 %v1599
        %v2018 = vunpack.c.l.b16 %v1600
        %v2019 = vunpack.c.l.b16 %v1601
        %v2020 = vunpack.c.l.b16 %v1602
        %v2021 = vunpack.c.l.b16 %v1603
        %v2022 = vunpack.c.l.b16 %v1604
        %v2023 = vunpack.c.l.b16 %v1605
        %v2024 = vpack.c.b16 %v2009, %v2008
        %v2025 = vpack.c.b16 %v2011, %v2010
        %v2026 = vpack.c.b16 %v2013, %v2012
        %v2027 = vpack.c.b16 %v2015, %v2014
        %v2028 = vpack.c.b16 %v2017, %v2016
        %v2029 = vpack.c.b16 %v2019, %v2018
        %v2030 = vpack.c.b16 %v2021, %v2020
        %v2031 = vpack.c.b16 %v2023, %v2022
        %2040 = vmatpush.bf16.msra.mxu0 %v2031
        %2041 = vmatpush.bf16.msra.mxu0 %v2030
        %2042 = vmatpush.bf16.msra.mxu0 %v2029
        %2043 = vmatpush.bf16.msra.mxu0 %v2028
        %2044 = vmatpush.bf16.msra.mxu0 %v2027
        %2045 = vmatpush.bf16.msra.mxu0 %v2026
        %2046 = vmatpush.bf16.msra.mxu0 %v2025
        %2047 = vmatpush.bf16.msra.mxu0 %v2024
        %2048 = vmatmul.bf16.gmra.mxu0 %v1991
        %v2049 = vpop.f32.mrf.mxu0
        %v2050 = vadd.f32 0.0, %v2049
        %v2051 = vpop.f32.mrf.mxu0
        %2052 = vdwg.mxu0
        %v2053 = vadd.f32 %v1937, %v2050
        %v2054 = vld [vmem:[%s6] sm:$0x1]
        %v2055 = vperm.slane %v2054, 0
        %v2056 = vadd.f32 %v2053, %v2055
        %v2057 = vadd.f32 %v2056, %v739
        %v2058 = vld [vmem:[%s7] sm:$0x1]
        %v2059 = vld [vmem:[%s8] sm:$0x1]
        %2060 = vadd.xlane.f32.xlu0 %v2057
        %v2061 = vpop.xlane.xlu0 %2060
        %v2062 = vmul.f32 %v2061, 0.03125
        %v2063 = vmul.f32 %v2057, %v2057
        %2064 = vadd.xlane.f32.xlu0 %v2063
        %v2065 = vpop.xlane.xlu0 %2064
        %v2066 = vmul.f32 %v2065, 0.03125
        %v2067 = vmul.f32 %v2062, %v2062
        %v2068 = vsub.f32 %v2066, %v2067
        %v2069 = vsub.f32 %v2057, %v2062
        %v2070 = vadd.f32 %v2068, 1e-05
        %v2071 = vrsqrt.pop %v2070
        %v2072 = vmul.f32 %v2071, %v2070
        %v2073 = vmul.f32 %v2072, %v2071
        %v2074 = vmul.f32 0.5, %v2073
        %v2075 = vsub.f32 1.5, %v2074
        %v2076 = vmul.f32 %v2071, %v2075
        %vm2077 = vweird.f32 %v2070
        %vm2078 = vweird.f32 %v2071
        %vm2079 = vmor %vm2077, %vm2078
        %v2080 = vsel %vm2079, %v2071, %v2076
        %v2081 = vmul.f32 %v2069, %v2080
        %v2082 = vperm.slane %v2058, 0
        %v2083 = vmul.f32 %v2081, %v2082
        %v2084 = vperm.slane %v2059, 0
        %v2085 = vadd.f32 %v2083, %v2084
        %v2086 = vpack.c.bf16 %v2085, %v2085
        %v2087 = vld [vmem:[#allocation13] sm:$0xff]
        %v2088 = vld [vmem:[#allocation13 + $0x8] sm:$0xf]
        %v2089 = vld [vmem:[#allocation13 + $0xc] sm:$0xff]
        %v2090 = vld [vmem:[#allocation13 + $0x14] sm:$0xf]
        %v2091 = vld [vmem:[#allocation13 + $0x18] sm:$0xff]
        %v2092 = vld [vmem:[#allocation13 + $0x20] sm:$0xf]
        %v2093 = vld [vmem:[#allocation13 + $0x24] sm:$0xff]
        %v2094 = vld [vmem:[#allocation13 + $0x2c] sm:$0xf]
        %v2095 = vld [vmem:[#allocation13 + $0x30] sm:$0xff]
        %v2096 = vld [vmem:[#allocation13 + $0x38] sm:$0xf]
        %v2097 = vld [vmem:[#allocation13 + $0x3c] sm:$0xff]
        %v2098 = vld [vmem:[#allocation13 + $0x44] sm:$0xf]
        %v2099 = vld [vmem:[#allocation13 + $0x48] sm:$0xff]
        %v2100 = vld [vmem:[#allocation13 + $0x50] sm:$0xf]
        %v2101 = vld [vmem:[#allocation13 + $0x54] sm:$0xff]
        %v2102 = vld [vmem:[#allocation13 + $0x5c] sm:$0xf]
        %v2103 = vld [vmem:[#allocation13 + $0x60] sm:$0xff]
        %v2104 = vld [vmem:[#allocation13 + $0x68] sm:$0xf]
        %v2105 = vld [vmem:[#allocation13 + $0x6c] sm:$0xff]
        %v2106 = vld [vmem:[#allocation13 + $0x74] sm:$0xf]
        %v2107 = vld [vmem:[#allocation13 + $0x78] sm:$0xff]
        %v2108 = vld [vmem:[#allocation13 + $0x80] sm:$0xf]
        %v2109 = vld [vmem:[#allocation13 + $0x84] sm:$0xff]
        %v2110 = vld [vmem:[#allocation13 + $0x8c] sm:$0xf]
        %v2111 = vld [vmem:[#allocation13 + $0x90] sm:$0xff]
        %v2112 = vld [vmem:[#allocation13 + $0x98] sm:$0xf]
        %v2113 = vld [vmem:[#allocation13 + $0x9c] sm:$0xff]
        %v2114 = vld [vmem:[#allocation13 + $0xa4] sm:$0xf]
        %v2115 = vld [vmem:[#allocation13 + $0xa8] sm:$0xff]
        %v2116 = vld [vmem:[#allocation13 + $0xb0] sm:$0xf]
        %v2117 = vld [vmem:[#allocation13 + $0xb4] sm:$0xff]
        %v2118 = vld [vmem:[#allocation13 + $0xbc] sm:$0xf]
        %v2119 = vld [vmem:[%s10] sm:$0x1]
        %v2152 = vunpack.c.l.b16 %v2087
        %v2153 = vunpack.c.h.b16 %v2087
        %v2154 = vunpack.c.l.b16 %v2088
        %v2155 = vunpack.c.l.b16 %v2089
        %v2156 = vunpack.c.h.b16 %v2089
        %v2157 = vunpack.c.l.b16 %v2090
        %v2158 = vunpack.c.l.b16 %v2091
        %v2159 = vunpack.c.h.b16 %v2091
        %v2160 = vunpack.c.l.b16 %v2092
        %v2161 = vunpack.c.l.b16 %v2093
        %v2162 = vunpack.c.h.b16 %v2093
        %v2163 = vunpack.c.l.b16 %v2094
        %v2164 = vunpack.c.l.b16 %v2095
        %v2165 = vunpack.c.h.b16 %v2095
        %v2166 = vunpack.c.l.b16 %v2096
        %v2167 = vunpack.c.l.b16 %v2097
        %v2168 = vunpack.c.h.b16 %v2097
        %v2169 = vunpack.c.l.b16 %v2098
        %v2170 = vunpack.c.l.b16 %v2099
        %v2171 = vunpack.c.h.b16 %v2099
        %v2172 = vunpack.c.l.b16 %v2100
        %v2173 = vunpack.c.l.b16 %v2101
        %v2174 = vunpack.c.h.b16 %v2101
        %v2175 = vunpack.c.l.b16 %v2102
        %v2176 = vunpack.c.l.b16 %v2103
        %v2177 = vunpack.c.h.b16 %v2103
        %v2178 = vunpack.c.l.b16 %v2104
        %v2179 = vunpack.c.l.b16 %v2105
        %v2180 = vunpack.c.h.b16 %v2105
        %v2181 = vunpack.c.l.b16 %v2106
        %v2182 = vunpack.c.l.b16 %v2107
        %v2183 = vunpack.c.h.b16 %v2107
        %v2184 = vunpack.c.l.b16 %v2108
        %v2185 = vunpack.c.l.b16 %v2109
        %v2186 = vunpack.c.h.b16 %v2109
        %v2187 = vunpack.c.l.b16 %v2110
        %v2188 = vunpack.c.l.b16 %v2111
        %v2189 = vunpack.c.h.b16 %v2111
        %v2190 = vunpack.c.l.b16 %v2112
        %v2191 = vunpack.c.l.b16 %v2113
        %v2192 = vunpack.c.h.b16 %v2113
        %v2193 = vunpack.c.l.b16 %v2114
        %v2194 = vunpack.c.l.b16 %v2115
        %v2195 = vunpack.c.h.b16 %v2115
        %v2196 = vunpack.c.l.b16 %v2116
        %v2197 = vunpack.c.l.b16 %v2117
        %v2198 = vunpack.c.h.b16 %v2117
        %v2199 = vunpack.c.l.b16 %v2118
        %v2200 = vpack.c.b16 %v2155, %v2152
        %v2201 = vpack.c.b16 %v2156, %v2153
        %v2202 = vpack.c.b16 %v2157, %v2154
        %v2203 = vpack.c.b16 %v2161, %v2158
        %v2204 = vpack.c.b16 %v2162, %v2159
        %v2205 = vpack.c.b16 %v2163, %v2160
        %v2206 = vpack.c.b16 %v2167, %v2164
        %v2207 = vpack.c.b16 %v2168, %v2165
        %v2208 = vpack.c.b16 %v2169, %v2166
        %v2209 = vpack.c.b16 %v2173, %v2170
        %v2210 = vpack.c.b16 %v2174, %v2171
        %v2211 = vpack.c.b16 %v2175, %v2172
        %v2212 = vpack.c.b16 %v2179, %v2176
        %v2213 = vpack.c.b16 %v2180, %v2177
        %v2214 = vpack.c.b16 %v2181, %v2178
        %v2215 = vpack.c.b16 %v2185, %v2182
        %v2216 = vpack.c.b16 %v2186, %v2183
        %v2217 = vpack.c.b16 %v2187, %v2184
        %v2218 = vpack.c.b16 %v2191, %v2188
        %v2219 = vpack.c.b16 %v2192, %v2189
        %v2220 = vpack.c.b16 %v2193, %v2190
        %v2221 = vpack.c.b16 %v2197, %v2194
        %v2222 = vpack.c.b16 %v2198, %v2195
        %v2223 = vpack.c.b16 %v2199, %v2196
        %2248 = vmatpush.bf16.msra.mxu0 %v2221
        %2249 = vmatpush.bf16.msra.mxu0 %v2218
        %2250 = vmatpush.bf16.msra.mxu0 %v2215
        %2251 = vmatpush.bf16.msra.mxu0 %v2212
        %2252 = vmatpush.bf16.msra.mxu0 %v2209
        %2253 = vmatpush.bf16.msra.mxu0 %v2206
        %2254 = vmatpush.bf16.msra.mxu0 %v2203
        %2255 = vmatpush.bf16.msra.mxu0 %v2200
        %2256 = vmatmul.bf16.gmra.mxu0 %v2086
        %v2257 = vpop.f32.mrf.mxu0
        %v2258 = vadd.f32 0.0, %v2257
        %v2259 = vpop.f32.mrf.mxu0
        %2260 = vdwg.mxu0
        %2261 = vmatpush.bf16.msra.mxu0 %v2222
        %2262 = vmatpush.bf16.msra.mxu0 %v2219
        %2263 = vmatpush.bf16.msra.mxu0 %v2216
        %2264 = vmatpush.bf16.msra.mxu0 %v2213
        %2265 = vmatpush.bf16.msra.mxu0 %v2210
        %2266 = vmatpush.bf16.msra.mxu0 %v2207
        %2267 = vmatpush.bf16.msra.mxu0 %v2204
        %2268 = vmatpush.bf16.msra.mxu0 %v2201
        %2269 = vmatmul.bf16.gmra.mxu0 %v2086
        %v2270 = vpop.f32.mrf.mxu0
        %v2271 = vadd.f32 0.0, %v2270
        %v2272 = vpop.f32.mrf.mxu0
        %2273 = vdwg.mxu0
        %2274 = vmatpush.bf16.msra.mxu0 %v2223
        %2275 = vmatpush.bf16.msra.mxu0 %v2220
        %2276 = vmatpush.bf16.msra.mxu0 %v2217
        %2277 = vmatpush.bf16.msra.mxu0 %v2214
        %2278 = vmatpush.bf16.msra.mxu0 %v2211
        %2279 = vmatpush.bf16.msra.mxu0 %v2208
        %2280 = vmatpush.bf16.msra.mxu0 %v2205
        %2281 = vmatpush.bf16.msra.mxu0 %v2202
        %2282 = vmatmul.bf16.gmra.mxu0 %v2086
        %v2283 = vpop.f32.mrf.mxu0
        %v2284 = vadd.f32 0.0, %v2283
        %v2285 = vpop.f32.mrf.mxu0
        %2286 = vdwg.mxu0
        %v2287 = vrot.slane %v2258, 7
        %v2288 = vsel %vm742, 1, 0
        %vm2289 = vcmp.eq.s32.totalorder %v2288, 1
        %v2290 = vsel %vm2289, %v2287, 0.0
        %v2291 = vrot.slane %v2284, 1
        %v2292 = vsel %vm743, 1, 0
        %vm2293 = vcmp.eq.s32.totalorder %v2292, 1
        %v2294 = vsel %vm2293, %v2291, 0.0
        %v2295 = vadd.f32 %v2290, %v2271
        %v2296 = vadd.f32 %v2295, %v2294
        %v2297 = vperm.slane %v2119, 0
        %v2298 = vadd.f32 %v2296, %v2297
        %v2299 = vmul.f32 %v2298, 0.5
        %v2300 = vmul.f32 %v2298, 0.044715
        %v2301 = vmul.f32 %v2300, %v2298
        %v2302 = vmul.f32 %v2301, %v2298
        %v2303 = vadd.f32 %v2298, %v2302
        %v2304 = vmul.f32 %v2303, 0.7978846
        %v2305 = vtanh.pop %v2304
        %v2306 = vadd.f32 %v2305, 1.0
        %v2307 = vmul.f32 %v2299, %v2306
        %v2308 = vpack.c.bf16 %v2307, %v2307
        %v2309 = vld [vmem:[#allocation14] sm:$0xff]
        %v2310 = vld [vmem:[#allocation14 + $0x8] sm:$0xf]
        %v2311 = vld [vmem:[#allocation14 + $0xc] sm:$0xff]
        %v2312 = vld [vmem:[#allocation14 + $0x14] sm:$0xf]
        %v2313 = vld [vmem:[#allocation14 + $0x18] sm:$0xff]
        %v2314 = vld [vmem:[#allocation14 + $0x20] sm:$0xf]
        %v2315 = vld [vmem:[#allocation14 + $0x24] sm:$0xff]
        %v2316 = vld [vmem:[#allocation14 + $0x2c] sm:$0xf]
        %v2317 = vld [vmem:[#allocation14 + $0x30] sm:$0xff]
        %v2318 = vld [vmem:[#allocation14 + $0x38] sm:$0xf]
        %v2319 = vld [vmem:[#allocation14 + $0x3c] sm:$0xff]
        %v2320 = vld [vmem:[#allocation14 + $0x44] sm:$0xf]
        %v2321 = vld [vmem:[#allocation14 + $0x48] sm:$0xff]
        %v2322 = vld [vmem:[#allocation14 + $0x50] sm:$0xf]
        %v2323 = vld [vmem:[#allocation14 + $0x54] sm:$0xff]
        %v2324 = vld [vmem:[#allocation14 + $0x5c] sm:$0xf]
        %v2325 = vld [vmem:[#allocation14 + $0x60] sm:$0xff]
        %v2326 = vld [vmem:[#allocation14 + $0x68] sm:$0xf]
        %v2327 = vld [vmem:[#allocation14 + $0x6c] sm:$0xff]
        %v2328 = vld [vmem:[#allocation14 + $0x74] sm:$0xf]
        %v2329 = vld [vmem:[#allocation14 + $0x78] sm:$0xff]
        %v2330 = vld [vmem:[#allocation14 + $0x80] sm:$0xf]
        %v2331 = vld [vmem:[#allocation14 + $0x84] sm:$0xff]
        %v2332 = vld [vmem:[#allocation14 + $0x8c] sm:$0xf]
        %v2333 = vld [vmem:[#allocation14 + $0x90] sm:$0xff]
        %v2334 = vld [vmem:[#allocation14 + $0x98] sm:$0xf]
        %v2335 = vld [vmem:[#allocation14 + $0x9c] sm:$0xff]
        %v2336 = vld [vmem:[#allocation14 + $0xa4] sm:$0xf]
        %v2337 = vld [vmem:[#allocation14 + $0xa8] sm:$0xff]
        %v2338 = vld [vmem:[#allocation14 + $0xb0] sm:$0xf]
        %v2339 = vld [vmem:[#allocation14 + $0xb4] sm:$0xff]
        %v2340 = vld [vmem:[#allocation14 + $0xbc] sm:$0xf]
        %v2341 = vld [vmem:[%s12] sm:$0x1]
        %v2374 = vunpack.c.l.b16 %v2309
        %v2375 = vunpack.c.h.b16 %v2309
        %v2376 = vunpack.c.l.b16 %v2310
        %v2377 = vunpack.c.l.b16 %v2311
        %v2378 = vunpack.c.h.b16 %v2311
        %v2379 = vunpack.c.l.b16 %v2312
        %v2380 = vunpack.c.l.b16 %v2313
        %v2381 = vunpack.c.h.b16 %v2313
        %v2382 = vunpack.c.l.b16 %v2314
        %v2383 = vunpack.c.l.b16 %v2315
        %v2384 = vunpack.c.h.b16 %v2315
        %v2385 = vunpack.c.l.b16 %v2316
        %v2386 = vunpack.c.l.b16 %v2317
        %v2387 = vunpack.c.h.b16 %v2317
        %v2388 = vunpack.c.l.b16 %v2318
        %v2389 = vunpack.c.l.b16 %v2319
        %v2390 = vunpack.c.h.b16 %v2319
        %v2391 = vunpack.c.l.b16 %v2320
        %v2392 = vunpack.c.l.b16 %v2321
        %v2393 = vunpack.c.h.b16 %v2321
        %v2394 = vunpack.c.l.b16 %v2322
        %v2395 = vunpack.c.l.b16 %v2323
        %v2396 = vunpack.c.h.b16 %v2323
        %v2397 = vunpack.c.l.b16 %v2324
        %v2398 = vunpack.c.l.b16 %v2325
        %v2399 = vunpack.c.h.b16 %v2325
        %v2400 = vunpack.c.l.b16 %v2326
        %v2401 = vunpack.c.l.b16 %v2327
        %v2402 = vunpack.c.h.b16 %v2327
        %v2403 = vunpack.c.l.b16 %v2328
        %v2404 = vunpack.c.l.b16 %v2329
        %v2405 = vunpack.c.h.b16 %v2329
        %v2406 = vunpack.c.l.b16 %v2330
        %v2407 = vunpack.c.l.b16 %v2331
        %v2408 = vunpack.c.h.b16 %v2331
        %v2409 = vunpack.c.l.b16 %v2332
        %v2410 = vunpack.c.l.b16 %v2333
        %v2411 = vunpack.c.h.b16 %v2333
        %v2412 = vunpack.c.l.b16 %v2334
        %v2413 = vunpack.c.l.b16 %v2335
        %v2414 = vunpack.c.h.b16 %v2335
        %v2415 = vunpack.c.l.b16 %v2336
        %v2416 = vunpack.c.l.b16 %v2337
        %v2417 = vunpack.c.h.b16 %v2337
        %v2418 = vunpack.c.l.b16 %v2338
        %v2419 = vunpack.c.l.b16 %v2339
        %v2420 = vunpack.c.h.b16 %v2339
        %v2421 = vunpack.c.l.b16 %v2340
        %v2422 = vpack.c.b16 %v2377, %v2374
        %v2423 = vpack.c.b16 %v2378, %v2375
        %v2424 = vpack.c.b16 %v2379, %v2376
        %v2425 = vpack.c.b16 %v2383, %v2380
        %v2426 = vpack.c.b16 %v2384, %v2381
        %v2427 = vpack.c.b16 %v2385, %v2382
        %v2428 = vpack.c.b16 %v2389, %v2386
        %v2429 = vpack.c.b16 %v2390, %v2387
        %v2430 = vpack.c.b16 %v2391, %v2388
        %v2431 = vpack.c.b16 %v2395, %v2392
        %v2432 = vpack.c.b16 %v2396, %v2393
        %v2433 = vpack.c.b16 %v2397, %v2394
        %v2434 = vpack.c.b16 %v2401, %v2398
        %v2435 = vpack.c.b16 %v2402, %v2399
        %v2436 = vpack.c.b16 %v2403, %v2400
        %v2437 = vpack.c.b16 %v2407, %v2404
        %v2438 = vpack.c.b16 %v2408, %v2405
        %v2439 = vpack.c.b16 %v2409, %v2406
        %v2440 = vpack.c.b16 %v2413, %v2410
        %v2441 = vpack.c.b16 %v2414, %v2411
        %v2442 = vpack.c.b16 %v2415, %v2412
        %v2443 = vpack.c.b16 %v2419, %v2416
        %v2444 = vpack.c.b16 %v2420, %v2417
        %v2445 = vpack.c.b16 %v2421, %v2418
        %2470 = vmatpush.bf16.msra.mxu0 %v2443
        %2471 = vmatpush.bf16.msra.mxu0 %v2440
        %2472 = vmatpush.bf16.msra.mxu0 %v2437
        %2473 = vmatpush.bf16.msra.mxu0 %v2434
        %2474 = vmatpush.bf16.msra.mxu0 %v2431
        %2475 = vmatpush.bf16.msra.mxu0 %v2428
        %2476 = vmatpush.bf16.msra.mxu0 %v2425
        %2477 = vmatpush.bf16.msra.mxu0 %v2422
        %2478 = vmatmul.bf16.gmra.mxu0 %v2308
        %v2479 = vpop.f32.mrf.mxu0
        %v2480 = vadd.f32 0.0, %v2479
        %v2481 = vpop.f32.mrf.mxu0
        %2482 = vdwg.mxu0
        %2483 = vmatpush.bf16.msra.mxu0 %v2444
        %2484 = vmatpush.bf16.msra.mxu0 %v2441
        %2485 = vmatpush.bf16.msra.mxu0 %v2438
        %2486 = vmatpush.bf16.msra.mxu0 %v2435
        %2487 = vmatpush.bf16.msra.mxu0 %v2432
        %2488 = vmatpush.bf16.msra.mxu0 %v2429
        %2489 = vmatpush.bf16.msra.mxu0 %v2426
        %2490 = vmatpush.bf16.msra.mxu0 %v2423
        %2491 = vmatmul.bf16.gmra.mxu0 %v2308
        %v2492 = vpop.f32.mrf.mxu0
        %v2493 = vadd.f32 0.0, %v2492
        %v2494 = vpop.f32.mrf.mxu0
        %2495 = vdwg.mxu0
        %2496 = vmatpush.bf16.msra.mxu0 %v2445
        %2497 = vmatpush.bf16.msra.mxu0 %v2442
        %2498 = vmatpush.bf16.msra.mxu0 %v2439
        %2499 = vmatpush.bf16.msra.mxu0 %v2436
        %2500 = vmatpush.bf16.msra.mxu0 %v2433
        %2501 = vmatpush.bf16.msra.mxu0 %v2430
        %2502 = vmatpush.bf16.msra.mxu0 %v2427
        %2503 = vmatpush.bf16.msra.mxu0 %v2424
        %2504 = vmatmul.bf16.gmra.mxu0 %v2308
        %v2505 = vpop.f32.mrf.mxu0
        %v2506 = vadd.f32 0.0, %v2505
        %v2507 = vpop.f32.mrf.mxu0
        %2508 = vdwg.mxu0
        %v2509 = vrot.slane %v2480, 7
        %v2510 = vsel %vm2289, %v2509, 0.0
        %v2511 = vrot.slane %v2506, 1
        %v2512 = vsel %vm2293, %v2511, 0.0
        %v2513 = vadd.f32 %v2510, %v2493
        %v2514 = vadd.f32 %v2513, %v2512
        %v2515 = vperm.slane %v2341, 0
        %v2516 = vadd.f32 %v2514, %v2515
        %v2517 = vmul.f32 %v2516, 0.5
        %v2518 = vmul.f32 %v2516, 0.044715
        %v2519 = vmul.f32 %v2518, %v2516
        %v2520 = vmul.f32 %v2519, %v2516
        %v2521 = vadd.f32 %v2516, %v2520
        %v2522 = vmul.f32 %v2521, 0.7978846
        %v2523 = vtanh.pop %v2522
        %v2524 = vadd.f32 %v2523, 1.0
        %v2525 = vmul.f32 %v2517, %v2524
        %v2526 = vadd.f32 %v2525, %v2057
        %v2527 = vld [vmem:[#allocation5 + $0x1] sm:$0x1]
        %v2528 = vld [vmem:[#allocation7 + $0x1] sm:$0x1]
        %v2529 = vperm.slane %v2527, 0
        %v2530 = vmul.f32 %v769, %v2529
        %v2531 = vperm.slane %v2528, 0
        %v2532 = vadd.f32 %v2530, %v2531
        %v2533 = vpack.c.bf16 %v2532, %v2532
        %s2534 = scalar_lea.vmem [#allocation8], 768
        %v2535 = vld [vmem:[%s2534] sm:$0xff]
        %v2536 = vld [vmem:[%s2534 + $0x8] sm:$0xff]
        %v2537 = vld [vmem:[%s2534 + $0x10] sm:$0xff]
        %v2538 = vld [vmem:[%s2534 + $0x18] sm:$0xff]
        %v2539 = vld [vmem:[%s2534 + $0x20] sm:$0xff]
        %v2540 = vld [vmem:[%s2534 + $0x28] sm:$0xff]
        %v2541 = vld [vmem:[%s2534 + $0x30] sm:$0xff]
        %v2542 = vld [vmem:[%s2534 + $0x38] sm:$0xff]
        %v2543 = vld [vmem:[%s2534 + $0x40] sm:$0xff]
        %v2544 = vld [vmem:[%s2534 + $0x48] sm:$0xff]
        %v2545 = vld [vmem:[%s2534 + $0x50] sm:$0xff]
        %v2546 = vld [vmem:[%s2534 + $0x58] sm:$0xff]
        %v2547 = vld [vmem:[%s2534 + $0x60] sm:$0xff]
        %v2548 = vld [vmem:[%s2534 + $0x68] sm:$0xff]
        %v2549 = vld [vmem:[%s2534 + $0x70] sm:$0xff]
        %v2550 = vld [vmem:[%s2534 + $0x78] sm:$0xff]
        %v2551 = vld [vmem:[%s2534 + $0x80] sm:$0xff]
        %v2552 = vld [vmem:[%s2534 + $0x88] sm:$0xff]
        %v2553 = vld [vmem:[%s2534 + $0x90] sm:$0xff]
        %v2554 = vld [vmem:[%s2534 + $0x98] sm:$0xff]
        %v2555 = vld [vmem:[%s2534 + $0xa0] sm:$0xff]
        %v2556 = vld [vmem:[%s2534 + $0xa8] sm:$0xff]
        %v2557 = vld [vmem:[%s2534 + $0xb0] sm:$0xff]
        %v2558 = vld [vmem:[%s2534 + $0xb8] sm:$0xff]
        %v2559 = vld [vmem:[%s2534 + $0xc0] sm:$0xff]
        %v2560 = vld [vmem:[%s2534 + $0xc8] sm:$0xff]
        %v2561 = vld [vmem:[%s2534 + $0xd0] sm:$0xff]
        %v2562 = vld [vmem:[%s2534 + $0xd8] sm:$0xff]
        %v2563 = vld [vmem:[%s2534 + $0xe0] sm:$0xff]
        %v2564 = vld [vmem:[%s2534 + $0xe8] sm:$0xff]
        %v2565 = vld [vmem:[%s2534 + $0xf0] sm:$0xff]
        %v2566 = vld [vmem:[%s2534 + $0xf8] sm:$0xff]
        %v2567 = vld [vmem:[%s2534 + $0x100] sm:$0xff]
        %v2568 = vld [vmem:[%s2534 + $0x108] sm:$0xff]
        %v2569 = vld [vmem:[%s2534 + $0x110] sm:$0xff]
        %v2570 = vld [vmem:[%s2534 + $0x118] sm:$0xff]
        %v2571 = vld [vmem:[%s2534 + $0x120] sm:$0xff]
        %v2572 = vld [vmem:[%s2534 + $0x128] sm:$0xff]
        %v2573 = vld [vmem:[%s2534 + $0x130] sm:$0xff]
        %v2574 = vld [vmem:[%s2534 + $0x138] sm:$0xff]
        %v2575 = vld [vmem:[%s2534 + $0x140] sm:$0xff]
        %v2576 = vld [vmem:[%s2534 + $0x148] sm:$0xff]
        %v2577 = vld [vmem:[%s2534 + $0x150] sm:$0xff]
        %v2578 = vld [vmem:[%s2534 + $0x158] sm:$0xff]
        %v2579 = vld [vmem:[%s2534 + $0x160] sm:$0xff]
        %v2580 = vld [vmem:[%s2534 + $0x168] sm:$0xff]
        %v2581 = vld [vmem:[%s2534 + $0x170] sm:$0xff]
        %v2582 = vld [vmem:[%s2534 + $0x178] sm:$0xff]
        %v2583 = vld [vmem:[%s2534 + $0x180] sm:$0xff]
        %v2584 = vld [vmem:[%s2534 + $0x188] sm:$0xff]
        %v2585 = vld [vmem:[%s2534 + $0x190] sm:$0xff]
        %v2586 = vld [vmem:[%s2534 + $0x198] sm:$0xff]
        %v2587 = vld [vmem:[%s2534 + $0x1a0] sm:$0xff]
        %v2588 = vld [vmem:[%s2534 + $0x1a8] sm:$0xff]
        %v2589 = vld [vmem:[%s2534 + $0x1b0] sm:$0xff]
        %v2590 = vld [vmem:[%s2534 + $0x1b8] sm:$0xff]
        %v2591 = vld [vmem:[%s2534 + $0x1c0] sm:$0xff]
        %v2592 = vld [vmem:[%s2534 + $0x1c8] sm:$0xff]
        %v2593 = vld [vmem:[%s2534 + $0x1d0] sm:$0xff]
        %v2594 = vld [vmem:[%s2534 + $0x1d8] sm:$0xff]
        %v2595 = vld [vmem:[%s2534 + $0x1e0] sm:$0xff]
        %v2596 = vld [vmem:[%s2534 + $0x1e8] sm:$0xff]
        %v2597 = vld [vmem:[%s2534 + $0x1f0] sm:$0xff]
        %v2598 = vld [vmem:[%s2534 + $0x1f8] sm:$0xff]
        %v2599 = vld [vmem:[%s2534 + $0x200] sm:$0xff]
        %v2600 = vld [vmem:[%s2534 + $0x208] sm:$0xff]
        %v2601 = vld [vmem:[%s2534 + $0x210] sm:$0xff]
        %v2602 = vld [vmem:[%s2534 + $0x218] sm:$0xff]
        %v2603 = vld [vmem:[%s2534 + $0x220] sm:$0xff]
        %v2604 = vld [vmem:[%s2534 + $0x228] sm:$0xff]
        %v2605 = vld [vmem:[%s2534 + $0x230] sm:$0xff]
        %v2606 = vld [vmem:[%s2534 + $0x238] sm:$0xff]
        %v2607 = vld [vmem:[%s2534 + $0x240] sm:$0xff]
        %v2608 = vld [vmem:[%s2534 + $0x248] sm:$0xff]
        %v2609 = vld [vmem:[%s2534 + $0x250] sm:$0xff]
        %v2610 = vld [vmem:[%s2534 + $0x258] sm:$0xff]
        %v2611 = vld [vmem:[%s2534 + $0x260] sm:$0xff]
        %v2612 = vld [vmem:[%s2534 + $0x268] sm:$0xff]
        %v2613 = vld [vmem:[%s2534 + $0x270] sm:$0xff]
        %v2614 = vld [vmem:[%s2534 + $0x278] sm:$0xff]
        %v2615 = vld [vmem:[%s2534 + $0x280] sm:$0xff]
        %v2616 = vld [vmem:[%s2534 + $0x288] sm:$0xff]
        %v2617 = vld [vmem:[%s2534 + $0x290] sm:$0xff]
        %v2618 = vld [vmem:[%s2534 + $0x298] sm:$0xff]
        %v2619 = vld [vmem:[%s2534 + $0x2a0] sm:$0xff]
        %v2620 = vld [vmem:[%s2534 + $0x2a8] sm:$0xff]
        %v2621 = vld [vmem:[%s2534 + $0x2b0] sm:$0xff]
        %v2622 = vld [vmem:[%s2534 + $0x2b8] sm:$0xff]
        %v2623 = vld [vmem:[%s2534 + $0x2c0] sm:$0xff]
        %v2624 = vld [vmem:[%s2534 + $0x2c8] sm:$0xff]
        %v2625 = vld [vmem:[%s2534 + $0x2d0] sm:$0xff]
        %v2626 = vld [vmem:[%s2534 + $0x2d8] sm:$0xff]
        %v2627 = vld [vmem:[%s2534 + $0x2e0] sm:$0xff]
        %v2628 = vld [vmem:[%s2534 + $0x2e8] sm:$0xff]
        %v2629 = vld [vmem:[%s2534 + $0x2f0] sm:$0xff]
        %v2630 = vld [vmem:[%s2534 + $0x2f8] sm:$0xff]
        %s2631 = scalar_lea.vmem [#allocation10], 12
        %v2632 = vld [vmem:[%s2631] sm:$0xff]
        %v2633 = vld [vmem:[%s2631 + $0x8] sm:$0xf]
        %v2636 = vperm.slane %v2632, 0
        %v2637 = vperm.slane %v2632, 1
        %v2638 = vperm.slane %v2632, 2
        %v2639 = vperm.slane %v2632, 3
        %v2640 = vperm.slane %v2632, 4
        %v2641 = vperm.slane %v2632, 5
        %v2642 = vperm.slane %v2632, 6
        %v2643 = vperm.slane %v2632, 7
        %v2644 = vperm.slane %v2633, 0
        %v2645 = vperm.slane %v2633, 1
        %v2646 = vperm.slane %v2633, 2
        %v2647 = vperm.slane %v2633, 3
        %v2756 = vunpack.c.l.b16 %v2535
        %v2757 = vunpack.c.h.b16 %v2535
        %v2758 = vunpack.c.l.b16 %v2536
        %v2759 = vunpack.c.h.b16 %v2536
        %v2760 = vunpack.c.l.b16 %v2537
        %v2761 = vunpack.c.h.b16 %v2537
        %v2762 = vunpack.c.l.b16 %v2538
        %v2763 = vunpack.c.h.b16 %v2538
        %v2764 = vunpack.c.l.b16 %v2539
        %v2765 = vunpack.c.h.b16 %v2539
        %v2766 = vunpack.c.l.b16 %v2540
        %v2767 = vunpack.c.h.b16 %v2540
        %v2768 = vunpack.c.l.b16 %v2541
        %v2769 = vunpack.c.h.b16 %v2541
        %v2770 = vunpack.c.l.b16 %v2542
        %v2771 = vunpack.c.h.b16 %v2542
        %v2772 = vunpack.c.l.b16 %v2543
        %v2773 = vunpack.c.h.b16 %v2543
        %v2774 = vunpack.c.l.b16 %v2544
        %v2775 = vunpack.c.h.b16 %v2544
        %v2776 = vunpack.c.l.b16 %v2545
        %v2777 = vunpack.c.h.b16 %v2545
        %v2778 = vunpack.c.l.b16 %v2546
        %v2779 = vunpack.c.h.b16 %v2546
        %v2780 = vunpack.c.l.b16 %v2547
        %v2781 = vunpack.c.h.b16 %v2547
        %v2782 = vunpack.c.l.b16 %v2548
        %v2783 = vunpack.c.h.b16 %v2548
        %v2784 = vunpack.c.l.b16 %v2549
        %v2785 = vunpack.c.h.b16 %v2549
        %v2786 = vunpack.c.l.b16 %v2550
        %v2787 = vunpack.c.h.b16 %v2550
        %v2788 = vunpack.c.l.b16 %v2551
        %v2789 = vunpack.c.h.b16 %v2551
        %v2790 = vunpack.c.l.b16 %v2552
        %v2791 = vunpack.c.h.b16 %v2552
        %v2792 = vunpack.c.l.b16 %v2553
        %v2793 = vunpack.c.h.b16 %v2553
        %v2794 = vunpack.c.l.b16 %v2554
        %v2795 = vunpack.c.h.b16 %v2554
        %v2796 = vunpack.c.l.b16 %v2555
        %v2797 = vunpack.c.h.b16 %v2555
        %v2798 = vunpack.c.l.b16 %v2556
        %v2799 = vunpack.c.h.b16 %v2556
        %v2800 = vunpack.c.l.b16 %v2557
        %v2801 = vunpack.c.h.b16 %v2557
        %v2802 = vunpack.c.l.b16 %v2558
        %v2803 = vunpack.c.h.b16 %v2558
        %v2804 = vunpack.c.l.b16 %v2559
        %v2805 = vunpack.c.h.b16 %v2559
        %v2806 = vunpack.c.l.b16 %v2560
        %v2807 = vunpack.c.h.b16 %v2560
        %v2808 = vunpack.c.l.b16 %v2561
        %v2809 = vunpack.c.h.b16 %v2561
        %v2810 = vunpack.c.l.b16 %v2562
        %v2811 = vunpack.c.h.b16 %v2562
        %v2812 = vunpack.c.l.b16 %v2563
        %v2813 = vunpack.c.h.b16 %v2563
        %v2814 = vunpack.c.l.b16 %v2564
        %v2815 = vunpack.c.h.b16 %v2564
        %v2816 = vunpack.c.l.b16 %v2565
        %v2817 = vunpack.c.h.b16 %v2565
        %v2818 = vunpack.c.l.b16 %v2566
        %v2819 = vunpack.c.h.b16 %v2566
        %v2820 = vunpack.c.l.b16 %v2567
        %v2821 = vunpack.c.h.b16 %v2567
        %v2822 = vunpack.c.l.b16 %v2568
        %v2823 = vunpack.c.h.b16 %v2568
        %v2824 = vunpack.c.l.b16 %v2569
        %v2825 = vunpack.c.h.b16 %v2569
        %v2826 = vunpack.c.l.b16 %v2570
        %v2827 = vunpack.c.h.b16 %v2570
        %v2828 = vunpack.c.l.b16 %v2571
        %v2829 = vunpack.c.h.b16 %v2571
        %v2830 = vunpack.c.l.b16 %v2572
        %v2831 = vunpack.c.h.b16 %v2572
        %v2832 = vunpack.c.l.b16 %v2573
        %v2833 = vunpack.c.h.b16 %v2573
        %v2834 = vunpack.c.l.b16 %v2574
        %v2835 = vunpack.c.h.b16 %v2574
        %v2836 = vunpack.c.l.b16 %v2575
        %v2837 = vunpack.c.h.b16 %v2575
        %v2838 = vunpack.c.l.b16 %v2576
        %v2839 = vunpack.c.h.b16 %v2576
        %v2840 = vunpack.c.l.b16 %v2577
        %v2841 = vunpack.c.h.b16 %v2577
        %v2842 = vunpack.c.l.b16 %v2578
        %v2843 = vunpack.c.h.b16 %v2578
        %v2844 = vunpack.c.l.b16 %v2579
        %v2845 = vunpack.c.h.b16 %v2579
        %v2846 = vunpack.c.l.b16 %v2580
        %v2847 = vunpack.c.h.b16 %v2580
        %v2848 = vunpack.c.l.b16 %v2581
        %v2849 = vunpack.c.h.b16 %v2581
        %v2850 = vunpack.c.l.b16 %v2582
        %v2851 = vunpack.c.h.b16 %v2582
        %v2852 = vunpack.c.l.b16 %v2583
        %v2853 = vunpack.c.h.b16 %v2583
        %v2854 = vunpack.c.l.b16 %v2584
        %v2855 = vunpack.c.h.b16 %v2584
        %v2856 = vunpack.c.l.b16 %v2585
        %v2857 = vunpack.c.h.b16 %v2585
        %v2858 = vunpack.c.l.b16 %v2586
        %v2859 = vunpack.c.h.b16 %v2586
        %v2860 = vunpack.c.l.b16 %v2587
        %v2861 = vunpack.c.h.b16 %v2587
        %v2862 = vunpack.c.l.b16 %v2588
        %v2863 = vunpack.c.h.b16 %v2588
        %v2864 = vunpack.c.l.b16 %v2589
        %v2865 = vunpack.c.h.b16 %v2589
        %v2866 = vunpack.c.l.b16 %v2590
        %v2867 = vunpack.c.h.b16 %v2590
        %v2868 = vunpack.c.l.b16 %v2591
        %v2869 = vunpack.c.h.b16 %v2591
        %v2870 = vunpack.c.l.b16 %v2592
        %v2871 = vunpack.c.h.b16 %v2592
        %v2872 = vunpack.c.l.b16 %v2593
        %v2873 = vunpack.c.h.b16 %v2593
        %v2874 = vunpack.c.l.b16 %v2594
        %v2875 = vunpack.c.h.b16 %v2594
        %v2876 = vunpack.c.l.b16 %v2595
        %v2877 = vunpack.c.h.b16 %v2595
        %v2878 = vunpack.c.l.b16 %v2596
        %v2879 = vunpack.c.h.b16 %v2596
        %v2880 = vunpack.c.l.b16 %v2597
        %v2881 = vunpack.c.h.b16 %v2597
        %v2882 = vunpack.c.l.b16 %v2598
        %v2883 = vunpack.c.h.b16 %v2598
        %v2884 = vunpack.c.l.b16 %v2599
        %v2885 = vunpack.c.h.b16 %v2599
        %v2886 = vunpack.c.l.b16 %v2600
        %v2887 = vunpack.c.h.b16 %v2600
        %v2888 = vunpack.c.l.b16 %v2601
        %v2889 = vunpack.c.h.b16 %v2601
        %v2890 = vunpack.c.l.b16 %v2602
        %v2891 = vunpack.c.h.b16 %v2602
        %v2892 = vunpack.c.l.b16 %v2603
        %v2893 = vunpack.c.h.b16 %v2603
        %v2894 = vunpack.c.l.b16 %v2604
        %v2895 = vunpack.c.h.b16 %v2604
        %v2896 = vunpack.c.l.b16 %v2605
        %v2897 = vunpack.c.h.b16 %v2605
        %v2898 = vunpack.c.l.b16 %v2606
        %v2899 = vunpack.c.h.b16 %v2606
        %v2900 = vunpack.c.l.b16 %v2607
        %v2901 = vunpack.c.h.b16 %v2607
        %v2902 = vunpack.c.l.b16 %v2608
        %v2903 = vunpack.c.h.b16 %v2608
        %v2904 = vunpack.c.l.b16 %v2609
        %v2905 = vunpack.c.h.b16 %v2609
        %v2906 = vunpack.c.l.b16 %v2610
        %v2907 = vunpack.c.h.b16 %v2610
        %v2908 = vunpack.c.l.b16 %v2611
        %v2909 = vunpack.c.h.b16 %v2611
        %v2910 = vunpack.c.l.b16 %v2612
        %v2911 = vunpack.c.h.b16 %v2612
        %v2912 = vunpack.c.l.b16 %v2613
        %v2913 = vunpack.c.h.b16 %v2613
        %v2914 = vunpack.c.l.b16 %v2614
        %v2915 = vunpack.c.h.b16 %v2614
        %v2916 = vunpack.c.l.b16 %v2615
        %v2917 = vunpack.c.h.b16 %v2615
        %v2918 = vunpack.c.l.b16 %v2616
        %v2919 = vunpack.c.h.b16 %v2616
        %v2920 = vunpack.c.l.b16 %v2617
        %v2921 = vunpack.c.h.b16 %v2617
        %v2922 = vunpack.c.l.b16 %v2618
        %v2923 = vunpack.c.h.b16 %v2618
        %v2924 = vunpack.c.l.b16 %v2619
        %v2925 = vunpack.c.h.b16 %v2619
        %v2926 = vunpack.c.l.b16 %v2620
        %v2927 = vunpack.c.h.b16 %v2620
        %v2928 = vunpack.c.l.b16 %v2621
        %v2929 = vunpack.c.h.b16 %v2621
        %v2930 = vunpack.c.l.b16 %v2622
        %v2931 = vunpack.c.h.b16 %v2622
        %v2932 = vunpack.c.l.b16 %v2623
        %v2933 = vunpack.c.h.b16 %v2623
        %v2934 = vunpack.c.l.b16 %v2624
        %v2935 = vunpack.c.h.b16 %v2624
        %v2936 = vunpack.c.l.b16 %v2625
        %v2937 = vunpack.c.h.b16 %v2625
        %v2938 = vunpack.c.l.b16 %v2626
        %v2939 = vunpack.c.h.b16 %v2626
        %v2940 = vunpack.c.l.b16 %v2627
        %v2941 = vunpack.c.h.b16 %v2627
        %v2942 = vunpack.c.l.b16 %v2628
        %v2943 = vunpack.c.h.b16 %v2628
        %v2944 = vunpack.c.l.b16 %v2629
        %v2945 = vunpack.c.h.b16 %v2629
        %v2946 = vunpack.c.l.b16 %v2630
        %v2947 = vunpack.c.h.b16 %v2630
        %v2948 = vpack.c.b16 %v2768, %v2756
        %v2949 = vpack.c.b16 %v2769, %v2757
        %v2950 = vpack.c.b16 %v2770, %v2758
        %v2951 = vpack.c.b16 %v2771, %v2759
        %v2952 = vpack.c.b16 %v2772, %v2760
        %v2953 = vpack.c.b16 %v2773, %v2761
        %v2954 = vpack.c.b16 %v2774, %v2762
        %v2955 = vpack.c.b16 %v2775, %v2763
        %v2956 = vpack.c.b16 %v2776, %v2764
        %v2957 = vpack.c.b16 %v2777, %v2765
        %v2958 = vpack.c.b16 %v2778, %v2766
        %v2959 = vpack.c.b16 %v2779, %v2767
        %v2960 = vpack.c.b16 %v2792, %v2780
        %v2961 = vpack.c.b16 %v2793, %v2781
        %v2962 = vpack.c.b16 %v2794, %v2782
        %v2963 = vpack.c.b16 %v2795, %v2783
        %v2964 = vpack.c.b16 %v2796, %v2784
        %v2965 = vpack.c.b16 %v2797, %v2785
        %v2966 = vpack.c.b16 %v2798, %v2786
        %v2967 = vpack.c.b16 %v2799, %v2787
        %v2968 = vpack.c.b16 %v2800, %v2788
        %v2969 = vpack.c.b16 %v2801, %v2789
        %v2970 = vpack.c.b16 %v2802, %v2790
        %v2971 = vpack.c.b16 %v2803, %v2791
        %v2972 = vpack.c.b16 %v2816, %v2804
        %v2973 = vpack.c.b16 %v2817, %v2805
        %v2974 = vpack.c.b16 %v2818, %v2806
        %v2975 = vpack.c.b16 %v2819, %v2807
        %v2976 = vpack.c.b16 %v2820, %v2808
        %v2977 = vpack.c.b16 %v2821, %v2809
        %v2978 = vpack.c.b16 %v2822, %v2810
        %v2979 = vpack.c.b16 %v2823, %v2811
        %v2980 = vpack.c.b16 %v2824, %v2812
        %v2981 = vpack.c.b16 %v2825, %v2813
        %v2982 = vpack.c.b16 %v2826, %v2814
        %v2983 = vpack.c.b16 %v2827, %v2815
        %v2984 = vpack.c.b16 %v2840, %v2828
        %v2985 = vpack.c.b16 %v2841, %v2829
        %v2986 = vpack.c.b16 %v2842, %v2830
        %v2987 = vpack.c.b16 %v2843, %v2831
        %v2988 = vpack.c.b16 %v2844, %v2832
        %v2989 = vpack.c.b16 %v2845, %v2833
        %v2990 = vpack.c.b16 %v2846, %v2834
        %v2991 = vpack.c.b16 %v2847, %v2835
        %v2992 = vpack.c.b16 %v2848, %v2836
        %v2993 = vpack.c.b16 %v2849, %v2837
        %v2994 = vpack.c.b16 %v2850, %v2838
        %v2995 = vpack.c.b16 %v2851, %v2839
        %v2996 = vpack.c.b16 %v2864, %v2852
        %v2997 = vpack.c.b16 %v2865, %v2853
        %v2998 = vpack.c.b16 %v2866, %v2854
        %v2999 = vpack.c.b16 %v2867, %v2855
        %v3000 = vpack.c.b16 %v2868, %v2856
        %v3001 = vpack.c.b16 %v2869, %v2857
        %v3002 = vpack.c.b16 %v2870, %v2858
        %v3003 = vpack.c.b16 %v2871, %v2859
        %v3004 = vpack.c.b16 %v2872, %v2860
        %v3005 = vpack.c.b16 %v2873, %v2861
        %v3006 = vpack.c.b16 %v2874, %v2862
        %v3007 = vpack.c.b16 %v2875, %v2863
        %v3008 = vpack.c.b16 %v2888, %v2876
        %v3009 = vpack.c.b16 %v2889, %v2877
        %v3010 = vpack.c.b16 %v2890, %v2878
        %v3011 = vpack.c.b16 %v2891, %v2879
        %v3012 = vpack.c.b16 %v2892, %v2880
        %v3013 = vpack.c.b16 %v2893, %v2881
        %v3014 = vpack.c.b16 %v2894, %v2882
        %v3015 = vpack.c.b16 %v2895, %v2883
        %v3016 = vpack.c.b16 %v2896, %v2884
        %v3017 = vpack.c.b16 %v2897, %v2885
        %v3018 = vpack.c.b16 %v2898, %v2886
        %v3019 = vpack.c.b16 %v2899, %v2887
        %v3020 = vpack.c.b16 %v2912, %v2900
        %v3021 = vpack.c.b16 %v2913, %v2901
        %v3022 = vpack.c.b16 %v2914, %v2902
        %v3023 = vpack.c.b16 %v2915, %v2903
        %v3024 = vpack.c.b16 %v2916, %v2904
        %v3025 = vpack.c.b16 %v2917, %v2905
        %v3026 = vpack.c.b16 %v2918, %v2906
        %v3027 = vpack.c.b16 %v2919, %v2907
        %v3028 = vpack.c.b16 %v2920, %v2908
        %v3029 = vpack.c.b16 %v2921, %v2909
        %v3030 = vpack.c.b16 %v2922, %v2910
        %v3031 = vpack.c.b16 %v2923, %v2911
        %v3032 = vpack.c.b16 %v2936, %v2924
        %v3033 = vpack.c.b16 %v2937, %v2925
        %v3034 = vpack.c.b16 %v2938, %v2926
        %v3035 = vpack.c.b16 %v2939, %v2927
        %v3036 = vpack.c.b16 %v2940, %v2928
        %v3037 = vpack.c.b16 %v2941, %v2929
        %v3038 = vpack.c.b16 %v2942, %v2930
        %v3039 = vpack.c.b16 %v2943, %v2931
        %v3040 = vpack.c.b16 %v2944, %v2932
        %v3041 = vpack.c.b16 %v2945, %v2933
        %v3042 = vpack.c.b16 %v2946, %v2934
        %v3043 = vpack.c.b16 %v2947, %v2935
        %3140 = vmatpush.bf16.msra.mxu0 %v3032
        %3141 = vmatpush.bf16.msra.mxu0 %v3020
        %3142 = vmatpush.bf16.msra.mxu0 %v3008
        %3143 = vmatpush.bf16.msra.mxu0 %v2996
        %3144 = vmatpush.bf16.msra.mxu0 %v2984
        %3145 = vmatpush.bf16.msra.mxu0 %v2972
        %3146 = vmatpush.bf16.msra.mxu0 %v2960
        %3147 = vmatpush.bf16.msra.mxu0 %v2948
        %3148 = vmatmul.bf16.gmra.mxu0 %v2533
        %v3149 = vpop.f32.mrf.mxu0
        %v3150 = vadd.f32 %v2636, %v3149
        %v3151 = vpop.f32.mrf.mxu0
        %3152 = vdwg.mxu0
        %3153 = vmatpush.bf16.msra.mxu0 %v3033
        %3154 = vmatpush.bf16.msra.mxu0 %v3021
        %3155 = vmatpush.bf16.msra.mxu0 %v3009
        %3156 = vmatpush.bf16.msra.mxu0 %v2997
        %3157 = vmatpush.bf16.msra.mxu0 %v2985
        %3158 = vmatpush.bf16.msra.mxu0 %v2973
        %3159 = vmatpush.bf16.msra.mxu0 %v2961
        %3160 = vmatpush.bf16.msra.mxu0 %v2949
        %3161 = vmatmul.bf16.gmra.mxu0 %v2533
        %v3162 = vpop.f32.mrf.mxu0
        %v3163 = vadd.f32 %v2637, %v3162
        %v3164 = vpop.f32.mrf.mxu0
        %3165 = vdwg.mxu0
        %3166 = vmatpush.bf16.msra.mxu0 %v3034
        %3167 = vmatpush.bf16.msra.mxu0 %v3022
        %3168 = vmatpush.bf16.msra.mxu0 %v3010
        %3169 = vmatpush.bf16.msra.mxu0 %v2998
        %3170 = vmatpush.bf16.msra.mxu0 %v2986
        %3171 = vmatpush.bf16.msra.mxu0 %v2974
        %3172 = vmatpush.bf16.msra.mxu0 %v2962
        %3173 = vmatpush.bf16.msra.mxu0 %v2950
        %3174 = vmatmul.bf16.gmra.mxu0 %v2533
        %v3175 = vpop.f32.mrf.mxu0
        %v3176 = vadd.f32 %v2638, %v3175
        %v3177 = vpop.f32.mrf.mxu0
        %3178 = vdwg.mxu0
        %3179 = vmatpush.bf16.msra.mxu0 %v3035
        %3180 = vmatpush.bf16.msra.mxu0 %v3023
        %3181 = vmatpush.bf16.msra.mxu0 %v3011
        %3182 = vmatpush.bf16.msra.mxu0 %v2999
        %3183 = vmatpush.bf16.msra.mxu0 %v2987
        %3184 = vmatpush.bf16.msra.mxu0 %v2975
        %3185 = vmatpush.bf16.msra.mxu0 %v2963
        %3186 = vmatpush.bf16.msra.mxu0 %v2951
        %3187 = vmatmul.bf16.gmra.mxu0 %v2533
        %v3188 = vpop.f32.mrf.mxu0
        %v3189 = vadd.f32 %v2639, %v3188
        %v3190 = vpop.f32.mrf.mxu0
        %3191 = vdwg.mxu0
        %3192 = vmatpush.bf16.msra.mxu0 %v3036
        %3193 = vmatpush.bf16.msra.mxu0 %v3024
        %3194 = vmatpush.bf16.msra.mxu0 %v3012
        %3195 = vmatpush.bf16.msra.mxu0 %v3000
        %3196 = vmatpush.bf16.msra.mxu0 %v2988
        %3197 = vmatpush.bf16.msra.mxu0 %v2976
        %3198 = vmatpush.bf16.msra.mxu0 %v2964
        %3199 = vmatpush.bf16.msra.mxu0 %v2952
        %3200 = vmatmul.bf16.gmra.mxu0 %v2533
        %v3201 = vpop.f32.mrf.mxu0
        %v3202 = vadd.f32 %v2640, %v3201
        %v3203 = vpop.f32.mrf.mxu0
        %3204 = vdwg.mxu0
        %3205 = vmatpush.bf16.msra.mxu0 %v3037
        %3206 = vmatpush.bf16.msra.mxu0 %v3025
        %3207 = vmatpush.bf16.msra.mxu0 %v3013
        %3208 = vmatpush.bf16.msra.mxu0 %v3001
        %3209 = vmatpush.bf16.msra.mxu0 %v2989
        %3210 = vmatpush.bf16.msra.mxu0 %v2977
        %3211 = vmatpush.bf16.msra.mxu0 %v2965
        %3212 = vmatpush.bf16.msra.mxu0 %v2953
        %3213 = vmatmul.bf16.gmra.mxu0 %v2533
        %v3214 = vpop.f32.mrf.mxu0
        %v3215 = vadd.f32 %v2641, %v3214
        %v3216 = vpop.f32.mrf.mxu0
        %3217 = vdwg.mxu0
        %3218 = vmatpush.bf16.msra.mxu0 %v3038
        %3219 = vmatpush.bf16.msra.mxu0 %v3026
        %3220 = vmatpush.bf16.msra.mxu0 %v3014
        %3221 = vmatpush.bf16.msra.mxu0 %v3002
        %3222 = vmatpush.bf16.msra.mxu0 %v2990
        %3223 = vmatpush.bf16.msra.mxu0 %v2978
        %3224 = vmatpush.bf16.msra.mxu0 %v2966
        %3225 = vmatpush.bf16.msra.mxu0 %v2954
        %3226 = vmatmul.bf16.gmra.mxu0 %v2533
        %v3227 = vpop.f32.mrf.mxu0
        %v3228 = vadd.f32 %v2642, %v3227
        %v3229 = vpop.f32.mrf.mxu0
        %3230 = vdwg.mxu0
        %3231 = vmatpush.bf16.msra.mxu0 %v3039
        %3232 = vmatpush.bf16.msra.mxu0 %v3027
        %3233 = vmatpush.bf16.msra.mxu0 %v3015
        %3234 = vmatpush.bf16.msra.mxu0 %v3003
        %3235 = vmatpush.bf16.msra.mxu0 %v2991
        %3236 = vmatpush.bf16.msra.mxu0 %v2979
        %3237 = vmatpush.bf16.msra.mxu0 %v2967
        %3238 = vmatpush.bf16.msra.mxu0 %v2955
        %3239 = vmatmul.bf16.gmra.mxu0 %v2533
        %v3240 = vpop.f32.mrf.mxu0
        %v3241 = vadd.f32 %v2643, %v3240
        %v3242 = vpop.f32.mrf.mxu0
        %3243 = vdwg.mxu0
        %3244 = vmatpush.bf16.msra.mxu0 %v3040
        %3245 = vmatpush.bf16.msra.mxu0 %v3028
        %3246 = vmatpush.bf16.msra.mxu0 %v3016
        %3247 = vmatpush.bf16.msra.mxu0 %v3004
        %3248 = vmatpush.bf16.msra.mxu0 %v2992
        %3249 = vmatpush.bf16.msra.mxu0 %v2980
        %3250 = vmatpush.bf16.msra.mxu0 %v2968
        %3251 = vmatpush.bf16.msra.mxu0 %v2956
        %3252 = vmatmul.bf16.gmra.mxu0 %v2533
        %v3253 = vpop.f32.mrf.mxu0
        %v3254 = vadd.f32 %v2644, %v3253
        %v3255 = vpop.f32.mrf.mxu0
        %3256 = vdwg.mxu0
        %3257 = vmatpush.bf16.msra.mxu0 %v3041
        %3258 = vmatpush.bf16.msra.mxu0 %v3029
        %3259 = vmatpush.bf16.msra.mxu0 %v3017
        %3260 = vmatpush.bf16.msra.mxu0 %v3005
        %3261 = vmatpush.bf16.msra.mxu0 %v2993
        %3262 = vmatpush.bf16.msra.mxu0 %v2981
        %3263 = vmatpush.bf16.msra.mxu0 %v2969
        %3264 = vmatpush.bf16.msra.mxu0 %v2957
        %3265 = vmatmul.bf16.gmra.mxu0 %v2533
        %v3266 = vpop.f32.mrf.mxu0
        %v3267 = vadd.f32 %v2645, %v3266
        %v3268 = vpop.f32.mrf.mxu0
        %3269 = vdwg.mxu0
        %3270 = vmatpush.bf16.msra.mxu0 %v3042
        %3271 = vmatpush.bf16.msra.mxu0 %v3030
        %3272 = vmatpush.bf16.msra.mxu0 %v3018
        %3273 = vmatpush.bf16.msra.mxu0 %v3006
        %3274 = vmatpush.bf16.msra.mxu0 %v2994
        %3275 = vmatpush.bf16.msra.mxu0 %v2982
        %3276 = vmatpush.bf16.msra.mxu0 %v2970
        %3277 = vmatpush.bf16.msra.mxu0 %v2958
        %3278 = vmatmul.bf16.gmra.mxu0 %v2533
        %v3279 = vpop.f32.mrf.mxu0
        %v3280 = vadd.f32 %v2646, %v3279
        %v3281 = vpop.f32.mrf.mxu0
        %3282 = vdwg.mxu0
        %3283 = vmatpush.bf16.msra.mxu0 %v3043
        %3284 = vmatpush.bf16.msra.mxu0 %v3031
        %3285 = vmatpush.bf16.msra.mxu0 %v3019
        %3286 = vmatpush.bf16.msra.mxu0 %v3007
        %3287 = vmatpush.bf16.msra.mxu0 %v2995
        %3288 = vmatpush.bf16.msra.mxu0 %v2983
        %3289 = vmatpush.bf16.msra.mxu0 %v2971
        %3290 = vmatpush.bf16.msra.mxu0 %v2959
        %3291 = vmatmul.bf16.gmra.mxu0 %v2533
        %v3292 = vpop.f32.mrf.mxu0
        %v3293 = vadd.f32 %v2647, %v3292
        %v3294 = vpop.f32.mrf.mxu0
        %3295 = vdwg.mxu0
        %v3296 = vpack.c.bf16 %v3163, %v3150
        %v3297 = vpack.c.bf16 %v3189, %v3176
        %v3298 = vpack.c.bf16 %v3215, %v3202
        %v3299 = vpack.c.bf16 %v3241, %v3228
        %v3300 = vpack.c.bf16 %v3267, %v3254
        %v3301 = vpack.c.bf16 %v3293, %v3280
        %vm3302 = vcmp.gt.s32.totalorder %v745, %v741
        %s3303 = scalar_lea.vmem [#allocation11], 256
        %v3304 = vld [vmem:[%s3303] sm:$0xf]
        %v3305 = vld [vmem:[%s3303 + $0x4] sm:$0xf]
        %v3306 = vld [vmem:[%s3303 + $0x8] sm:$0xf]
        %v3307 = vld [vmem:[%s3303 + $0xc] sm:$0xf]
        %v3308 = vld [vmem:[%s3303 + $0x10] sm:$0xf]
        %v3309 = vld [vmem:[%s3303 + $0x14] sm:$0xf]
        %v3310 = vld [vmem:[%s3303 + $0x18] sm:$0xf]
        %v3311 = vld [vmem:[%s3303 + $0x1c] sm:$0xf]
        %v3312 = vld [vmem:[%s3303 + $0x20] sm:$0xf]
        %v3313 = vld [vmem:[%s3303 + $0x24] sm:$0xf]
        %v3314 = vld [vmem:[%s3303 + $0x28] sm:$0xf]
        %v3315 = vld [vmem:[%s3303 + $0x2c] sm:$0xf]
        %v3316 = vld [vmem:[%s3303 + $0x30] sm:$0xf]
        %v3317 = vld [vmem:[%s3303 + $0x34] sm:$0xf]
        %v3318 = vld [vmem:[%s3303 + $0x38] sm:$0xf]
        %v3319 = vld [vmem:[%s3303 + $0x3c] sm:$0xf]
        %v3320 = vld [vmem:[%s3303 + $0x40] sm:$0xf]
        %v3321 = vld [vmem:[%s3303 + $0x44] sm:$0xf]
        %v3322 = vld [vmem:[%s3303 + $0x48] sm:$0xf]
        %v3323 = vld [vmem:[%s3303 + $0x4c] sm:$0xf]
        %v3324 = vld [vmem:[%s3303 + $0x50] sm:$0xf]
        %v3325 = vld [vmem:[%s3303 + $0x54] sm:$0xf]
        %v3326 = vld [vmem:[%s3303 + $0x58] sm:$0xf]
        %v3327 = vld [vmem:[%s3303 + $0x5c] sm:$0xf]
        %v3328 = vld [vmem:[%s3303 + $0x60] sm:$0xf]
        %v3329 = vld [vmem:[%s3303 + $0x64] sm:$0xf]
        %v3330 = vld [vmem:[%s3303 + $0x68] sm:$0xf]
        %v3331 = vld [vmem:[%s3303 + $0x6c] sm:$0xf]
        %v3332 = vld [vmem:[%s3303 + $0x70] sm:$0xf]
        %v3333 = vld [vmem:[%s3303 + $0x74] sm:$0xf]
        %v3334 = vld [vmem:[%s3303 + $0x78] sm:$0xf]
        %v3335 = vld [vmem:[%s3303 + $0x7c] sm:$0xf]
        %v3336 = vld [vmem:[%s3303 + $0x80] sm:$0xf]
        %v3337 = vld [vmem:[%s3303 + $0x84] sm:$0xf]
        %v3338 = vld [vmem:[%s3303 + $0x88] sm:$0xf]
        %v3339 = vld [vmem:[%s3303 + $0x8c] sm:$0xf]
        %v3340 = vld [vmem:[%s3303 + $0x90] sm:$0xf]
        %v3341 = vld [vmem:[%s3303 + $0x94] sm:$0xf]
        %v3342 = vld [vmem:[%s3303 + $0x98] sm:$0xf]
        %v3343 = vld [vmem:[%s3303 + $0x9c] sm:$0xf]
        %v3344 = vld [vmem:[%s3303 + $0xa0] sm:$0xf]
        %v3345 = vld [vmem:[%s3303 + $0xa4] sm:$0xf]
        %v3346 = vld [vmem:[%s3303 + $0xa8] sm:$0xf]
        %v3347 = vld [vmem:[%s3303 + $0xac] sm:$0xf]
        %v3348 = vld [vmem:[%s3303 + $0xb0] sm:$0xf]
        %v3349 = vld [vmem:[%s3303 + $0xb4] sm:$0xf]
        %v3350 = vld [vmem:[%s3303 + $0xb8] sm:$0xf]
        %v3351 = vld [vmem:[%s3303 + $0xbc] sm:$0xf]
        %v3352 = vld [vmem:[%s3303 + $0xc0] sm:$0xf]
        %v3353 = vld [vmem:[%s3303 + $0xc4] sm:$0xf]
        %v3354 = vld [vmem:[%s3303 + $0xc8] sm:$0xf]
        %v3355 = vld [vmem:[%s3303 + $0xcc] sm:$0xf]
        %v3356 = vld [vmem:[%s3303 + $0xd0] sm:$0xf]
        %v3357 = vld [vmem:[%s3303 + $0xd4] sm:$0xf]
        %v3358 = vld [vmem:[%s3303 + $0xd8] sm:$0xf]
        %v3359 = vld [vmem:[%s3303 + $0xdc] sm:$0xf]
        %v3360 = vld [vmem:[%s3303 + $0xe0] sm:$0xf]
        %v3361 = vld [vmem:[%s3303 + $0xe4] sm:$0xf]
        %v3362 = vld [vmem:[%s3303 + $0xe8] sm:$0xf]
        %v3363 = vld [vmem:[%s3303 + $0xec] sm:$0xf]
        %v3364 = vld [vmem:[%s3303 + $0xf0] sm:$0xf]
        %v3365 = vld [vmem:[%s3303 + $0xf4] sm:$0xf]
        %v3366 = vld [vmem:[%s3303 + $0xf8] sm:$0xf]
        %v3367 = vld [vmem:[%s3303 + $0xfc] sm:$0xf]
        %3368 = vmatpush.bf16.xpose.msra.mxu0 0
        %3369 = vmatpush.bf16.xpose.msra.mxu0 0
        %3370 = vmatpush.bf16.xpose.msra.mxu0 0
        %3371 = vmatpush.bf16.xpose.msra.mxu0 0
        %3372 = vmatpush.bf16.xpose.msra.mxu0 0
        %3373 = vmatpush.bf16.xpose.msra.mxu0 0
        %3374 = vmatpush.bf16.xpose.msra.mxu0 0
        %3375 = vmatpush.bf16.xpose.msra.mxu0 %v3298
        %3376 = vmatmul.bf16.gmra.mxu0 %v3296
        %v3377 = vpop.f32.mrf.mxu0
        %v3378 = vadd.f32 0.0, %v3377
        %v3379 = vpop.f32.mrf.mxu0
        %3380 = vdwg.mxu0
        %v3381 = vsel %vm3302, -1e+30, %v3378
        %v3382 = vsel %vm1620, %v3381, -inf
        %3383 = vmax.xlane.f32.xlu0 %v3382
        %v3384 = vpop.xlane.xlu0 %3383
        %v3385 = vsub.f32 %v3381, %v3384
        %v3386 = vmul.f32 %v3385, 1.442695
        %v3387 = vpow.pop %v3386
        %v3388 = vsel %vm1620, %v3387, 0.0
        %3389 = vadd.xlane.f32.xlu0 %v3388
        %v3390 = vpop.xlane.xlu0 %3389
        %v3391 = vrcp.pop %v3390
        %v3392 = vmul.f32 %v3387, %v3391
        %v3393 = vpack.c.bf16 %v3392, %v3392
        %v3395 = vsel %vm1620, %v3393, 0
        %v3398 = vsel %vm1636, %v3300, 0
        %3400 = vmatpush.bf16.msra.mxu0 0
        %3401 = vmatpush.bf16.msra.mxu0 0
        %3402 = vmatpush.bf16.msra.mxu0 0
        %3403 = vmatpush.bf16.msra.mxu0 0
        %3404 = vmatpush.bf16.msra.mxu0 0
        %3405 = vmatpush.bf16.msra.mxu0 0
        %3406 = vmatpush.bf16.msra.mxu0 0
        %3407 = vmatpush.bf16.msra.mxu0 %v3398
        %3408 = vmatmul.bf16.gmra.mxu0 %v3395
        %v3409 = vpop.f32.mrf.mxu0
        %v3410 = vadd.f32 0.0, %v3409
        %v3411 = vpop.f32.mrf.mxu0
        %3412 = vdwg.mxu0
        %v3413 = vpack.c.bf16 %v3410, %v3410
        %v3415 = vrot.slane %v3296, 4
        %v3418 = vrot.slane %v3298, 4
        %v3421 = vrot.slane %v3300, 4
        %3422 = vmatpush.bf16.xpose.msra.mxu0 0
        %3423 = vmatpush.bf16.xpose.msra.mxu0 0
        %3424 = vmatpush.bf16.xpose.msra.mxu0 0
        %3425 = vmatpush.bf16.xpose.msra.mxu0 0
        %3426 = vmatpush.bf16.xpose.msra.mxu0 0
        %3427 = vmatpush.bf16.xpose.msra.mxu0 0
        %3428 = vmatpush.bf16.xpose.msra.mxu0 0
        %3429 = vmatpush.bf16.xpose.msra.mxu0 %v3418
        %3430 = vmatmul.bf16.gmra.mxu0 %v3415
        %v3431 = vpop.f32.mrf.mxu0
        %v3432 = vadd.f32 0.0, %v3431
        %v3433 = vpop.f32.mrf.mxu0
        %3434 = vdwg.mxu0
        %v3435 = vsel %vm3302, -1e+30, %v3432
        %v3436 = vsel %vm1620, %v3435, -inf
        %3437 = vmax.xlane.f32.xlu0 %v3436
        %v3438 = vpop.xlane.xlu0 %3437
        %v3439 = vsub.f32 %v3435, %v3438
        %v3440 = vmul.f32 %v3439, 1.442695
        %v3441 = vpow.pop %v3440
        %v3442 = vsel %vm1620, %v3441, 0.0
        %3443 = vadd.xlane.f32.xlu0 %v3442
        %v3444 = vpop.xlane.xlu0 %3443
        %v3445 = vrcp.pop %v3444
        %v3446 = vmul.f32 %v3441, %v3445
        %v3447 = vpack.c.bf16 %v3446, %v3446
        %v3449 = vsel %vm1620, %v3447, 0
        %v3452 = vsel %vm1636, %v3421, 0
        %3454 = vmatpush.bf16.msra.mxu0 0
        %3455 = vmatpush.bf16.msra.mxu0 0
        %3456 = vmatpush.bf16.msra.mxu0 0
        %3457 = vmatpush.bf16.msra.mxu0 0
        %3458 = vmatpush.bf16.msra.mxu0 0
        %3459 = vmatpush.bf16.msra.mxu0 0
        %3460 = vmatpush.bf16.msra.mxu0 0
        %3461 = vmatpush.bf16.msra.mxu0 %v3452
        %3462 = vmatmul.bf16.gmra.mxu0 %v3449
        %v3463 = vpop.f32.mrf.mxu0
        %v3464 = vadd.f32 0.0, %v3463
        %v3465 = vpop.f32.mrf.mxu0
        %3466 = vdwg.mxu0
        %v3467 = vpack.c.bf16 %v3464, %v3464
        %v3484 = vunpack.c.l.b16 %v3320
        %v3485 = vunpack.c.l.b16 %v3321
        %v3486 = vunpack.c.l.b16 %v3322
        %v3487 = vunpack.c.l.b16 %v3323
        %v3488 = vunpack.c.l.b16 %v3324
        %v3489 = vunpack.c.l.b16 %v3325
        %v3490 = vunpack.c.l.b16 %v3326
        %v3491 = vunpack.c.l.b16 %v3327
        %v3492 = vunpack.c.l.b16 %v3328
        %v3493 = vunpack.c.l.b16 %v3329
        %v3494 = vunpack.c.l.b16 %v3330
        %v3495 = vunpack.c.l.b16 %v3331
        %v3496 = vunpack.c.l.b16 %v3332
        %v3497 = vunpack.c.l.b16 %v3333
        %v3498 = vunpack.c.l.b16 %v3334
        %v3499 = vunpack.c.l.b16 %v3335
        %v3500 = vpack.c.b16 %v3485, %v3484
        %v3501 = vpack.c.b16 %v3487, %v3486
        %v3502 = vpack.c.b16 %v3489, %v3488
        %v3503 = vpack.c.b16 %v3491, %v3490
        %v3504 = vpack.c.b16 %v3493, %v3492
        %v3505 = vpack.c.b16 %v3495, %v3494
        %v3506 = vpack.c.b16 %v3497, %v3496
        %v3507 = vpack.c.b16 %v3499, %v3498
        %3516 = vmatpush.bf16.msra.mxu0 %v3507
        %3517 = vmatpush.bf16.msra.mxu0 %v3506
        %3518 = vmatpush.bf16.msra.mxu0 %v3505
        %3519 = vmatpush.bf16.msra.mxu0 %v3504
        %3520 = vmatpush.bf16.msra.mxu0 %v3503
        %3521 = vmatpush.bf16.msra.mxu0 %v3502
        %3522 = vmatpush.bf16.msra.mxu0 %v3501
        %3523 = vmatpush.bf16.msra.mxu0 %v3500
        %3524 = vmatmul.bf16.gmra.mxu0 %v3467
        %v3525 = vpop.f32.mrf.mxu0
        %v3526 = vadd.f32 0.0, %v3525
        %v3527 = vpop.f32.mrf.mxu0
        %3528 = vdwg.mxu0
        %v3545 = vunpack.c.l.b16 %v3304
        %v3546 = vunpack.c.l.b16 %v3305
        %v3547 = vunpack.c.l.b16 %v3306
        %v3548 = vunpack.c.l.b16 %v3307
        %v3549 = vunpack.c.l.b16 %v3308
        %v3550 = vunpack.c.l.b16 %v3309
        %v3551 = vunpack.c.l.b16 %v3310
        %v3552 = vunpack.c.l.b16 %v3311
        %v3553 = vunpack.c.l.b16 %v3312
        %v3554 = vunpack.c.l.b16 %v3313
        %v3555 = vunpack.c.l.b16 %v3314
        %v3556 = vunpack.c.l.b16 %v3315
        %v3557 = vunpack.c.l.b16 %v3316
        %v3558 = vunpack.c.l.b16 %v3317
        %v3559 = vunpack.c.l.b16 %v3318
        %v3560 = vunpack.c.l.b16 %v3319
        %v3561 = vpack.c.b16 %v3546, %v3545
        %v3562 = vpack.c.b16 %v3548, %v3547
        %v3563 = vpack.c.b16 %v3550, %v3549
        %v3564 = vpack.c.b16 %v3552, %v3551
        %v3565 = vpack.c.b16 %v3554, %v3553
        %v3566 = vpack.c.b16 %v3556, %v3555
        %v3567 = vpack.c.b16 %v3558, %v3557
        %v3568 = vpack.c.b16 %v3560, %v3559
        %3577 = vmatpush.bf16.msra.mxu0 %v3568
        %3578 = vmatpush.bf16.msra.mxu0 %v3567
        %3579 = vmatpush.bf16.msra.mxu0 %v3566
        %3580 = vmatpush.bf16.msra.mxu0 %v3565
        %3581 = vmatpush.bf16.msra.mxu0 %v3564
        %3582 = vmatpush.bf16.msra.mxu0 %v3563
        %3583 = vmatpush.bf16.msra.mxu0 %v3562
        %3584 = vmatpush.bf16.msra.mxu0 %v3561
        %3585 = vmatmul.bf16.gmra.mxu0 %v3413
        %v3586 = vpop.f32.mrf.mxu0
        %v3587 = vadd.f32 %v3526, %v3586
        %v3588 = vpop.f32.mrf.mxu0
        %3589 = vdwg.mxu0
        %3590 = vmatpush.bf16.xpose.msra.mxu0 0
        %3591 = vmatpush.bf16.xpose.msra.mxu0 0
        %3592 = vmatpush.bf16.xpose.msra.mxu0 0
        %3593 = vmatpush.bf16.xpose.msra.mxu0 0
        %3594 = vmatpush.bf16.xpose.msra.mxu0 0
        %3595 = vmatpush.bf16.xpose.msra.mxu0 0
        %3596 = vmatpush.bf16.xpose.msra.mxu0 0
        %3597 = vmatpush.bf16.xpose.msra.mxu0 %v3299
        %3598 = vmatmul.bf16.gmra.mxu0 %v3297
        %v3599 = vpop.f32.mrf.mxu0
        %v3600 = vadd.f32 0.0, %v3599
        %v3601 = vpop.f32.mrf.mxu0
        %3602 = vdwg.mxu0
        %v3603 = vsel %vm3302, -1e+30, %v3600
        %v3604 = vsel %vm1620, %v3603, -inf
        %3605 = vmax.xlane.f32.xlu0 %v3604
        %v3606 = vpop.xlane.xlu0 %3605
        %v3607 = vsub.f32 %v3603, %v3606
        %v3608 = vmul.f32 %v3607, 1.442695
        %v3609 = vpow.pop %v3608
        %v3610 = vsel %vm1620, %v3609, 0.0
        %3611 = vadd.xlane.f32.xlu0 %v3610
        %v3612 = vpop.xlane.xlu0 %3611
        %v3613 = vrcp.pop %v3612
        %v3614 = vmul.f32 %v3609, %v3613
        %v3615 = vpack.c.bf16 %v3614, %v3614
        %v3617 = vsel %vm1620, %v3615, 0
        %v3620 = vsel %vm1636, %v3301, 0
        %3622 = vmatpush.bf16.msra.mxu0 0
        %3623 = vmatpush.bf16.msra.mxu0 0
        %3624 = vmatpush.bf16.msra.mxu0 0
        %3625 = vmatpush.bf16.msra.mxu0 0
        %3626 = vmatpush.bf16.msra.mxu0 0
        %3627 = vmatpush.bf16.msra.mxu0 0
        %3628 = vmatpush.bf16.msra.mxu0 0
        %3629 = vmatpush.bf16.msra.mxu0 %v3620
        %3630 = vmatmul.bf16.gmra.mxu0 %v3617
        %v3631 = vpop.f32.mrf.mxu0
        %v3632 = vadd.f32 0.0, %v3631
        %v3633 = vpop.f32.mrf.mxu0
        %3634 = vdwg.mxu0
        %v3635 = vpack.c.bf16 %v3632, %v3632
        %v3652 = vunpack.c.l.b16 %v3336
        %v3653 = vunpack.c.l.b16 %v3337
        %v3654 = vunpack.c.l.b16 %v3338
        %v3655 = vunpack.c.l.b16 %v3339
        %v3656 = vunpack.c.l.b16 %v3340
        %v3657 = vunpack.c.l.b16 %v3341
        %v3658 = vunpack.c.l.b16 %v3342
        %v3659 = vunpack.c.l.b16 %v3343
        %v3660 = vunpack.c.l.b16 %v3344
        %v3661 = vunpack.c.l.b16 %v3345
        %v3662 = vunpack.c.l.b16 %v3346
        %v3663 = vunpack.c.l.b16 %v3347
        %v3664 = vunpack.c.l.b16 %v3348
        %v3665 = vunpack.c.l.b16 %v3349
        %v3666 = vunpack.c.l.b16 %v3350
        %v3667 = vunpack.c.l.b16 %v3351
        %v3668 = vpack.c.b16 %v3653, %v3652
        %v3669 = vpack.c.b16 %v3655, %v3654
        %v3670 = vpack.c.b16 %v3657, %v3656
        %v3671 = vpack.c.b16 %v3659, %v3658
        %v3672 = vpack.c.b16 %v3661, %v3660
        %v3673 = vpack.c.b16 %v3663, %v3662
        %v3674 = vpack.c.b16 %v3665, %v3664
        %v3675 = vpack.c.b16 %v3667, %v3666
        %3684 = vmatpush.bf16.msra.mxu0 %v3675
        %3685 = vmatpush.bf16.msra.mxu0 %v3674
        %3686 = vmatpush.bf16.msra.mxu0 %v3673
        %3687 = vmatpush.bf16.msra.mxu0 %v3672
        %3688 = vmatpush.bf16.msra.mxu0 %v3671
        %3689 = vmatpush.bf16.msra.mxu0 %v3670
        %3690 = vmatpush.bf16.msra.mxu0 %v3669
        %3691 = vmatpush.bf16.msra.mxu0 %v3668
        %3692 = vmatmul.bf16.gmra.mxu0 %v3635
        %v3693 = vpop.f32.mrf.mxu0
        %v3694 = vadd.f32 0.0, %v3693
        %v3695 = vpop.f32.mrf.mxu0
        %3696 = vdwg.mxu0
        %v3697 = vadd.f32 %v3587, %v3694
        %v3699 = vrot.slane %v3297, 4
        %v3702 = vrot.slane %v3299, 4
        %v3705 = vrot.slane %v3301, 4
        %3706 = vmatpush.bf16.xpose.msra.mxu0 0
        %3707 = vmatpush.bf16.xpose.msra.mxu0 0
        %3708 = vmatpush.bf16.xpose.msra.mxu0 0
        %3709 = vmatpush.bf16.xpose.msra.mxu0 0
        %3710 = vmatpush.bf16.xpose.msra.mxu0 0
        %3711 = vmatpush.bf16.xpose.msra.mxu0 0
        %3712 = vmatpush.bf16.xpose.msra.mxu0 0
        %3713 = vmatpush.bf16.xpose.msra.mxu0 %v3702
        %3714 = vmatmul.bf16.gmra.mxu0 %v3699
        %v3715 = vpop.f32.mrf.mxu0
        %v3716 = vadd.f32 0.0, %v3715
        %v3717 = vpop.f32.mrf.mxu0
        %3718 = vdwg.mxu0
        %v3719 = vsel %vm3302, -1e+30, %v3716
        %v3720 = vsel %vm1620, %v3719, -inf
        %3721 = vmax.xlane.f32.xlu0 %v3720
        %v3722 = vpop.xlane.xlu0 %3721
        %v3723 = vsub.f32 %v3719, %v3722
        %v3724 = vmul.f32 %v3723, 1.442695
        %v3725 = vpow.pop %v3724
        %v3726 = vsel %vm1620, %v3725, 0.0
        %3727 = vadd.xlane.f32.xlu0 %v3726
        %v3728 = vpop.xlane.xlu0 %3727
        %v3729 = vrcp.pop %v3728
        %v3730 = vmul.f32 %v3725, %v3729
        %v3731 = vpack.c.bf16 %v3730, %v3730
        %v3733 = vsel %vm1620, %v3731, 0
        %v3736 = vsel %vm1636, %v3705, 0
        %3738 = vmatpush.bf16.msra.mxu0 0
        %3739 = vmatpush.bf16.msra.mxu0 0
        %3740 = vmatpush.bf16.msra.mxu0 0
        %3741 = vmatpush.bf16.msra.mxu0 0
        %3742 = vmatpush.bf16.msra.mxu0 0
        %3743 = vmatpush.bf16.msra.mxu0 0
        %3744 = vmatpush.bf16.msra.mxu0 0
        %3745 = vmatpush.bf16.msra.mxu0 %v3736
        %3746 = vmatmul.bf16.gmra.mxu0 %v3733
        %v3747 = vpop.f32.mrf.mxu0
        %v3748 = vadd.f32 0.0, %v3747
        %v3749 = vpop.f32.mrf.mxu0
        %3750 = vdwg.mxu0
        %v3751 = vpack.c.bf16 %v3748, %v3748
        %v3768 = vunpack.c.l.b16 %v3352
        %v3769 = vunpack.c.l.b16 %v3353
        %v3770 = vunpack.c.l.b16 %v3354
        %v3771 = vunpack.c.l.b16 %v3355
        %v3772 = vunpack.c.l.b16 %v3356
        %v3773 = vunpack.c.l.b16 %v3357
        %v3774 = vunpack.c.l.b16 %v3358
        %v3775 = vunpack.c.l.b16 %v3359
        %v3776 = vunpack.c.l.b16 %v3360
        %v3777 = vunpack.c.l.b16 %v3361
        %v3778 = vunpack.c.l.b16 %v3362
        %v3779 = vunpack.c.l.b16 %v3363
        %v3780 = vunpack.c.l.b16 %v3364
        %v3781 = vunpack.c.l.b16 %v3365
        %v3782 = vunpack.c.l.b16 %v3366
        %v3783 = vunpack.c.l.b16 %v3367
        %v3784 = vpack.c.b16 %v3769, %v3768
        %v3785 = vpack.c.b16 %v3771, %v3770
        %v3786 = vpack.c.b16 %v3773, %v3772
        %v3787 = vpack.c.b16 %v3775, %v3774
        %v3788 = vpack.c.b16 %v3777, %v3776
        %v3789 = vpack.c.b16 %v3779, %v3778
        %v3790 = vpack.c.b16 %v3781, %v3780
        %v3791 = vpack.c.b16 %v3783, %v3782
        %3800 = vmatpush.bf16.msra.mxu0 %v3791
        %3801 = vmatpush.bf16.msra.mxu0 %v3790
        %3802 = vmatpush.bf16.msra.mxu0 %v3789
        %3803 = vmatpush.bf16.msra.mxu0 %v3788
        %3804 = vmatpush.bf16.msra.mxu0 %v3787
        %3805 = vmatpush.bf16.msra.mxu0 %v3786
        %3806 = vmatpush.bf16.msra.mxu0 %v3785
        %3807 = vmatpush.bf16.msra.mxu0 %v3784
        %3808 = vmatmul.bf16.gmra.mxu0 %v3751
        %v3809 = vpop.f32.mrf.mxu0
        %v3810 = vadd.f32 0.0, %v3809
        %v3811 = vpop.f32.mrf.mxu0
        %3812 = vdwg.mxu0
        %v3813 = vadd.f32 %v3697, %v3810
        %v3814 = vld [vmem:[%s6 + $0x1] sm:$0x1]
        %v3815 = vperm.slane %v3814, 0
        %v3816 = vadd.f32 %v3813, %v3815
        %v3817 = vadd.f32 %v3816, %v739
        %v3818 = vld [vmem:[%s7 + $0x1] sm:$0x1]
        %v3819 = vld [vmem:[%s8 + $0x1] sm:$0x1]
        %3820 = vadd.xlane.f32.xlu0 %v3817
        %v3821 = vpop.xlane.xlu0 %3820
        %v3822 = vmul.f32 %v3821, 0.03125
        %v3823 = vmul.f32 %v3817, %v3817
        %3824 = vadd.xlane.f32.xlu0 %v3823
        %v3825 = vpop.xlane.xlu0 %3824
        %v3826 = vmul.f32 %v3825, 0.03125
        %v3827 = vmul.f32 %v3822, %v3822
        %v3828 = vsub.f32 %v3826, %v3827
        %v3829 = vsub.f32 %v3817, %v3822
        %v3830 = vadd.f32 %v3828, 1e-05
        %v3831 = vrsqrt.pop %v3830
        %v3832 = vmul.f32 %v3831, %v3830
        %v3833 = vmul.f32 %v3832, %v3831
        %v3834 = vmul.f32 0.5, %v3833
        %v3835 = vsub.f32 1.5, %v3834
        %v3836 = vmul.f32 %v3831, %v3835
        %vm3837 = vweird.f32 %v3830
        %vm3838 = vweird.f32 %v3831
        %vm3839 = vmor %vm3837, %vm3838
        %v3840 = vsel %vm3839, %v3831, %v3836
        %v3841 = vmul.f32 %v3829, %v3840
        %v3842 = vperm.slane %v3818, 0
        %v3843 = vmul.f32 %v3841, %v3842
        %v3844 = vperm.slane %v3819, 0
        %v3845 = vadd.f32 %v3843, %v3844
        %v3846 = vpack.c.bf16 %v3845, %v3845
        %s3847 = scalar_lea.vmem [#allocation13], 192
        %v3848 = vld [vmem:[%s3847] sm:$0xff]
        %v3849 = vld [vmem:[%s3847 + $0x8] sm:$0xf]
        %v3850 = vld [vmem:[%s3847 + $0xc] sm:$0xff]
        %v3851 = vld [vmem:[%s3847 + $0x14] sm:$0xf]
        %v3852 = vld [vmem:[%s3847 + $0x18] sm:$0xff]
        %v3853 = vld [vmem:[%s3847 + $0x20] sm:$0xf]
        %v3854 = vld [vmem:[%s3847 + $0x24] sm:$0xff]
        %v3855 = vld [vmem:[%s3847 + $0x2c] sm:$0xf]
        %v3856 = vld [vmem:[%s3847 + $0x30] sm:$0xff]
        %v3857 = vld [vmem:[%s3847 + $0x38] sm:$0xf]
        %v3858 = vld [vmem:[%s3847 + $0x3c] sm:$0xff]
        %v3859 = vld [vmem:[%s3847 + $0x44] sm:$0xf]
        %v3860 = vld [vmem:[%s3847 + $0x48] sm:$0xff]
        %v3861 = vld [vmem:[%s3847 + $0x50] sm:$0xf]
        %v3862 = vld [vmem:[%s3847 + $0x54] sm:$0xff]
        %v3863 = vld [vmem:[%s3847 + $0x5c] sm:$0xf]
        %v3864 = vld [vmem:[%s3847 + $0x60] sm:$0xff]
        %v3865 = vld [vmem:[%s3847 + $0x68] sm:$0xf]
        %v3866 = vld [vmem:[%s3847 + $0x6c] sm:$0xff]
        %v3867 = vld [vmem:[%s3847 + $0x74] sm:$0xf]
        %v3868 = vld [vmem:[%s3847 + $0x78] sm:$0xff]
        %v3869 = vld [vmem:[%s3847 + $0x80] sm:$0xf]
        %v3870 = vld [vmem:[%s3847 + $0x84] sm:$0xff]
        %v3871 = vld [vmem:[%s3847 + $0x8c] sm:$0xf]
        %v3872 = vld [vmem:[%s3847 + $0x90] sm:$0xff]
        %v3873 = vld [vmem:[%s3847 + $0x98] sm:$0xf]
        %v3874 = vld [vmem:[%s3847 + $0x9c] sm:$0xff]
        %v3875 = vld [vmem:[%s3847 + $0xa4] sm:$0xf]
        %v3876 = vld [vmem:[%s3847 + $0xa8] sm:$0xff]
        %v3877 = vld [vmem:[%s3847 + $0xb0] sm:$0xf]
        %v3878 = vld [vmem:[%s3847 + $0xb4] sm:$0xff]
        %v3879 = vld [vmem:[%s3847 + $0xbc] sm:$0xf]
        %v3880 = vld [vmem:[%s10 + $0x1] sm:$0x1]
        %v3913 = vunpack.c.l.b16 %v3848
        %v3914 = vunpack.c.h.b16 %v3848
        %v3915 = vunpack.c.l.b16 %v3849
        %v3916 = vunpack.c.l.b16 %v3850
        %v3917 = vunpack.c.h.b16 %v3850
        %v3918 = vunpack.c.l.b16 %v3851
        %v3919 = vunpack.c.l.b16 %v3852
        %v3920 = vunpack.c.h.b16 %v3852
        %v3921 = vunpack.c.l.b16 %v3853
        %v3922 = vunpack.c.l.b16 %v3854
        %v3923 = vunpack.c.h.b16 %v3854
        %v3924 = vunpack.c.l.b16 %v3855
        %v3925 = vunpack.c.l.b16 %v3856
        %v3926 = vunpack.c.h.b16 %v3856
        %v3927 = vunpack.c.l.b16 %v3857
        %v3928 = vunpack.c.l.b16 %v3858
        %v3929 = vunpack.c.h.b16 %v3858
        %v3930 = vunpack.c.l.b16 %v3859
        %v3931 = vunpack.c.l.b16 %v3860
        %v3932 = vunpack.c.h.b16 %v3860
        %v3933 = vunpack.c.l.b16 %v3861
        %v3934 = vunpack.c.l.b16 %v3862
        %v3935 = vunpack.c.h.b16 %v3862
        %v3936 = vunpack.c.l.b16 %v3863
        %v3937 = vunpack.c.l.b16 %v3864
        %v3938 = vunpack.c.h.b16 %v3864
        %v3939 = vunpack.c.l.b16 %v3865
        %v3940 = vunpack.c.l.b16 %v3866
        %v3941 = vunpack.c.h.b16 %v3866
        %v3942 = vunpack.c.l.b16 %v3867
        %v3943 = vunpack.c.l.b16 %v3868
        %v3944 = vunpack.c.h.b16 %v3868
        %v3945 = vunpack.c.l.b16 %v3869
        %v3946 = vunpack.c.l.b16 %v3870
        %v3947 = vunpack.c.h.b16 %v3870
        %v3948 = vunpack.c.l.b16 %v3871
        %v3949 = vunpack.c.l.b16 %v3872
        %v3950 = vunpack.c.h.b16 %v3872
        %v3951 = vunpack.c.l.b16 %v3873
        %v3952 = vunpack.c.l.b16 %v3874
        %v3953 = vunpack.c.h.b16 %v3874
        %v3954 = vunpack.c.l.b16 %v3875
        %v3955 = vunpack.c.l.b16 %v3876
        %v3956 = vunpack.c.h.b16 %v3876
        %v3957 = vunpack.c.l.b16 %v3877
        %v3958 = vunpack.c.l.b16 %v3878
        %v3959 = vunpack.c.h.b16 %v3878
        %v3960 = vunpack.c.l.b16 %v3879
        %v3961 = vpack.c.b16 %v3916, %v3913
        %v3962 = vpack.c.b16 %v3917, %v3914
        %v3963 = vpack.c.b16 %v3918, %v3915
        %v3964 = vpack.c.b16 %v3922, %v3919
        %v3965 = vpack.c.b16 %v3923, %v3920
        %v3966 = vpack.c.b16 %v3924, %v3921
        %v3967 = vpack.c.b16 %v3928, %v3925
        %v3968 = vpack.c.b16 %v3929, %v3926
        %v3969 = vpack.c.b16 %v3930, %v3927
        %v3970 = vpack.c.b16 %v3934, %v3931
        %v3971 = vpack.c.b16 %v3935, %v3932
        %v3972 = vpack.c.b16 %v3936, %v3933
        %v3973 = vpack.c.b16 %v3940, %v3937
        %v3974 = vpack.c.b16 %v3941, %v3938
        %v3975 = vpack.c.b16 %v3942, %v3939
        %v3976 = vpack.c.b16 %v3946, %v3943
        %v3977 = vpack.c.b16 %v3947, %v3944
        %v3978 = vpack.c.b16 %v3948, %v3945
        %v3979 = vpack.c.b16 %v3952, %v3949
        %v3980 = vpack.c.b16 %v3953, %v3950
        %v3981 = vpack.c.b16 %v3954, %v3951
        %v3982 = vpack.c.b16 %v3958, %v3955
        %v3983 = vpack.c.b16 %v3959, %v3956
        %v3984 = vpack.c.b16 %v3960, %v3957
        %4009 = vmatpush.bf16.msra.mxu0 %v3982
        %4010 = vmatpush.bf16.msra.mxu0 %v3979
        %4011 = vmatpush.bf16.msra.mxu0 %v3976
        %4012 = vmatpush.bf16.msra.mxu0 %v3973
        %4013 = vmatpush.bf16.msra.mxu0 %v3970
        %4014 = vmatpush.bf16.msra.mxu0 %v3967
        %4015 = vmatpush.bf16.msra.mxu0 %v3964
        %4016 = vmatpush.bf16.msra.mxu0 %v3961
        %4017 = vmatmul.bf16.gmra.mxu0 %v3846
        %v4018 = vpop.f32.mrf.mxu0
        %v4019 = vadd.f32 0.0, %v4018
        %v4020 = vpop.f32.mrf.mxu0
        %4021 = vdwg.mxu0
        %4022 = vmatpush.bf16.msra.mxu0 %v3983
        %4023 = vmatpush.bf16.msra.mxu0 %v3980
        %4024 = vmatpush.bf16.msra.mxu0 %v3977
        %4025 = vmatpush.bf16.msra.mxu0 %v3974
        %4026 = vmatpush.bf16.msra.mxu0 %v3971
        %4027 = vmatpush.bf16.msra.mxu0 %v3968
        %4028 = vmatpush.bf16.msra.mxu0 %v3965
        %4029 = vmatpush.bf16.msra.mxu0 %v3962
        %4030 = vmatmul.bf16.gmra.mxu0 %v3846
        %v4031 = vpop.f32.mrf.mxu0
        %v4032 = vadd.f32 0.0, %v4031
        %v4033 = vpop.f32.mrf.mxu0
        %4034 = vdwg.mxu0
        %4035 = vmatpush.bf16.msra.mxu0 %v3984
        %4036 = vmatpush.bf16.msra.mxu0 %v3981
        %4037 = vmatpush.bf16.msra.mxu0 %v3978
        %4038 = vmatpush.bf16.msra.mxu0 %v3975
        %4039 = vmatpush.bf16.msra.mxu0 %v3972
        %4040 = vmatpush.bf16.msra.mxu0 %v3969
        %4041 = vmatpush.bf16.msra.mxu0 %v3966
        %4042 = vmatpush.bf16.msra.mxu0 %v3963
        %4043 = vmatmul.bf16.gmra.mxu0 %v3846
        %v4044 = vpop.f32.mrf.mxu0
        %v4045 = vadd.f32 0.0, %v4044
        %v4046 = vpop.f32.mrf.mxu0
        %4047 = vdwg.mxu0
        %v4048 = vrot.slane %v4019, 7
        %v4049 = vsel %vm2289, %v4048, 0.0
        %v4050 = vrot.slane %v4045, 1
        %v4051 = vsel %vm2293, %v4050, 0.0
        %v4052 = vadd.f32 %v4049, %v4032
        %v4053 = vadd.f32 %v4052, %v4051
        %v4054 = vperm.slane %v3880, 0
        %v4055 = vadd.f32 %v4053, %v4054
        %v4056 = vmul.f32 %v4055, 0.5
        %v4057 = vmul.f32 %v4055, 0.044715
        %v4058 = vmul.f32 %v4057, %v4055
        %v4059 = vmul.f32 %v4058, %v4055
        %v4060 = vadd.f32 %v4055, %v4059
        %v4061 = vmul.f32 %v4060, 0.7978846
        %v4062 = vtanh.pop %v4061
        %v4063 = vadd.f32 %v4062, 1.0
        %v4064 = vmul.f32 %v4056, %v4063
        %v4065 = vpack.c.bf16 %v4064, %v4064
        %s4066 = scalar_lea.vmem [#allocation14], 192
        %v4067 = vld [vmem:[%s4066] sm:$0xff]
        %v4068 = vld [vmem:[%s4066 + $0x8] sm:$0xf]
        %v4069 = vld [vmem:[%s4066 + $0xc] sm:$0xff]
        %v4070 = vld [vmem:[%s4066 + $0x14] sm:$0xf]
        %v4071 = vld [vmem:[%s4066 + $0x18] sm:$0xff]
        %v4072 = vld [vmem:[%s4066 + $0x20] sm:$0xf]
        %v4073 = vld [vmem:[%s4066 + $0x24] sm:$0xff]
        %v4074 = vld [vmem:[%s4066 + $0x2c] sm:$0xf]
        %v4075 = vld [vmem:[%s4066 + $0x30] sm:$0xff]
        %v4076 = vld [vmem:[%s4066 + $0x38] sm:$0xf]
        %v4077 = vld [vmem:[%s4066 + $0x3c] sm:$0xff]
        %v4078 = vld [vmem:[%s4066 + $0x44] sm:$0xf]
        %v4079 = vld [vmem:[%s4066 + $0x48] sm:$0xff]
        %v4080 = vld [vmem:[%s4066 + $0x50] sm:$0xf]
        %v4081 = vld [vmem:[%s4066 + $0x54] sm:$0xff]
        %v4082 = vld [vmem:[%s4066 + $0x5c] sm:$0xf]
        %v4083 = vld [vmem:[%s4066 + $0x60] sm:$0xff]
        %v4084 = vld [vmem:[%s4066 + $0x68] sm:$0xf]
        %v4085 = vld [vmem:[%s4066 + $0x6c] sm:$0xff]
        %v4086 = vld [vmem:[%s4066 + $0x74] sm:$0xf]
        %v4087 = vld [vmem:[%s4066 + $0x78] sm:$0xff]
        %v4088 = vld [vmem:[%s4066 + $0x80] sm:$0xf]
        %v4089 = vld [vmem:[%s4066 + $0x84] sm:$0xff]
        %v4090 = vld [vmem:[%s4066 + $0x8c] sm:$0xf]
        %v4091 = vld [vmem:[%s4066 + $0x90] sm:$0xff]
        %v4092 = vld [vmem:[%s4066 + $0x98] sm:$0xf]
        %v4093 = vld [vmem:[%s4066 + $0x9c] sm:$0xff]
        %v4094 = vld [vmem:[%s4066 + $0xa4] sm:$0xf]
        %v4095 = vld [vmem:[%s4066 + $0xa8] sm:$0xff]
        %v4096 = vld [vmem:[%s4066 + $0xb0] sm:$0xf]
        %v4097 = vld [vmem:[%s4066 + $0xb4] sm:$0xff]
        %v4098 = vld [vmem:[%s4066 + $0xbc] sm:$0xf]
        %v4099 = vld [vmem:[%s12 + $0x1] sm:$0x1]
        %v4132 = vunpack.c.l.b16 %v4067
        %v4133 = vunpack.c.h.b16 %v4067
        %v4134 = vunpack.c.l.b16 %v4068
        %v4135 = vunpack.c.l.b16 %v4069
        %v4136 = vunpack.c.h.b16 %v4069
        %v4137 = vunpack.c.l.b16 %v4070
        %v4138 = vunpack.c.l.b16 %v4071
        %v4139 = vunpack.c.h.b16 %v4071
        %v4140 = vunpack.c.l.b16 %v4072
        %v4141 = vunpack.c.l.b16 %v4073
        %v4142 = vunpack.c.h.b16 %v4073
        %v4143 = vunpack.c.l.b16 %v4074
        %v4144 = vunpack.c.l.b16 %v4075
        %v4145 = vunpack.c.h.b16 %v4075
        %v4146 = vunpack.c.l.b16 %v4076
        %v4147 = vunpack.c.l.b16 %v4077
        %v4148 = vunpack.c.h.b16 %v4077
        %v4149 = vunpack.c.l.b16 %v4078
        %v4150 = vunpack.c.l.b16 %v4079
        %v4151 = vunpack.c.h.b16 %v4079
        %v4152 = vunpack.c.l.b16 %v4080
        %v4153 = vunpack.c.l.b16 %v4081
        %v4154 = vunpack.c.h.b16 %v4081
        %v4155 = vunpack.c.l.b16 %v4082
        %v4156 = vunpack.c.l.b16 %v4083
        %v4157 = vunpack.c.h.b16 %v4083
        %v4158 = vunpack.c.l.b16 %v4084
        %v4159 = vunpack.c.l.b16 %v4085
        %v4160 = vunpack.c.h.b16 %v4085
        %v4161 = vunpack.c.l.b16 %v4086
        %v4162 = vunpack.c.l.b16 %v4087
        %v4163 = vunpack.c.h.b16 %v4087
        %v4164 = vunpack.c.l.b16 %v4088
        %v4165 = vunpack.c.l.b16 %v4089
        %v4166 = vunpack.c.h.b16 %v4089
        %v4167 = vunpack.c.l.b16 %v4090
        %v4168 = vunpack.c.l.b16 %v4091
        %v4169 = vunpack.c.h.b16 %v4091
        %v4170 = vunpack.c.l.b16 %v4092
        %v4171 = vunpack.c.l.b16 %v4093
        %v4172 = vunpack.c.h.b16 %v4093
        %v4173 = vunpack.c.l.b16 %v4094
        %v4174 = vunpack.c.l.b16 %v4095
        %v4175 = vunpack.c.h.b16 %v4095
        %v4176 = vunpack.c.l.b16 %v4096
        %v4177 = vunpack.c.l.b16 %v4097
        %v4178 = vunpack.c.h.b16 %v4097
        %v4179 = vunpack.c.l.b16 %v4098
        %v4180 = vpack.c.b16 %v4135, %v4132
        %v4181 = vpack.c.b16 %v4136, %v4133
        %v4182 = vpack.c.b16 %v4137, %v4134
        %v4183 = vpack.c.b16 %v4141, %v4138
        %v4184 = vpack.c.b16 %v4142, %v4139
        %v4185 = vpack.c.b16 %v4143, %v4140
        %v4186 = vpack.c.b16 %v4147, %v4144
        %v4187 = vpack.c.b16 %v4148, %v4145
        %v4188 = vpack.c.b16 %v4149, %v4146
        %v4189 = vpack.c.b16 %v4153, %v4150
        %v4190 = vpack.c.b16 %v4154, %v4151
        %v4191 = vpack.c.b16 %v4155, %v4152
        %v4192 = vpack.c.b16 %v4159, %v4156
        %v4193 = vpack.c.b16 %v4160, %v4157
        %v4194 = vpack.c.b16 %v4161, %v4158
        %v4195 = vpack.c.b16 %v4165, %v4162
        %v4196 = vpack.c.b16 %v4166, %v4163
        %v4197 = vpack.c.b16 %v4167, %v4164
        %v4198 = vpack.c.b16 %v4171, %v4168
        %v4199 = vpack.c.b16 %v4172, %v4169
        %v4200 = vpack.c.b16 %v4173, %v4170
        %v4201 = vpack.c.b16 %v4177, %v4174
        %v4202 = vpack.c.b16 %v4178, %v4175
        %v4203 = vpack.c.b16 %v4179, %v4176
        %4228 = vmatpush.bf16.msra.mxu0 %v4201
        %4229 = vmatpush.bf16.msra.mxu0 %v4198
        %4230 = vmatpush.bf16.msra.mxu0 %v4195
        %4231 = vmatpush.bf16.msra.mxu0 %v4192
        %4232 = vmatpush.bf16.msra.mxu0 %v4189
        %4233 = vmatpush.bf16.msra.mxu0 %v4186
        %4234 = vmatpush.bf16.msra.mxu0 %v4183
        %4235 = vmatpush.bf16.msra.mxu0 %v4180
        %4236 = vmatmul.bf16.gmra.mxu0 %v4065
        %v4237 = vpop.f32.mrf.mxu0
        %v4238 = vadd.f32 0.0, %v4237
        %v4239 = vpop.f32.mrf.mxu0
        %4240 = vdwg.mxu0
        %4241 = vmatpush.bf16.msra.mxu0 %v4202
        %4242 = vmatpush.bf16.msra.mxu0 %v4199
        %4243 = vmatpush.bf16.msra.mxu0 %v4196
        %4244 = vmatpush.bf16.msra.mxu0 %v4193
        %4245 = vmatpush.bf16.msra.mxu0 %v4190
        %4246 = vmatpush.bf16.msra.mxu0 %v4187
        %4247 = vmatpush.bf16.msra.mxu0 %v4184
        %4248 = vmatpush.bf16.msra.mxu0 %v4181
        %4249 = vmatmul.bf16.gmra.mxu0 %v4065
        %v4250 = vpop.f32.mrf.mxu0
        %v4251 = vadd.f32 0.0, %v4250
        %v4252 = vpop.f32.mrf.mxu0
        %4253 = vdwg.mxu0
        %4254 = vmatpush.bf16.msra.mxu0 %v4203
        %4255 = vmatpush.bf16.msra.mxu0 %v4200
        %4256 = vmatpush.bf16.msra.mxu0 %v4197
        %4257 = vmatpush.bf16.msra.mxu0 %v4194
        %4258 = vmatpush.bf16.msra.mxu0 %v4191
        %4259 = vmatpush.bf16.msra.mxu0 %v4188
        %4260 = vmatpush.bf16.msra.mxu0 %v4185
        %4261 = vmatpush.bf16.msra.mxu0 %v4182
        %4262 = vmatmul.bf16.gmra.mxu0 %v4065
        %v4263 = vpop.f32.mrf.mxu0
        %v4264 = vadd.f32 0.0, %v4263
        %v4265 = vpop.f32.mrf.mxu0
        %4266 = vdwg.mxu0
        %v4267 = vrot.slane %v4238, 7
        %v4268 = vsel %vm2289, %v4267, 0.0
        %v4269 = vrot.slane %v4264, 1
        %v4270 = vsel %vm2293, %v4269, 0.0
        %v4271 = vadd.f32 %v4268, %v4251
        %v4272 = vadd.f32 %v4271, %v4270
        %v4273 = vperm.slane %v4099, 0
        %v4274 = vadd.f32 %v4272, %v4273
        %v4275 = vmul.f32 %v4274, 0.5
        %v4276 = vmul.f32 %v4274, 0.044715
        %v4277 = vmul.f32 %v4276, %v4274
        %v4278 = vmul.f32 %v4277, %v4274
        %v4279 = vadd.f32 %v4274, %v4278
        %v4280 = vmul.f32 %v4279, 0.7978846
        %v4281 = vtanh.pop %v4280
        %v4282 = vadd.f32 %v4281, 1.0
        %v4283 = vmul.f32 %v4275, %v4282
        %v4284 = vadd.f32 %v4283, %v3817
        %v4285 = vpack.c.bf16 %v2526, %v2526
        %v4286 = vld [vmem:[#allocation16] sm:$0xf]
        %v4287 = vld [vmem:[#allocation16 + $0x4] sm:$0xf]
        %v4288 = vld [vmem:[#allocation16 + $0x8] sm:$0xf]
        %v4289 = vld [vmem:[#allocation16 + $0xc] sm:$0xf]
        %v4290 = vld [vmem:[#allocation16 + $0x10] sm:$0xf]
        %v4291 = vld [vmem:[#allocation16 + $0x14] sm:$0xf]
        %v4292 = vld [vmem:[#allocation16 + $0x18] sm:$0xf]
        %v4293 = vld [vmem:[#allocation16 + $0x1c] sm:$0xf]
        %v4294 = vld [vmem:[#allocation16 + $0x20] sm:$0xf]
        %v4295 = vld [vmem:[#allocation16 + $0x24] sm:$0xf]
        %v4296 = vld [vmem:[#allocation16 + $0x28] sm:$0xf]
        %v4297 = vld [vmem:[#allocation16 + $0x2c] sm:$0xf]
        %v4298 = vld [vmem:[#allocation16 + $0x30] sm:$0xf]
        %v4299 = vld [vmem:[#allocation16 + $0x34] sm:$0xf]
        %v4300 = vld [vmem:[#allocation16 + $0x38] sm:$0xf]
        %v4301 = vld [vmem:[#allocation16 + $0x3c] sm:$0xf]
        %v4302 = vpack.c.bf16 %v4284, %v4284
        %v4303 = vld [vmem:[#allocation17] sm:$0xf]
        %v4304 = vld [vmem:[#allocation17 + $0x4] sm:$0xf]
        %v4305 = vld [vmem:[#allocation17 + $0x8] sm:$0xf]
        %v4306 = vld [vmem:[#allocation17 + $0xc] sm:$0xf]
        %v4307 = vld [vmem:[#allocation17 + $0x10] sm:$0xf]
        %v4308 = vld [vmem:[#allocation17 + $0x14] sm:$0xf]
        %v4309 = vld [vmem:[#allocation17 + $0x18] sm:$0xf]
        %v4310 = vld [vmem:[#allocation17 + $0x1c] sm:$0xf]
        %v4311 = vld [vmem:[#allocation17 + $0x20] sm:$0xf]
        %v4312 = vld [vmem:[#allocation17 + $0x24] sm:$0xf]
        %v4313 = vld [vmem:[#allocation17 + $0x28] sm:$0xf]
        %v4314 = vld [vmem:[#allocation17 + $0x2c] sm:$0xf]
        %v4315 = vld [vmem:[#allocation17 + $0x30] sm:$0xf]
        %v4316 = vld [vmem:[#allocation17 + $0x34] sm:$0xf]
        %v4317 = vld [vmem:[#allocation17 + $0x38] sm:$0xf]
        %v4318 = vld [vmem:[#allocation17 + $0x3c] sm:$0xf]
        %v4335 = vunpack.c.l.b16 %v4303
        %v4336 = vunpack.c.l.b16 %v4304
        %v4337 = vunpack.c.l.b16 %v4305
        %v4338 = vunpack.c.l.b16 %v4306
        %v4339 = vunpack.c.l.b16 %v4307
        %v4340 = vunpack.c.l.b16 %v4308
        %v4341 = vunpack.c.l.b16 %v4309
        %v4342 = vunpack.c.l.b16 %v4310
        %v4343 = vunpack.c.l.b16 %v4311
        %v4344 = vunpack.c.l.b16 %v4312
        %v4345 = vunpack.c.l.b16 %v4313
        %v4346 = vunpack.c.l.b16 %v4314
        %v4347 = vunpack.c.l.b16 %v4315
        %v4348 = vunpack.c.l.b16 %v4316
        %v4349 = vunpack.c.l.b16 %v4317
        %v4350 = vunpack.c.l.b16 %v4318
        %v4351 = vpack.c.b16 %v4336, %v4335
        %v4352 = vpack.c.b16 %v4338, %v4337
        %v4353 = vpack.c.b16 %v4340, %v4339
        %v4354 = vpack.c.b16 %v4342, %v4341
        %v4355 = vpack.c.b16 %v4344, %v4343
        %v4356 = vpack.c.b16 %v4346, %v4345
        %v4357 = vpack.c.b16 %v4348, %v4347
        %v4358 = vpack.c.b16 %v4350, %v4349
        %4367 = vmatpush.bf16.msra.mxu0 %v4358
        %4368 = vmatpush.bf16.msra.mxu0 %v4357
        %4369 = vmatpush.bf16.msra.mxu0 %v4356
        %4370 = vmatpush.bf16.msra.mxu0 %v4355
        %4371 = vmatpush.bf16.msra.mxu0 %v4354
        %4372 = vmatpush.bf16.msra.mxu0 %v4353
        %4373 = vmatpush.bf16.msra.mxu0 %v4352
        %4374 = vmatpush.bf16.msra.mxu0 %v4351
        %4375 = vmatmul.bf16.gmra.mxu0 %v4302
        %v4376 = vpop.f32.mrf.mxu0
        %v4377 = vadd.f32 0.0, %v4376
        %v4378 = vpop.f32.mrf.mxu0
        %4379 = vdwg.mxu0
        %v4396 = vunpack.c.l.b16 %v4286
        %v4397 = vunpack.c.l.b16 %v4287
        %v4398 = vunpack.c.l.b16 %v4288
        %v4399 = vunpack.c.l.b16 %v4289
        %v4400 = vunpack.c.l.b16 %v4290
        %v4401 = vunpack.c.l.b16 %v4291
        %v4402 = vunpack.c.l.b16 %v4292
        %v4403 = vunpack.c.l.b16 %v4293
        %v4404 = vunpack.c.l.b16 %v4294
        %v4405 = vunpack.c.l.b16 %v4295
        %v4406 = vunpack.c.l.b16 %v4296
        %v4407 = vunpack.c.l.b16 %v4297
        %v4408 = vunpack.c.l.b16 %v4298
        %v4409 = vunpack.c.l.b16 %v4299
        %v4410 = vunpack.c.l.b16 %v4300
        %v4411 = vunpack.c.l.b16 %v4301
        %v4412 = vpack.c.b16 %v4397, %v4396
        %v4413 = vpack.c.b16 %v4399, %v4398
        %v4414 = vpack.c.b16 %v4401, %v4400
        %v4415 = vpack.c.b16 %v4403, %v4402
        %v4416 = vpack.c.b16 %v4405, %v4404
        %v4417 = vpack.c.b16 %v4407, %v4406
        %v4418 = vpack.c.b16 %v4409, %v4408
        %v4419 = vpack.c.b16 %v4411, %v4410
        %4428 = vmatpush.bf16.msra.mxu0 %v4419
        %4429 = vmatpush.bf16.msra.mxu0 %v4418
        %4430 = vmatpush.bf16.msra.mxu0 %v4417
        %4431 = vmatpush.bf16.msra.mxu0 %v4416
        %4432 = vmatpush.bf16.msra.mxu0 %v4415
        %4433 = vmatpush.bf16.msra.mxu0 %v4414
        %4434 = vmatpush.bf16.msra.mxu0 %v4413
        %4435 = vmatpush.bf16.msra.mxu0 %v4412
        %4436 = vmatmul.bf16.gmra.mxu0 %v4285
        %v4437 = vpop.f32.mrf.mxu0
        %v4438 = vadd.f32 %v4377, %v4437
        %v4439 = vpop.f32.mrf.mxu0
        %4440 = vdwg.mxu0
        %v4441 = vld [vmem:[%s15] sm:$0x1]
        %v4443 = vperm.slane %v4441, 0
        %v4445 = vadd.f32 %v4438, %v4443
        %v4446 = vld [vmem:[%s16] sm:$0x1]
        %v4447 = vld [vmem:[%s17] sm:$0x1]
        %4448 = vadd.xlane.f32.xlu0 %v4445
        %v4449 = vpop.xlane.xlu0 %4448
        %v4450 = vmul.f32 %v4449, 0.03125
        %v4451 = vmul.f32 %v4445, %v4445
        %4452 = vadd.xlane.f32.xlu0 %v4451
        %v4453 = vpop.xlane.xlu0 %4452
        %v4454 = vmul.f32 %v4453, 0.03125
        %v4455 = vmul.f32 %v4450, %v4450
        %v4456 = vsub.f32 %v4454, %v4455
        %v4457 = vsub.f32 %v4445, %v4450
        %v4458 = vadd.f32 %v4456, 1e-05
        %v4459 = vrsqrt.pop %v4458
        %v4460 = vmul.f32 %v4459, %v4458
        %v4461 = vmul.f32 %v4460, %v4459
        %v4462 = vmul.f32 0.5, %v4461
        %v4463 = vsub.f32 1.5, %v4462
        %v4464 = vmul.f32 %v4459, %v4463
        %vm4465 = vweird.f32 %v4458
        %vm4466 = vweird.f32 %v4459
        %vm4467 = vmor %vm4465, %vm4466
        %v4468 = vsel %vm4467, %v4459, %v4464
        %v4469 = vmul.f32 %v4457, %v4468
        %v4471 = vperm.slane %v4446, 0
        %v4473 = vmul.f32 %v4469, %v4471
        %v4475 = vperm.slane %v4447, 0
        %v4477 = vadd.f32 %v4473, %v4475
        %4478 = vst [vmem:[%s737] sm:$0xff] %v4477
        %s4479 = sand.u32 %s431, 1
        %s4480 = scalar_lea.sflag [#allocation4], %s4479
        %s4481 = sand.u32 %s431, 1
        %s4482 = smul.addr %s4481, 8
        %s4483 = scalar_lea.vmem [#allocation19], %s4482
        // Predicated region
        $region133: #{tpu_custom_call.1} parent=91 // pred_check
          %p4484 = pneg %p441
        $region134: #{tpu_custom_call.1} parent=91 // pred_check_branch
          %4486 = sbr.rel (%p4484) target = $region136
        $region135: #{tpu_custom_call.1} parent=91 // pred_region
          %4488 = vsyncadd %s4480, 0
          %s4489 = smul.addr %s40, 8
          %s4490 = scalar_lea.hbm %s18, %s4489
          %s4492 = sshll.u32 %s4483, 4
          %s4493 = int_to_ptr.vmem [resolvable:$true] %s4492
          %s4494 = sshll.u32 %s4490, 4
          %s4495 = int_to_ptr.hbm [resolvable:$true] %s4494
          %4497 = dma.vmem_to_hbm [thread:$0]  %s4493, 128, %s4495, %s4480
        $region136: #{tpu_custom_call.1} parent=91 // pred_fallthru
          _
      $region92: #{tpu_custom_call.1} parent=5 // pred_fallthru
        _
      %p4498 = scmp.le.s32.totalorder 2, %s35
      // Predicated region
      $region137: #{tpu_custom_call.1} parent=5 // pred_check
        %p4499 = pneg %p4498
      $region138: #{tpu_custom_call.1} parent=5 // pred_check_branch
        %4501 = sbr.rel (%p4499) target = $region140
      $region139: #{tpu_custom_call.1} parent=5 // pred_region
        %s4502 = ssub.s32 %s35, 2
        // Predicated region
        $region141: #{tpu_custom_call.1} parent=139 // pred_check
          %p4503 = pneg %p447
        $region142: #{tpu_custom_call.1} parent=139 // pred_check_branch
          %4505 = sbr.rel (%p4503) target = $region144
        $region143: #{tpu_custom_call.1} parent=139 // pred_region
          %s4506 = sand.u32 %s432, 1
          %s4507 = scalar_lea.sflag [#allocation4], %s4506
          %s4508 = sand.u32 %s432, 1
          %s4509 = smul.addr %s4508, 8
          %s4510 = scalar_lea.vmem [#allocation19], %s4509
          %4512 = dma.done %s4507, 128
        $region144: #{tpu_custom_call.1} parent=139 // pred_fallthru
          _
      $region140: #{tpu_custom_call.1} parent=5 // pred_fallthru
        _
    $region6: #{tpu_custom_call.1} parent=1 // loop_footer
      %s39 = sadd.s32 1, %s35
    $region7: #{tpu_custom_call.1} parent=1 // loop_footer_branch
      %34 = sbr.rel target = $region3
    $region8: #{tpu_custom_call.1} parent=1 // loop_exit
      _
    %4513 = vsyncpa [#allocation3], 1
    %s4514 = scalar_lea.sflag [#allocation3], 1
    %4515 = vsyncpa %s4514, 1
    %4516 = vsyncpa [#allocation6], 1
    %4517 = vsyncpa [#allocation9], 1
    %4518 = vsyncpa [#allocation12], 1
    %4519 = vsyncpa [#allocation15], 1
    %4520 = vsyncpa [#allocation18], 1
    %4521 = vsyncpa [#allocation4], 1
    %s4522 = scalar_lea.sflag [#allocation4], 1
    %4523 = vsyncpa %s4522, 1

// kernel: tpu_custom_call.1
$region0: #{tpu_custom_call.1}
  #allocation0 [shape = 'u32[]', space=smem, size = 0x4, offset = 0x4, fixed_abs, tag = 'smem constant byte address 0x4 - core index']
  #allocation1 [shape = 'u32[72,128]{1,0:T(1,128)}', space=vmem, size = 0x9000, scoped, tag = 'internal scratch']
  %s0 = inlined_call_operand.hbm [shape: f32[16,128], index: 0, kind: input, shape index: {}]
  %s1 = inlined_call_operand.hbm [shape: f32[2,128], index: 1, kind: input, shape index: {}]
  %s2 = inlined_call_operand.hbm [shape: f32[2,128], index: 2, kind: input, shape index: {}]
  %s3 = inlined_call_operand.hbm [shape: bf16[2,128,1536], index: 3, kind: input, shape index: {}]
  %s4 = inlined_call_operand.hbm [shape: f32[2,1,1536], index: 4, kind: input, shape index: {}]
  %s5 = inlined_call_operand.hbm [shape: bf16[2,512,128], index: 5, kind: input, shape index: {}]
  %s6 = inlined_call_operand.vmem [shape: f32[2,128], index: 6, kind: input, shape index: {}]
  %s7 = inlined_call_operand.vmem [shape: f32[2,128], index: 7, kind: input, shape index: {}]
  %s8 = inlined_call_operand.vmem [shape: f32[2,128], index: 8, kind: input, shape index: {}]
  %s9 = inlined_call_operand.hbm [shape: bf16[2,128,384], index: 9, kind: input, shape index: {}]
  %s10 = inlined_call_operand.vmem [shape: f32[2,128], index: 10, kind: input, shape index: {}]
  %s11 = inlined_call_operand.hbm [shape: bf16[2,128,384], index: 11, kind: input, shape index: {}]
  %s12 = inlined_call_operand.vmem [shape: f32[2,128], index: 12, kind: input, shape index: {}]
  %s13 = inlined_call_operand.hbm [shape: bf16[128,128], index: 13, kind: input, shape index: {}]
  %s14 = inlined_call_operand.hbm [shape: bf16[128,128], index: 14, kind: input, shape index: {}]
  %s15 = inlined_call_operand.vmem [shape: f32[1,128], index: 15, kind: input, shape index: {}]
  %s16 = inlined_call_operand.vmem [shape: f32[1,128], index: 16, kind: input, shape index: {}]
  %s17 = inlined_call_operand.vmem [shape: f32[1,128], index: 17, kind: input, shape index: {}]
  %s18 = inlined_call_operand.hbm [shape: f32[16,128], index: 18, kind: output, shape index: {}]
  %s19 = sld [smem:[#allocation0]]
  $region145: #{tpu_custom_call.1} parent=0
    _
  %s21 = ssub.s32 1, %s19
  %s22 = scalar_select 0, %s21, %s19
  $region1: #{tpu_custom_call.1} parent=0
    #allocation2 [shape = 'u8[8192]{0}', space=vmem, size = 0x2000, scoped, tag = 'input window, operand 0']
    #allocation3 [shape = 's32[2]{0}', space=sflag, size = 0x8, scoped, tag = 'scoped memory for tpu_custom_call.1']
    #allocation4 [shape = 's32[2]{0}', space=sflag, size = 0x8, scoped, tag = 'scoped memory for tpu_custom_call.1']
    #allocation5 [shape = 'u8[1024]{0}', space=vmem, size = 0x400, scoped, tag = 'input window, operand 1, single buffered']
    #allocation6 [shape = 's32[1]{0}', space=sflag, size = 0x4, scoped, tag = 'scoped memory for tpu_custom_call.1']
    #allocation7 [shape = 'u8[1024]{0}', space=vmem, size = 0x400, scoped, tag = 'input window, operand 2, single buffered']
    #allocation8 [shape = 'u8[786432]{0}', space=vmem, size = 0xc0000, scoped, tag = 'input window, operand 3, single buffered']
    #allocation9 [shape = 's32[1]{0}', space=sflag, size = 0x4, scoped, tag = 'scoped memory for tpu_custom_call.1']
    #allocation10 [shape = 'u8[12288]{0}', space=vmem, size = 0x3000, scoped, tag = 'input window, operand 4, single buffered']
    #allocation11 [shape = 'u8[262144]{0}', space=vmem, size = 0x40000, scoped, tag = 'input window, operand 5, single buffered']
    #allocation12 [shape = 's32[1]{0}', space=sflag, size = 0x4, scoped, tag = 'scoped memory for tpu_custom_call.1']
    #allocation13 [shape = 'u8[196608]{0}', space=vmem, size = 0x30000, scoped, tag = 'input window, operand 9, single buffered']
    #allocation14 [shape = 'u8[196608]{0}', space=vmem, size = 0x30000, scoped, tag = 'input window, operand 11, single buffered']
    #allocation15 [shape = 's32[1]{0}', space=sflag, size = 0x4, scoped, tag = 'scoped memory for tpu_custom_call.1']
    #allocation16 [shape = 'u8[32768]{0}', space=vmem, size = 0x8000, scoped, tag = 'input window, operand 13, single buffered']
    #allocation17 [shape = 'u8[32768]{0}', space=vmem, size = 0x8000, scoped, tag = 'input window, operand 14, single buffered']
    #allocation18 [shape = 's32[1]{0}', space=sflag, size = 0x4, scoped, tag = 'scoped memory for tpu_custom_call.1']
    #allocation19 [shape = 'u8[8192]{0}', space=vmem, size = 0x2000, scoped, tag = 'output window, operand 0']
    %23 = vsyncpa [#allocation3], 0
    %s24 = scalar_lea.sflag [#allocation3], 1
    %25 = vsyncpa %s24, 0
    %26 = vsyncpa [#allocation6], 0
    %27 = vsyncpa [#allocation9], 0
    %28 = vsyncpa [#allocation12], 0
    %29 = vsyncpa [#allocation15], 0
    %30 = vsyncpa [#allocation18], 0
    %31 = vsyncpa [#allocation4], 0
    %s32 = scalar_lea.sflag [#allocation4], 1
    %33 = vsyncpa %s32, 0
    loop: start=0, step=1, limit=4
    $region2: #{tpu_custom_call.1} parent=1 // loop_pre_header
      _
    $region3: #{tpu_custom_call.1} parent=1 // loop_header
      %s35 = sphi 0, %s39
      %p36 = scmp.ge.s32.totalorder %s35, 4
      %s45 = sphi 0, %s47
      %s48 = sphi 0, %s45
      %s49 = sphi 0, %s48
      %s65 = sphi 0, %s49
      %s69 = sphi 0, %s69
      %s71 = sphi 0, %s69
      %s72 = sphi 0, %s71
      %s86 = sphi 0, %s72
      %s90 = sphi 0, %s90
      %s92 = sphi 0, %s90
      %s93 = sphi 0, %s92
      %s107 = sphi 0, %s93
      %s111 = sphi 0, %s111
      %s113 = sphi 0, %s111
      %s114 = sphi 0, %s113
      %s128 = sphi 0, %s114
      %s132 = sphi 0, %s132
      %s134 = sphi 0, %s132
      %s135 = sphi 0, %s134
      %s149 = sphi 0, %s135
      %s153 = sphi 0, %s153
      %s155 = sphi 0, %s153
      %s156 = sphi 0, %s155
      %s170 = sphi 0, %s156
      %s174 = sphi 0, %s174
      %s176 = sphi 0, %s174
      %s177 = sphi 0, %s176
      %s191 = sphi 0, %s177
      %s195 = sphi 0, %s195
      %s197 = sphi 0, %s195
      %s198 = sphi 0, %s197
      %s212 = sphi 0, %s198
      %s216 = sphi 0, %s216
      %s218 = sphi 0, %s216
      %s219 = sphi 0, %s218
      %s233 = sphi 0, %s219
      %s237 = sphi 0, %s237
      %s239 = sphi 0, %s237
      %s240 = sphi 0, %s239
      %s254 = sphi 0, %s240
      %s258 = sphi 0, %s258
      %s260 = sphi 0, %s258
      %s261 = sphi 0, %s260
      %s275 = sphi 0, %s261
      %s279 = sphi 0, %s279
      %s281 = sphi 0, %s279
      %s282 = sphi 0, %s281
      %s296 = sphi 0, %s282
      %s300 = sphi 0, %s300
      %s302 = sphi 0, %s300
      %s303 = sphi 0, %s302
      %s317 = sphi 0, %s303
      %s321 = sphi 0, %s321
      %s323 = sphi 0, %s321
      %s324 = sphi 0, %s323
      %s338 = sphi 0, %s324
      %s342 = sphi 0, %s342
      %s344 = sphi 0, %s342
      %s345 = sphi 0, %s344
      %s359 = sphi 0, %s345
      %s363 = sphi 0, %s363
      %s365 = sphi 0, %s363
      %s366 = sphi 0, %s365
      %s380 = sphi 0, %s366
      %s384 = sphi 0, %s384
      %s386 = sphi 0, %s384
      %s387 = sphi 0, %s386
      %s401 = sphi 0, %s387
      %s405 = sphi 0, %s405
      %s407 = sphi 0, %s405
      %s408 = sphi 0, %s407
      %s422 = sphi 0, %s408
      %s428 = sphi 0, %s430
      %s431 = sphi 0, %s428
      %s432 = sphi 0, %s431
      %s448 = sphi 0, %s432
    $region4: #{tpu_custom_call.1} parent=1 // loop_header_branch
      %38 = sbr.rel (%p36) target = $region8
    $region5: #{tpu_custom_call.1} parent=1 // loop_body
      %s40 = ssub.s32 %s35, 1
      %s41 = ssub.s32 %s35, 2
      %s42 = sadd.s32 %s35, 1
      %s43 = ssub.s32 %s35, %s42
      %p44 = scmp.eq.s32.totalorder %s43, 0
      %s46 = sadd.s32 %s45, 1
      %s47 = scalar_select %p44, %s45, %s46
      %p50 = pneg %p44
      %p51 = scmp.eq.s32.totalorder %s35, 1
      %p52 = por %p50, %p51
      %p53 = scmp.ne.s32.totalorder %s45, %s48
      %p54 = scmp.eq.s32.totalorder %s35, 0
      %p55 = por %p53, %p54
      %p56 = scmp.ne.s32.totalorder %s45, %s48
      %p57 = scmp.eq.s32.totalorder %s40, 1
      %p58 = por %p56, %p57
      %p59 = scmp.ne.s32.totalorder %s48, %s49
      %p60 = scmp.eq.s32.totalorder %s40, 0
      %p61 = por %p59, %p60
      %p62 = scmp.ne.s32.totalorder %s48, %s49
      %p63 = scmp.eq.s32.totalorder %s41, 1
      %p64 = por %p62, %p63
      %p66 = scmp.ne.s32.totalorder %s49, %s65
      %p67 = scmp.eq.s32.totalorder %s41, 0
      %p68 = por %p66, %p67
      %s70 = sadd.s32 %s69, 1
      %p73 = scmp.eq.s32.totalorder %s35, 1
      %p74 = scmp.ne.s32.totalorder %s69, %s71
      %p75 = scmp.eq.s32.totalorder %s35, 0
      %p76 = por %p74, %p75
      %p77 = scmp.ne.s32.totalorder %s69, %s71
      %p78 = scmp.eq.s32.totalorder %s40, 1
      %p79 = por %p77, %p78
      %p80 = scmp.ne.s32.totalorder %s71, %s72
      %p81 = scmp.eq.s32.totalorder %s40, 0
      %p82 = por %p80, %p81
      %p83 = scmp.ne.s32.totalorder %s71, %s72
      %p84 = scmp.eq.s32.totalorder %s41, 1
      %p85 = por %p83, %p84
      %p87 = scmp.ne.s32.totalorder %s72, %s86
      %p88 = scmp.eq.s32.totalorder %s41, 0
      %p89 = por %p87, %p88
      %s91 = sadd.s32 %s90, 1
      %p94 = scmp.eq.s32.totalorder %s35, 1
      %p95 = scmp.ne.s32.totalorder %s90, %s92
      %p96 = scmp.eq.s32.totalorder %s35, 0
      %p97 = por %p95, %p96
      %p98 = scmp.ne.s32.totalorder %s90, %s92
      %p99 = scmp.eq.s32.totalorder %s40, 1
      %p100 = por %p98, %p99
      %p101 = scmp.ne.s32.totalorder %s92, %s93
      %p102 = scmp.eq.s32.totalorder %s40, 0
      %p103 = por %p101, %p102
      %p104 = scmp.ne.s32.totalorder %s92, %s93
      %p105 = scmp.eq.s32.totalorder %s41, 1
      %p106 = por %p104, %p105
      %p108 = scmp.ne.s32.totalorder %s93, %s107
      %p109 = scmp.eq.s32.totalorder %s41, 0
      %p110 = por %p108, %p109
      %s112 = sadd.s32 %s111, 1
      %p115 = scmp.eq.s32.totalorder %s35, 1
      %p116 = scmp.ne.s32.totalorder %s111, %s113
      %p117 = scmp.eq.s32.totalorder %s35, 0
      %p118 = por %p116, %p117
      %p119 = scmp.ne.s32.totalorder %s111, %s113
      %p120 = scmp.eq.s32.totalorder %s40, 1
      %p121 = por %p119, %p120
      %p122 = scmp.ne.s32.totalorder %s113, %s114
      %p123 = scmp.eq.s32.totalorder %s40, 0
      %p124 = por %p122, %p123
      %p125 = scmp.ne.s32.totalorder %s113, %s114
      %p126 = scmp.eq.s32.totalorder %s41, 1
      %p127 = por %p125, %p126
      %p129 = scmp.ne.s32.totalorder %s114, %s128
      %p130 = scmp.eq.s32.totalorder %s41, 0
      %p131 = por %p129, %p130
      %s133 = sadd.s32 %s132, 1
      %p136 = scmp.eq.s32.totalorder %s35, 1
      %p137 = scmp.ne.s32.totalorder %s132, %s134
      %p138 = scmp.eq.s32.totalorder %s35, 0
      %p139 = por %p137, %p138
      %p140 = scmp.ne.s32.totalorder %s132, %s134
      %p141 = scmp.eq.s32.totalorder %s40, 1
      %p142 = por %p140, %p141
      %p143 = scmp.ne.s32.totalorder %s134, %s135
      %p144 = scmp.eq.s32.totalorder %s40, 0
      %p145 = por %p143, %p144
      %p146 = scmp.ne.s32.totalorder %s134, %s135
      %p147 = scmp.eq.s32.totalorder %s41, 1
      %p148 = por %p146, %p147
      %p150 = scmp.ne.s32.totalorder %s135, %s149
      %p151 = scmp.eq.s32.totalorder %s41, 0
      %p152 = por %p150, %p151
      %s154 = sadd.s32 %s153, 1
      %p157 = scmp.eq.s32.totalorder %s35, 1
      %p158 = scmp.ne.s32.totalorder %s153, %s155
      %p159 = scmp.eq.s32.totalorder %s35, 0
      %p160 = por %p158, %p159
      %p161 = scmp.ne.s32.totalorder %s153, %s155
      %p162 = scmp.eq.s32.totalorder %s40, 1
      %p163 = por %p161, %p162
      %p164 = scmp.ne.s32.totalorder %s155, %s156
      %p165 = scmp.eq.s32.totalorder %s40, 0
      %p166 = por %p164, %p165
      %p167 = scmp.ne.s32.totalorder %s155, %s156
      %p168 = scmp.eq.s32.totalorder %s41, 1
      %p169 = por %p167, %p168
      %p171 = scmp.ne.s32.totalorder %s156, %s170
      %p172 = scmp.eq.s32.totalorder %s41, 0
      %p173 = por %p171, %p172
      %s175 = sadd.s32 %s174, 1
      %p178 = scmp.eq.s32.totalorder %s35, 1
      %p179 = scmp.ne.s32.totalorder %s174, %s176
      %p180 = scmp.eq.s32.totalorder %s35, 0
      %p181 = por %p179, %p180
      %p182 = scmp.ne.s32.totalorder %s174, %s176
      %p183 = scmp.eq.s32.totalorder %s40, 1
      %p184 = por %p182, %p183
      %p185 = scmp.ne.s32.totalorder %s176, %s177
      %p186 = scmp.eq.s32.totalorder %s40, 0
      %p187 = por %p185, %p186
      %p188 = scmp.ne.s32.totalorder %s176, %s177
      %p189 = scmp.eq.s32.totalorder %s41, 1
      %p190 = por %p188, %p189
      %p192 = scmp.ne.s32.totalorder %s177, %s191
      %p193 = scmp.eq.s32.totalorder %s41, 0
      %p194 = por %p192, %p193
      %s196 = sadd.s32 %s195, 1
      %p199 = scmp.eq.s32.totalorder %s35, 1
      %p200 = scmp.ne.s32.totalorder %s195, %s197
      %p201 = scmp.eq.s32.totalorder %s35, 0
      %p202 = por %p200, %p201
      %p203 = scmp.ne.s32.totalorder %s195, %s197
      %p204 = scmp.eq.s32.totalorder %s40, 1
      %p205 = por %p203, %p204
      %p206 = scmp.ne.s32.totalorder %s197, %s198
      %p207 = scmp.eq.s32.totalorder %s40, 0
      %p208 = por %p206, %p207
      %p209 = scmp.ne.s32.totalorder %s197, %s198
      %p210 = scmp.eq.s32.totalorder %s41, 1
      %p211 = por %p209, %p210
      %p213 = scmp.ne.s32.totalorder %s198, %s212
      %p214 = scmp.eq.s32.totalorder %s41, 0
      %p215 = por %p213, %p214
      %s217 = sadd.s32 %s216, 1
      %p220 = scmp.eq.s32.totalorder %s35, 1
      %p221 = scmp.ne.s32.totalorder %s216, %s218
      %p222 = scmp.eq.s32.totalorder %s35, 0
      %p223 = por %p221, %p222
      %p224 = scmp.ne.s32.totalorder %s216, %s218
      %p225 = scmp.eq.s32.totalorder %s40, 1
      %p226 = por %p224, %p225
      %p227 = scmp.ne.s32.totalorder %s218, %s219
      %p228 = scmp.eq.s32.totalorder %s40, 0
      %p229 = por %p227, %p228
      %p230 = scmp.ne.s32.totalorder %s218, %s219
      %p231 = scmp.eq.s32.totalorder %s41, 1
      %p232 = por %p230, %p231
      %p234 = scmp.ne.s32.totalorder %s219, %s233
      %p235 = scmp.eq.s32.totalorder %s41, 0
      %p236 = por %p234, %p235
      %s238 = sadd.s32 %s237, 1
      %p241 = scmp.eq.s32.totalorder %s35, 1
      %p242 = scmp.ne.s32.totalorder %s237, %s239
      %p243 = scmp.eq.s32.totalorder %s35, 0
      %p244 = por %p242, %p243
      %p245 = scmp.ne.s32.totalorder %s237, %s239
      %p246 = scmp.eq.s32.totalorder %s40, 1
      %p247 = por %p245, %p246
      %p248 = scmp.ne.s32.totalorder %s239, %s240
      %p249 = scmp.eq.s32.totalorder %s40, 0
      %p250 = por %p248, %p249
      %p251 = scmp.ne.s32.totalorder %s239, %s240
      %p252 = scmp.eq.s32.totalorder %s41, 1
      %p253 = por %p251, %p252
      %p255 = scmp.ne.s32.totalorder %s240, %s254
      %p256 = scmp.eq.s32.totalorder %s41, 0
      %p257 = por %p255, %p256
      %s259 = sadd.s32 %s258, 1
      %p262 = scmp.eq.s32.totalorder %s35, 1
      %p263 = scmp.ne.s32.totalorder %s258, %s260
      %p264 = scmp.eq.s32.totalorder %s35, 0
      %p265 = por %p263, %p264
      %p266 = scmp.ne.s32.totalorder %s258, %s260
      %p267 = scmp.eq.s32.totalorder %s40, 1
      %p268 = por %p266, %p267
      %p269 = scmp.ne.s32.totalorder %s260, %s261
      %p270 = scmp.eq.s32.totalorder %s40, 0
      %p271 = por %p269, %p270
      %p272 = scmp.ne.s32.totalorder %s260, %s261
      %p273 = scmp.eq.s32.totalorder %s41, 1
      %p274 = por %p272, %p273
      %p276 = scmp.ne.s32.totalorder %s261, %s275
      %p277 = scmp.eq.s32.totalorder %s41, 0
      %p278 = por %p276, %p277
      %s280 = sadd.s32 %s279, 1
      %p283 = scmp.eq.s32.totalorder %s35, 1
      %p284 = scmp.ne.s32.totalorder %s279, %s281
      %p285 = scmp.eq.s32.totalorder %s35, 0
      %p286 = por %p284, %p285
      %p287 = scmp.ne.s32.totalorder %s279, %s281
      %p288 = scmp.eq.s32.totalorder %s40, 1
      %p289 = por %p287, %p288
      %p290 = scmp.ne.s32.totalorder %s281, %s282
      %p291 = scmp.eq.s32.totalorder %s40, 0
      %p292 = por %p290, %p291
      %p293 = scmp.ne.s32.totalorder %s281, %s282
      %p294 = scmp.eq.s32.totalorder %s41, 1
      %p295 = por %p293, %p294
      %p297 = scmp.ne.s32.totalorder %s282, %s296
      %p298 = scmp.eq.s32.totalorder %s41, 0
      %p299 = por %p297, %p298
      %s301 = sadd.s32 %s300, 1
      %p304 = scmp.eq.s32.totalorder %s35, 1
      %p305 = scmp.ne.s32.totalorder %s300, %s302
      %p306 = scmp.eq.s32.totalorder %s35, 0
      %p307 = por %p305, %p306
      %p308 = scmp.ne.s32.totalorder %s300, %s302
      %p309 = scmp.eq.s32.totalorder %s40, 1
      %p310 = por %p308, %p309
      %p311 = scmp.ne.s32.totalorder %s302, %s303
      %p312 = scmp.eq.s32.totalorder %s40, 0
      %p313 = por %p311, %p312
      %p314 = scmp.ne.s32.totalorder %s302, %s303
      %p315 = scmp.eq.s32.totalorder %s41, 1
      %p316 = por %p314, %p315
      %p318 = scmp.ne.s32.totalorder %s303, %s317
      %p319 = scmp.eq.s32.totalorder %s41, 0
      %p320 = por %p318, %p319
      %s322 = sadd.s32 %s321, 1
      %p325 = scmp.eq.s32.totalorder %s35, 1
      %p326 = scmp.ne.s32.totalorder %s321, %s323
      %p327 = scmp.eq.s32.totalorder %s35, 0
      %p328 = por %p326, %p327
      %p329 = scmp.ne.s32.totalorder %s321, %s323
      %p330 = scmp.eq.s32.totalorder %s40, 1
      %p331 = por %p329, %p330
      %p332 = scmp.ne.s32.totalorder %s323, %s324
      %p333 = scmp.eq.s32.totalorder %s40, 0
      %p334 = por %p332, %p333
      %p335 = scmp.ne.s32.totalorder %s323, %s324
      %p336 = scmp.eq.s32.totalorder %s41, 1
      %p337 = por %p335, %p336
      %p339 = scmp.ne.s32.totalorder %s324, %s338
      %p340 = scmp.eq.s32.totalorder %s41, 0
      %p341 = por %p339, %p340
      %s343 = sadd.s32 %s342, 1
      %p346 = scmp.eq.s32.totalorder %s35, 1
      %p347 = scmp.ne.s32.totalorder %s342, %s344
      %p348 = scmp.eq.s32.totalorder %s35, 0
      %p349 = por %p347, %p348
      %p350 = scmp.ne.s32.totalorder %s342, %s344
      %p351 = scmp.eq.s32.totalorder %s40, 1
      %p352 = por %p350, %p351
      %p353 = scmp.ne.s32.totalorder %s344, %s345
      %p354 = scmp.eq.s32.totalorder %s40, 0
      %p355 = por %p353, %p354
      %p356 = scmp.ne.s32.totalorder %s344, %s345
      %p357 = scmp.eq.s32.totalorder %s41, 1
      %p358 = por %p356, %p357
      %p360 = scmp.ne.s32.totalorder %s345, %s359
      %p361 = scmp.eq.s32.totalorder %s41, 0
      %p362 = por %p360, %p361
      %s364 = sadd.s32 %s363, 1
      %p367 = scmp.eq.s32.totalorder %s35, 1
      %p368 = scmp.ne.s32.totalorder %s363, %s365
      %p369 = scmp.eq.s32.totalorder %s35, 0
      %p370 = por %p368, %p369
      %p371 = scmp.ne.s32.totalorder %s363, %s365
      %p372 = scmp.eq.s32.totalorder %s40, 1
      %p373 = por %p371, %p372
      %p374 = scmp.ne.s32.totalorder %s365, %s366
      %p375 = scmp.eq.s32.totalorder %s40, 0
      %p376 = por %p374, %p375
      %p377 = scmp.ne.s32.totalorder %s365, %s366
      %p378 = scmp.eq.s32.totalorder %s41, 1
      %p379 = por %p377, %p378
      %p381 = scmp.ne.s32.totalorder %s366, %s380
      %p382 = scmp.eq.s32.totalorder %s41, 0
      %p383 = por %p381, %p382
      %s385 = sadd.s32 %s384, 1
      %p388 = scmp.eq.s32.totalorder %s35, 1
      %p389 = scmp.ne.s32.totalorder %s384, %s386
      %p390 = scmp.eq.s32.totalorder %s35, 0
      %p391 = por %p389, %p390
      %p392 = scmp.ne.s32.totalorder %s384, %s386
      %p393 = scmp.eq.s32.totalorder %s40, 1
      %p394 = por %p392, %p393
      %p395 = scmp.ne.s32.totalorder %s386, %s387
      %p396 = scmp.eq.s32.totalorder %s40, 0
      %p397 = por %p395, %p396
      %p398 = scmp.ne.s32.totalorder %s386, %s387
      %p399 = scmp.eq.s32.totalorder %s41, 1
      %p400 = por %p398, %p399
      %p402 = scmp.ne.s32.totalorder %s387, %s401
      %p403 = scmp.eq.s32.totalorder %s41, 0
      %p404 = por %p402, %p403
      %s406 = sadd.s32 %s405, 1
      %p409 = scmp.eq.s32.totalorder %s35, 1
      %p410 = scmp.ne.s32.totalorder %s405, %s407
      %p411 = scmp.eq.s32.totalorder %s35, 0
      %p412 = por %p410, %p411
      %p413 = scmp.ne.s32.totalorder %s405, %s407
      %p414 = scmp.eq.s32.totalorder %s40, 1
      %p415 = por %p413, %p414
      %p416 = scmp.ne.s32.totalorder %s407, %s408
      %p417 = scmp.eq.s32.totalorder %s40, 0
      %p418 = por %p416, %p417
      %p419 = scmp.ne.s32.totalorder %s407, %s408
      %p420 = scmp.eq.s32.totalorder %s41, 1
      %p421 = por %p419, %p420
      %p423 = scmp.ne.s32.totalorder %s408, %s422
      %p424 = scmp.eq.s32.totalorder %s41, 0
      %p425 = por %p423, %p424
      %s426 = ssub.s32 %s35, %s42
      %p427 = scmp.eq.s32.totalorder %s426, 0
      %s429 = sadd.s32 %s428, 1
      %s430 = scalar_select %p427, %s428, %s429
      %p433 = pneg %p427
      %p434 = scmp.eq.s32.totalorder %s35, 1
      %p435 = por %p433, %p434
      %p436 = scmp.ne.s32.totalorder %s428, %s431
      %p437 = scmp.eq.s32.totalorder %s35, 0
      %p438 = por %p436, %p437
      %p439 = scmp.ne.s32.totalorder %s428, %s431
      %p440 = scmp.eq.s32.totalorder %s40, 1
      %p441 = por %p439, %p440
      %p442 = scmp.ne.s32.totalorder %s431, %s432
      %p443 = scmp.eq.s32.totalorder %s40, 0
      %p444 = por %p442, %p443
      %p445 = scmp.ne.s32.totalorder %s431, %s432
      %p446 = scmp.eq.s32.totalorder %s41, 1
      %p447 = por %p445, %p446
      %p449 = scmp.ne.s32.totalorder %s432, %s448
      %p450 = scmp.eq.s32.totalorder %s41, 0
      %p451 = por %p449, %p450
      %p452 = scmp.le.s32.totalorder 1, %s35
      %p453 = scmp.lt.s32.totalorder %s35, 3
      %p454 = pnand %p452, %p453
      %p455 = pneg %p454
      // Predicated region
      $region9: #{tpu_custom_call.1} parent=5 // pred_check
        _
      $region10: #{tpu_custom_call.1} parent=5 // pred_check_branch
        %457 = sbr.rel (%p454) target = $region12
      $region11: #{tpu_custom_call.1} parent=5 // pred_region
        %s458 = ssub.s32 %s35, 1
        // Predicated region
        $region13: #{tpu_custom_call.1} parent=11 // pred_check
          %p459 = pneg %p82
        $region14: #{tpu_custom_call.1} parent=11 // pred_check_branch
          %461 = sbr.rel (%p459) target = $region16
        $region15: #{tpu_custom_call.1} parent=11 // pred_region
          %463 = vsyncadd [#allocation6], 0
          %s465 = sshll.u32 %s1, 4
          %s466 = int_to_ptr.hbm [resolvable:$true] %s465
          %s467 = sshll.u32 [#allocation5], 4
          %s468 = int_to_ptr.vmem [resolvable:$true] %s467
          %470 = dma.hbm_to_vmem [thread:$0]  %s466, 32, %s468, [#allocation6]
        $region16: #{tpu_custom_call.1} parent=11 // pred_fallthru
          _
        // Predicated region
        $region17: #{tpu_custom_call.1} parent=11 // pred_check
          %p471 = pneg %p103
        $region18: #{tpu_custom_call.1} parent=11 // pred_check_branch
          %473 = sbr.rel (%p471) target = $region20
        $region19: #{tpu_custom_call.1} parent=11 // pred_region
          %475 = vsyncadd [#allocation6], 0
          %s477 = sshll.u32 %s2, 4
          %s478 = int_to_ptr.hbm [resolvable:$true] %s477
          %s479 = sshll.u32 [#allocation7], 4
          %s480 = int_to_ptr.vmem [resolvable:$true] %s479
          %482 = dma.hbm_to_vmem [thread:$0]  %s478, 32, %s480, [#allocation6]
        $region20: #{tpu_custom_call.1} parent=11 // pred_fallthru
          _
        // Predicated region
        $region21: #{tpu_custom_call.1} parent=11 // pred_check
          %p483 = pneg %p124
        $region22: #{tpu_custom_call.1} parent=11 // pred_check_branch
          %485 = sbr.rel (%p483) target = $region24
        $region23: #{tpu_custom_call.1} parent=11 // pred_region
          %487 = vsyncadd [#allocation9], 0
          %s488 = sshll.u32 %s3, 4
          %s489 = int_to_ptr.hbm [resolvable:$true] %s488
          %s490 = sshll.u32 [#allocation8], 4
          %s491 = int_to_ptr.vmem [resolvable:$true] %s490
          %496 = dma.hbm_to_vmem [thread:$0]  %s489, 24576, %s491, [#allocation9], 768, 768, 48
        $region24: #{tpu_custom_call.1} parent=11 // pred_fallthru
          _
        // Predicated region
        $region25: #{tpu_custom_call.1} parent=11 // pred_check
          %p497 = pneg %p145
        $region26: #{tpu_custom_call.1} parent=11 // pred_check_branch
          %499 = sbr.rel (%p497) target = $region28
        $region27: #{tpu_custom_call.1} parent=11 // pred_region
          %501 = vsyncadd [#allocation9], 0
          %s502 = sshll.u32 %s4, 4
          %s503 = int_to_ptr.hbm [resolvable:$true] %s502
          %s504 = sshll.u32 [#allocation10], 4
          %s505 = int_to_ptr.vmem [resolvable:$true] %s504
          %510 = dma.hbm_to_vmem [thread:$0]  %s503, 384, %s505, [#allocation9], 192, 192, 12
        $region28: #{tpu_custom_call.1} parent=11 // pred_fallthru
          _
        // Predicated region
        $region29: #{tpu_custom_call.1} parent=11 // pred_check
          %p511 = pneg %p166
        $region30: #{tpu_custom_call.1} parent=11 // pred_check_branch
          %513 = sbr.rel (%p511) target = $region32
        $region31: #{tpu_custom_call.1} parent=11 // pred_region
          %515 = vsyncadd [#allocation12], 0
          %s516 = sshll.u32 %s5, 4
          %s517 = int_to_ptr.hbm [resolvable:$true] %s516
          %s518 = sshll.u32 [#allocation11], 4
          %s519 = int_to_ptr.vmem [resolvable:$true] %s518
          %524 = dma.hbm_to_vmem [thread:$0]  %s517, 8192, %s519, [#allocation12], 64, 64, 4
        $region32: #{tpu_custom_call.1} parent=11 // pred_fallthru
          _
        // Predicated region
        $region33: #{tpu_custom_call.1} parent=11 // pred_check
          %p525 = pneg %p187
        $region34: #{tpu_custom_call.1} parent=11 // pred_check_branch
          %527 = sbr.rel (%p525) target = $region36
        $region35: #{tpu_custom_call.1} parent=11 // pred_region
          _
        $region36: #{tpu_custom_call.1} parent=11 // pred_fallthru
          _
        // Predicated region
        $region37: #{tpu_custom_call.1} parent=11 // pred_check
          %p528 = pneg %p208
        $region38: #{tpu_custom_call.1} parent=11 // pred_check_branch
          %530 = sbr.rel (%p528) target = $region40
        $region39: #{tpu_custom_call.1} parent=11 // pred_region
          _
        $region40: #{tpu_custom_call.1} parent=11 // pred_fallthru
          _
        // Predicated region
        $region41: #{tpu_custom_call.1} parent=11 // pred_check
          %p531 = pneg %p229
        $region42: #{tpu_custom_call.1} parent=11 // pred_check_branch
          %533 = sbr.rel (%p531) target = $region44
        $region43: #{tpu_custom_call.1} parent=11 // pred_region
          _
        $region44: #{tpu_custom_call.1} parent=11 // pred_fallthru
          _
        // Predicated region
        $region45: #{tpu_custom_call.1} parent=11 // pred_check
          %p534 = pneg %p250
        $region46: #{tpu_custom_call.1} parent=11 // pred_check_branch
          %536 = sbr.rel (%p534) target = $region48
        $region47: #{tpu_custom_call.1} parent=11 // pred_region
          %538 = vsyncadd [#allocation12], 0
          %s539 = sshll.u32 %s9, 4
          %s540 = int_to_ptr.hbm [resolvable:$true] %s539
          %s541 = sshll.u32 [#allocation13], 4
          %s542 = int_to_ptr.vmem [resolvable:$true] %s541
          %547 = dma.hbm_to_vmem [thread:$0]  %s540, 6144, %s542, [#allocation12], 192, 192, 12
        $region48: #{tpu_custom_call.1} parent=11 // pred_fallthru
          _
        // Predicated region
        $region49: #{tpu_custom_call.1} parent=11 // pred_check
          %p548 = pneg %p271
        $region50: #{tpu_custom_call.1} parent=11 // pred_check_branch
          %550 = sbr.rel (%p548) target = $region52
        $region51: #{tpu_custom_call.1} parent=11 // pred_region
          _
        $region52: #{tpu_custom_call.1} parent=11 // pred_fallthru
          _
        // Predicated region
        $region53: #{tpu_custom_call.1} parent=11 // pred_check
          %p551 = pneg %p292
        $region54: #{tpu_custom_call.1} parent=11 // pred_check_branch
          %553 = sbr.rel (%p551) target = $region56
        $region55: #{tpu_custom_call.1} parent=11 // pred_region
          %555 = vsyncadd [#allocation15], 0
          %s556 = sshll.u32 %s11, 4
          %s557 = int_to_ptr.hbm [resolvable:$true] %s556
          %s558 = sshll.u32 [#allocation14], 4
          %s559 = int_to_ptr.vmem [resolvable:$true] %s558
          %564 = dma.hbm_to_vmem [thread:$0]  %s557, 6144, %s559, [#allocation15], 192, 192, 12
        $region56: #{tpu_custom_call.1} parent=11 // pred_fallthru
          _
        // Predicated region
        $region57: #{tpu_custom_call.1} parent=11 // pred_check
          %p565 = pneg %p313
        $region58: #{tpu_custom_call.1} parent=11 // pred_check_branch
          %567 = sbr.rel (%p565) target = $region60
        $region59: #{tpu_custom_call.1} parent=11 // pred_region
          _
        $region60: #{tpu_custom_call.1} parent=11 // pred_fallthru
          _
        // Predicated region
        $region61: #{tpu_custom_call.1} parent=11 // pred_check
          %p568 = pneg %p334
        $region62: #{tpu_custom_call.1} parent=11 // pred_check_branch
          %570 = sbr.rel (%p568) target = $region64
        $region63: #{tpu_custom_call.1} parent=11 // pred_region
          %572 = vsyncadd [#allocation15], 0
          %s573 = sshll.u32 %s13, 4
          %s574 = int_to_ptr.hbm [resolvable:$true] %s573
          %s575 = sshll.u32 [#allocation16], 4
          %s576 = int_to_ptr.vmem [resolvable:$true] %s575
          %581 = dma.hbm_to_vmem [thread:$0]  %s574, 1024, %s576, [#allocation15], 64, 64, 4
        $region64: #{tpu_custom_call.1} parent=11 // pred_fallthru
          _
        // Predicated region
        $region65: #{tpu_custom_call.1} parent=11 // pred_check
          %p582 = pneg %p355
        $region66: #{tpu_custom_call.1} parent=11 // pred_check_branch
          %584 = sbr.rel (%p582) target = $region68
        $region67: #{tpu_custom_call.1} parent=11 // pred_region
          %586 = vsyncadd [#allocation18], 0
          %s587 = sshll.u32 %s14, 4
          %s588 = int_to_ptr.hbm [resolvable:$true] %s587
          %s589 = sshll.u32 [#allocation17], 4
          %s590 = int_to_ptr.vmem [resolvable:$true] %s589
          %595 = dma.hbm_to_vmem [thread:$0]  %s588, 1024, %s590, [#allocation18], 64, 64, 4
        $region68: #{tpu_custom_call.1} parent=11 // pred_fallthru
          _
        // Predicated region
        $region69: #{tpu_custom_call.1} parent=11 // pred_check
          %p596 = pneg %p376
        $region70: #{tpu_custom_call.1} parent=11 // pred_check_branch
          %598 = sbr.rel (%p596) target = $region72
        $region71: #{tpu_custom_call.1} parent=11 // pred_region
          _
        $region72: #{tpu_custom_call.1} parent=11 // pred_fallthru
          _
        // Predicated region
        $region73: #{tpu_custom_call.1} parent=11 // pred_check
          %p599 = pneg %p397
        $region74: #{tpu_custom_call.1} parent=11 // pred_check_branch
          %601 = sbr.rel (%p599) target = $region76
        $region75: #{tpu_custom_call.1} parent=11 // pred_region
          _
        $region76: #{tpu_custom_call.1} parent=11 // pred_fallthru
          _
        // Predicated region
        $region77: #{tpu_custom_call.1} parent=11 // pred_check
          %p602 = pneg %p418
        $region78: #{tpu_custom_call.1} parent=11 // pred_check_branch
          %604 = sbr.rel (%p602) target = $region80
        $region79: #{tpu_custom_call.1} parent=11 // pred_region
          _
        $region80: #{tpu_custom_call.1} parent=11 // pred_fallthru
          _
      $region12: #{tpu_custom_call.1} parent=5 // pred_fallthru
        _
      %p605 = scmp.lt.s32.totalorder %s35, 2
      // Predicated region
      $region81: #{tpu_custom_call.1} parent=5 // pred_check
        %p606 = pneg %p605
      $region82: #{tpu_custom_call.1} parent=5 // pred_check_branch
        %608 = sbr.rel (%p606) target = $region84
      $region83: #{tpu_custom_call.1} parent=5 // pred_region
        // Predicated region
        $region85: #{tpu_custom_call.1} parent=83 // pred_check
          %p609 = pneg %p55
        $region86: #{tpu_custom_call.1} parent=83 // pred_check_branch
          %611 = sbr.rel (%p609) target = $region88
        $region87: #{tpu_custom_call.1} parent=83 // pred_region
          %s612 = sand.u32 %s45, 1
          %s613 = scalar_lea.sflag [#allocation3], %s612
          %s614 = sand.u32 %s45, 1
          %s615 = smul.addr %s614, 8
          %s616 = scalar_lea.vmem [#allocation2], %s615
          %618 = vsyncadd %s613, 0
          %s619 = smul.addr %s35, 8
          %s620 = scalar_lea.hbm %s0, %s619
          %s622 = sshll.u32 %s620, 4
          %s623 = int_to_ptr.hbm [resolvable:$true] %s622
          %s624 = sshll.u32 %s616, 4
          %s625 = int_to_ptr.vmem [resolvable:$true] %s624
          %627 = dma.hbm_to_vmem [thread:$0]  %s623, 128, %s625, %s613
        $region88: #{tpu_custom_call.1} parent=83 // pred_fallthru
          _
      $region84: #{tpu_custom_call.1} parent=5 // pred_fallthru
        _
      %p628 = scmp.le.s32.totalorder 1, %s35
      %p629 = scmp.lt.s32.totalorder %s35, 3
      %p630 = pnand %p628, %p629
      %p631 = pneg %p630
      // Predicated region
      $region89: #{tpu_custom_call.1} parent=5 // pred_check
        _
      $region90: #{tpu_custom_call.1} parent=5 // pred_check_branch
        %633 = sbr.rel (%p630) target = $region92
      $region91: #{tpu_custom_call.1} parent=5 // pred_region
        %s634 = ssub.s32 %s35, 1
        %s635 = sand.u32 %s48, 1
        %s636 = scalar_lea.sflag [#allocation3], %s635
        %s637 = sand.u32 %s48, 1
        %s638 = smul.addr %s637, 8
        %s639 = scalar_lea.vmem [#allocation2], %s638
        // Predicated region
        $region93: #{tpu_custom_call.1} parent=91 // pred_check
          %p640 = pneg %p61
        $region94: #{tpu_custom_call.1} parent=91 // pred_check_branch
          %642 = sbr.rel (%p640) target = $region96
        $region95: #{tpu_custom_call.1} parent=91 // pred_region
          %644 = dma.done %s636, 128
        $region96: #{tpu_custom_call.1} parent=91 // pred_fallthru
          _
        // Predicated region
        $region97: #{tpu_custom_call.1} parent=91 // pred_check
          %p645 = pneg %p82
        $region98: #{tpu_custom_call.1} parent=91 // pred_check_branch
          %647 = sbr.rel (%p645) target = $region100
        $region99: #{tpu_custom_call.1} parent=91 // pred_region
          %649 = dma.done [#allocation6], 32
        $region100: #{tpu_custom_call.1} parent=91 // pred_fallthru
          _
        // Predicated region
        $region101: #{tpu_custom_call.1} parent=91 // pred_check
          %p650 = pneg %p103
        $region102: #{tpu_custom_call.1} parent=91 // pred_check_branch
          %652 = sbr.rel (%p650) target = $region104
        $region103: #{tpu_custom_call.1} parent=91 // pred_region
          %654 = dma.done [#allocation6], 32
        $region104: #{tpu_custom_call.1} parent=91 // pred_fallthru
          _
        // Predicated region
        $region105: #{tpu_custom_call.1} parent=91 // pred_check
          %p655 = pneg %p124
        $region106: #{tpu_custom_call.1} parent=91 // pred_check_branch
          %657 = sbr.rel (%p655) target = $region108
        $region107: #{tpu_custom_call.1} parent=91 // pred_region
          %659 = dma.done [#allocation9], 24576
        $region108: #{tpu_custom_call.1} parent=91 // pred_fallthru
          _
        // Predicated region
        $region109: #{tpu_custom_call.1} parent=91 // pred_check
          %p660 = pneg %p145
        $region110: #{tpu_custom_call.1} parent=91 // pred_check_branch
          %662 = sbr.rel (%p660) target = $region112
        $region111: #{tpu_custom_call.1} parent=91 // pred_region
          %664 = dma.done [#allocation9], 384
        $region112: #{tpu_custom_call.1} parent=91 // pred_fallthru
          _
        // Predicated region
        $region113: #{tpu_custom_call.1} parent=91 // pred_check
          %p665 = pneg %p166
        $region114: #{tpu_custom_call.1} parent=91 // pred_check_branch
          %667 = sbr.rel (%p665) target = $region116
        $region115: #{tpu_custom_call.1} parent=91 // pred_region
          %669 = dma.done [#allocation12], 8192
        $region116: #{tpu_custom_call.1} parent=91 // pred_fallthru
          _
        // Predicated region
        $region117: #{tpu_custom_call.1} parent=91 // pred_check
          %p670 = pneg %p250
        $region118: #{tpu_custom_call.1} parent=91 // pred_check_branch
          %672 = sbr.rel (%p670) target = $region120
        $region119: #{tpu_custom_call.1} parent=91 // pred_region
          %674 = dma.done [#allocation12], 6144
        $region120: #{tpu_custom_call.1} parent=91 // pred_fallthru
          _
        // Predicated region
        $region121: #{tpu_custom_call.1} parent=91 // pred_check
          %p675 = pneg %p292
        $region122: #{tpu_custom_call.1} parent=91 // pred_check_branch
          %677 = sbr.rel (%p675) target = $region124
        $region123: #{tpu_custom_call.1} parent=91 // pred_region
          %679 = dma.done [#allocation15], 6144
        $region124: #{tpu_custom_call.1} parent=91 // pred_fallthru
          _
        // Predicated region
        $region125: #{tpu_custom_call.1} parent=91 // pred_check
          %p680 = pneg %p334
        $region126: #{tpu_custom_call.1} parent=91 // pred_check_branch
          %682 = sbr.rel (%p680) target = $region128
        $region127: #{tpu_custom_call.1} parent=91 // pred_region
          %684 = dma.done [#allocation15], 1024
        $region128: #{tpu_custom_call.1} parent=91 // pred_fallthru
          _
        // Predicated region
        $region129: #{tpu_custom_call.1} parent=91 // pred_check
          %p685 = pneg %p355
        $region130: #{tpu_custom_call.1} parent=91 // pred_check_branch
          %687 = sbr.rel (%p685) target = $region132
        $region131: #{tpu_custom_call.1} parent=91 // pred_region
          %689 = dma.done [#allocation18], 1024
        $region132: #{tpu_custom_call.1} parent=91 // pred_fallthru
          _
        %s690 = sand.u32 %s48, 1
        %s691 = scalar_lea.sflag [#allocation3], %s690
        %s692 = sand.u32 %s48, 1
        %s693 = smul.addr %s692, 8
        %s694 = scalar_lea.vmem [#allocation2], %s693
        %p695 = pneg %p61
        %p696 = pneg %p58
        %p697 = pneg %p82
        %p698 = pneg %p79
        %p699 = pneg %p103
        %p700 = pneg %p100
        %p701 = pneg %p124
        %p702 = pneg %p121
        %p703 = pneg %p145
        %p704 = pneg %p142
        %p705 = pneg %p166
        %p706 = pneg %p163
        %p707 = pneg %p187
        %p708 = pneg %p184
        %p709 = pneg %p208
        %p710 = pneg %p205
        %p711 = pneg %p229
        %p712 = pneg %p226
        %p713 = pneg %p250
        %p714 = pneg %p247
        %p715 = pneg %p271
        %p716 = pneg %p268
        %p717 = pneg %p292
        %p718 = pneg %p289
        %p719 = pneg %p313
        %p720 = pneg %p310
        %p721 = pneg %p334
        %p722 = pneg %p331
        %p723 = pneg %p355
        %p724 = pneg %p352
        %p725 = pneg %p376
        %p726 = pneg %p373
        %p727 = pneg %p397
        %p728 = pneg %p394
        %p729 = pneg %p418
        %p730 = pneg %p415
        %p731 = pneg %p444
        %p732 = pneg %p441
        %s733 = sand.u32 %s431, 1
        %s734 = scalar_lea.sflag [#allocation4], %s733
        %s735 = sand.u32 %s431, 1
        %s736 = smul.addr %s735, 8
        %s737 = scalar_lea.vmem [#allocation19], %s736
        %v739 = vld [vmem:[%s639] sm:$0xff]
        %v740 = vlaneseq
        %v741 = vshrl.u32 %v740, 7
        %vm742 = vcmp.gt.s32.totalorder %v741, 0
        %vm743 = vcmp.lt.s32.totalorder %v741, 7
        %v744 = vlaneseq
        %v745 = vand.u32 %v744, 127
        %v746 = vld [vmem:[#allocation5] sm:$0x1]
        %v747 = vld [vmem:[#allocation7] sm:$0x1]
        %748 = vadd.xlane.f32.xlu0 %v739
        %v749 = vpop.xlane.xlu0 %748
        %v750 = vmul.f32 %v749, 0.03125
        %v751 = vmul.f32 %v739, %v739
        %752 = vadd.xlane.f32.xlu0 %v751
        %v753 = vpop.xlane.xlu0 %752
        %v754 = vmul.f32 %v753, 0.03125
        %v755 = vmul.f32 %v750, %v750
        %v756 = vsub.f32 %v754, %v755
        %v757 = vsub.f32 %v739, %v750
        %v758 = vadd.f32 %v756, 1e-05
        %v759 = vrsqrt.pop %v758
        %v760 = vmul.f32 %v759, %v758
        %v761 = vmul.f32 %v760, %v759
        %v762 = vmul.f32 0.5, %v761
        %v763 = vsub.f32 1.5, %v762
        %v764 = vmul.f32 %v759, %v763
        %vm765 = vweird.f32 %v758
        %vm766 = vweird.f32 %v759
        %vm767 = vmor %vm765, %vm766
        %v768 = vsel %vm767, %v759, %v764
        %v769 = vmul.f32 %v757, %v768
        %v770 = vperm.slane %v746, 0
        %v771 = vmul.f32 %v769, %v770
        %v772 = vperm.slane %v747, 0
        %v773 = vadd.f32 %v771, %v772
        %v774 = vpack.c.bf16 %v773, %v773
        %v775 = vld [vmem:[#allocation8] sm:$0xff]
        %v776 = vld [vmem:[#allocation8 + $0x8] sm:$0xff]
        %v777 = vld [vmem:[#allocation8 + $0x10] sm:$0xff]
        %v778 = vld [vmem:[#allocation8 + $0x18] sm:$0xff]
        %v779 = vld [vmem:[#allocation8 + $0x20] sm:$0xff]
        %v780 = vld [vmem:[#allocation8 + $0x28] sm:$0xff]
        %v781 = vld [vmem:[#allocation8 + $0x30] sm:$0xff]
        %v782 = vld [vmem:[#allocation8 + $0x38] sm:$0xff]
        %v783 = vld [vmem:[#allocation8 + $0x40] sm:$0xff]
        %v784 = vld [vmem:[#allocation8 + $0x48] sm:$0xff]
        %v785 = vld [vmem:[#allocation8 + $0x50] sm:$0xff]
        %v786 = vld [vmem:[#allocation8 + $0x58] sm:$0xff]
        %v787 = vld [vmem:[#allocation8 + $0x60] sm:$0xff]
        %v788 = vld [vmem:[#allocation8 + $0x68] sm:$0xff]
        %v789 = vld [vmem:[#allocation8 + $0x70] sm:$0xff]
        %v790 = vld [vmem:[#allocation8 + $0x78] sm:$0xff]
        %v791 = vld [vmem:[#allocation8 + $0x80] sm:$0xff]
        %v792 = vld [vmem:[#allocation8 + $0x88] sm:$0xff]
        %v793 = vld [vmem:[#allocation8 + $0x90] sm:$0xff]
        %v794 = vld [vmem:[#allocation8 + $0x98] sm:$0xff]
        %v795 = vld [vmem:[#allocation8 + $0xa0] sm:$0xff]
        %v796 = vld [vmem:[#allocation8 + $0xa8] sm:$0xff]
        %v797 = vld [vmem:[#allocation8 + $0xb0] sm:$0xff]
        %v798 = vld [vmem:[#allocation8 + $0xb8] sm:$0xff]
        %v799 = vld [vmem:[#allocation8 + $0xc0] sm:$0xff]
        %v800 = vld [vmem:[#allocation8 + $0xc8] sm:$0xff]
        %v801 = vld [vmem:[#allocation8 + $0xd0] sm:$0xff]
        %v802 = vld [vmem:[#allocation8 + $0xd8] sm:$0xff]
        %v803 = vld [vmem:[#allocation8 + $0xe0] sm:$0xff]
        %v804 = vld [vmem:[#allocation8 + $0xe8] sm:$0xff]
        %v805 = vld [vmem:[#allocation8 + $0xf0] sm:$0xff]
        %v806 = vld [vmem:[#allocation8 + $0xf8] sm:$0xff]
        %v807 = vld [vmem:[#allocation8 + $0x100] sm:$0xff]
        %v808 = vld [vmem:[#allocation8 + $0x108] sm:$0xff]
        %v809 = vld [vmem:[#allocation8 + $0x110] sm:$0xff]
        %v810 = vld [vmem:[#allocation8 + $0x118] sm:$0xff]
        %v811 = vld [vmem:[#allocation8 + $0x120] sm:$0xff]
        %v812 = vld [vmem:[#allocation8 + $0x128] sm:$0xff]
        %v813 = vld [vmem:[#allocation8 + $0x130] sm:$0xff]
        %v814 = vld [vmem:[#allocation8 + $0x138] sm:$0xff]
        %v815 = vld [vmem:[#allocation8 + $0x140] sm:$0xff]
        %v816 = vld [vmem:[#allocation8 + $0x148] sm:$0xff]
        %v817 = vld [vmem:[#allocation8 + $0x150] sm:$0xff]
        %v818 = vld [vmem:[#allocation8 + $0x158] sm:$0xff]
        %v819 = vld [vmem:[#allocation8 + $0x160] sm:$0xff]
        %v820 = vld [vmem:[#allocation8 + $0x168] sm:$0xff]
        %v821 = vld [vmem:[#allocation8 + $0x170] sm:$0xff]
        %v822 = vld [vmem:[#allocation8 + $0x178] sm:$0xff]
        %v823 = vld [vmem:[#allocation8 + $0x180] sm:$0xff]
        %v824 = vld [vmem:[#allocation8 + $0x188] sm:$0xff]
        %v825 = vld [vmem:[#allocation8 + $0x190] sm:$0xff]
        %v826 = vld [vmem:[#allocation8 + $0x198] sm:$0xff]
        %v827 = vld [vmem:[#allocation8 + $0x1a0] sm:$0xff]
        %v828 = vld [vmem:[#allocation8 + $0x1a8] sm:$0xff]
        %v829 = vld [vmem:[#allocation8 + $0x1b0] sm:$0xff]
        %v830 = vld [vmem:[#allocation8 + $0x1b8] sm:$0xff]
        %v831 = vld [vmem:[#allocation8 + $0x1c0] sm:$0xff]
        %v832 = vld [vmem:[#allocation8 + $0x1c8] sm:$0xff]
        %v833 = vld [vmem:[#allocation8 + $0x1d0] sm:$0xff]
        %v834 = vld [vmem:[#allocation8 + $0x1d8] sm:$0xff]
        %v835 = vld [vmem:[#allocation8 + $0x1e0] sm:$0xff]
        %v836 = vld [vmem:[#allocation8 + $0x1e8] sm:$0xff]
        %v837 = vld [vmem:[#allocation8 + $0x1f0] sm:$0xff]
        %v838 = vld [vmem:[#allocation8 + $0x1f8] sm:$0xff]
        %v839 = vld [vmem:[#allocation8 + $0x200] sm:$0xff]
        %v840 = vld [vmem:[#allocation8 + $0x208] sm:$0xff]
        %v841 = vld [vmem:[#allocation8 + $0x210] sm:$0xff]
        %v842 = vld [vmem:[#allocation8 + $0x218] sm:$0xff]
        %v843 = vld [vmem:[#allocation8 + $0x220] sm:$0xff]
        %v844 = vld [vmem:[#allocation8 + $0x228] sm:$0xff]
        %v845 = vld [vmem:[#allocation8 + $0x230] sm:$0xff]
        %v846 = vld [vmem:[#allocation8 + $0x238] sm:$0xff]
        %v847 = vld [vmem:[#allocation8 + $0x240] sm:$0xff]
        %v848 = vld [vmem:[#allocation8 + $0x248] sm:$0xff]
        %v849 = vld [vmem:[#allocation8 + $0x250] sm:$0xff]
        %v850 = vld [vmem:[#allocation8 + $0x258] sm:$0xff]
        %v851 = vld [vmem:[#allocation8 + $0x260] sm:$0xff]
        %v852 = vld [vmem:[#allocation8 + $0x268] sm:$0xff]
        %v853 = vld [vmem:[#allocation8 + $0x270] sm:$0xff]
        %v854 = vld [vmem:[#allocation8 + $0x278] sm:$0xff]
        %v855 = vld [vmem:[#allocation8 + $0x280] sm:$0xff]
        %v856 = vld [vmem:[#allocation8 + $0x288] sm:$0xff]
        %v857 = vld [vmem:[#allocation8 + $0x290] sm:$0xff]
        %v858 = vld [vmem:[#allocation8 + $0x298] sm:$0xff]
        %v859 = vld [vmem:[#allocation8 + $0x2a0] sm:$0xff]
        %v860 = vld [vmem:[#allocation8 + $0x2a8] sm:$0xff]
        %v861 = vld [vmem:[#allocation8 + $0x2b0] sm:$0xff]
        %v862 = vld [vmem:[#allocation8 + $0x2b8] sm:$0xff]
        %v863 = vld [vmem:[#allocation8 + $0x2c0] sm:$0xff]
        %v864 = vld [vmem:[#allocation8 + $0x2c8] sm:$0xff]
        %v865 = vld [vmem:[#allocation8 + $0x2d0] sm:$0xff]
        %v866 = vld [vmem:[#allocation8 + $0x2d8] sm:$0xff]
        %v867 = vld [vmem:[#allocation8 + $0x2e0] sm:$0xff]
        %v868 = vld [vmem:[#allocation8 + $0x2e8] sm:$0xff]
        %v869 = vld [vmem:[#allocation8 + $0x2f0] sm:$0xff]
        %v870 = vld [vmem:[#allocation8 + $0x2f8] sm:$0xff]
        %v871 = vld [vmem:[#allocation10] sm:$0xff]
        %v872 = vld [vmem:[#allocation10 + $0x8] sm:$0xf]
        %v875 = vperm.slane %v871, 0
        %v876 = vperm.slane %v871, 1
        %v877 = vperm.slane %v871, 2
        %v878 = vperm.slane %v871, 3
        %v879 = vperm.slane %v871, 4
        %v880 = vperm.slane %v871, 5
        %v881 = vperm.slane %v871, 6
        %v882 = vperm.slane %v871, 7
        %v883 = vperm.slane %v872, 0
        %v884 = vperm.slane %v872, 1
        %v885 = vperm.slane %v872, 2
        %v886 = vperm.slane %v872, 3
        %v995 = vunpack.c.l.b16 %v775
        %v996 = vunpack.c.h.b16 %v775
        %v997 = vunpack.c.l.b16 %v776
        %v998 = vunpack.c.h.b16 %v776
        %v999 = vunpack.c.l.b16 %v777
        %v1000 = vunpack.c.h.b16 %v777
        %v1001 = vunpack.c.l.b16 %v778
        %v1002 = vunpack.c.h.b16 %v778
        %v1003 = vunpack.c.l.b16 %v779
        %v1004 = vunpack.c.h.b16 %v779
        %v1005 = vunpack.c.l.b16 %v780
        %v1006 = vunpack.c.h.b16 %v780
        %v1007 = vunpack.c.l.b16 %v781
        %v1008 = vunpack.c.h.b16 %v781
        %v1009 = vunpack.c.l.b16 %v782
        %v1010 = vunpack.c.h.b16 %v782
        %v1011 = vunpack.c.l.b16 %v783
        %v1012 = vunpack.c.h.b16 %v783
        %v1013 = vunpack.c.l.b16 %v784
        %v1014 = vunpack.c.h.b16 %v784
        %v1015 = vunpack.c.l.b16 %v785
        %v1016 = vunpack.c.h.b16 %v785
        %v1017 = vunpack.c.l.b16 %v786
        %v1018 = vunpack.c.h.b16 %v786
        %v1019 = vunpack.c.l.b16 %v787
        %v1020 = vunpack.c.h.b16 %v787
        %v1021 = vunpack.c.l.b16 %v788
        %v1022 = vunpack.c.h.b16 %v788
        %v1023 = vunpack.c.l.b16 %v789
        %v1024 = vunpack.c.h.b16 %v789
        %v1025 = vunpack.c.l.b16 %v790
        %v1026 = vunpack.c.h.b16 %v790
        %v1027 = vunpack.c.l.b16 %v791
        %v1028 = vunpack.c.h.b16 %v791
        %v1029 = vunpack.c.l.b16 %v792
        %v1030 = vunpack.c.h.b16 %v792
        %v1031 = vunpack.c.l.b16 %v793
        %v1032 = vunpack.c.h.b16 %v793
        %v1033 = vunpack.c.l.b16 %v794
        %v1034 = vunpack.c.h.b16 %v794
        %v1035 = vunpack.c.l.b16 %v795
        %v1036 = vunpack.c.h.b16 %v795
        %v1037 = vunpack.c.l.b16 %v796
        %v1038 = vunpack.c.h.b16 %v796
        %v1039 = vunpack.c.l.b16 %v797
        %v1040 = vunpack.c.h.b16 %v797
        %v1041 = vunpack.c.l.b16 %v798
        %v1042 = vunpack.c.h.b16 %v798
        %v1043 = vunpack.c.l.b16 %v799
        %v1044 = vunpack.c.h.b16 %v799
        %v1045 = vunpack.c.l.b16 %v800
        %v1046 = vunpack.c.h.b16 %v800
        %v1047 = vunpack.c.l.b16 %v801
        %v1048 = vunpack.c.h.b16 %v801
        %v1049 = vunpack.c.l.b16 %v802
        %v1050 = vunpack.c.h.b16 %v802
        %v1051 = vunpack.c.l.b16 %v803
        %v1052 = vunpack.c.h.b16 %v803
        %v1053 = vunpack.c.l.b16 %v804
        %v1054 = vunpack.c.h.b16 %v804
        %v1055 = vunpack.c.l.b16 %v805
        %v1056 = vunpack.c.h.b16 %v805
        %v1057 = vunpack.c.l.b16 %v806
        %v1058 = vunpack.c.h.b16 %v806
        %v1059 = vunpack.c.l.b16 %v807
        %v1060 = vunpack.c.h.b16 %v807
        %v1061 = vunpack.c.l.b16 %v808
        %v1062 = vunpack.c.h.b16 %v808
        %v1063 = vunpack.c.l.b16 %v809
        %v1064 = vunpack.c.h.b16 %v809
        %v1065 = vunpack.c.l.b16 %v810
        %v1066 = vunpack.c.h.b16 %v810
        %v1067 = vunpack.c.l.b16 %v811
        %v1068 = vunpack.c.h.b16 %v811
        %v1069 = vunpack.c.l.b16 %v812
        %v1070 = vunpack.c.h.b16 %v812
        %v1071 = vunpack.c.l.b16 %v813
        %v1072 = vunpack.c.h.b16 %v813
        %v1073 = vunpack.c.l.b16 %v814
        %v1074 = vunpack.c.h.b16 %v814
        %v1075 = vunpack.c.l.b16 %v815
        %v1076 = vunpack.c.h.b16 %v815
        %v1077 = vunpack.c.l.b16 %v816
        %v1078 = vunpack.c.h.b16 %v816
        %v1079 = vunpack.c.l.b16 %v817
        %v1080 = vunpack.c.h.b16 %v817
        %v1081 = vunpack.c.l.b16 %v818
        %v1082 = vunpack.c.h.b16 %v818
        %v1083 = vunpack.c.l.b16 %v819
        %v1084 = vunpack.c.h.b16 %v819
        %v1085 = vunpack.c.l.b16 %v820
        %v1086 = vunpack.c.h.b16 %v820
        %v1087 = vunpack.c.l.b16 %v821
        %v1088 = vunpack.c.h.b16 %v821
        %v1089 = vunpack.c.l.b16 %v822
        %v1090 = vunpack.c.h.b16 %v822
        %v1091 = vunpack.c.l.b16 %v823
        %v1092 = vunpack.c.h.b16 %v823
        %v1093 = vunpack.c.l.b16 %v824
        %v1094 = vunpack.c.h.b16 %v824
        %v1095 = vunpack.c.l.b16 %v825
        %v1096 = vunpack.c.h.b16 %v825
        %v1097 = vunpack.c.l.b16 %v826
        %v1098 = vunpack.c.h.b16 %v826
        %v1099 = vunpack.c.l.b16 %v827
        %v1100 = vunpack.c.h.b16 %v827
        %v1101 = vunpack.c.l.b16 %v828
        %v1102 = vunpack.c.h.b16 %v828
        %v1103 = vunpack.c.l.b16 %v829
        %v1104 = vunpack.c.h.b16 %v829
        %v1105 = vunpack.c.l.b16 %v830
        %v1106 = vunpack.c.h.b16 %v830
        %v1107 = vunpack.c.l.b16 %v831
        %v1108 = vunpack.c.h.b16 %v831
        %v1109 = vunpack.c.l.b16 %v832
        %v1110 = vunpack.c.h.b16 %v832
        %v1111 = vunpack.c.l.b16 %v833
        %v1112 = vunpack.c.h.b16 %v833
        %v1113 = vunpack.c.l.b16 %v834
        %v1114 = vunpack.c.h.b16 %v834
        %v1115 = vunpack.c.l.b16 %v835
        %v1116 = vunpack.c.h.b16 %v835
        %v1117 = vunpack.c.l.b16 %v836
        %v1118 = vunpack.c.h.b16 %v836
        %v1119 = vunpack.c.l.b16 %v837
        %v1120 = vunpack.c.h.b16 %v837
        %v1121 = vunpack.c.l.b16 %v838
        %v1122 = vunpack.c.h.b16 %v838
        %v1123 = vunpack.c.l.b16 %v839
        %v1124 = vunpack.c.h.b16 %v839
        %v1125 = vunpack.c.l.b16 %v840
        %v1126 = vunpack.c.h.b16 %v840
        %v1127 = vunpack.c.l.b16 %v841
        %v1128 = vunpack.c.h.b16 %v841
        %v1129 = vunpack.c.l.b16 %v842
        %v1130 = vunpack.c.h.b16 %v842
        %v1131 = vunpack.c.l.b16 %v843
        %v1132 = vunpack.c.h.b16 %v843
        %v1133 = vunpack.c.l.b16 %v844
        %v1134 = vunpack.c.h.b16 %v844
        %v1135 = vunpack.c.l.b16 %v845
        %v1136 = vunpack.c.h.b16 %v845
        %v1137 = vunpack.c.l.b16 %v846
        %v1138 = vunpack.c.h.b16 %v846
        %v1139 = vunpack.c.l.b16 %v847
        %v1140 = vunpack.c.h.b16 %v847
        %v1141 = vunpack.c.l.b16 %v848
        %v1142 = vunpack.c.h.b16 %v848
        %v1143 = vunpack.c.l.b16 %v849
        %v1144 = vunpack.c.h.b16 %v849
        %v1145 = vunpack.c.l.b16 %v850
        %v1146 = vunpack.c.h.b16 %v850
        %v1147 = vunpack.c.l.b16 %v851
        %v1148 = vunpack.c.h.b16 %v851
        %v1149 = vunpack.c.l.b16 %v852
        %v1150 = vunpack.c.h.b16 %v852
        %v1151 = vunpack.c.l.b16 %v853
        %v1152 = vunpack.c.h.b16 %v853
        %v1153 = vunpack.c.l.b16 %v854
        %v1154 = vunpack.c.h.b16 %v854
        %v1155 = vunpack.c.l.b16 %v855
        %v1156 = vunpack.c.h.b16 %v855
        %v1157 = vunpack.c.l.b16 %v856
        %v1158 = vunpack.c.h.b16 %v856
        %v1159 = vunpack.c.l.b16 %v857
        %v1160 = vunpack.c.h.b16 %v857
        %v1161 = vunpack.c.l.b16 %v858
        %v1162 = vunpack.c.h.b16 %v858
        %v1163 = vunpack.c.l.b16 %v859
        %v1164 = vunpack.c.h.b16 %v859
        %v1165 = vunpack.c.l.b16 %v860
        %v1166 = vunpack.c.h.b16 %v860
        %v1167 = vunpack.c.l.b16 %v861
        %v1168 = vunpack.c.h.b16 %v861
        %v1169 = vunpack.c.l.b16 %v862
        %v1170 = vunpack.c.h.b16 %v862
        %v1171 = vunpack.c.l.b16 %v863
        %v1172 = vunpack.c.h.b16 %v863
        %v1173 = vunpack.c.l.b16 %v864
        %v1174 = vunpack.c.h.b16 %v864
        %v1175 = vunpack.c.l.b16 %v865
        %v1176 = vunpack.c.h.b16 %v865
        %v1177 = vunpack.c.l.b16 %v866
        %v1178 = vunpack.c.h.b16 %v866
        %v1179 = vunpack.c.l.b16 %v867
        %v1180 = vunpack.c.h.b16 %v867
        %v1181 = vunpack.c.l.b16 %v868
        %v1182 = vunpack.c.h.b16 %v868
        %v1183 = vunpack.c.l.b16 %v869
        %v1184 = vunpack.c.h.b16 %v869
        %v1185 = vunpack.c.l.b16 %v870
        %v1186 = vunpack.c.h.b16 %v870
        %v1187 = vpack.c.b16 %v1007, %v995
        %v1188 = vpack.c.b16 %v1008, %v996
        %v1189 = vpack.c.b16 %v1009, %v997
        %v1190 = vpack.c.b16 %v1010, %v998
        %v1191 = vpack.c.b16 %v1011, %v999
        %v1192 = vpack.c.b16 %v1012, %v1000
        %v1193 = vpack.c.b16 %v1013, %v1001
        %v1194 = vpack.c.b16 %v1014, %v1002
        %v1195 = vpack.c.b16 %v1015, %v1003
        %v1196 = vpack.c.b16 %v1016, %v1004
        %v1197 = vpack.c.b16 %v1017, %v1005
        %v1198 = vpack.c.b16 %v1018, %v1006
        %v1199 = vpack.c.b16 %v1031, %v1019
        %v1200 = vpack.c.b16 %v1032, %v1020
        %v1201 = vpack.c.b16 %v1033, %v1021
        %v1202 = vpack.c.b16 %v1034, %v1022
        %v1203 = vpack.c.b16 %v1035, %v1023
        %v1204 = vpack.c.b16 %v1036, %v1024
        %v1205 = vpack.c.b16 %v1037, %v1025
        %v1206 = vpack.c.b16 %v1038, %v1026
        %v1207 = vpack.c.b16 %v1039, %v1027
        %v1208 = vpack.c.b16 %v1040, %v1028
        %v1209 = vpack.c.b16 %v1041, %v1029
        %v1210 = vpack.c.b16 %v1042, %v1030
        %v1211 = vpack.c.b16 %v1055, %v1043
        %v1212 = vpack.c.b16 %v1056, %v1044
        %v1213 = vpack.c.b16 %v1057, %v1045
        %v1214 = vpack.c.b16 %v1058, %v1046
        %v1215 = vpack.c.b16 %v1059, %v1047
        %v1216 = vpack.c.b16 %v1060, %v1048
        %v1217 = vpack.c.b16 %v1061, %v1049
        %v1218 = vpack.c.b16 %v1062, %v1050
        %v1219 = vpack.c.b16 %v1063, %v1051
        %v1220 = vpack.c.b16 %v1064, %v1052
        %v1221 = vpack.c.b16 %v1065, %v1053
        %v1222 = vpack.c.b16 %v1066, %v1054
        %v1223 = vpack.c.b16 %v1079, %v1067
        %v1224 = vpack.c.b16 %v1080, %v1068
        %v1225 = vpack.c.b16 %v1081, %v1069
        %v1226 = vpack.c.b16 %v1082, %v1070
        %v1227 = vpack.c.b16 %v1083, %v1071
        %v1228 = vpack.c.b16 %v1084, %v1072
        %v1229 = vpack.c.b16 %v1085, %v1073
        %v1230 = vpack.c.b16 %v1086, %v1074
        %v1231 = vpack.c.b16 %v1087, %v1075
        %v1232 = vpack.c.b16 %v1088, %v1076
        %v1233 = vpack.c.b16 %v1089, %v1077
        %v1234 = vpack.c.b16 %v1090, %v1078
        %v1235 = vpack.c.b16 %v1103, %v1091
        %v1236 = vpack.c.b16 %v1104, %v1092
        %v1237 = vpack.c.b16 %v1105, %v1093
        %v1238 = vpack.c.b16 %v1106, %v1094
        %v1239 = vpack.c.b16 %v1107, %v1095
        %v1240 = vpack.c.b16 %v1108, %v1096
        %v1241 = vpack.c.b16 %v1109, %v1097
        %v1242 = vpack.c.b16 %v1110, %v1098
        %v1243 = vpack.c.b16 %v1111, %v1099
        %v1244 = vpack.c.b16 %v1112, %v1100
        %v1245 = vpack.c.b16 %v1113, %v1101
        %v1246 = vpack.c.b16 %v1114, %v1102
        %v1247 = vpack.c.b16 %v1127, %v1115
        %v1248 = vpack.c.b16 %v1128, %v1116
        %v1249 = vpack.c.b16 %v1129, %v1117
        %v1250 = vpack.c.b16 %v1130, %v1118
        %v1251 = vpack.c.b16 %v1131, %v1119
        %v1252 = vpack.c.b16 %v1132, %v1120
        %v1253 = vpack.c.b16 %v1133, %v1121
        %v1254 = vpack.c.b16 %v1134, %v1122
        %v1255 = vpack.c.b16 %v1135, %v1123
        %v1256 = vpack.c.b16 %v1136, %v1124
        %v1257 = vpack.c.b16 %v1137, %v1125
        %v1258 = vpack.c.b16 %v1138, %v1126
        %v1259 = vpack.c.b16 %v1151, %v1139
        %v1260 = vpack.c.b16 %v1152, %v1140
        %v1261 = vpack.c.b16 %v1153, %v1141
        %v1262 = vpack.c.b16 %v1154, %v1142
        %v1263 = vpack.c.b16 %v1155, %v1143
        %v1264 = vpack.c.b16 %v1156, %v1144
        %v1265 = vpack.c.b16 %v1157, %v1145
        %v1266 = vpack.c.b16 %v1158, %v1146
        %v1267 = vpack.c.b16 %v1159, %v1147
        %v1268 = vpack.c.b16 %v1160, %v1148
        %v1269 = vpack.c.b16 %v1161, %v1149
        %v1270 = vpack.c.b16 %v1162, %v1150
        %v1271 = vpack.c.b16 %v1175, %v1163
        %v1272 = vpack.c.b16 %v1176, %v1164
        %v1273 = vpack.c.b16 %v1177, %v1165
        %v1274 = vpack.c.b16 %v1178, %v1166
        %v1275 = vpack.c.b16 %v1179, %v1167
        %v1276 = vpack.c.b16 %v1180, %v1168
        %v1277 = vpack.c.b16 %v1181, %v1169
        %v1278 = vpack.c.b16 %v1182, %v1170
        %v1279 = vpack.c.b16 %v1183, %v1171
        %v1280 = vpack.c.b16 %v1184, %v1172
        %v1281 = vpack.c.b16 %v1185, %v1173
        %v1282 = vpack.c.b16 %v1186, %v1174
        %1379 = vmatpush.bf16.msra.mxu0 %v1271
        %1380 = vmatpush.bf16.msra.mxu0 %v1259
        %1381 = vmatpush.bf16.msra.mxu0 %v1247
        %1382 = vmatpush.bf16.msra.mxu0 %v1235
        %1383 = vmatpush.bf16.msra.mxu0 %v1223
        %1384 = vmatpush.bf16.msra.mxu0 %v1211
        %1385 = vmatpush.bf16.msra.mxu0 %v1199
        %1386 = vmatpush.bf16.msra.mxu0 %v1187
        %1387 = vmatmul.bf16.gmra.mxu0 %v774
        %v1388 = vpop.f32.mrf.mxu0
        %v1389 = vadd.f32 %v875, %v1388
        %v1390 = vpop.f32.mrf.mxu0
        %1391 = vdwg.mxu0
        %1392 = vmatpush.bf16.msra.mxu0 %v1272
        %1393 = vmatpush.bf16.msra.mxu0 %v1260
        %1394 = vmatpush.bf16.msra.mxu0 %v1248
        %1395 = vmatpush.bf16.msra.mxu0 %v1236
        %1396 = vmatpush.bf16.msra.mxu0 %v1224
        %1397 = vmatpush.bf16.msra.mxu0 %v1212
        %1398 = vmatpush.bf16.msra.mxu0 %v1200
        %1399 = vmatpush.bf16.msra.mxu0 %v1188
        %1400 = vmatmul.bf16.gmra.mxu0 %v774
        %v1401 = vpop.f32.mrf.mxu0
        %v1402 = vadd.f32 %v876, %v1401
        %v1403 = vpop.f32.mrf.mxu0
        %1404 = vdwg.mxu0
        %1405 = vmatpush.bf16.msra.mxu0 %v1273
        %1406 = vmatpush.bf16.msra.mxu0 %v1261
        %1407 = vmatpush.bf16.msra.mxu0 %v1249
        %1408 = vmatpush.bf16.msra.mxu0 %v1237
        %1409 = vmatpush.bf16.msra.mxu0 %v1225
        %1410 = vmatpush.bf16.msra.mxu0 %v1213
        %1411 = vmatpush.bf16.msra.mxu0 %v1201
        %1412 = vmatpush.bf16.msra.mxu0 %v1189
        %1413 = vmatmul.bf16.gmra.mxu0 %v774
        %v1414 = vpop.f32.mrf.mxu0
        %v1415 = vadd.f32 %v877, %v1414
        %v1416 = vpop.f32.mrf.mxu0
        %1417 = vdwg.mxu0
        %1418 = vmatpush.bf16.msra.mxu0 %v1274
        %1419 = vmatpush.bf16.msra.mxu0 %v1262
        %1420 = vmatpush.bf16.msra.mxu0 %v1250
        %1421 = vmatpush.bf16.msra.mxu0 %v1238
        %1422 = vmatpush.bf16.msra.mxu0 %v1226
        %1423 = vmatpush.bf16.msra.mxu0 %v1214
        %1424 = vmatpush.bf16.msra.mxu0 %v1202
        %1425 = vmatpush.bf16.msra.mxu0 %v1190
        %1426 = vmatmul.bf16.gmra.mxu0 %v774
        %v1427 = vpop.f32.mrf.mxu0
        %v1428 = vadd.f32 %v878, %v1427
        %v1429 = vpop.f32.mrf.mxu0
        %1430 = vdwg.mxu0
        %1431 = vmatpush.bf16.msra.mxu0 %v1275
        %1432 = vmatpush.bf16.msra.mxu0 %v1263
        %1433 = vmatpush.bf16.msra.mxu0 %v1251
        %1434 = vmatpush.bf16.msra.mxu0 %v1239
        %1435 = vmatpush.bf16.msra.mxu0 %v1227
        %1436 = vmatpush.bf16.msra.mxu0 %v1215
        %1437 = vmatpush.bf16.msra.mxu0 %v1203
        %1438 = vmatpush.bf16.msra.mxu0 %v1191
        %1439 = vmatmul.bf16.gmra.mxu0 %v774
        %v1440 = vpop.f32.mrf.mxu0
        %v1441 = vadd.f32 %v879, %v1440
        %v1442 = vpop.f32.mrf.mxu0
        %1443 = vdwg.mxu0
        %1444 = vmatpush.bf16.msra.mxu0 %v1276
        %1445 = vmatpush.bf16.msra.mxu0 %v1264
        %1446 = vmatpush.bf16.msra.mxu0 %v1252
        %1447 = vmatpush.bf16.msra.mxu0 %v1240
        %1448 = vmatpush.bf16.msra.mxu0 %v1228
        %1449 = vmatpush.bf16.msra.mxu0 %v1216
        %1450 = vmatpush.bf16.msra.mxu0 %v1204
        %1451 = vmatpush.bf16.msra.mxu0 %v1192
        %1452 = vmatmul.bf16.gmra.mxu0 %v774
        %v1453 = vpop.f32.mrf.mxu0
        %v1454 = vadd.f32 %v880, %v1453
        %v1455 = vpop.f32.mrf.mxu0
        %1456 = vdwg.mxu0
        %1457 = vmatpush.bf16.msra.mxu0 %v1277
        %1458 = vmatpush.bf16.msra.mxu0 %v1265
        %1459 = vmatpush.bf16.msra.mxu0 %v1253
        %1460 = vmatpush.bf16.msra.mxu0 %v1241
        %1461 = vmatpush.bf16.msra.mxu0 %v1229
        %1462 = vmatpush.bf16.msra.mxu0 %v1217
        %1463 = vmatpush.bf16.msra.mxu0 %v1205
        %1464 = vmatpush.bf16.msra.mxu0 %v1193
        %1465 = vmatmul.bf16.gmra.mxu0 %v774
        %v1466 = vpop.f32.mrf.mxu0
        %v1467 = vadd.f32 %v881, %v1466
        %v1468 = vpop.f32.mrf.mxu0
        %1469 = vdwg.mxu0
        %1470 = vmatpush.bf16.msra.mxu0 %v1278
        %1471 = vmatpush.bf16.msra.mxu0 %v1266
        %1472 = vmatpush.bf16.msra.mxu0 %v1254
        %1473 = vmatpush.bf16.msra.mxu0 %v1242
        %1474 = vmatpush.bf16.msra.mxu0 %v1230
        %1475 = vmatpush.bf16.msra.mxu0 %v1218
        %1476 = vmatpush.bf16.msra.mxu0 %v1206
        %1477 = vmatpush.bf16.msra.mxu0 %v1194
        %1478 = vmatmul.bf16.gmra.mxu0 %v774
        %v1479 = vpop.f32.mrf.mxu0
        %v1480 = vadd.f32 %v882, %v1479
        %v1481 = vpop.f32.mrf.mxu0
        %1482 = vdwg.mxu0
        %1483 = vmatpush.bf16.msra.mxu0 %v1279
        %1484 = vmatpush.bf16.msra.mxu0 %v1267
        %1485 = vmatpush.bf16.msra.mxu0 %v1255
        %1486 = vmatpush.bf16.msra.mxu0 %v1243
        %1487 = vmatpush.bf16.msra.mxu0 %v1231
        %1488 = vmatpush.bf16.msra.mxu0 %v1219
        %1489 = vmatpush.bf16.msra.mxu0 %v1207
        %1490 = vmatpush.bf16.msra.mxu0 %v1195
        %1491 = vmatmul.bf16.gmra.mxu0 %v774
        %v1492 = vpop.f32.mrf.mxu0
        %v1493 = vadd.f32 %v883, %v1492
        %v1494 = vpop.f32.mrf.mxu0
        %1495 = vdwg.mxu0
        %1496 = vmatpush.bf16.msra.mxu0 %v1280
        %1497 = vmatpush.bf16.msra.mxu0 %v1268
        %1498 = vmatpush.bf16.msra.mxu0 %v1256
        %1499 = vmatpush.bf16.msra.mxu0 %v1244
        %1500 = vmatpush.bf16.msra.mxu0 %v1232
        %1501 = vmatpush.bf16.msra.mxu0 %v1220
        %1502 = vmatpush.bf16.msra.mxu0 %v1208
        %1503 = vmatpush.bf16.msra.mxu0 %v1196
        %1504 = vmatmul.bf16.gmra.mxu0 %v774
        %v1505 = vpop.f32.mrf.mxu0
        %v1506 = vadd.f32 %v884, %v1505
        %v1507 = vpop.f32.mrf.mxu0
        %1508 = vdwg.mxu0
        %1509 = vmatpush.bf16.msra.mxu0 %v1281
        %1510 = vmatpush.bf16.msra.mxu0 %v1269
        %1511 = vmatpush.bf16.msra.mxu0 %v1257
        %1512 = vmatpush.bf16.msra.mxu0 %v1245
        %1513 = vmatpush.bf16.msra.mxu0 %v1233
        %1514 = vmatpush.bf16.msra.mxu0 %v1221
        %1515 = vmatpush.bf16.msra.mxu0 %v1209
        %1516 = vmatpush.bf16.msra.mxu0 %v1197
        %1517 = vmatmul.bf16.gmra.mxu0 %v774
        %v1518 = vpop.f32.mrf.mxu0
        %v1519 = vadd.f32 %v885, %v1518
        %v1520 = vpop.f32.mrf.mxu0
        %1521 = vdwg.mxu0
        %1522 = vmatpush.bf16.msra.mxu0 %v1282
        %1523 = vmatpush.bf16.msra.mxu0 %v1270
        %1524 = vmatpush.bf16.msra.mxu0 %v1258
        %1525 = vmatpush.bf16.msra.mxu0 %v1246
        %1526 = vmatpush.bf16.msra.mxu0 %v1234
        %1527 = vmatpush.bf16.msra.mxu0 %v1222
        %1528 = vmatpush.bf16.msra.mxu0 %v1210
        %1529 = vmatpush.bf16.msra.mxu0 %v1198
        %1530 = vmatmul.bf16.gmra.mxu0 %v774
        %v1531 = vpop.f32.mrf.mxu0
        %v1532 = vadd.f32 %v886, %v1531
        %v1533 = vpop.f32.mrf.mxu0
        %1534 = vdwg.mxu0
        %v1535 = vpack.c.bf16 %v1402, %v1389
        %v1536 = vpack.c.bf16 %v1428, %v1415
        %v1537 = vpack.c.bf16 %v1454, %v1441
        %v1538 = vpack.c.bf16 %v1480, %v1467
        %v1539 = vpack.c.bf16 %v1506, %v1493
        %v1540 = vpack.c.bf16 %v1532, %v1519
        %vm1541 = vcmp.lt.s32.totalorder %v745, %v741
        %v1542 = vld [vmem:[#allocation11] sm:$0xf]
        %v1543 = vld [vmem:[#allocation11 + $0x4] sm:$0xf]
        %v1544 = vld [vmem:[#allocation11 + $0x8] sm:$0xf]
        %v1545 = vld [vmem:[#allocation11 + $0xc] sm:$0xf]
        %v1546 = vld [vmem:[#allocation11 + $0x10] sm:$0xf]
        %v1547 = vld [vmem:[#allocation11 + $0x14] sm:$0xf]
        %v1548 = vld [vmem:[#allocation11 + $0x18] sm:$0xf]
        %v1549 = vld [vmem:[#allocation11 + $0x1c] sm:$0xf]
        %v1550 = vld [vmem:[#allocation11 + $0x20] sm:$0xf]
        %v1551 = vld [vmem:[#allocation11 + $0x24] sm:$0xf]
        %v1552 = vld [vmem:[#allocation11 + $0x28] sm:$0xf]
        %v1553 = vld [vmem:[#allocation11 + $0x2c] sm:$0xf]
        %v1554 = vld [vmem:[#allocation11 + $0x30] sm:$0xf]
        %v1555 = vld [vmem:[#allocation11 + $0x34] sm:$0xf]
        %v1556 = vld [vmem:[#allocation11 + $0x38] sm:$0xf]
        %v1557 = vld [vmem:[#allocation11 + $0x3c] sm:$0xf]
        %v1558 = vld [vmem:[#allocation11 + $0x40] sm:$0xf]
        %v1559 = vld [vmem:[#allocation11 + $0x44] sm:$0xf]
        %v1560 = vld [vmem:[#allocation11 + $0x48] sm:$0xf]
        %v1561 = vld [vmem:[#allocation11 + $0x4c] sm:$0xf]
        %v1562 = vld [vmem:[#allocation11 + $0x50] sm:$0xf]
        %v1563 = vld [vmem:[#allocation11 + $0x54] sm:$0xf]
        %v1564 = vld [vmem:[#allocation11 + $0x58] sm:$0xf]
        %v1565 = vld [vmem:[#allocation11 + $0x5c] sm:$0xf]
        %v1566 = vld [vmem:[#allocation11 + $0x60] sm:$0xf]
        %v1567 = vld [vmem:[#allocation11 + $0x64] sm:$0xf]
        %v1568 = vld [vmem:[#allocation11 + $0x68] sm:$0xf]
        %v1569 = vld [vmem:[#allocation11 + $0x6c] sm:$0xf]
        %v1570 = vld [vmem:[#allocation11 + $0x70] sm:$0xf]
        %v1571 = vld [vmem:[#allocation11 + $0x74] sm:$0xf]
        %v1572 = vld [vmem:[#allocation11 + $0x78] sm:$0xf]
        %v1573 = vld [vmem:[#allocation11 + $0x7c] sm:$0xf]
        %v1574 = vld [vmem:[#allocation11 + $0x80] sm:$0xf]
        %v1575 = vld [vmem:[#allocation11 + $0x84] sm:$0xf]
        %v1576 = vld [vmem:[#allocation11 + $0x88] sm:$0xf]
        %v1577 = vld [vmem:[#allocation11 + $0x8c] sm:$0xf]
        %v1578 = vld [vmem:[#allocation11 + $0x90] sm:$0xf]
        %v1579 = vld [vmem:[#allocation11 + $0x94] sm:$0xf]
        %v1580 = vld [vmem:[#allocation11 + $0x98] sm:$0xf]
        %v1581 = vld [vmem:[#allocation11 + $0x9c] sm:$0xf]
        %v1582 = vld [vmem:[#allocation11 + $0xa0] sm:$0xf]
        %v1583 = vld [vmem:[#allocation11 + $0xa4] sm:$0xf]
        %v1584 = vld [vmem:[#allocation11 + $0xa8] sm:$0xf]
        %v1585 = vld [vmem:[#allocation11 + $0xac] sm:$0xf]
        %v1586 = vld [vmem:[#allocation11 + $0xb0] sm:$0xf]
        %v1587 = vld [vmem:[#allocation11 + $0xb4] sm:$0xf]
        %v1588 = vld [vmem:[#allocation11 + $0xb8] sm:$0xf]
        %v1589 = vld [vmem:[#allocation11 + $0xbc] sm:$0xf]
        %v1590 = vld [vmem:[#allocation11 + $0xc0] sm:$0xf]
        %v1591 = vld [vmem:[#allocation11 + $0xc4] sm:$0xf]
        %v1592 = vld [vmem:[#allocation11 + $0xc8] sm:$0xf]
        %v1593 = vld [vmem:[#allocation11 + $0xcc] sm:$0xf]
        %v1594 = vld [vmem:[#allocation11 + $0xd0] sm:$0xf]
        %v1595 = vld [vmem:[#allocation11 + $0xd4] sm:$0xf]
        %v1596 = vld [vmem:[#allocation11 + $0xd8] sm:$0xf]
        %v1597 = vld [vmem:[#allocation11 + $0xdc] sm:$0xf]
        %v1598 = vld [vmem:[#allocation11 + $0xe0] sm:$0xf]
        %v1599 = vld [vmem:[#allocation11 + $0xe4] sm:$0xf]
        %v1600 = vld [vmem:[#allocation11 + $0xe8] sm:$0xf]
        %v1601 = vld [vmem:[#allocation11 + $0xec] sm:$0xf]
        %v1602 = vld [vmem:[#allocation11 + $0xf0] sm:$0xf]
        %v1603 = vld [vmem:[#allocation11 + $0xf4] sm:$0xf]
        %v1604 = vld [vmem:[#allocation11 + $0xf8] sm:$0xf]
        %v1605 = vld [vmem:[#allocation11 + $0xfc] sm:$0xf]
        %1606 = vmatpush.bf16.xpose.msra.mxu0 0
        %1607 = vmatpush.bf16.xpose.msra.mxu0 0
        %1608 = vmatpush.bf16.xpose.msra.mxu0 0
        %1609 = vmatpush.bf16.xpose.msra.mxu0 0
        %1610 = vmatpush.bf16.xpose.msra.mxu0 0
        %1611 = vmatpush.bf16.xpose.msra.mxu0 0
        %1612 = vmatpush.bf16.xpose.msra.mxu0 0
        %1613 = vmatpush.bf16.xpose.msra.mxu0 %v1537
        %1614 = vmatmul.bf16.gmra.mxu0 %v1535
        %v1615 = vpop.f32.mrf.mxu0
        %v1616 = vadd.f32 0.0, %v1615
        %v1617 = vpop.f32.mrf.mxu0
        %1618 = vdwg.mxu0
        %v1619 = vsel %vm1541, -1e+30, %v1616
        %vm1620 = vcmask 64512
        %v1621 = vsel %vm1620, %v1619, -inf
        %1622 = vmax.xlane.f32.xlu0 %v1621
        %v1623 = vpop.xlane.xlu0 %1622
        %v1624 = vsub.f32 %v1619, %v1623
        %v1625 = vmul.f32 %v1624, 1.442695
        %v1626 = vpow.pop %v1625
        %v1627 = vsel %vm1620, %v1626, 0.0
        %1628 = vadd.xlane.f32.xlu0 %v1627
        %v1629 = vpop.xlane.xlu0 %1628
        %v1630 = vrcp.pop %v1629
        %v1631 = vmul.f32 %v1626, %v1630
        %v1632 = vpack.c.bf16 %v1631, %v1631
        %v1634 = vsel %vm1620, %v1632, 0
        %vm1636 = vcmask 1043456
        %v1638 = vsel %vm1636, %v1539, 0
        %1640 = vmatpush.bf16.msra.mxu0 0
        %1641 = vmatpush.bf16.msra.mxu0 0
        %1642 = vmatpush.bf16.msra.mxu0 0
        %1643 = vmatpush.bf16.msra.mxu0 0
        %1644 = vmatpush.bf16.msra.mxu0 0
        %1645 = vmatpush.bf16.msra.mxu0 0
        %1646 = vmatpush.bf16.msra.mxu0 0
        %1647 = vmatpush.bf16.msra.mxu0 %v1638
        %1648 = vmatmul.bf16.gmra.mxu0 %v1634
        %v1649 = vpop.f32.mrf.mxu0
        %v1650 = vadd.f32 0.0, %v1649
        %v1651 = vpop.f32.mrf.mxu0
        %1652 = vdwg.mxu0
        %v1653 = vpack.c.bf16 %v1650, %v1650
        %v1655 = vrot.slane %v1535, 4
        %v1658 = vrot.slane %v1537, 4
        %v1661 = vrot.slane %v1539, 4
        %1662 = vmatpush.bf16.xpose.msra.mxu0 0
        %1663 = vmatpush.bf16.xpose.msra.mxu0 0
        %1664 = vmatpush.bf16.xpose.msra.mxu0 0
        %1665 = vmatpush.bf16.xpose.msra.mxu0 0
        %1666 = vmatpush.bf16.xpose.msra.mxu0 0
        %1667 = vmatpush.bf16.xpose.msra.mxu0 0
        %1668 = vmatpush.bf16.xpose.msra.mxu0 0
        %1669 = vmatpush.bf16.xpose.msra.mxu0 %v1658
        %1670 = vmatmul.bf16.gmra.mxu0 %v1655
        %v1671 = vpop.f32.mrf.mxu0
        %v1672 = vadd.f32 0.0, %v1671
        %v1673 = vpop.f32.mrf.mxu0
        %1674 = vdwg.mxu0
        %v1675 = vsel %vm1541, -1e+30, %v1672
        %v1676 = vsel %vm1620, %v1675, -inf
        %1677 = vmax.xlane.f32.xlu0 %v1676
        %v1678 = vpop.xlane.xlu0 %1677
        %v1679 = vsub.f32 %v1675, %v1678
        %v1680 = vmul.f32 %v1679, 1.442695
        %v1681 = vpow.pop %v1680
        %v1682 = vsel %vm1620, %v1681, 0.0
        %1683 = vadd.xlane.f32.xlu0 %v1682
        %v1684 = vpop.xlane.xlu0 %1683
        %v1685 = vrcp.pop %v1684
        %v1686 = vmul.f32 %v1681, %v1685
        %v1687 = vpack.c.bf16 %v1686, %v1686
        %v1689 = vsel %vm1620, %v1687, 0
        %v1692 = vsel %vm1636, %v1661, 0
        %1694 = vmatpush.bf16.msra.mxu0 0
        %1695 = vmatpush.bf16.msra.mxu0 0
        %1696 = vmatpush.bf16.msra.mxu0 0
        %1697 = vmatpush.bf16.msra.mxu0 0
        %1698 = vmatpush.bf16.msra.mxu0 0
        %1699 = vmatpush.bf16.msra.mxu0 0
        %1700 = vmatpush.bf16.msra.mxu0 0
        %1701 = vmatpush.bf16.msra.mxu0 %v1692
        %1702 = vmatmul.bf16.gmra.mxu0 %v1689
        %v1703 = vpop.f32.mrf.mxu0
        %v1704 = vadd.f32 0.0, %v1703
        %v1705 = vpop.f32.mrf.mxu0
        %1706 = vdwg.mxu0
        %v1707 = vpack.c.bf16 %v1704, %v1704
        %v1724 = vunpack.c.l.b16 %v1558
        %v1725 = vunpack.c.l.b16 %v1559
        %v1726 = vunpack.c.l.b16 %v1560
        %v1727 = vunpack.c.l.b16 %v1561
        %v1728 = vunpack.c.l.b16 %v1562
        %v1729 = vunpack.c.l.b16 %v1563
        %v1730 = vunpack.c.l.b16 %v1564
        %v1731 = vunpack.c.l.b16 %v1565
        %v1732 = vunpack.c.l.b16 %v1566
        %v1733 = vunpack.c.l.b16 %v1567
        %v1734 = vunpack.c.l.b16 %v1568
        %v1735 = vunpack.c.l.b16 %v1569
        %v1736 = vunpack.c.l.b16 %v1570
        %v1737 = vunpack.c.l.b16 %v1571
        %v1738 = vunpack.c.l.b16 %v1572
        %v1739 = vunpack.c.l.b16 %v1573
        %v1740 = vpack.c.b16 %v1725, %v1724
        %v1741 = vpack.c.b16 %v1727, %v1726
        %v1742 = vpack.c.b16 %v1729, %v1728
        %v1743 = vpack.c.b16 %v1731, %v1730
        %v1744 = vpack.c.b16 %v1733, %v1732
        %v1745 = vpack.c.b16 %v1735, %v1734
        %v1746 = vpack.c.b16 %v1737, %v1736
        %v1747 = vpack.c.b16 %v1739, %v1738
        %1756 = vmatpush.bf16.msra.mxu0 %v1747
        %1757 = vmatpush.bf16.msra.mxu0 %v1746
        %1758 = vmatpush.bf16.msra.mxu0 %v1745
        %1759 = vmatpush.bf16.msra.mxu0 %v1744
        %1760 = vmatpush.bf16.msra.mxu0 %v1743
        %1761 = vmatpush.bf16.msra.mxu0 %v1742
        %1762 = vmatpush.bf16.msra.mxu0 %v1741
        %1763 = vmatpush.bf16.msra.mxu0 %v1740
        %1764 = vmatmul.bf16.gmra.mxu0 %v1707
        %v1765 = vpop.f32.mrf.mxu0
        %v1766 = vadd.f32 0.0, %v1765
        %v1767 = vpop.f32.mrf.mxu0
        %1768 = vdwg.mxu0
        %v1785 = vunpack.c.l.b16 %v1542
        %v1786 = vunpack.c.l.b16 %v1543
        %v1787 = vunpack.c.l.b16 %v1544
        %v1788 = vunpack.c.l.b16 %v1545
        %v1789 = vunpack.c.l.b16 %v1546
        %v1790 = vunpack.c.l.b16 %v1547
        %v1791 = vunpack.c.l.b16 %v1548
        %v1792 = vunpack.c.l.b16 %v1549
        %v1793 = vunpack.c.l.b16 %v1550
        %v1794 = vunpack.c.l.b16 %v1551
        %v1795 = vunpack.c.l.b16 %v1552
        %v1796 = vunpack.c.l.b16 %v1553
        %v1797 = vunpack.c.l.b16 %v1554
        %v1798 = vunpack.c.l.b16 %v1555
        %v1799 = vunpack.c.l.b16 %v1556
        %v1800 = vunpack.c.l.b16 %v1557
        %v1801 = vpack.c.b16 %v1786, %v1785
        %v1802 = vpack.c.b16 %v1788, %v1787
        %v1803 = vpack.c.b16 %v1790, %v1789
        %v1804 = vpack.c.b16 %v1792, %v1791
        %v1805 = vpack.c.b16 %v1794, %v1793
        %v1806 = vpack.c.b16 %v1796, %v1795
        %v1807 = vpack.c.b16 %v1798, %v1797
        %v1808 = vpack.c.b16 %v1800, %v1799
        %1817 = vmatpush.bf16.msra.mxu0 %v1808
        %1818 = vmatpush.bf16.msra.mxu0 %v1807
        %1819 = vmatpush.bf16.msra.mxu0 %v1806
        %1820 = vmatpush.bf16.msra.mxu0 %v1805
        %1821 = vmatpush.bf16.msra.mxu0 %v1804
        %1822 = vmatpush.bf16.msra.mxu0 %v1803
        %1823 = vmatpush.bf16.msra.mxu0 %v1802
        %1824 = vmatpush.bf16.msra.mxu0 %v1801
        %1825 = vmatmul.bf16.gmra.mxu0 %v1653
        %v1826 = vpop.f32.mrf.mxu0
        %v1827 = vadd.f32 %v1766, %v1826
        %v1828 = vpop.f32.mrf.mxu0
        %1829 = vdwg.mxu0
        %1830 = vmatpush.bf16.xpose.msra.mxu0 0
        %1831 = vmatpush.bf16.xpose.msra.mxu0 0
        %1832 = vmatpush.bf16.xpose.msra.mxu0 0
        %1833 = vmatpush.bf16.xpose.msra.mxu0 0
        %1834 = vmatpush.bf16.xpose.msra.mxu0 0
        %1835 = vmatpush.bf16.xpose.msra.mxu0 0
        %1836 = vmatpush.bf16.xpose.msra.mxu0 0
        %1837 = vmatpush.bf16.xpose.msra.mxu0 %v1538
        %1838 = vmatmul.bf16.gmra.mxu0 %v1536
        %v1839 = vpop.f32.mrf.mxu0
        %v1840 = vadd.f32 0.0, %v1839
        %v1841 = vpop.f32.mrf.mxu0
        %1842 = vdwg.mxu0
        %v1843 = vsel %vm1541, -1e+30, %v1840
        %v1844 = vsel %vm1620, %v1843, -inf
        %1845 = vmax.xlane.f32.xlu0 %v1844
        %v1846 = vpop.xlane.xlu0 %1845
        %v1847 = vsub.f32 %v1843, %v1846
        %v1848 = vmul.f32 %v1847, 1.442695
        %v1849 = vpow.pop %v1848
        %v1850 = vsel %vm1620, %v1849, 0.0
        %1851 = vadd.xlane.f32.xlu0 %v1850
        %v1852 = vpop.xlane.xlu0 %1851
        %v1853 = vrcp.pop %v1852
        %v1854 = vmul.f32 %v1849, %v1853
        %v1855 = vpack.c.bf16 %v1854, %v1854
        %v1857 = vsel %vm1620, %v1855, 0
        %v1860 = vsel %vm1636, %v1540, 0
        %1862 = vmatpush.bf16.msra.mxu0 0
        %1863 = vmatpush.bf16.msra.mxu0 0
        %1864 = vmatpush.bf16.msra.mxu0 0
        %1865 = vmatpush.bf16.msra.mxu0 0
        %1866 = vmatpush.bf16.msra.mxu0 0
        %1867 = vmatpush.bf16.msra.mxu0 0
        %1868 = vmatpush.bf16.msra.mxu0 0
        %1869 = vmatpush.bf16.msra.mxu0 %v1860
        %1870 = vmatmul.bf16.gmra.mxu0 %v1857
        %v1871 = vpop.f32.mrf.mxu0
        %v1872 = vadd.f32 0.0, %v1871
        %v1873 = vpop.f32.mrf.mxu0
        %1874 = vdwg.mxu0
        %v1875 = vpack.c.bf16 %v1872, %v1872
        %v1892 = vunpack.c.l.b16 %v1574
        %v1893 = vunpack.c.l.b16 %v1575
        %v1894 = vunpack.c.l.b16 %v1576
        %v1895 = vunpack.c.l.b16 %v1577
        %v1896 = vunpack.c.l.b16 %v1578
        %v1897 = vunpack.c.l.b16 %v1579
        %v1898 = vunpack.c.l.b16 %v1580
        %v1899 = vunpack.c.l.b16 %v1581
        %v1900 = vunpack.c.l.b16 %v1582
        %v1901 = vunpack.c.l.b16 %v1583
        %v1902 = vunpack.c.l.b16 %v1584
        %v1903 = vunpack.c.l.b16 %v1585
        %v1904 = vunpack.c.l.b16 %v1586
        %v1905 = vunpack.c.l.b16 %v1587
        %v1906 = vunpack.c.l.b16 %v1588
        %v1907 = vunpack.c.l.b16 %v1589
        %v1908 = vpack.c.b16 %v1893, %v1892
        %v1909 = vpack.c.b16 %v1895, %v1894
        %v1910 = vpack.c.b16 %v1897, %v1896
        %v1911 = vpack.c.b16 %v1899, %v1898
        %v1912 = vpack.c.b16 %v1901, %v1900
        %v1913 = vpack.c.b16 %v1903, %v1902
        %v1914 = vpack.c.b16 %v1905, %v1904
        %v1915 = vpack.c.b16 %v1907, %v1906
        %1924 = vmatpush.bf16.msra.mxu0 %v1915
        %1925 = vmatpush.bf16.msra.mxu0 %v1914
        %1926 = vmatpush.bf16.msra.mxu0 %v1913
        %1927 = vmatpush.bf16.msra.mxu0 %v1912
        %1928 = vmatpush.bf16.msra.mxu0 %v1911
        %1929 = vmatpush.bf16.msra.mxu0 %v1910
        %1930 = vmatpush.bf16.msra.mxu0 %v1909
        %1931 = vmatpush.bf16.msra.mxu0 %v1908
        %1932 = vmatmul.bf16.gmra.mxu0 %v1875
        %v1933 = vpop.f32.mrf.mxu0
        %v1934 = vadd.f32 0.0, %v1933
        %v1935 = vpop.f32.mrf.mxu0
        %1936 = vdwg.mxu0
        %v1937 = vadd.f32 %v1827, %v1934
        %v1939 = vrot.slane %v1536, 4
        %v1942 = vrot.slane %v1538, 4
        %v1945 = vrot.slane %v1540, 4
        %1946 = vmatpush.bf16.xpose.msra.mxu0 0
        %1947 = vmatpush.bf16.xpose.msra.mxu0 0
        %1948 = vmatpush.bf16.xpose.msra.mxu0 0
        %1949 = vmatpush.bf16.xpose.msra.mxu0 0
        %1950 = vmatpush.bf16.xpose.msra.mxu0 0
        %1951 = vmatpush.bf16.xpose.msra.mxu0 0
        %1952 = vmatpush.bf16.xpose.msra.mxu0 0
        %1953 = vmatpush.bf16.xpose.msra.mxu0 %v1942
        %1954 = vmatmul.bf16.gmra.mxu0 %v1939
        %v1955 = vpop.f32.mrf.mxu0
        %v1956 = vadd.f32 0.0, %v1955
        %v1957 = vpop.f32.mrf.mxu0
        %1958 = vdwg.mxu0
        %v1959 = vsel %vm1541, -1e+30, %v1956
        %v1960 = vsel %vm1620, %v1959, -inf
        %1961 = vmax.xlane.f32.xlu0 %v1960
        %v1962 = vpop.xlane.xlu0 %1961
        %v1963 = vsub.f32 %v1959, %v1962
        %v1964 = vmul.f32 %v1963, 1.442695
        %v1965 = vpow.pop %v1964
        %v1966 = vsel %vm1620, %v1965, 0.0
        %1967 = vadd.xlane.f32.xlu0 %v1966
        %v1968 = vpop.xlane.xlu0 %1967
        %v1969 = vrcp.pop %v1968
        %v1970 = vmul.f32 %v1965, %v1969
        %v1971 = vpack.c.bf16 %v1970, %v1970
        %v1973 = vsel %vm1620, %v1971, 0
        %v1976 = vsel %vm1636, %v1945, 0
        %1978 = vmatpush.bf16.msra.mxu0 0
        %1979 = vmatpush.bf16.msra.mxu0 0
        %1980 = vmatpush.bf16.msra.mxu0 0
        %1981 = vmatpush.bf16.msra.mxu0 0
        %1982 = vmatpush.bf16.msra.mxu0 0
        %1983 = vmatpush.bf16.msra.mxu0 0
        %1984 = vmatpush.bf16.msra.mxu0 0
        %1985 = vmatpush.bf16.msra.mxu0 %v1976
        %1986 = vmatmul.bf16.gmra.mxu0 %v1973
        %v1987 = vpop.f32.mrf.mxu0
        %v1988 = vadd.f32 0.0, %v1987
        %v1989 = vpop.f32.mrf.mxu0
        %1990 = vdwg.mxu0
        %v1991 = vpack.c.bf16 %v1988, %v1988
        %v2008 = vunpack.c.l.b16 %v1590
        %v2009 = vunpack.c.l.b16 %v1591
        %v2010 = vunpack.c.l.b16 %v1592
        %v2011 = vunpack.c.l.b16 %v1593
        %v2012 = vunpack.c.l.b16 %v1594
        %v2013 = vunpack.c.l.b16 %v1595
        %v2014 = vunpack.c.l.b16 %v1596
        %v2015 = vunpack.c.l.b16 %v1597
        %v2016 = vunpack.c.l.b16 %v1598
        %v2017 = vunpack.c.l.b16 %v1599
        %v2018 = vunpack.c.l.b16 %v1600
        %v2019 = vunpack.c.l.b16 %v1601
        %v2020 = vunpack.c.l.b16 %v1602
        %v2021 = vunpack.c.l.b16 %v1603
        %v2022 = vunpack.c.l.b16 %v1604
        %v2023 = vunpack.c.l.b16 %v1605
        %v2024 = vpack.c.b16 %v2009, %v2008
        %v2025 = vpack.c.b16 %v2011, %v2010
        %v2026 = vpack.c.b16 %v2013, %v2012
        %v2027 = vpack.c.b16 %v2015, %v2014
        %v2028 = vpack.c.b16 %v2017, %v2016
        %v2029 = vpack.c.b16 %v2019, %v2018
        %v2030 = vpack.c.b16 %v2021, %v2020
        %v2031 = vpack.c.b16 %v2023, %v2022
        %2040 = vmatpush.bf16.msra.mxu0 %v2031
        %2041 = vmatpush.bf16.msra.mxu0 %v2030
        %2042 = vmatpush.bf16.msra.mxu0 %v2029
        %2043 = vmatpush.bf16.msra.mxu0 %v2028
        %2044 = vmatpush.bf16.msra.mxu0 %v2027
        %2045 = vmatpush.bf16.msra.mxu0 %v2026
        %2046 = vmatpush.bf16.msra.mxu0 %v2025
        %2047 = vmatpush.bf16.msra.mxu0 %v2024
        %2048 = vmatmul.bf16.gmra.mxu0 %v1991
        %v2049 = vpop.f32.mrf.mxu0
        %v2050 = vadd.f32 0.0, %v2049
        %v2051 = vpop.f32.mrf.mxu0
        %2052 = vdwg.mxu0
        %v2053 = vadd.f32 %v1937, %v2050
        %v2054 = vld [vmem:[%s6] sm:$0x1]
        %v2055 = vperm.slane %v2054, 0
        %v2056 = vadd.f32 %v2053, %v2055
        %v2057 = vadd.f32 %v2056, %v739
        %v2058 = vld [vmem:[%s7] sm:$0x1]
        %v2059 = vld [vmem:[%s8] sm:$0x1]
        %2060 = vadd.xlane.f32.xlu0 %v2057
        %v2061 = vpop.xlane.xlu0 %2060
        %v2062 = vmul.f32 %v2061, 0.03125
        %v2063 = vmul.f32 %v2057, %v2057
        %2064 = vadd.xlane.f32.xlu0 %v2063
        %v2065 = vpop.xlane.xlu0 %2064
        %v2066 = vmul.f32 %v2065, 0.03125
        %v2067 = vmul.f32 %v2062, %v2062
        %v2068 = vsub.f32 %v2066, %v2067
        %v2069 = vsub.f32 %v2057, %v2062
        %v2070 = vadd.f32 %v2068, 1e-05
        %v2071 = vrsqrt.pop %v2070
        %v2072 = vmul.f32 %v2071, %v2070
        %v2073 = vmul.f32 %v2072, %v2071
        %v2074 = vmul.f32 0.5, %v2073
        %v2075 = vsub.f32 1.5, %v2074
        %v2076 = vmul.f32 %v2071, %v2075
        %vm2077 = vweird.f32 %v2070
        %vm2078 = vweird.f32 %v2071
        %vm2079 = vmor %vm2077, %vm2078
        %v2080 = vsel %vm2079, %v2071, %v2076
        %v2081 = vmul.f32 %v2069, %v2080
        %v2082 = vperm.slane %v2058, 0
        %v2083 = vmul.f32 %v2081, %v2082
        %v2084 = vperm.slane %v2059, 0
        %v2085 = vadd.f32 %v2083, %v2084
        %v2086 = vpack.c.bf16 %v2085, %v2085
        %v2087 = vld [vmem:[#allocation13] sm:$0xff]
        %v2088 = vld [vmem:[#allocation13 + $0x8] sm:$0xf]
        %v2089 = vld [vmem:[#allocation13 + $0xc] sm:$0xff]
        %v2090 = vld [vmem:[#allocation13 + $0x14] sm:$0xf]
        %v2091 = vld [vmem:[#allocation13 + $0x18] sm:$0xff]
        %v2092 = vld [vmem:[#allocation13 + $0x20] sm:$0xf]
        %v2093 = vld [vmem:[#allocation13 + $0x24] sm:$0xff]
        %v2094 = vld [vmem:[#allocation13 + $0x2c] sm:$0xf]
        %v2095 = vld [vmem:[#allocation13 + $0x30] sm:$0xff]
        %v2096 = vld [vmem:[#allocation13 + $0x38] sm:$0xf]
        %v2097 = vld [vmem:[#allocation13 + $0x3c] sm:$0xff]
        %v2098 = vld [vmem:[#allocation13 + $0x44] sm:$0xf]
        %v2099 = vld [vmem:[#allocation13 + $0x48] sm:$0xff]
        %v2100 = vld [vmem:[#allocation13 + $0x50] sm:$0xf]
        %v2101 = vld [vmem:[#allocation13 + $0x54] sm:$0xff]
        %v2102 = vld [vmem:[#allocation13 + $0x5c] sm:$0xf]
        %v2103 = vld [vmem:[#allocation13 + $0x60] sm:$0xff]
        %v2104 = vld [vmem:[#allocation13 + $0x68] sm:$0xf]
        %v2105 = vld [vmem:[#allocation13 + $0x6c] sm:$0xff]
        %v2106 = vld [vmem:[#allocation13 + $0x74] sm:$0xf]
        %v2107 = vld [vmem:[#allocation13 + $0x78] sm:$0xff]
        %v2108 = vld [vmem:[#allocation13 + $0x80] sm:$0xf]
        %v2109 = vld [vmem:[#allocation13 + $0x84] sm:$0xff]
        %v2110 = vld [vmem:[#allocation13 + $0x8c] sm:$0xf]
        %v2111 = vld [vmem:[#allocation13 + $0x90] sm:$0xff]
        %v2112 = vld [vmem:[#allocation13 + $0x98] sm:$0xf]
        %v2113 = vld [vmem:[#allocation13 + $0x9c] sm:$0xff]
        %v2114 = vld [vmem:[#allocation13 + $0xa4] sm:$0xf]
        %v2115 = vld [vmem:[#allocation13 + $0xa8] sm:$0xff]
        %v2116 = vld [vmem:[#allocation13 + $0xb0] sm:$0xf]
        %v2117 = vld [vmem:[#allocation13 + $0xb4] sm:$0xff]
        %v2118 = vld [vmem:[#allocation13 + $0xbc] sm:$0xf]
        %v2119 = vld [vmem:[%s10] sm:$0x1]
        %v2152 = vunpack.c.l.b16 %v2087
        %v2153 = vunpack.c.h.b16 %v2087
        %v2154 = vunpack.c.l.b16 %v2088
        %v2155 = vunpack.c.l.b16 %v2089
        %v2156 = vunpack.c.h.b16 %v2089
        %v2157 = vunpack.c.l.b16 %v2090
        %v2158 = vunpack.c.l.b16 %v2091
        %v2159 = vunpack.c.h.b16 %v2091
        %v2160 = vunpack.c.l.b16 %v2092
        %v2161 = vunpack.c.l.b16 %v2093
        %v2162 = vunpack.c.h.b16 %v2093
        %v2163 = vunpack.c.l.b16 %v2094
        %v2164 = vunpack.c.l.b16 %v2095
        %v2165 = vunpack.c.h.b16 %v2095
        %v2166 = vunpack.c.l.b16 %v2096
        %v2167 = vunpack.c.l.b16 %v2097
        %v2168 = vunpack.c.h.b16 %v2097
        %v2169 = vunpack.c.l.b16 %v2098
        %v2170 = vunpack.c.l.b16 %v2099
        %v2171 = vunpack.c.h.b16 %v2099
        %v2172 = vunpack.c.l.b16 %v2100
        %v2173 = vunpack.c.l.b16 %v2101
        %v2174 = vunpack.c.h.b16 %v2101
        %v2175 = vunpack.c.l.b16 %v2102
        %v2176 = vunpack.c.l.b16 %v2103
        %v2177 = vunpack.c.h.b16 %v2103
        %v2178 = vunpack.c.l.b16 %v2104
        %v2179 = vunpack.c.l.b16 %v2105
        %v2180 = vunpack.c.h.b16 %v2105
        %v2181 = vunpack.c.l.b16 %v2106
        %v2182 = vunpack.c.l.b16 %v2107
        %v2183 = vunpack.c.h.b16 %v2107
        %v2184 = vunpack.c.l.b16 %v2108
        %v2185 = vunpack.c.l.b16 %v2109
        %v2186 = vunpack.c.h.b16 %v2109
        %v2187 = vunpack.c.l.b16 %v2110
        %v2188 = vunpack.c.l.b16 %v2111
        %v2189 = vunpack.c.h.b16 %v2111
        %v2190 = vunpack.c.l.b16 %v2112
        %v2191 = vunpack.c.l.b16 %v2113
        %v2192 = vunpack.c.h.b16 %v2113
        %v2193 = vunpack.c.l.b16 %v2114
        %v2194 = vunpack.c.l.b16 %v2115
        %v2195 = vunpack.c.h.b16 %v2115
        %v2196 = vunpack.c.l.b16 %v2116
        %v2197 = vunpack.c.l.b16 %v2117
        %v2198 = vunpack.c.h.b16 %v2117
        %v2199 = vunpack.c.l.b16 %v2118
        %v2200 = vpack.c.b16 %v2155, %v2152
        %v2201 = vpack.c.b16 %v2156, %v2153
        %v2202 = vpack.c.b16 %v2157, %v2154
        %v2203 = vpack.c.b16 %v2161, %v2158
        %v2204 = vpack.c.b16 %v2162, %v2159
        %v2205 = vpack.c.b16 %v2163, %v2160
        %v2206 = vpack.c.b16 %v2167, %v2164
        %v2207 = vpack.c.b16 %v2168, %v2165
        %v2208 = vpack.c.b16 %v2169, %v2166
        %v2209 = vpack.c.b16 %v2173, %v2170
        %v2210 = vpack.c.b16 %v2174, %v2171
        %v2211 = vpack.c.b16 %v2175, %v2172
        %v2212 = vpack.c.b16 %v2179, %v2176
        %v2213 = vpack.c.b16 %v2180, %v2177
        %v2214 = vpack.c.b16 %v2181, %v2178
        %v2215 = vpack.c.b16 %v2185, %v2182
        %v2216 = vpack.c.b16 %v2186, %v2183
        %v2217 = vpack.c.b16 %v2187, %v2184
        %v2218 = vpack.c.b16 %v2191, %v2188
        %v2219 = vpack.c.b16 %v2192, %v2189
        %v2220 = vpack.c.b16 %v2193, %v2190
        %v2221 = vpack.c.b16 %v2197, %v2194
        %v2222 = vpack.c.b16 %v2198, %v2195
        %v2223 = vpack.c.b16 %v2199, %v2196
        %2248 = vmatpush.bf16.msra.mxu0 %v2221
        %2249 = vmatpush.bf16.msra.mxu0 %v2218
        %2250 = vmatpush.bf16.msra.mxu0 %v2215
        %2251 = vmatpush.bf16.msra.mxu0 %v2212
        %2252 = vmatpush.bf16.msra.mxu0 %v2209
        %2253 = vmatpush.bf16.msra.mxu0 %v2206
        %2254 = vmatpush.bf16.msra.mxu0 %v2203
        %2255 = vmatpush.bf16.msra.mxu0 %v2200
        %2256 = vmatmul.bf16.gmra.mxu0 %v2086
        %v2257 = vpop.f32.mrf.mxu0
        %v2258 = vadd.f32 0.0, %v2257
        %v2259 = vpop.f32.mrf.mxu0
        %2260 = vdwg.mxu0
        %2261 = vmatpush.bf16.msra.mxu0 %v2222
        %2262 = vmatpush.bf16.msra.mxu0 %v2219
        %2263 = vmatpush.bf16.msra.mxu0 %v2216
        %2264 = vmatpush.bf16.msra.mxu0 %v2213
        %2265 = vmatpush.bf16.msra.mxu0 %v2210
        %2266 = vmatpush.bf16.msra.mxu0 %v2207
        %2267 = vmatpush.bf16.msra.mxu0 %v2204
        %2268 = vmatpush.bf16.msra.mxu0 %v2201
        %2269 = vmatmul.bf16.gmra.mxu0 %v2086
        %v2270 = vpop.f32.mrf.mxu0
        %v2271 = vadd.f32 0.0, %v2270
        %v2272 = vpop.f32.mrf.mxu0
        %2273 = vdwg.mxu0
        %2274 = vmatpush.bf16.msra.mxu0 %v2223
        %2275 = vmatpush.bf16.msra.mxu0 %v2220
        %2276 = vmatpush.bf16.msra.mxu0 %v2217
        %2277 = vmatpush.bf16.msra.mxu0 %v2214
        %2278 = vmatpush.bf16.msra.mxu0 %v2211
        %2279 = vmatpush.bf16.msra.mxu0 %v2208
        %2280 = vmatpush.bf16.msra.mxu0 %v2205
        %2281 = vmatpush.bf16.msra.mxu0 %v2202
        %2282 = vmatmul.bf16.gmra.mxu0 %v2086
        %v2283 = vpop.f32.mrf.mxu0
        %v2284 = vadd.f32 0.0, %v2283
        %v2285 = vpop.f32.mrf.mxu0
        %2286 = vdwg.mxu0
        %v2287 = vrot.slane %v2258, 7
        %v2288 = vsel %vm742, 1, 0
        %vm2289 = vcmp.eq.s32.totalorder %v2288, 1
        %v2290 = vsel %vm2289, %v2287, 0.0
        %v2291 = vrot.slane %v2284, 1
        %v2292 = vsel %vm743, 1, 0
        %vm2293 = vcmp.eq.s32.totalorder %v2292, 1
        %v2294 = vsel %vm2293, %v2291, 0.0
        %v2295 = vadd.f32 %v2290, %v2271
        %v2296 = vadd.f32 %v2295, %v2294
        %v2297 = vperm.slane %v2119, 0
        %v2298 = vadd.f32 %v2296, %v2297
        %v2299 = vmul.f32 %v2298, 0.5
        %v2300 = vmul.f32 %v2298, 0.044715
        %v2301 = vmul.f32 %v2300, %v2298
        %v2302 = vmul.f32 %v2301, %v2298
        %v2303 = vadd.f32 %v2298, %v2302
        %v2304 = vmul.f32 %v2303, 0.7978846
        %v2305 = vtanh.pop %v2304
        %v2306 = vadd.f32 %v2305, 1.0
        %v2307 = vmul.f32 %v2299, %v2306
        %v2308 = vpack.c.bf16 %v2307, %v2307
        %v2309 = vld [vmem:[#allocation14] sm:$0xff]
        %v2310 = vld [vmem:[#allocation14 + $0x8] sm:$0xf]
        %v2311 = vld [vmem:[#allocation14 + $0xc] sm:$0xff]
        %v2312 = vld [vmem:[#allocation14 + $0x14] sm:$0xf]
        %v2313 = vld [vmem:[#allocation14 + $0x18] sm:$0xff]
        %v2314 = vld [vmem:[#allocation14 + $0x20] sm:$0xf]
        %v2315 = vld [vmem:[#allocation14 + $0x24] sm:$0xff]
        %v2316 = vld [vmem:[#allocation14 + $0x2c] sm:$0xf]
        %v2317 = vld [vmem:[#allocation14 + $0x30] sm:$0xff]
        %v2318 = vld [vmem:[#allocation14 + $0x38] sm:$0xf]
        %v2319 = vld [vmem:[#allocation14 + $0x3c] sm:$0xff]
        %v2320 = vld [vmem:[#allocation14 + $0x44] sm:$0xf]
        %v2321 = vld [vmem:[#allocation14 + $0x48] sm:$0xff]
        %v2322 = vld [vmem:[#allocation14 + $0x50] sm:$0xf]
        %v2323 = vld [vmem:[#allocation14 + $0x54] sm:$0xff]
        %v2324 = vld [vmem:[#allocation14 + $0x5c] sm:$0xf]
        %v2325 = vld [vmem:[#allocation14 + $0x60] sm:$0xff]
        %v2326 = vld [vmem:[#allocation14 + $0x68] sm:$0xf]
        %v2327 = vld [vmem:[#allocation14 + $0x6c] sm:$0xff]
        %v2328 = vld [vmem:[#allocation14 + $0x74] sm:$0xf]
        %v2329 = vld [vmem:[#allocation14 + $0x78] sm:$0xff]
        %v2330 = vld [vmem:[#allocation14 + $0x80] sm:$0xf]
        %v2331 = vld [vmem:[#allocation14 + $0x84] sm:$0xff]
        %v2332 = vld [vmem:[#allocation14 + $0x8c] sm:$0xf]
        %v2333 = vld [vmem:[#allocation14 + $0x90] sm:$0xff]
        %v2334 = vld [vmem:[#allocation14 + $0x98] sm:$0xf]
        %v2335 = vld [vmem:[#allocation14 + $0x9c] sm:$0xff]
        %v2336 = vld [vmem:[#allocation14 + $0xa4] sm:$0xf]
        %v2337 = vld [vmem:[#allocation14 + $0xa8] sm:$0xff]
        %v2338 = vld [vmem:[#allocation14 + $0xb0] sm:$0xf]
        %v2339 = vld [vmem:[#allocation14 + $0xb4] sm:$0xff]
        %v2340 = vld [vmem:[#allocation14 + $0xbc] sm:$0xf]
        %v2341 = vld [vmem:[%s12] sm:$0x1]
        %v2374 = vunpack.c.l.b16 %v2309
        %v2375 = vunpack.c.h.b16 %v2309
        %v2376 = vunpack.c.l.b16 %v2310
        %v2377 = vunpack.c.l.b16 %v2311
        %v2378 = vunpack.c.h.b16 %v2311
        %v2379 = vunpack.c.l.b16 %v2312
        %v2380 = vunpack.c.l.b16 %v2313
        %v2381 = vunpack.c.h.b16 %v2313
        %v2382 = vunpack.c.l.b16 %v2314
        %v2383 = vunpack.c.l.b16 %v2315
        %v2384 = vunpack.c.h.b16 %v2315
        %v2385 = vunpack.c.l.b16 %v2316
        %v2386 = vunpack.c.l.b16 %v2317
        %v2387 = vunpack.c.h.b16 %v2317
        %v2388 = vunpack.c.l.b16 %v2318
        %v2389 = vunpack.c.l.b16 %v2319
        %v2390 = vunpack.c.h.b16 %v2319
        %v2391 = vunpack.c.l.b16 %v2320
        %v2392 = vunpack.c.l.b16 %v2321
        %v2393 = vunpack.c.h.b16 %v2321
        %v2394 = vunpack.c.l.b16 %v2322
        %v2395 = vunpack.c.l.b16 %v2323
        %v2396 = vunpack.c.h.b16 %v2323
        %v2397 = vunpack.c.l.b16 %v2324
        %v2398 = vunpack.c.l.b16 %v2325
        %v2399 = vunpack.c.h.b16 %v2325
        %v2400 = vunpack.c.l.b16 %v2326
        %v2401 = vunpack.c.l.b16 %v2327
        %v2402 = vunpack.c.h.b16 %v2327
        %v2403 = vunpack.c.l.b16 %v2328
        %v2404 = vunpack.c.l.b16 %v2329
        %v2405 = vunpack.c.h.b16 %v2329
        %v2406 = vunpack.c.l.b16 %v2330
        %v2407 = vunpack.c.l.b16 %v2331
        %v2408 = vunpack.c.h.b16 %v2331
        %v2409 = vunpack.c.l.b16 %v2332
        %v2410 = vunpack.c.l.b16 %v2333
        %v2411 = vunpack.c.h.b16 %v2333
        %v2412 = vunpack.c.l.b16 %v2334
        %v2413 = vunpack.c.l.b16 %v2335
        %v2414 = vunpack.c.h.b16 %v2335
        %v2415 = vunpack.c.l.b16 %v2336
        %v2416 = vunpack.c.l.b16 %v2337
        %v2417 = vunpack.c.h.b16 %v2337
        %v2418 = vunpack.c.l.b16 %v2338
        %v2419 = vunpack.c.l.b16 %v2339
        %v2420 = vunpack.c.h.b16 %v2339
        %v2421 = vunpack.c.l.b16 %v2340
        %v2422 = vpack.c.b16 %v2377, %v2374
        %v2423 = vpack.c.b16 %v2378, %v2375
        %v2424 = vpack.c.b16 %v2379, %v2376
        %v2425 = vpack.c.b16 %v2383, %v2380
        %v2426 = vpack.c.b16 %v2384, %v2381
        %v2427 = vpack.c.b16 %v2385, %v2382
        %v2428 = vpack.c.b16 %v2389, %v2386
        %v2429 = vpack.c.b16 %v2390, %v2387
        %v2430 = vpack.c.b16 %v2391, %v2388
        %v2431 = vpack.c.b16 %v2395, %v2392
        %v2432 = vpack.c.b16 %v2396, %v2393
        %v2433 = vpack.c.b16 %v2397, %v2394
        %v2434 = vpack.c.b16 %v2401, %v2398
        %v2435 = vpack.c.b16 %v2402, %v2399
        %v2436 = vpack.c.b16 %v2403, %v2400
        %v2437 = vpack.c.b16 %v2407, %v2404
        %v2438 = vpack.c.b16 %v2408, %v2405
        %v2439 = vpack.c.b16 %v2409, %v2406
        %v2440 = vpack.c.b16 %v2413, %v2410
        %v2441 = vpack.c.b16 %v2414, %v2411
        %v2442 = vpack.c.b16 %v2415, %v2412
        %v2443 = vpack.c.b16 %v2419, %v2416
        %v2444 = vpack.c.b16 %v2420, %v2417
        %v2445 = vpack.c.b16 %v2421, %v2418
        %2470 = vmatpush.bf16.msra.mxu0 %v2443
        %2471 = vmatpush.bf16.msra.mxu0 %v2440
        %2472 = vmatpush.bf16.msra.mxu0 %v2437
        %2473 = vmatpush.bf16.msra.mxu0 %v2434
        %2474 = vmatpush.bf16.msra.mxu0 %v2431
        %2475 = vmatpush.bf16.msra.mxu0 %v2428
        %2476 = vmatpush.bf16.msra.mxu0 %v2425
        %2477 = vmatpush.bf16.msra.mxu0 %v2422
        %2478 = vmatmul.bf16.gmra.mxu0 %v2308
        %v2479 = vpop.f32.mrf.mxu0
        %v2480 = vadd.f32 0.0, %v2479
        %v2481 = vpop.f32.mrf.mxu0
        %2482 = vdwg.mxu0
        %2483 = vmatpush.bf16.msra.mxu0 %v2444
        %2484 = vmatpush.bf16.msra.mxu0 %v2441
        %2485 = vmatpush.bf16.msra.mxu0 %v2438
        %2486 = vmatpush.bf16.msra.mxu0 %v2435
        %2487 = vmatpush.bf16.msra.mxu0 %v2432
        %2488 = vmatpush.bf16.msra.mxu0 %v2429
        %2489 = vmatpush.bf16.msra.mxu0 %v2426
        %2490 = vmatpush.bf16.msra.mxu0 %v2423
        %2491 = vmatmul.bf16.gmra.mxu0 %v2308
        %v2492 = vpop.f32.mrf.mxu0
        %v2493 = vadd.f32 0.0, %v2492
        %v2494 = vpop.f32.mrf.mxu0
        %2495 = vdwg.mxu0
        %2496 = vmatpush.bf16.msra.mxu0 %v2445
        %2497 = vmatpush.bf16.msra.mxu0 %v2442
        %2498 = vmatpush.bf16.msra.mxu0 %v2439
        %2499 = vmatpush.bf16.msra.mxu0 %v2436
        %2500 = vmatpush.bf16.msra.mxu0 %v2433
        %2501 = vmatpush.bf16.msra.mxu0 %v2430
        %2502 = vmatpush.bf16.msra.mxu0 %v2427
        %2503 = vmatpush.bf16.msra.mxu0 %v2424
        %2504 = vmatmul.bf16.gmra.mxu0 %v2308
        %v2505 = vpop.f32.mrf.mxu0
        %v2506 = vadd.f32 0.0, %v2505
        %v2507 = vpop.f32.mrf.mxu0
        %2508 = vdwg.mxu0
        %v2509 = vrot.slane %v2480, 7
        %v2510 = vsel %vm2289, %v2509, 0.0
        %v2511 = vrot.slane %v2506, 1
        %v2512 = vsel %vm2293, %v2511, 0.0
        %v2513 = vadd.f32 %v2510, %v2493
        %v2514 = vadd.f32 %v2513, %v2512
        %v2515 = vperm.slane %v2341, 0
        %v2516 = vadd.f32 %v2514, %v2515
        %v2517 = vmul.f32 %v2516, 0.5
        %v2518 = vmul.f32 %v2516, 0.044715
        %v2519 = vmul.f32 %v2518, %v2516
        %v2520 = vmul.f32 %v2519, %v2516
        %v2521 = vadd.f32 %v2516, %v2520
        %v2522 = vmul.f32 %v2521, 0.7978846
        %v2523 = vtanh.pop %v2522
        %v2524 = vadd.f32 %v2523, 1.0
        %v2525 = vmul.f32 %v2517, %v2524
        %v2526 = vadd.f32 %v2525, %v2057
        %v2527 = vld [vmem:[#allocation5 + $0x1] sm:$0x1]
        %v2528 = vld [vmem:[#allocation7 + $0x1] sm:$0x1]
        %v2529 = vperm.slane %v2527, 0
        %v2530 = vmul.f32 %v769, %v2529
        %v2531 = vperm.slane %v2528, 0
        %v2532 = vadd.f32 %v2530, %v2531
        %v2533 = vpack.c.bf16 %v2532, %v2532
        %s2534 = scalar_lea.vmem [#allocation8], 768
        %v2535 = vld [vmem:[%s2534] sm:$0xff]
        %v2536 = vld [vmem:[%s2534 + $0x8] sm:$0xff]
        %v2537 = vld [vmem:[%s2534 + $0x10] sm:$0xff]
        %v2538 = vld [vmem:[%s2534 + $0x18] sm:$0xff]
        %v2539 = vld [vmem:[%s2534 + $0x20] sm:$0xff]
        %v2540 = vld [vmem:[%s2534 + $0x28] sm:$0xff]
        %v2541 = vld [vmem:[%s2534 + $0x30] sm:$0xff]
        %v2542 = vld [vmem:[%s2534 + $0x38] sm:$0xff]
        %v2543 = vld [vmem:[%s2534 + $0x40] sm:$0xff]
        %v2544 = vld [vmem:[%s2534 + $0x48] sm:$0xff]
        %v2545 = vld [vmem:[%s2534 + $0x50] sm:$0xff]
        %v2546 = vld [vmem:[%s2534 + $0x58] sm:$0xff]
        %v2547 = vld [vmem:[%s2534 + $0x60] sm:$0xff]
        %v2548 = vld [vmem:[%s2534 + $0x68] sm:$0xff]
        %v2549 = vld [vmem:[%s2534 + $0x70] sm:$0xff]
        %v2550 = vld [vmem:[%s2534 + $0x78] sm:$0xff]
        %v2551 = vld [vmem:[%s2534 + $0x80] sm:$0xff]
        %v2552 = vld [vmem:[%s2534 + $0x88] sm:$0xff]
        %v2553 = vld [vmem:[%s2534 + $0x90] sm:$0xff]
        %v2554 = vld [vmem:[%s2534 + $0x98] sm:$0xff]
        %v2555 = vld [vmem:[%s2534 + $0xa0] sm:$0xff]
        %v2556 = vld [vmem:[%s2534 + $0xa8] sm:$0xff]
        %v2557 = vld [vmem:[%s2534 + $0xb0] sm:$0xff]
        %v2558 = vld [vmem:[%s2534 + $0xb8] sm:$0xff]
        %v2559 = vld [vmem:[%s2534 + $0xc0] sm:$0xff]
        %v2560 = vld [vmem:[%s2534 + $0xc8] sm:$0xff]
        %v2561 = vld [vmem:[%s2534 + $0xd0] sm:$0xff]
        %v2562 = vld [vmem:[%s2534 + $0xd8] sm:$0xff]
        %v2563 = vld [vmem:[%s2534 + $0xe0] sm:$0xff]
        %v2564 = vld [vmem:[%s2534 + $0xe8] sm:$0xff]
        %v2565 = vld [vmem:[%s2534 + $0xf0] sm:$0xff]
        %v2566 = vld [vmem:[%s2534 + $0xf8] sm:$0xff]
        %v2567 = vld [vmem:[%s2534 + $0x100] sm:$0xff]
        %v2568 = vld [vmem:[%s2534 + $0x108] sm:$0xff]
        %v2569 = vld [vmem:[%s2534 + $0x110] sm:$0xff]
        %v2570 = vld [vmem:[%s2534 + $0x118] sm:$0xff]
        %v2571 = vld [vmem:[%s2534 + $0x120] sm:$0xff]
        %v2572 = vld [vmem:[%s2534 + $0x128] sm:$0xff]
        %v2573 = vld [vmem:[%s2534 + $0x130] sm:$0xff]
        %v2574 = vld [vmem:[%s2534 + $0x138] sm:$0xff]
        %v2575 = vld [vmem:[%s2534 + $0x140] sm:$0xff]
        %v2576 = vld [vmem:[%s2534 + $0x148] sm:$0xff]
        %v2577 = vld [vmem:[%s2534 + $0x150] sm:$0xff]
        %v2578 = vld [vmem:[%s2534 + $0x158] sm:$0xff]
        %v2579 = vld [vmem:[%s2534 + $0x160] sm:$0xff]
        %v2580 = vld [vmem:[%s2534 + $0x168] sm:$0xff]
        %v2581 = vld [vmem:[%s2534 + $0x170] sm:$0xff]
        %v2582 = vld [vmem:[%s2534 + $0x178] sm:$0xff]
        %v2583 = vld [vmem:[%s2534 + $0x180] sm:$0xff]
        %v2584 = vld [vmem:[%s2534 + $0x188] sm:$0xff]
        %v2585 = vld [vmem:[%s2534 + $0x190] sm:$0xff]
        %v2586 = vld [vmem:[%s2534 + $0x198] sm:$0xff]
        %v2587 = vld [vmem:[%s2534 + $0x1a0] sm:$0xff]
        %v2588 = vld [vmem:[%s2534 + $0x1a8] sm:$0xff]
        %v2589 = vld [vmem:[%s2534 + $0x1b0] sm:$0xff]
        %v2590 = vld [vmem:[%s2534 + $0x1b8] sm:$0xff]
        %v2591 = vld [vmem:[%s2534 + $0x1c0] sm:$0xff]
        %v2592 = vld [vmem:[%s2534 + $0x1c8] sm:$0xff]
        %v2593 = vld [vmem:[%s2534 + $0x1d0] sm:$0xff]
        %v2594 = vld [vmem:[%s2534 + $0x1d8] sm:$0xff]
        %v2595 = vld [vmem:[%s2534 + $0x1e0] sm:$0xff]
        %v2596 = vld [vmem:[%s2534 + $0x1e8] sm:$0xff]
        %v2597 = vld [vmem:[%s2534 + $0x1f0] sm:$0xff]
        %v2598 = vld [vmem:[%s2534 + $0x1f8] sm:$0xff]
        %v2599 = vld [vmem:[%s2534 + $0x200] sm:$0xff]
        %v2600 = vld [vmem:[%s2534 + $0x208] sm:$0xff]
        %v2601 = vld [vmem:[%s2534 + $0x210] sm:$0xff]
        %v2602 = vld [vmem:[%s2534 + $0x218] sm:$0xff]
        %v2603 = vld [vmem:[%s2534 + $0x220] sm:$0xff]
        %v2604 = vld [vmem:[%s2534 + $0x228] sm:$0xff]
        %v2605 = vld [vmem:[%s2534 + $0x230] sm:$0xff]
        %v2606 = vld [vmem:[%s2534 + $0x238] sm:$0xff]
        %v2607 = vld [vmem:[%s2534 + $0x240] sm:$0xff]
        %v2608 = vld [vmem:[%s2534 + $0x248] sm:$0xff]
        %v2609 = vld [vmem:[%s2534 + $0x250] sm:$0xff]
        %v2610 = vld [vmem:[%s2534 + $0x258] sm:$0xff]
        %v2611 = vld [vmem:[%s2534 + $0x260] sm:$0xff]
        %v2612 = vld [vmem:[%s2534 + $0x268] sm:$0xff]
        %v2613 = vld [vmem:[%s2534 + $0x270] sm:$0xff]
        %v2614 = vld [vmem:[%s2534 + $0x278] sm:$0xff]
        %v2615 = vld [vmem:[%s2534 + $0x280] sm:$0xff]
        %v2616 = vld [vmem:[%s2534 + $0x288] sm:$0xff]
        %v2617 = vld [vmem:[%s2534 + $0x290] sm:$0xff]
        %v2618 = vld [vmem:[%s2534 + $0x298] sm:$0xff]
        %v2619 = vld [vmem:[%s2534 + $0x2a0] sm:$0xff]
        %v2620 = vld [vmem:[%s2534 + $0x2a8] sm:$0xff]
        %v2621 = vld [vmem:[%s2534 + $0x2b0] sm:$0xff]
        %v2622 = vld [vmem:[%s2534 + $0x2b8] sm:$0xff]
        %v2623 = vld [vmem:[%s2534 + $0x2c0] sm:$0xff]
        %v2624 = vld [vmem:[%s2534 + $0x2c8] sm:$0xff]
        %v2625 = vld [vmem:[%s2534 + $0x2d0] sm:$0xff]
        %v2626 = vld [vmem:[%s2534 + $0x2d8] sm:$0xff]
        %v2627 = vld [vmem:[%s2534 + $0x2e0] sm:$0xff]
        %v2628 = vld [vmem:[%s2534 + $0x2e8] sm:$0xff]
        %v2629 = vld [vmem:[%s2534 + $0x2f0] sm:$0xff]
        %v2630 = vld [vmem:[%s2534 + $0x2f8] sm:$0xff]
        %s2631 = scalar_lea.vmem [#allocation10], 12
        %v2632 = vld [vmem:[%s2631] sm:$0xff]
        %v2633 = vld [vmem:[%s2631 + $0x8] sm:$0xf]
        %v2636 = vperm.slane %v2632, 0
        %v2637 = vperm.slane %v2632, 1
        %v2638 = vperm.slane %v2632, 2
        %v2639 = vperm.slane %v2632, 3
        %v2640 = vperm.slane %v2632, 4
        %v2641 = vperm.slane %v2632, 5
        %v2642 = vperm.slane %v2632, 6
        %v2643 = vperm.slane %v2632, 7
        %v2644 = vperm.slane %v2633, 0
        %v2645 = vperm.slane %v2633, 1
        %v2646 = vperm.slane %v2633, 2
        %v2647 = vperm.slane %v2633, 3
        %v2756 = vunpack.c.l.b16 %v2535
        %v2757 = vunpack.c.h.b16 %v2535
        %v2758 = vunpack.c.l.b16 %v2536
        %v2759 = vunpack.c.h.b16 %v2536
        %v2760 = vunpack.c.l.b16 %v2537
        %v2761 = vunpack.c.h.b16 %v2537
        %v2762 = vunpack.c.l.b16 %v2538
        %v2763 = vunpack.c.h.b16 %v2538
        %v2764 = vunpack.c.l.b16 %v2539
        %v2765 = vunpack.c.h.b16 %v2539
        %v2766 = vunpack.c.l.b16 %v2540
        %v2767 = vunpack.c.h.b16 %v2540
        %v2768 = vunpack.c.l.b16 %v2541
        %v2769 = vunpack.c.h.b16 %v2541
        %v2770 = vunpack.c.l.b16 %v2542
        %v2771 = vunpack.c.h.b16 %v2542
        %v2772 = vunpack.c.l.b16 %v2543
        %v2773 = vunpack.c.h.b16 %v2543
        %v2774 = vunpack.c.l.b16 %v2544
        %v2775 = vunpack.c.h.b16 %v2544
        %v2776 = vunpack.c.l.b16 %v2545
        %v2777 = vunpack.c.h.b16 %v2545
        %v2778 = vunpack.c.l.b16 %v2546
        %v2779 = vunpack.c.h.b16 %v2546
        %v2780 = vunpack.c.l.b16 %v2547
        %v2781 = vunpack.c.h.b16 %v2547
        %v2782 = vunpack.c.l.b16 %v2548
        %v2783 = vunpack.c.h.b16 %v2548
        %v2784 = vunpack.c.l.b16 %v2549
        %v2785 = vunpack.c.h.b16 %v2549
        %v2786 = vunpack.c.l.b16 %v2550
        %v2787 = vunpack.c.h.b16 %v2550
        %v2788 = vunpack.c.l.b16 %v2551
        %v2789 = vunpack.c.h.b16 %v2551
        %v2790 = vunpack.c.l.b16 %v2552
        %v2791 = vunpack.c.h.b16 %v2552
        %v2792 = vunpack.c.l.b16 %v2553
        %v2793 = vunpack.c.h.b16 %v2553
        %v2794 = vunpack.c.l.b16 %v2554
        %v2795 = vunpack.c.h.b16 %v2554
        %v2796 = vunpack.c.l.b16 %v2555
        %v2797 = vunpack.c.h.b16 %v2555
        %v2798 = vunpack.c.l.b16 %v2556
        %v2799 = vunpack.c.h.b16 %v2556
        %v2800 = vunpack.c.l.b16 %v2557
        %v2801 = vunpack.c.h.b16 %v2557
        %v2802 = vunpack.c.l.b16 %v2558
        %v2803 = vunpack.c.h.b16 %v2558
        %v2804 = vunpack.c.l.b16 %v2559
        %v2805 = vunpack.c.h.b16 %v2559
        %v2806 = vunpack.c.l.b16 %v2560
        %v2807 = vunpack.c.h.b16 %v2560
        %v2808 = vunpack.c.l.b16 %v2561
        %v2809 = vunpack.c.h.b16 %v2561
        %v2810 = vunpack.c.l.b16 %v2562
        %v2811 = vunpack.c.h.b16 %v2562
        %v2812 = vunpack.c.l.b16 %v2563
        %v2813 = vunpack.c.h.b16 %v2563
        %v2814 = vunpack.c.l.b16 %v2564
        %v2815 = vunpack.c.h.b16 %v2564
        %v2816 = vunpack.c.l.b16 %v2565
        %v2817 = vunpack.c.h.b16 %v2565
        %v2818 = vunpack.c.l.b16 %v2566
        %v2819 = vunpack.c.h.b16 %v2566
        %v2820 = vunpack.c.l.b16 %v2567
        %v2821 = vunpack.c.h.b16 %v2567
        %v2822 = vunpack.c.l.b16 %v2568
        %v2823 = vunpack.c.h.b16 %v2568
        %v2824 = vunpack.c.l.b16 %v2569
        %v2825 = vunpack.c.h.b16 %v2569
        %v2826 = vunpack.c.l.b16 %v2570
        %v2827 = vunpack.c.h.b16 %v2570
        %v2828 = vunpack.c.l.b16 %v2571
        %v2829 = vunpack.c.h.b16 %v2571
        %v2830 = vunpack.c.l.b16 %v2572
        %v2831 = vunpack.c.h.b16 %v2572
        %v2832 = vunpack.c.l.b16 %v2573
        %v2833 = vunpack.c.h.b16 %v2573
        %v2834 = vunpack.c.l.b16 %v2574
        %v2835 = vunpack.c.h.b16 %v2574
        %v2836 = vunpack.c.l.b16 %v2575
        %v2837 = vunpack.c.h.b16 %v2575
        %v2838 = vunpack.c.l.b16 %v2576
        %v2839 = vunpack.c.h.b16 %v2576
        %v2840 = vunpack.c.l.b16 %v2577
        %v2841 = vunpack.c.h.b16 %v2577
        %v2842 = vunpack.c.l.b16 %v2578
        %v2843 = vunpack.c.h.b16 %v2578
        %v2844 = vunpack.c.l.b16 %v2579
        %v2845 = vunpack.c.h.b16 %v2579
        %v2846 = vunpack.c.l.b16 %v2580
        %v2847 = vunpack.c.h.b16 %v2580
        %v2848 = vunpack.c.l.b16 %v2581
        %v2849 = vunpack.c.h.b16 %v2581
        %v2850 = vunpack.c.l.b16 %v2582
        %v2851 = vunpack.c.h.b16 %v2582
        %v2852 = vunpack.c.l.b16 %v2583
        %v2853 = vunpack.c.h.b16 %v2583
        %v2854 = vunpack.c.l.b16 %v2584
        %v2855 = vunpack.c.h.b16 %v2584
        %v2856 = vunpack.c.l.b16 %v2585
        %v2857 = vunpack.c.h.b16 %v2585
        %v2858 = vunpack.c.l.b16 %v2586
        %v2859 = vunpack.c.h.b16 %v2586
        %v2860 = vunpack.c.l.b16 %v2587
        %v2861 = vunpack.c.h.b16 %v2587
        %v2862 = vunpack.c.l.b16 %v2588
        %v2863 = vunpack.c.h.b16 %v2588
        %v2864 = vunpack.c.l.b16 %v2589
        %v2865 = vunpack.c.h.b16 %v2589
        %v2866 = vunpack.c.l.b16 %v2590
        %v2867 = vunpack.c.h.b16 %v2590
        %v2868 = vunpack.c.l.b16 %v2591
        %v2869 = vunpack.c.h.b16 %v2591
        %v2870 = vunpack.c.l.b16 %v2592
        %v2871 = vunpack.c.h.b16 %v2592
        %v2872 = vunpack.c.l.b16 %v2593
        %v2873 = vunpack.c.h.b16 %v2593
        %v2874 = vunpack.c.l.b16 %v2594
        %v2875 = vunpack.c.h.b16 %v2594
        %v2876 = vunpack.c.l.b16 %v2595
        %v2877 = vunpack.c.h.b16 %v2595
        %v2878 = vunpack.c.l.b16 %v2596
        %v2879 = vunpack.c.h.b16 %v2596
        %v2880 = vunpack.c.l.b16 %v2597
        %v2881 = vunpack.c.h.b16 %v2597
        %v2882 = vunpack.c.l.b16 %v2598
        %v2883 = vunpack.c.h.b16 %v2598
        %v2884 = vunpack.c.l.b16 %v2599
        %v2885 = vunpack.c.h.b16 %v2599
        %v2886 = vunpack.c.l.b16 %v2600
        %v2887 = vunpack.c.h.b16 %v2600
        %v2888 = vunpack.c.l.b16 %v2601
        %v2889 = vunpack.c.h.b16 %v2601
        %v2890 = vunpack.c.l.b16 %v2602
        %v2891 = vunpack.c.h.b16 %v2602
        %v2892 = vunpack.c.l.b16 %v2603
        %v2893 = vunpack.c.h.b16 %v2603
        %v2894 = vunpack.c.l.b16 %v2604
        %v2895 = vunpack.c.h.b16 %v2604
        %v2896 = vunpack.c.l.b16 %v2605
        %v2897 = vunpack.c.h.b16 %v2605
        %v2898 = vunpack.c.l.b16 %v2606
        %v2899 = vunpack.c.h.b16 %v2606
        %v2900 = vunpack.c.l.b16 %v2607
        %v2901 = vunpack.c.h.b16 %v2607
        %v2902 = vunpack.c.l.b16 %v2608
        %v2903 = vunpack.c.h.b16 %v2608
        %v2904 = vunpack.c.l.b16 %v2609
        %v2905 = vunpack.c.h.b16 %v2609
        %v2906 = vunpack.c.l.b16 %v2610
        %v2907 = vunpack.c.h.b16 %v2610
        %v2908 = vunpack.c.l.b16 %v2611
        %v2909 = vunpack.c.h.b16 %v2611
        %v2910 = vunpack.c.l.b16 %v2612
        %v2911 = vunpack.c.h.b16 %v2612
        %v2912 = vunpack.c.l.b16 %v2613
        %v2913 = vunpack.c.h.b16 %v2613
        %v2914 = vunpack.c.l.b16 %v2614
        %v2915 = vunpack.c.h.b16 %v2614
        %v2916 = vunpack.c.l.b16 %v2615
        %v2917 = vunpack.c.h.b16 %v2615
        %v2918 = vunpack.c.l.b16 %v2616
        %v2919 = vunpack.c.h.b16 %v2616
        %v2920 = vunpack.c.l.b16 %v2617
        %v2921 = vunpack.c.h.b16 %v2617
        %v2922 = vunpack.c.l.b16 %v2618
        %v2923 = vunpack.c.h.b16 %v2618
        %v2924 = vunpack.c.l.b16 %v2619
        %v2925 = vunpack.c.h.b16 %v2619
        %v2926 = vunpack.c.l.b16 %v2620
        %v2927 = vunpack.c.h.b16 %v2620
        %v2928 = vunpack.c.l.b16 %v2621
        %v2929 = vunpack.c.h.b16 %v2621
        %v2930 = vunpack.c.l.b16 %v2622
        %v2931 = vunpack.c.h.b16 %v2622
        %v2932 = vunpack.c.l.b16 %v2623
        %v2933 = vunpack.c.h.b16 %v2623
        %v2934 = vunpack.c.l.b16 %v2624
        %v2935 = vunpack.c.h.b16 %v2624
        %v2936 = vunpack.c.l.b16 %v2625
        %v2937 = vunpack.c.h.b16 %v2625
        %v2938 = vunpack.c.l.b16 %v2626
        %v2939 = vunpack.c.h.b16 %v2626
        %v2940 = vunpack.c.l.b16 %v2627
        %v2941 = vunpack.c.h.b16 %v2627
        %v2942 = vunpack.c.l.b16 %v2628
        %v2943 = vunpack.c.h.b16 %v2628
        %v2944 = vunpack.c.l.b16 %v2629
        %v2945 = vunpack.c.h.b16 %v2629
        %v2946 = vunpack.c.l.b16 %v2630
        %v2947 = vunpack.c.h.b16 %v2630
        %v2948 = vpack.c.b16 %v2768, %v2756
        %v2949 = vpack.c.b16 %v2769, %v2757
        %v2950 = vpack.c.b16 %v2770, %v2758
        %v2951 = vpack.c.b16 %v2771, %v2759
        %v2952 = vpack.c.b16 %v2772, %v2760
        %v2953 = vpack.c.b16 %v2773, %v2761
        %v2954 = vpack.c.b16 %v2774, %v2762
        %v2955 = vpack.c.b16 %v2775, %v2763
        %v2956 = vpack.c.b16 %v2776, %v2764
        %v2957 = vpack.c.b16 %v2777, %v2765
        %v2958 = vpack.c.b16 %v2778, %v2766
        %v2959 = vpack.c.b16 %v2779, %v2767
        %v2960 = vpack.c.b16 %v2792, %v2780
        %v2961 = vpack.c.b16 %v2793, %v2781
        %v2962 = vpack.c.b16 %v2794, %v2782
        %v2963 = vpack.c.b16 %v2795, %v2783
        %v2964 = vpack.c.b16 %v2796, %v2784
        %v2965 = vpack.c.b16 %v2797, %v2785
        %v2966 = vpack.c.b16 %v2798, %v2786
        %v2967 = vpack.c.b16 %v2799, %v2787
        %v2968 = vpack.c.b16 %v2800, %v2788
        %v2969 = vpack.c.b16 %v2801, %v2789
        %v2970 = vpack.c.b16 %v2802, %v2790
        %v2971 = vpack.c.b16 %v2803, %v2791
        %v2972 = vpack.c.b16 %v2816, %v2804
        %v2973 = vpack.c.b16 %v2817, %v2805
        %v2974 = vpack.c.b16 %v2818, %v2806
        %v2975 = vpack.c.b16 %v2819, %v2807
        %v2976 = vpack.c.b16 %v2820, %v2808
        %v2977 = vpack.c.b16 %v2821, %v2809
        %v2978 = vpack.c.b16 %v2822, %v2810
        %v2979 = vpack.c.b16 %v2823, %v2811
        %v2980 = vpack.c.b16 %v2824, %v2812
        %v2981 = vpack.c.b16 %v2825, %v2813
        %v2982 = vpack.c.b16 %v2826, %v2814
        %v2983 = vpack.c.b16 %v2827, %v2815
        %v2984 = vpack.c.b16 %v2840, %v2828
        %v2985 = vpack.c.b16 %v2841, %v2829
        %v2986 = vpack.c.b16 %v2842, %v2830
        %v2987 = vpack.c.b16 %v2843, %v2831
        %v2988 = vpack.c.b16 %v2844, %v2832
        %v2989 = vpack.c.b16 %v2845, %v2833
        %v2990 = vpack.c.b16 %v2846, %v2834
        %v2991 = vpack.c.b16 %v2847, %v2835
        %v2992 = vpack.c.b16 %v2848, %v2836
        %v2993 = vpack.c.b16 %v2849, %v2837
        %v2994 = vpack.c.b16 %v2850, %v2838
        %v2995 = vpack.c.b16 %v2851, %v2839
        %v2996 = vpack.c.b16 %v2864, %v2852
        %v2997 = vpack.c.b16 %v2865, %v2853
        %v2998 = vpack.c.b16 %v2866, %v2854
        %v2999 = vpack.c.b16 %v2867, %v2855
        %v3000 = vpack.c.b16 %v2868, %v2856
        %v3001 = vpack.c.b16 %v2869, %v2857
        %v3002 = vpack.c.b16 %v2870, %v2858
        %v3003 = vpack.c.b16 %v2871, %v2859
        %v3004 = vpack.c.b16 %v2872, %v2860
        %v3005 = vpack.c.b16 %v2873, %v2861
        %v3006 = vpack.c.b16 %v2874, %v2862
        %v3007 = vpack.c.b16 %v2875, %v2863
        %v3008 = vpack.c.b16 %v2888, %v2876
        %v3009 = vpack.c.b16 %v2889, %v2877
        %v3010 = vpack.c.b16 %v2890, %v2878
        %v3011 = vpack.c.b16 %v2891, %v2879
        %v3012 = vpack.c.b16 %v2892, %v2880
        %v3013 = vpack.c.b16 %v2893, %v2881
        %v3014 = vpack.c.b16 %v2894, %v2882
        %v3015 = vpack.c.b16 %v2895, %v2883
        %v3016 = vpack.c.b16 %v2896, %v2884
        %v3017 = vpack.c.b16 %v2897, %v2885
        %v3018 = vpack.c.b16 %v2898, %v2886
        %v3019 = vpack.c.b16 %v2899, %v2887
        %v3020 = vpack.c.b16 %v2912, %v2900
        %v3021 = vpack.c.b16 %v2913, %v2901
        %v3022 = vpack.c.b16 %v2914, %v2902
        %v3023 = vpack.c.b16 %v2915, %v2903
        %v3024 = vpack.c.b16 %v2916, %v2904
        %v3025 = vpack.c.b16 %v2917, %v2905
        %v3026 = vpack.c.b16 %v2918, %v2906
        %v3027 = vpack.c.b16 %v2919, %v2907
        %v3028 = vpack.c.b16 %v2920, %v2908
        %v3029 = vpack.c.b16 %v2921, %v2909
        %v3030 = vpack.c.b16 %v2922, %v2910
        %v3031 = vpack.c.b16 %v2923, %v2911
        %v3032 = vpack.c.b16 %v2936, %v2924
        %v3033 = vpack.c.b16 %v2937, %v2925
        %v3034 = vpack.c.b16 %v2938, %v2926
        %v3035 = vpack.c.b16 %v2939, %v2927
        %v3036 = vpack.c.b16 %v2940, %v2928
        %v3037 = vpack.c.b16 %v2941, %v2929
        %v3038 = vpack.c.b16 %v2942, %v2930
        %v3039 = vpack.c.b16 %v2943, %v2931
        %v3040 = vpack.c.b16 %v2944, %v2932
        %v3041 = vpack.c.b16 %v2945, %v2933
        %v3042 = vpack.c.b16 %v2946, %v2934
        %v3043 = vpack.c.b16 %v2947, %v2935
        %3140 = vmatpush.bf16.msra.mxu0 %v3032
        %3141 = vmatpush.bf16.msra.mxu0 %v3020
        %3142 = vmatpush.bf16.msra.mxu0 %v3008
        %3143 = vmatpush.bf16.msra.mxu0 %v2996
        %3144 = vmatpush.bf16.msra.mxu0 %v2984
        %3145 = vmatpush.bf16.msra.mxu0 %v2972
        %3146 = vmatpush.bf16.msra.mxu0 %v2960
        %3147 = vmatpush.bf16.msra.mxu0 %v2948
        %3148 = vmatmul.bf16.gmra.mxu0 %v2533
        %v3149 = vpop.f32.mrf.mxu0
        %v3150 = vadd.f32 %v2636, %v3149
        %v3151 = vpop.f32.mrf.mxu0
        %3152 = vdwg.mxu0
        %3153 = vmatpush.bf16.msra.mxu0 %v3033
        %3154 = vmatpush.bf16.msra.mxu0 %v3021
        %3155 = vmatpush.bf16.msra.mxu0 %v3009
        %3156 = vmatpush.bf16.msra.mxu0 %v2997
        %3157 = vmatpush.bf16.msra.mxu0 %v2985
        %3158 = vmatpush.bf16.msra.mxu0 %v2973
        %3159 = vmatpush.bf16.msra.mxu0 %v2961
        %3160 = vmatpush.bf16.msra.mxu0 %v2949
        %3161 = vmatmul.bf16.gmra.mxu0 %v2533
        %v3162 = vpop.f32.mrf.mxu0
        %v3163 = vadd.f32 %v2637, %v3162
        %v3164 = vpop.f32.mrf.mxu0
        %3165 = vdwg.mxu0
        %3166 = vmatpush.bf16.msra.mxu0 %v3034
        %3167 = vmatpush.bf16.msra.mxu0 %v3022
        %3168 = vmatpush.bf16.msra.mxu0 %v3010
        %3169 = vmatpush.bf16.msra.mxu0 %v2998
        %3170 = vmatpush.bf16.msra.mxu0 %v2986
        %3171 = vmatpush.bf16.msra.mxu0 %v2974
        %3172 = vmatpush.bf16.msra.mxu0 %v2962
        %3173 = vmatpush.bf16.msra.mxu0 %v2950
        %3174 = vmatmul.bf16.gmra.mxu0 %v2533
        %v3175 = vpop.f32.mrf.mxu0
        %v3176 = vadd.f32 %v2638, %v3175
        %v3177 = vpop.f32.mrf.mxu0
        %3178 = vdwg.mxu0
        %3179 = vmatpush.bf16.msra.mxu0 %v3035
        %3180 = vmatpush.bf16.msra.mxu0 %v3023
        %3181 = vmatpush.bf16.msra.mxu0 %v3011
        %3182 = vmatpush.bf16.msra.mxu0 %v2999
        %3183 = vmatpush.bf16.msra.mxu0 %v2987
        %3184 = vmatpush.bf16.msra.mxu0 %v2975
        %3185 = vmatpush.bf16.msra.mxu0 %v2963
        %3186 = vmatpush.bf16.msra.mxu0 %v2951
        %3187 = vmatmul.bf16.gmra.mxu0 %v2533
        %v3188 = vpop.f32.mrf.mxu0
        %v3189 = vadd.f32 %v2639, %v3188
        %v3190 = vpop.f32.mrf.mxu0
        %3191 = vdwg.mxu0
        %3192 = vmatpush.bf16.msra.mxu0 %v3036
        %3193 = vmatpush.bf16.msra.mxu0 %v3024
        %3194 = vmatpush.bf16.msra.mxu0 %v3012
        %3195 = vmatpush.bf16.msra.mxu0 %v3000
        %3196 = vmatpush.bf16.msra.mxu0 %v2988
        %3197 = vmatpush.bf16.msra.mxu0 %v2976
        %3198 = vmatpush.bf16.msra.mxu0 %v2964
        %3199 = vmatpush.bf16.msra.mxu0 %v2952
        %3200 = vmatmul.bf16.gmra.mxu0 %v2533
        %v3201 = vpop.f32.mrf.mxu0
        %v3202 = vadd.f32 %v2640, %v3201
        %v3203 = vpop.f32.mrf.mxu0
        %3204 = vdwg.mxu0
        %3205 = vmatpush.bf16.msra.mxu0 %v3037
        %3206 = vmatpush.bf16.msra.mxu0 %v3025
        %3207 = vmatpush.bf16.msra.mxu0 %v3013
        %3208 = vmatpush.bf16.msra.mxu0 %v3001
        %3209 = vmatpush.bf16.msra.mxu0 %v2989
        %3210 = vmatpush.bf16.msra.mxu0 %v2977
        %3211 = vmatpush.bf16.msra.mxu0 %v2965
        %3212 = vmatpush.bf16.msra.mxu0 %v2953
        %3213 = vmatmul.bf16.gmra.mxu0 %v2533
        %v3214 = vpop.f32.mrf.mxu0
        %v3215 = vadd.f32 %v2641, %v3214
        %v3216 = vpop.f32.mrf.mxu0
        %3217 = vdwg.mxu0
        %3218 = vmatpush.bf16.msra.mxu0 %v3038
        %3219 = vmatpush.bf16.msra.mxu0 %v3026
        %3220 = vmatpush.bf16.msra.mxu0 %v3014
        %3221 = vmatpush.bf16.msra.mxu0 %v3002
        %3222 = vmatpush.bf16.msra.mxu0 %v2990
        %3223 = vmatpush.bf16.msra.mxu0 %v2978
        %3224 = vmatpush.bf16.msra.mxu0 %v2966
        %3225 = vmatpush.bf16.msra.mxu0 %v2954
        %3226 = vmatmul.bf16.gmra.mxu0 %v2533
        %v3227 = vpop.f32.mrf.mxu0
        %v3228 = vadd.f32 %v2642, %v3227
        %v3229 = vpop.f32.mrf.mxu0
        %3230 = vdwg.mxu0
        %3231 = vmatpush.bf16.msra.mxu0 %v3039
        %3232 = vmatpush.bf16.msra.mxu0 %v3027
        %3233 = vmatpush.bf16.msra.mxu0 %v3015
        %3234 = vmatpush.bf16.msra.mxu0 %v3003
        %3235 = vmatpush.bf16.msra.mxu0 %v2991
        %3236 = vmatpush.bf16.msra.mxu0 %v2979
        %3237 = vmatpush.bf16.msra.mxu0 %v2967
        %3238 = vmatpush.bf16.msra.mxu0 %v2955
        %3239 = vmatmul.bf16.gmra.mxu0 %v2533
        %v3240 = vpop.f32.mrf.mxu0
        %v3241 = vadd.f32 %v2643, %v3240
        %v3242 = vpop.f32.mrf.mxu0
        %3243 = vdwg.mxu0
        %3244 = vmatpush.bf16.msra.mxu0 %v3040
        %3245 = vmatpush.bf16.msra.mxu0 %v3028
        %3246 = vmatpush.bf16.msra.mxu0 %v3016
        %3247 = vmatpush.bf16.msra.mxu0 %v3004
        %3248 = vmatpush.bf16.msra.mxu0 %v2992
        %3249 = vmatpush.bf16.msra.mxu0 %v2980
        %3250 = vmatpush.bf16.msra.mxu0 %v2968
        %3251 = vmatpush.bf16.msra.mxu0 %v2956
        %3252 = vmatmul.bf16.gmra.mxu0 %v2533
        %v3253 = vpop.f32.mrf.mxu0
        %v3254 = vadd.f32 %v2644, %v3253
        %v3255 = vpop.f32.mrf.mxu0
        %3256 = vdwg.mxu0
        %3257 = vmatpush.bf16.msra.mxu0 %v3041
        %3258 = vmatpush.bf16.msra.mxu0 %v3029
        %3259 = vmatpush.bf16.msra.mxu0 %v3017
        %3260 = vmatpush.bf16.msra.mxu0 %v3005
        %3261 = vmatpush.bf16.msra.mxu0 %v2993
        %3262 = vmatpush.bf16.msra.mxu0 %v2981
        %3263 = vmatpush.bf16.msra.mxu0 %v2969
        %3264 = vmatpush.bf16.msra.mxu0 %v2957
        %3265 = vmatmul.bf16.gmra.mxu0 %v2533
        %v3266 = vpop.f32.mrf.mxu0
        %v3267 = vadd.f32 %v2645, %v3266
        %v3268 = vpop.f32.mrf.mxu0
        %3269 = vdwg.mxu0
        %3270 = vmatpush.bf16.msra.mxu0 %v3042
        %3271 = vmatpush.bf16.msra.mxu0 %v3030
        %3272 = vmatpush.bf16.msra.mxu0 %v3018
        %3273 = vmatpush.bf16.msra.mxu0 %v3006
        %3274 = vmatpush.bf16.msra.mxu0 %v2994
        %3275 = vmatpush.bf16.msra.mxu0 %v2982
        %3276 = vmatpush.bf16.msra.mxu0 %v2970
        %3277 = vmatpush.bf16.msra.mxu0 %v2958
        %3278 = vmatmul.bf16.gmra.mxu0 %v2533
        %v3279 = vpop.f32.mrf.mxu0
        %v3280 = vadd.f32 %v2646, %v3279
        %v3281 = vpop.f32.mrf.mxu0
        %3282 = vdwg.mxu0
        %3283 = vmatpush.bf16.msra.mxu0 %v3043
        %3284 = vmatpush.bf16.msra.mxu0 %v3031
        %3285 = vmatpush.bf16.msra.mxu0 %v3019
        %3286 = vmatpush.bf16.msra.mxu0 %v3007
        %3287 = vmatpush.bf16.msra.mxu0 %v2995
        %3288 = vmatpush.bf16.msra.mxu0 %v2983
        %3289 = vmatpush.bf16.msra.mxu0 %v2971
        %3290 = vmatpush.bf16.msra.mxu0 %v2959
        %3291 = vmatmul.bf16.gmra.mxu0 %v2533
        %v3292 = vpop.f32.mrf.mxu0
        %v3293 = vadd.f32 %v2647, %v3292
        %v3294 = vpop.f32.mrf.mxu0
        %3295 = vdwg.mxu0
        %v3296 = vpack.c.bf16 %v3163, %v3150
        %v3297 = vpack.c.bf16 %v3189, %v3176
        %v3298 = vpack.c.bf16 %v3215, %v3202
        %v3299 = vpack.c.bf16 %v3241, %v3228
        %v3300 = vpack.c.bf16 %v3267, %v3254
        %v3301 = vpack.c.bf16 %v3293, %v3280
        %vm3302 = vcmp.gt.s32.totalorder %v745, %v741
        %s3303 = scalar_lea.vmem [#allocation11], 256
        %v3304 = vld [vmem:[%s3303] sm:$0xf]
        %v3305 = vld [vmem:[%s3303 + $0x4] sm:$0xf]
        %v3306 = vld [vmem:[%s3303 + $0x8] sm:$0xf]
        %v3307 = vld [vmem:[%s3303 + $0xc] sm:$0xf]
        %v3308 = vld [vmem:[%s3303 + $0x10] sm:$0xf]
        %v3309 = vld [vmem:[%s3303 + $0x14] sm:$0xf]
        %v3310 = vld [vmem:[%s3303 + $0x18] sm:$0xf]
        %v3311 = vld [vmem:[%s3303 + $0x1c] sm:$0xf]
        %v3312 = vld [vmem:[%s3303 + $0x20] sm:$0xf]
        %v3313 = vld [vmem:[%s3303 + $0x24] sm:$0xf]
        %v3314 = vld [vmem:[%s3303 + $0x28] sm:$0xf]
        %v3315 = vld [vmem:[%s3303 + $0x2c] sm:$0xf]
        %v3316 = vld [vmem:[%s3303 + $0x30] sm:$0xf]
        %v3317 = vld [vmem:[%s3303 + $0x34] sm:$0xf]
        %v3318 = vld [vmem:[%s3303 + $0x38] sm:$0xf]
        %v3319 = vld [vmem:[%s3303 + $0x3c] sm:$0xf]
        %v3320 = vld [vmem:[%s3303 + $0x40] sm:$0xf]
        %v3321 = vld [vmem:[%s3303 + $0x44] sm:$0xf]
        %v3322 = vld [vmem:[%s3303 + $0x48] sm:$0xf]
        %v3323 = vld [vmem:[%s3303 + $0x4c] sm:$0xf]
        %v3324 = vld [vmem:[%s3303 + $0x50] sm:$0xf]
        %v3325 = vld [vmem:[%s3303 + $0x54] sm:$0xf]
        %v3326 = vld [vmem:[%s3303 + $0x58] sm:$0xf]
        %v3327 = vld [vmem:[%s3303 + $0x5c] sm:$0xf]
        %v3328 = vld [vmem:[%s3303 + $0x60] sm:$0xf]
        %v3329 = vld [vmem:[%s3303 + $0x64] sm:$0xf]
        %v3330 = vld [vmem:[%s3303 + $0x68] sm:$0xf]
        %v3331 = vld [vmem:[%s3303 + $0x6c] sm:$0xf]
        %v3332 = vld [vmem:[%s3303 + $0x70] sm:$0xf]
        %v3333 = vld [vmem:[%s3303 + $0x74] sm:$0xf]
        %v3334 = vld [vmem:[%s3303 + $0x78] sm:$0xf]
        %v3335 = vld [vmem:[%s3303 + $0x7c] sm:$0xf]
        %v3336 = vld [vmem:[%s3303 + $0x80] sm:$0xf]
        %v3337 = vld [vmem:[%s3303 + $0x84] sm:$0xf]
        %v3338 = vld [vmem:[%s3303 + $0x88] sm:$0xf]
        %v3339 = vld [vmem:[%s3303 + $0x8c] sm:$0xf]
        %v3340 = vld [vmem:[%s3303 + $0x90] sm:$0xf]
        %v3341 = vld [vmem:[%s3303 + $0x94] sm:$0xf]
        %v3342 = vld [vmem:[%s3303 + $0x98] sm:$0xf]
        %v3343 = vld [vmem:[%s3303 + $0x9c] sm:$0xf]
        %v3344 = vld [vmem:[%s3303 + $0xa0] sm:$0xf]
        %v3345 = vld [vmem:[%s3303 + $0xa4] sm:$0xf]
        %v3346 = vld [vmem:[%s3303 + $0xa8] sm:$0xf]
        %v3347 = vld [vmem:[%s3303 + $0xac] sm:$0xf]
        %v3348 = vld [vmem:[%s3303 + $0xb0] sm:$0xf]
        %v3349 = vld [vmem:[%s3303 + $0xb4] sm:$0xf]
        %v3350 = vld [vmem:[%s3303 + $0xb8] sm:$0xf]
        %v3351 = vld [vmem:[%s3303 + $0xbc] sm:$0xf]
        %v3352 = vld [vmem:[%s3303 + $0xc0] sm:$0xf]
        %v3353 = vld [vmem:[%s3303 + $0xc4] sm:$0xf]
        %v3354 = vld [vmem:[%s3303 + $0xc8] sm:$0xf]
        %v3355 = vld [vmem:[%s3303 + $0xcc] sm:$0xf]
        %v3356 = vld [vmem:[%s3303 + $0xd0] sm:$0xf]
        %v3357 = vld [vmem:[%s3303 + $0xd4] sm:$0xf]
        %v3358 = vld [vmem:[%s3303 + $0xd8] sm:$0xf]
        %v3359 = vld [vmem:[%s3303 + $0xdc] sm:$0xf]
        %v3360 = vld [vmem:[%s3303 + $0xe0] sm:$0xf]
        %v3361 = vld [vmem:[%s3303 + $0xe4] sm:$0xf]
        %v3362 = vld [vmem:[%s3303 + $0xe8] sm:$0xf]
        %v3363 = vld [vmem:[%s3303 + $0xec] sm:$0xf]
        %v3364 = vld [vmem:[%s3303 + $0xf0] sm:$0xf]
        %v3365 = vld [vmem:[%s3303 + $0xf4] sm:$0xf]
        %v3366 = vld [vmem:[%s3303 + $0xf8] sm:$0xf]
        %v3367 = vld [vmem:[%s3303 + $0xfc] sm:$0xf]
        %3368 = vmatpush.bf16.xpose.msra.mxu0 0
        %3369 = vmatpush.bf16.xpose.msra.mxu0 0
        %3370 = vmatpush.bf16.xpose.msra.mxu0 0
        %3371 = vmatpush.bf16.xpose.msra.mxu0 0
        %3372 = vmatpush.bf16.xpose.msra.mxu0 0
        %3373 = vmatpush.bf16.xpose.msra.mxu0 0
        %3374 = vmatpush.bf16.xpose.msra.mxu0 0
        %3375 = vmatpush.bf16.xpose.msra.mxu0 %v3298
        %3376 = vmatmul.bf16.gmra.mxu0 %v3296
        %v3377 = vpop.f32.mrf.mxu0
        %v3378 = vadd.f32 0.0, %v3377
        %v3379 = vpop.f32.mrf.mxu0
        %3380 = vdwg.mxu0
        %v3381 = vsel %vm3302, -1e+30, %v3378
        %v3382 = vsel %vm1620, %v3381, -inf
        %3383 = vmax.xlane.f32.xlu0 %v3382
        %v3384 = vpop.xlane.xlu0 %3383
        %v3385 = vsub.f32 %v3381, %v3384
        %v3386 = vmul.f32 %v3385, 1.442695
        %v3387 = vpow.pop %v3386
        %v3388 = vsel %vm1620, %v3387, 0.0
        %3389 = vadd.xlane.f32.xlu0 %v3388
        %v3390 = vpop.xlane.xlu0 %3389
        %v3391 = vrcp.pop %v3390
        %v3392 = vmul.f32 %v3387, %v3391
        %v3393 = vpack.c.bf16 %v3392, %v3392
        %v3395 = vsel %vm1620, %v3393, 0
        %v3398 = vsel %vm1636, %v3300, 0
        %3400 = vmatpush.bf16.msra.mxu0 0
        %3401 = vmatpush.bf16.msra.mxu0 0
        %3402 = vmatpush.bf16.msra.mxu0 0
        %3403 = vmatpush.bf16.msra.mxu0 0
        %3404 = vmatpush.bf16.msra.mxu0 0
        %3405 = vmatpush.bf16.msra.mxu0 0
        %3406 = vmatpush.bf16.msra.mxu0 0
        %3407 = vmatpush.bf16.msra.mxu0 %v3398
        %3408 = vmatmul.bf16.gmra.mxu0 %v3395
        %v3409 = vpop.f32.mrf.mxu0
        %v3410 = vadd.f32 0.0, %v3409
        %v3411 = vpop.f32.mrf.mxu0
        %3412 = vdwg.mxu0
        %v3413 = vpack.c.bf16 %v3410, %v3410
        %v3415 = vrot.slane %v3296, 4
        %v3418 = vrot.slane %v3298, 4
        %v3421 = vrot.slane %v3300, 4
        %3422 = vmatpush.bf16.xpose.msra.mxu0 0
        %3423 = vmatpush.bf16.xpose.msra.mxu0 0
        %3424 = vmatpush.bf16.xpose.msra.mxu0 0
        %3425 = vmatpush.bf16.xpose.msra.mxu0 0
        %3426 = vmatpush.bf16.xpose.msra.mxu0 0
        %3427 = vmatpush.bf16.xpose.msra.mxu0 0
        %3428 = vmatpush.bf16.xpose.msra.mxu0 0
        %3429 = vmatpush.bf16.xpose.msra.mxu0 %v3418
        %3430 = vmatmul.bf16.gmra.mxu0 %v3415
        %v3431 = vpop.f32.mrf.mxu0
        %v3432 = vadd.f32 0.0, %v3431
        %v3433 = vpop.f32.mrf.mxu0
        %3434 = vdwg.mxu0
        %v3435 = vsel %vm3302, -1e+30, %v3432
        %v3436 = vsel %vm1620, %v3435, -inf
        %3437 = vmax.xlane.f32.xlu0 %v3436
        %v3438 = vpop.xlane.xlu0 %3437
        %v3439 = vsub.f32 %v3435, %v3438
        %v3440 = vmul.f32 %v3439, 1.442695
        %v3441 = vpow.pop %v3440
        %v3442 = vsel %vm1620, %v3441, 0.0
        %3443 = vadd.xlane.f32.xlu0 %v3442
        %v3444 = vpop.xlane.xlu0 %3443
        %v3445 = vrcp.pop %v3444
        %v3446 = vmul.f32 %v3441, %v3445
        %v3447 = vpack.c.bf16 %v3446, %v3446
        %v3449 = vsel %vm1620, %v3447, 0
        %v3452 = vsel %vm1636, %v3421, 0
        %3454 = vmatpush.bf16.msra.mxu0 0
        %3455 = vmatpush.bf16.msra.mxu0 0
        %3456 = vmatpush.bf16.msra.mxu0 0
        %3457 = vmatpush.bf16.msra.mxu0 0
        %3458 = vmatpush.bf16.msra.mxu0 0
        %3459 = vmatpush.bf16.msra.mxu0 0
        %3460 = vmatpush.bf16.msra.mxu0 0
        %3461 = vmatpush.bf16.msra.mxu0 %v3452
        %3462 = vmatmul.bf16.gmra.mxu0 %v3449
        %v3463 = vpop.f32.mrf.mxu0
        %v3464 = vadd.f32 0.0, %v3463
        %v3465 = vpop.f32.mrf.mxu0
        %3466 = vdwg.mxu0
        %v3467 = vpack.c.bf16 %v3464, %v3464
        %v3484 = vunpack.c.l.b16 %v3320
        %v3485 = vunpack.c.l.b16 %v3321
        %v3486 = vunpack.c.l.b16 %v3322
        %v3487 = vunpack.c.l.b16 %v3323
        %v3488 = vunpack.c.l.b16 %v3324
        %v3489 = vunpack.c.l.b16 %v3325
        %v3490 = vunpack.c.l.b16 %v3326
        %v3491 = vunpack.c.l.b16 %v3327
        %v3492 = vunpack.c.l.b16 %v3328
        %v3493 = vunpack.c.l.b16 %v3329
        %v3494 = vunpack.c.l.b16 %v3330
        %v3495 = vunpack.c.l.b16 %v3331
        %v3496 = vunpack.c.l.b16 %v3332
        %v3497 = vunpack.c.l.b16 %v3333
        %v3498 = vunpack.c.l.b16 %v3334
        %v3499 = vunpack.c.l.b16 %v3335
        %v3500 = vpack.c.b16 %v3485, %v3484
        %v3501 = vpack.c.b16 %v3487, %v3486
        %v3502 = vpack.c.b16 %v3489, %v3488
        %v3503 = vpack.c.b16 %v3491, %v3490
        %v3504 = vpack.c.b16 %v3493, %v3492
        %v3505 = vpack.c.b16 %v3495, %v3494
        %v3506 = vpack.c.b16 %v3497, %v3496
        %v3507 = vpack.c.b16 %v3499, %v3498
        %3516 = vmatpush.bf16.msra.mxu0 %v3507
        %3517 = vmatpush.bf16.msra.mxu0 %v3506
        %3518 = vmatpush.bf16.msra.mxu0 %v3505
        %3519 = vmatpush.bf16.msra.mxu0 %v3504
        %3520 = vmatpush.bf16.msra.mxu0 %v3503
        %3521 = vmatpush.bf16.msra.mxu0 %v3502
        %3522 = vmatpush.bf16.msra.mxu0 %v3501
        %3523 = vmatpush.bf16.msra.mxu0 %v3500
        %3524 = vmatmul.bf16.gmra.mxu0 %v3467
        %v3525 = vpop.f32.mrf.mxu0
        %v3526 = vadd.f32 0.0, %v3525
        %v3527 = vpop.f32.mrf.mxu0
        %3528 = vdwg.mxu0
        %v3545 = vunpack.c.l.b16 %v3304
        %v3546 = vunpack.c.l.b16 %v3305
        %v3547 = vunpack.c.l.b16 %v3306
        %v3548 = vunpack.c.l.b16 %v3307
        %v3549 = vunpack.c.l.b16 %v3308
        %v3550 = vunpack.c.l.b16 %v3309
        %v3551 = vunpack.c.l.b16 %v3310
        %v3552 = vunpack.c.l.b16 %v3311
        %v3553 = vunpack.c.l.b16 %v3312
        %v3554 = vunpack.c.l.b16 %v3313
        %v3555 = vunpack.c.l.b16 %v3314
        %v3556 = vunpack.c.l.b16 %v3315
        %v3557 = vunpack.c.l.b16 %v3316
        %v3558 = vunpack.c.l.b16 %v3317
        %v3559 = vunpack.c.l.b16 %v3318
        %v3560 = vunpack.c.l.b16 %v3319
        %v3561 = vpack.c.b16 %v3546, %v3545
        %v3562 = vpack.c.b16 %v3548, %v3547
        %v3563 = vpack.c.b16 %v3550, %v3549
        %v3564 = vpack.c.b16 %v3552, %v3551
        %v3565 = vpack.c.b16 %v3554, %v3553
        %v3566 = vpack.c.b16 %v3556, %v3555
        %v3567 = vpack.c.b16 %v3558, %v3557
        %v3568 = vpack.c.b16 %v3560, %v3559
        %3577 = vmatpush.bf16.msra.mxu0 %v3568
        %3578 = vmatpush.bf16.msra.mxu0 %v3567
        %3579 = vmatpush.bf16.msra.mxu0 %v3566
        %3580 = vmatpush.bf16.msra.mxu0 %v3565
        %3581 = vmatpush.bf16.msra.mxu0 %v3564
        %3582 = vmatpush.bf16.msra.mxu0 %v3563
        %3583 = vmatpush.bf16.msra.mxu0 %v3562
        %3584 = vmatpush.bf16.msra.mxu0 %v3561
        %3585 = vmatmul.bf16.gmra.mxu0 %v3413
        %v3586 = vpop.f32.mrf.mxu0
        %v3587 = vadd.f32 %v3526, %v3586
        %v3588 = vpop.f32.mrf.mxu0
        %3589 = vdwg.mxu0
        %3590 = vmatpush.bf16.xpose.msra.mxu0 0
        %3591 = vmatpush.bf16.xpose.msra.mxu0 0
        %3592 = vmatpush.bf16.xpose.msra.mxu0 0
        %3593 = vmatpush.bf16.xpose.msra.mxu0 0
        %3594 = vmatpush.bf16.xpose.msra.mxu0 0
        %3595 = vmatpush.bf16.xpose.msra.mxu0 0
        %3596 = vmatpush.bf16.xpose.msra.mxu0 0
        %3597 = vmatpush.bf16.xpose.msra.mxu0 %v3299
        %3598 = vmatmul.bf16.gmra.mxu0 %v3297
        %v3599 = vpop.f32.mrf.mxu0
        %v3600 = vadd.f32 0.0, %v3599
        %v3601 = vpop.f32.mrf.mxu0
        %3602 = vdwg.mxu0
        %v3603 = vsel %vm3302, -1e+30, %v3600
        %v3604 = vsel %vm1620, %v3603, -inf
        %3605 = vmax.xlane.f32.xlu0 %v3604
        %v3606 = vpop.xlane.xlu0 %3605
        %v3607 = vsub.f32 %v3603, %v3606
        %v3608 = vmul.f32 %v3607, 1.442695
        %v3609 = vpow.pop %v3608
        %v3610 = vsel %vm1620, %v3609, 0.0
        %3611 = vadd.xlane.f32.xlu0 %v3610
        %v3612 = vpop.xlane.xlu0 %3611
        %v3613 = vrcp.pop %v3612
        %v3614 = vmul.f32 %v3609, %v3613
        %v3615 = vpack.c.bf16 %v3614, %v3614
        %v3617 = vsel %vm1620, %v3615, 0
        %v3620 = vsel %vm1636, %v3301, 0
        %3622 = vmatpush.bf16.msra.mxu0 0
        %3623 = vmatpush.bf16.msra.mxu0 0
        %3624 = vmatpush.bf16.msra.mxu0 0
        %3625 = vmatpush.bf16.msra.mxu0 0
        %3626 = vmatpush.bf16.msra.mxu0 0
        %3627 = vmatpush.bf16.msra.mxu0 0
        %3628 = vmatpush.bf16.msra.mxu0 0
        %3629 = vmatpush.bf16.msra.mxu0 %v3620
        %3630 = vmatmul.bf16.gmra.mxu0 %v3617
        %v3631 = vpop.f32.mrf.mxu0
        %v3632 = vadd.f32 0.0, %v3631
        %v3633 = vpop.f32.mrf.mxu0
        %3634 = vdwg.mxu0
        %v3635 = vpack.c.bf16 %v3632, %v3632
        %v3652 = vunpack.c.l.b16 %v3336
        %v3653 = vunpack.c.l.b16 %v3337
        %v3654 = vunpack.c.l.b16 %v3338
        %v3655 = vunpack.c.l.b16 %v3339
        %v3656 = vunpack.c.l.b16 %v3340
        %v3657 = vunpack.c.l.b16 %v3341
        %v3658 = vunpack.c.l.b16 %v3342
        %v3659 = vunpack.c.l.b16 %v3343
        %v3660 = vunpack.c.l.b16 %v3344
        %v3661 = vunpack.c.l.b16 %v3345
        %v3662 = vunpack.c.l.b16 %v3346
        %v3663 = vunpack.c.l.b16 %v3347
        %v3664 = vunpack.c.l.b16 %v3348
        %v3665 = vunpack.c.l.b16 %v3349
        %v3666 = vunpack.c.l.b16 %v3350
        %v3667 = vunpack.c.l.b16 %v3351
        %v3668 = vpack.c.b16 %v3653, %v3652
        %v3669 = vpack.c.b16 %v3655, %v3654
        %v3670 = vpack.c.b16 %v3657, %v3656
        %v3671 = vpack.c.b16 %v3659, %v3658
        %v3672 = vpack.c.b16 %v3661, %v3660
        %v3673 = vpack.c.b16 %v3663, %v3662
        %v3674 = vpack.c.b16 %v3665, %v3664
        %v3675 = vpack.c.b16 %v3667, %v3666
        %3684 = vmatpush.bf16.msra.mxu0 %v3675
        %3685 = vmatpush.bf16.msra.mxu0 %v3674
        %3686 = vmatpush.bf16.msra.mxu0 %v3673
        %3687 = vmatpush.bf16.msra.mxu0 %v3672
        %3688 = vmatpush.bf16.msra.mxu0 %v3671
        %3689 = vmatpush.bf16.msra.mxu0 %v3670
        %3690 = vmatpush.bf16.msra.mxu0 %v3669
        %3691 = vmatpush.bf16.msra.mxu0 %v3668
        %3692 = vmatmul.bf16.gmra.mxu0 %v3635
        %v3693 = vpop.f32.mrf.mxu0
        %v3694 = vadd.f32 0.0, %v3693
        %v3695 = vpop.f32.mrf.mxu0
        %3696 = vdwg.mxu0
        %v3697 = vadd.f32 %v3587, %v3694
        %v3699 = vrot.slane %v3297, 4
        %v3702 = vrot.slane %v3299, 4
        %v3705 = vrot.slane %v3301, 4
        %3706 = vmatpush.bf16.xpose.msra.mxu0 0
        %3707 = vmatpush.bf16.xpose.msra.mxu0 0
        %3708 = vmatpush.bf16.xpose.msra.mxu0 0
        %3709 = vmatpush.bf16.xpose.msra.mxu0 0
        %3710 = vmatpush.bf16.xpose.msra.mxu0 0
        %3711 = vmatpush.bf16.xpose.msra.mxu0 0
        %3712 = vmatpush.bf16.xpose.msra.mxu0 0
        %3713 = vmatpush.bf16.xpose.msra.mxu0 %v3702
        %3714 = vmatmul.bf16.gmra.mxu0 %v3699
        %v3715 = vpop.f32.mrf.mxu0
        %v3716 = vadd.f32 0.0, %v3715
        %v3717 = vpop.f32.mrf.mxu0
        %3718 = vdwg.mxu0
        %v3719 = vsel %vm3302, -1e+30, %v3716
        %v3720 = vsel %vm1620, %v3719, -inf
        %3721 = vmax.xlane.f32.xlu0 %v3720
        %v3722 = vpop.xlane.xlu0 %3721
        %v3723 = vsub.f32 %v3719, %v3722
        %v3724 = vmul.f32 %v3723, 1.442695
        %v3725 = vpow.pop %v3724
        %v3726 = vsel %vm1620, %v3725, 0.0
        %3727 = vadd.xlane.f32.xlu0 %v3726
        %v3728 = vpop.xlane.xlu0 %3727
        %v3729 = vrcp.pop %v3728
        %v3730 = vmul.f32 %v3725, %v3729
        %v3731 = vpack.c.bf16 %v3730, %v3730
        %v3733 = vsel %vm1620, %v3731, 0
        %v3736 = vsel %vm1636, %v3705, 0
        %3738 = vmatpush.bf16.msra.mxu0 0
        %3739 = vmatpush.bf16.msra.mxu0 0
        %3740 = vmatpush.bf16.msra.mxu0 0
        %3741 = vmatpush.bf16.msra.mxu0 0
        %3742 = vmatpush.bf16.msra.mxu0 0
        %3743 = vmatpush.bf16.msra.mxu0 0
        %3744 = vmatpush.bf16.msra.mxu0 0
        %3745 = vmatpush.bf16.msra.mxu0 %v3736
        %3746 = vmatmul.bf16.gmra.mxu0 %v3733
        %v3747 = vpop.f32.mrf.mxu0
        %v3748 = vadd.f32 0.0, %v3747
        %v3749 = vpop.f32.mrf.mxu0
        %3750 = vdwg.mxu0
        %v3751 = vpack.c.bf16 %v3748, %v3748
        %v3768 = vunpack.c.l.b16 %v3352
        %v3769 = vunpack.c.l.b16 %v3353
        %v3770 = vunpack.c.l.b16 %v3354
        %v3771 = vunpack.c.l.b16 %v3355
        %v3772 = vunpack.c.l.b16 %v3356
        %v3773 = vunpack.c.l.b16 %v3357
        %v3774 = vunpack.c.l.b16 %v3358
        %v3775 = vunpack.c.l.b16 %v3359
        %v3776 = vunpack.c.l.b16 %v3360
        %v3777 = vunpack.c.l.b16 %v3361
        %v3778 = vunpack.c.l.b16 %v3362
        %v3779 = vunpack.c.l.b16 %v3363
        %v3780 = vunpack.c.l.b16 %v3364
        %v3781 = vunpack.c.l.b16 %v3365
        %v3782 = vunpack.c.l.b16 %v3366
        %v3783 = vunpack.c.l.b16 %v3367
        %v3784 = vpack.c.b16 %v3769, %v3768
        %v3785 = vpack.c.b16 %v3771, %v3770
        %v3786 = vpack.c.b16 %v3773, %v3772
        %v3787 = vpack.c.b16 %v3775, %v3774
        %v3788 = vpack.c.b16 %v3777, %v3776
        %v3789 = vpack.c.b16 %v3779, %v3778
        %v3790 = vpack.c.b16 %v3781, %v3780
        %v3791 = vpack.c.b16 %v3783, %v3782
        %3800 = vmatpush.bf16.msra.mxu0 %v3791
        %3801 = vmatpush.bf16.msra.mxu0 %v3790
        %3802 = vmatpush.bf16.msra.mxu0 %v3789
        %3803 = vmatpush.bf16.msra.mxu0 %v3788
        %3804 = vmatpush.bf16.msra.mxu0 %v3787
        %3805 = vmatpush.bf16.msra.mxu0 %v3786
        %3806 = vmatpush.bf16.msra.mxu0 %v3785
        %3807 = vmatpush.bf16.msra.mxu0 %v3784
        %3808 = vmatmul.bf16.gmra.mxu0 %v3751
        %v3809 = vpop.f32.mrf.mxu0
        %v3810 = vadd.f32 0.0, %v3809
        %v3811 = vpop.f32.mrf.mxu0
        %3812 = vdwg.mxu0
        %v3813 = vadd.f32 %v3697, %v3810
        %v3814 = vld [vmem:[%s6 + $0x1] sm:$0x1]
        %v3815 = vperm.slane %v3814, 0
        %v3816 = vadd.f32 %v3813, %v3815
        %v3817 = vadd.f32 %v3816, %v739
        %v3818 = vld [vmem:[%s7 + $0x1] sm:$0x1]
        %v3819 = vld [vmem:[%s8 + $0x1] sm:$0x1]
        %3820 = vadd.xlane.f32.xlu0 %v3817
        %v3821 = vpop.xlane.xlu0 %3820
        %v3822 = vmul.f32 %v3821, 0.03125
        %v3823 = vmul.f32 %v3817, %v3817
        %3824 = vadd.xlane.f32.xlu0 %v3823
        %v3825 = vpop.xlane.xlu0 %3824
        %v3826 = vmul.f32 %v3825, 0.03125
        %v3827 = vmul.f32 %v3822, %v3822
        %v3828 = vsub.f32 %v3826, %v3827
        %v3829 = vsub.f32 %v3817, %v3822
        %v3830 = vadd.f32 %v3828, 1e-05
        %v3831 = vrsqrt.pop %v3830
        %v3832 = vmul.f32 %v3831, %v3830
        %v3833 = vmul.f32 %v3832, %v3831
        %v3834 = vmul.f32 0.5, %v3833
        %v3835 = vsub.f32 1.5, %v3834
        %v3836 = vmul.f32 %v3831, %v3835
        %vm3837 = vweird.f32 %v3830
        %vm3838 = vweird.f32 %v3831
        %vm3839 = vmor %vm3837, %vm3838
        %v3840 = vsel %vm3839, %v3831, %v3836
        %v3841 = vmul.f32 %v3829, %v3840
        %v3842 = vperm.slane %v3818, 0
        %v3843 = vmul.f32 %v3841, %v3842
        %v3844 = vperm.slane %v3819, 0
        %v3845 = vadd.f32 %v3843, %v3844
        %v3846 = vpack.c.bf16 %v3845, %v3845
        %s3847 = scalar_lea.vmem [#allocation13], 192
        %v3848 = vld [vmem:[%s3847] sm:$0xff]
        %v3849 = vld [vmem:[%s3847 + $0x8] sm:$0xf]
        %v3850 = vld [vmem:[%s3847 + $0xc] sm:$0xff]
        %v3851 = vld [vmem:[%s3847 + $0x14] sm:$0xf]
        %v3852 = vld [vmem:[%s3847 + $0x18] sm:$0xff]
        %v3853 = vld [vmem:[%s3847 + $0x20] sm:$0xf]
        %v3854 = vld [vmem:[%s3847 + $0x24] sm:$0xff]
        %v3855 = vld [vmem:[%s3847 + $0x2c] sm:$0xf]
        %v3856 = vld [vmem:[%s3847 + $0x30] sm:$0xff]
        %v3857 = vld [vmem:[%s3847 + $0x38] sm:$0xf]
        %v3858 = vld [vmem:[%s3847 + $0x3c] sm:$0xff]
        %v3859 = vld [vmem:[%s3847 + $0x44] sm:$0xf]
        %v3860 = vld [vmem:[%s3847 + $0x48] sm:$0xff]
        %v3861 = vld [vmem:[%s3847 + $0x50] sm:$0xf]
        %v3862 = vld [vmem:[%s3847 + $0x54] sm:$0xff]
        %v3863 = vld [vmem:[%s3847 + $0x5c] sm:$0xf]
        %v3864 = vld [vmem:[%s3847 + $0x60] sm:$0xff]
        %v3865 = vld [vmem:[%s3847 + $0x68] sm:$0xf]
        %v3866 = vld [vmem:[%s3847 + $0x6c] sm:$0xff]
        %v3867 = vld [vmem:[%s3847 + $0x74] sm:$0xf]
        %v3868 = vld [vmem:[%s3847 + $0x78] sm:$0xff]
        %v3869 = vld [vmem:[%s3847 + $0x80] sm:$0xf]
        %v3870 = vld [vmem:[%s3847 + $0x84] sm:$0xff]
        %v3871 = vld [vmem:[%s3847 + $0x8c] sm:$0xf]
        %v3872 = vld [vmem:[%s3847 + $0x90] sm:$0xff]
        %v3873 = vld [vmem:[%s3847 + $0x98] sm:$0xf]
        %v3874 = vld [vmem:[%s3847 + $0x9c] sm:$0xff]
        %v3875 = vld [vmem:[%s3847 + $0xa4] sm:$0xf]
        %v3876 = vld [vmem:[%s3847 + $0xa8] sm:$0xff]
        %v3877 = vld [vmem:[%s3847 + $0xb0] sm:$0xf]
        %v3878 = vld [vmem:[%s3847 + $0xb4] sm:$0xff]
        %v3879 = vld [vmem:[%s3847 + $0xbc] sm:$0xf]
        %v3880 = vld [vmem:[%s10 + $0x1] sm:$0x1]
        %v3913 = vunpack.c.l.b16 %v3848
        %v3914 = vunpack.c.h.b16 %v3848
        %v3915 = vunpack.c.l.b16 %v3849
        %v3916 = vunpack.c.l.b16 %v3850
        %v3917 = vunpack.c.h.b16 %v3850
        %v3918 = vunpack.c.l.b16 %v3851
        %v3919 = vunpack.c.l.b16 %v3852
        %v3920 = vunpack.c.h.b16 %v3852
        %v3921 = vunpack.c.l.b16 %v3853
        %v3922 = vunpack.c.l.b16 %v3854
        %v3923 = vunpack.c.h.b16 %v3854
        %v3924 = vunpack.c.l.b16 %v3855
        %v3925 = vunpack.c.l.b16 %v3856
        %v3926 = vunpack.c.h.b16 %v3856
        %v3927 = vunpack.c.l.b16 %v3857
        %v3928 = vunpack.c.l.b16 %v3858
        %v3929 = vunpack.c.h.b16 %v3858
        %v3930 = vunpack.c.l.b16 %v3859
        %v3931 = vunpack.c.l.b16 %v3860
        %v3932 = vunpack.c.h.b16 %v3860
        %v3933 = vunpack.c.l.b16 %v3861
        %v3934 = vunpack.c.l.b16 %v3862
        %v3935 = vunpack.c.h.b16 %v3862
        %v3936 = vunpack.c.l.b16 %v3863
        %v3937 = vunpack.c.l.b16 %v3864
        %v3938 = vunpack.c.h.b16 %v3864
        %v3939 = vunpack.c.l.b16 %v3865
        %v3940 = vunpack.c.l.b16 %v3866
        %v3941 = vunpack.c.h.b16 %v3866
        %v3942 = vunpack.c.l.b16 %v3867
        %v3943 = vunpack.c.l.b16 %v3868
        %v3944 = vunpack.c.h.b16 %v3868
        %v3945 = vunpack.c.l.b16 %v3869
        %v3946 = vunpack.c.l.b16 %v3870
        %v3947 = vunpack.c.h.b16 %v3870
        %v3948 = vunpack.c.l.b16 %v3871
        %v3949 = vunpack.c.l.b16 %v3872
        %v3950 = vunpack.c.h.b16 %v3872
        %v3951 = vunpack.c.l.b16 %v3873
        %v3952 = vunpack.c.l.b16 %v3874
        %v3953 = vunpack.c.h.b16 %v3874
        %v3954 = vunpack.c.l.b16 %v3875
        %v3955 = vunpack.c.l.b16 %v3876
        %v3956 = vunpack.c.h.b16 %v3876
        %v3957 = vunpack.c.l.b16 %v3877
        %v3958 = vunpack.c.l.b16 %v3878
        %v3959 = vunpack.c.h.b16 %v3878
        %v3960 = vunpack.c.l.b16 %v3879
        %v3961 = vpack.c.b16 %v3916, %v3913
        %v3962 = vpack.c.b16 %v3917, %v3914
        %v3963 = vpack.c.b16 %v3918, %v3915
        %v3964 = vpack.c.b16 %v3922, %v3919
        %v3965 = vpack.c.b16 %v3923, %v3920
        %v3966 = vpack.c.b16 %v3924, %v3921
        %v3967 = vpack.c.b16 %v3928, %v3925
        %v3968 = vpack.c.b16 %v3929, %v3926
        %v3969 = vpack.c.b16 %v3930, %v3927
        %v3970 = vpack.c.b16 %v3934, %v3931
        %v3971 = vpack.c.b16 %v3935, %v3932
        %v3972 = vpack.c.b16 %v3936, %v3933
        %v3973 = vpack.c.b16 %v3940, %v3937
        %v3974 = vpack.c.b16 %v3941, %v3938
        %v3975 = vpack.c.b16 %v3942, %v3939
        %v3976 = vpack.c.b16 %v3946, %v3943
        %v3977 = vpack.c.b16 %v3947, %v3944
        %v3978 = vpack.c.b16 %v3948, %v3945
        %v3979 = vpack.c.b16 %v3952, %v3949
        %v3980 = vpack.c.b16 %v3953, %v3950
        %v3981 = vpack.c.b16 %v3954, %v3951
        %v3982 = vpack.c.b16 %v3958, %v3955
        %v3983 = vpack.c.b16 %v3959, %v3956
        %v3984 = vpack.c.b16 %v3960, %v3957
        %4009 = vmatpush.bf16.msra.mxu0 %v3982
        %4010 = vmatpush.bf16.msra.mxu0 %v3979
        %4011 = vmatpush.bf16.msra.mxu0 %v3976
        %4012 = vmatpush.bf16.msra.mxu0 %v3973
        %4013 = vmatpush.bf16.msra.mxu0 %v3970
        %4014 = vmatpush.bf16.msra.mxu0 %v3967
        %4015 = vmatpush.bf16.msra.mxu0 %v3964
        %4016 = vmatpush.bf16.msra.mxu0 %v3961
        %4017 = vmatmul.bf16.gmra.mxu0 %v3846
        %v4018 = vpop.f32.mrf.mxu0
        %v4019 = vadd.f32 0.0, %v4018
        %v4020 = vpop.f32.mrf.mxu0
        %4021 = vdwg.mxu0
        %4022 = vmatpush.bf16.msra.mxu0 %v3983
        %4023 = vmatpush.bf16.msra.mxu0 %v3980
        %4024 = vmatpush.bf16.msra.mxu0 %v3977
        %4025 = vmatpush.bf16.msra.mxu0 %v3974
        %4026 = vmatpush.bf16.msra.mxu0 %v3971
        %4027 = vmatpush.bf16.msra.mxu0 %v3968
        %4028 = vmatpush.bf16.msra.mxu0 %v3965
        %4029 = vmatpush.bf16.msra.mxu0 %v3962
        %4030 = vmatmul.bf16.gmra.mxu0 %v3846
        %v4031 = vpop.f32.mrf.mxu0
        %v4032 = vadd.f32 0.0, %v4031
        %v4033 = vpop.f32.mrf.mxu0
        %4034 = vdwg.mxu0
        %4035 = vmatpush.bf16.msra.mxu0 %v3984
        %4036 = vmatpush.bf16.msra.mxu0 %v3981
        %4037 = vmatpush.bf16.msra.mxu0 %v3978
        %4038 = vmatpush.bf16.msra.mxu0 %v3975
        %4039 = vmatpush.bf16.msra.mxu0 %v3972
        %4040 = vmatpush.bf16.msra.mxu0 %v3969
        %4041 = vmatpush.bf16.msra.mxu0 %v3966
        %4042 = vmatpush.bf16.msra.mxu0 %v3963
        %4043 = vmatmul.bf16.gmra.mxu0 %v3846
        %v4044 = vpop.f32.mrf.mxu0
        %v4045 = vadd.f32 0.0, %v4044
        %v4046 = vpop.f32.mrf.mxu0
        %4047 = vdwg.mxu0
        %v4048 = vrot.slane %v4019, 7
        %v4049 = vsel %vm2289, %v4048, 0.0
        %v4050 = vrot.slane %v4045, 1
        %v4051 = vsel %vm2293, %v4050, 0.0
        %v4052 = vadd.f32 %v4049, %v4032
        %v4053 = vadd.f32 %v4052, %v4051
        %v4054 = vperm.slane %v3880, 0
        %v4055 = vadd.f32 %v4053, %v4054
        %v4056 = vmul.f32 %v4055, 0.5
        %v4057 = vmul.f32 %v4055, 0.044715
        %v4058 = vmul.f32 %v4057, %v4055
        %v4059 = vmul.f32 %v4058, %v4055
        %v4060 = vadd.f32 %v4055, %v4059
        %v4061 = vmul.f32 %v4060, 0.7978846
        %v4062 = vtanh.pop %v4061
        %v4063 = vadd.f32 %v4062, 1.0
        %v4064 = vmul.f32 %v4056, %v4063
        %v4065 = vpack.c.bf16 %v4064, %v4064
        %s4066 = scalar_lea.vmem [#allocation14], 192
        %v4067 = vld [vmem:[%s4066] sm:$0xff]
        %v4068 = vld [vmem:[%s4066 + $0x8] sm:$0xf]
        %v4069 = vld [vmem:[%s4066 + $0xc] sm:$0xff]
        %v4070 = vld [vmem:[%s4066 + $0x14] sm:$0xf]
        %v4071 = vld [vmem:[%s4066 + $0x18] sm:$0xff]
        %v4072 = vld [vmem:[%s4066 + $0x20] sm:$0xf]
        %v4073 = vld [vmem:[%s4066 + $0x24] sm:$0xff]
        %v4074 = vld [vmem:[%s4066 + $0x2c] sm:$0xf]
        %v4075 = vld [vmem:[%s4066 + $0x30] sm:$0xff]
        %v4076 = vld [vmem:[%s4066 + $0x38] sm:$0xf]
        %v4077 = vld [vmem:[%s4066 + $0x3c] sm:$0xff]
        %v4078 = vld [vmem:[%s4066 + $0x44] sm:$0xf]
        %v4079 = vld [vmem:[%s4066 + $0x48] sm:$0xff]
        %v4080 = vld [vmem:[%s4066 + $0x50] sm:$0xf]
        %v4081 = vld [vmem:[%s4066 + $0x54] sm:$0xff]
        %v4082 = vld [vmem:[%s4066 + $0x5c] sm:$0xf]
        %v4083 = vld [vmem:[%s4066 + $0x60] sm:$0xff]
        %v4084 = vld [vmem:[%s4066 + $0x68] sm:$0xf]
        %v4085 = vld [vmem:[%s4066 + $0x6c] sm:$0xff]
        %v4086 = vld [vmem:[%s4066 + $0x74] sm:$0xf]
        %v4087 = vld [vmem:[%s4066 + $0x78] sm:$0xff]
        %v4088 = vld [vmem:[%s4066 + $0x80] sm:$0xf]
        %v4089 = vld [vmem:[%s4066 + $0x84] sm:$0xff]
        %v4090 = vld [vmem:[%s4066 + $0x8c] sm:$0xf]
        %v4091 = vld [vmem:[%s4066 + $0x90] sm:$0xff]
        %v4092 = vld [vmem:[%s4066 + $0x98] sm:$0xf]
        %v4093 = vld [vmem:[%s4066 + $0x9c] sm:$0xff]
        %v4094 = vld [vmem:[%s4066 + $0xa4] sm:$0xf]
        %v4095 = vld [vmem:[%s4066 + $0xa8] sm:$0xff]
        %v4096 = vld [vmem:[%s4066 + $0xb0] sm:$0xf]
        %v4097 = vld [vmem:[%s4066 + $0xb4] sm:$0xff]
        %v4098 = vld [vmem:[%s4066 + $0xbc] sm:$0xf]
        %v4099 = vld [vmem:[%s12 + $0x1] sm:$0x1]
        %v4132 = vunpack.c.l.b16 %v4067
        %v4133 = vunpack.c.h.b16 %v4067
        %v4134 = vunpack.c.l.b16 %v4068
        %v4135 = vunpack.c.l.b16 %v4069
        %v4136 = vunpack.c.h.b16 %v4069
        %v4137 = vunpack.c.l.b16 %v4070
        %v4138 = vunpack.c.l.b16 %v4071
        %v4139 = vunpack.c.h.b16 %v4071
        %v4140 = vunpack.c.l.b16 %v4072
        %v4141 = vunpack.c.l.b16 %v4073
        %v4142 = vunpack.c.h.b16 %v4073
        %v4143 = vunpack.c.l.b16 %v4074
        %v4144 = vunpack.c.l.b16 %v4075
        %v4145 = vunpack.c.h.b16 %v4075
        %v4146 = vunpack.c.l.b16 %v4076
        %v4147 = vunpack.c.l.b16 %v4077
        %v4148 = vunpack.c.h.b16 %v4077
        %v4149 = vunpack.c.l.b16 %v4078
        %v4150 = vunpack.c.l.b16 %v4079
        %v4151 = vunpack.c.h.b16 %v4079
        %v4152 = vunpack.c.l.b16 %v4080
        %v4153 = vunpack.c.l.b16 %v4081
        %v4154 = vunpack.c.h.b16 %v4081
        %v4155 = vunpack.c.l.b16 %v4082
        %v4156 = vunpack.c.l.b16 %v4083
        %v4157 = vunpack.c.h.b16 %v4083
        %v4158 = vunpack.c.l.b16 %v4084
        %v4159 = vunpack.c.l.b16 %v4085
        %v4160 = vunpack.c.h.b16 %v4085
        %v4161 = vunpack.c.l.b16 %v4086
        %v4162 = vunpack.c.l.b16 %v4087
        %v4163 = vunpack.c.h.b16 %v4087
        %v4164 = vunpack.c.l.b16 %v4088
        %v4165 = vunpack.c.l.b16 %v4089
        %v4166 = vunpack.c.h.b16 %v4089
        %v4167 = vunpack.c.l.b16 %v4090
        %v4168 = vunpack.c.l.b16 %v4091
        %v4169 = vunpack.c.h.b16 %v4091
        %v4170 = vunpack.c.l.b16 %v4092
        %v4171 = vunpack.c.l.b16 %v4093
        %v4172 = vunpack.c.h.b16 %v4093
        %v4173 = vunpack.c.l.b16 %v4094
        %v4174 = vunpack.c.l.b16 %v4095
        %v4175 = vunpack.c.h.b16 %v4095
        %v4176 = vunpack.c.l.b16 %v4096
        %v4177 = vunpack.c.l.b16 %v4097
        %v4178 = vunpack.c.h.b16 %v4097
        %v4179 = vunpack.c.l.b16 %v4098
        %v4180 = vpack.c.b16 %v4135, %v4132
        %v4181 = vpack.c.b16 %v4136, %v4133
        %v4182 = vpack.c.b16 %v4137, %v4134
        %v4183 = vpack.c.b16 %v4141, %v4138
        %v4184 = vpack.c.b16 %v4142, %v4139
        %v4185 = vpack.c.b16 %v4143, %v4140
        %v4186 = vpack.c.b16 %v4147, %v4144
        %v4187 = vpack.c.b16 %v4148, %v4145
        %v4188 = vpack.c.b16 %v4149, %v4146
        %v4189 = vpack.c.b16 %v4153, %v4150
        %v4190 = vpack.c.b16 %v4154, %v4151
        %v4191 = vpack.c.b16 %v4155, %v4152
        %v4192 = vpack.c.b16 %v4159, %v4156
        %v4193 = vpack.c.b16 %v4160, %v4157
        %v4194 = vpack.c.b16 %v4161, %v4158
        %v4195 = vpack.c.b16 %v4165, %v4162
        %v4196 = vpack.c.b16 %v4166, %v4163
        %v4197 = vpack.c.b16 %v4167, %v4164
        %v4198 = vpack.c.b16 %v4171, %v4168
        %v4199 = vpack.c.b16 %v4172, %v4169
        %v4200 = vpack.c.b16 %v4173, %v4170
        %v4201 = vpack.c.b16 %v4177, %v4174
        %v4202 = vpack.c.b16 %v4178, %v4175
        %v4203 = vpack.c.b16 %v4179, %v4176
        %4228 = vmatpush.bf16.msra.mxu0 %v4201
        %4229 = vmatpush.bf16.msra.mxu0 %v4198
        %4230 = vmatpush.bf16.msra.mxu0 %v4195
        %4231 = vmatpush.bf16.msra.mxu0 %v4192
        %4232 = vmatpush.bf16.msra.mxu0 %v4189
        %4233 = vmatpush.bf16.msra.mxu0 %v4186
        %4234 = vmatpush.bf16.msra.mxu0 %v4183
        %4235 = vmatpush.bf16.msra.mxu0 %v4180
        %4236 = vmatmul.bf16.gmra.mxu0 %v4065
        %v4237 = vpop.f32.mrf.mxu0
        %v4238 = vadd.f32 0.0, %v4237
        %v4239 = vpop.f32.mrf.mxu0
        %4240 = vdwg.mxu0
        %4241 = vmatpush.bf16.msra.mxu0 %v4202
        %4242 = vmatpush.bf16.msra.mxu0 %v4199
        %4243 = vmatpush.bf16.msra.mxu0 %v4196
        %4244 = vmatpush.bf16.msra.mxu0 %v4193
        %4245 = vmatpush.bf16.msra.mxu0 %v4190
        %4246 = vmatpush.bf16.msra.mxu0 %v4187
        %4247 = vmatpush.bf16.msra.mxu0 %v4184
        %4248 = vmatpush.bf16.msra.mxu0 %v4181
        %4249 = vmatmul.bf16.gmra.mxu0 %v4065
        %v4250 = vpop.f32.mrf.mxu0
        %v4251 = vadd.f32 0.0, %v4250
        %v4252 = vpop.f32.mrf.mxu0
        %4253 = vdwg.mxu0
        %4254 = vmatpush.bf16.msra.mxu0 %v4203
        %4255 = vmatpush.bf16.msra.mxu0 %v4200
        %4256 = vmatpush.bf16.msra.mxu0 %v4197
        %4257 = vmatpush.bf16.msra.mxu0 %v4194
        %4258 = vmatpush.bf16.msra.mxu0 %v4191
        %4259 = vmatpush.bf16.msra.mxu0 %v4188
        %4260 = vmatpush.bf16.msra.mxu0 %v4185
        %4261 = vmatpush.bf16.msra.mxu0 %v4182
        %4262 = vmatmul.bf16.gmra.mxu0 %v4065
        %v4263 = vpop.f32.mrf.mxu0
        %v4264 = vadd.f32 0.0, %v4263
        %v4265 = vpop.f32.mrf.mxu0
        %4266 = vdwg.mxu0
        %v4267 = vrot.slane %v4238, 7
        %v4268 = vsel %vm2289, %v4267, 0.0
        %v4269 = vrot.slane %v4264, 1
        %v4270 = vsel %vm2293, %v4269, 0.0
        %v4271 = vadd.f32 %v4268, %v4251
        %v4272 = vadd.f32 %v4271, %v4270
        %v4273 = vperm.slane %v4099, 0
        %v4274 = vadd.f32 %v4272, %v4273
        %v4275 = vmul.f32 %v4274, 0.5
        %v4276 = vmul.f32 %v4274, 0.044715
        %v4277 = vmul.f32 %v4276, %v4274
        %v4278 = vmul.f32 %v4277, %v4274
        %v4279 = vadd.f32 %v4274, %v4278
        %v4280 = vmul.f32 %v4279, 0.7978846
        %v4281 = vtanh.pop %v4280
        %v4282 = vadd.f32 %v4281, 1.0
        %v4283 = vmul.f32 %v4275, %v4282
        %v4284 = vadd.f32 %v4283, %v3817
        %v4285 = vpack.c.bf16 %v2526, %v2526
        %v4286 = vld [vmem:[#allocation16] sm:$0xf]
        %v4287 = vld [vmem:[#allocation16 + $0x4] sm:$0xf]
        %v4288 = vld [vmem:[#allocation16 + $0x8] sm:$0xf]
        %v4289 = vld [vmem:[#allocation16 + $0xc] sm:$0xf]
        %v4290 = vld [vmem:[#allocation16 + $0x10] sm:$0xf]
        %v4291 = vld [vmem:[#allocation16 + $0x14] sm:$0xf]
        %v4292 = vld [vmem:[#allocation16 + $0x18] sm:$0xf]
        %v4293 = vld [vmem:[#allocation16 + $0x1c] sm:$0xf]
        %v4294 = vld [vmem:[#allocation16 + $0x20] sm:$0xf]
        %v4295 = vld [vmem:[#allocation16 + $0x24] sm:$0xf]
        %v4296 = vld [vmem:[#allocation16 + $0x28] sm:$0xf]
        %v4297 = vld [vmem:[#allocation16 + $0x2c] sm:$0xf]
        %v4298 = vld [vmem:[#allocation16 + $0x30] sm:$0xf]
        %v4299 = vld [vmem:[#allocation16 + $0x34] sm:$0xf]
        %v4300 = vld [vmem:[#allocation16 + $0x38] sm:$0xf]
        %v4301 = vld [vmem:[#allocation16 + $0x3c] sm:$0xf]
        %v4302 = vpack.c.bf16 %v4284, %v4284
        %v4303 = vld [vmem:[#allocation17] sm:$0xf]
        %v4304 = vld [vmem:[#allocation17 + $0x4] sm:$0xf]
        %v4305 = vld [vmem:[#allocation17 + $0x8] sm:$0xf]
        %v4306 = vld [vmem:[#allocation17 + $0xc] sm:$0xf]
        %v4307 = vld [vmem:[#allocation17 + $0x10] sm:$0xf]
        %v4308 = vld [vmem:[#allocation17 + $0x14] sm:$0xf]
        %v4309 = vld [vmem:[#allocation17 + $0x18] sm:$0xf]
        %v4310 = vld [vmem:[#allocation17 + $0x1c] sm:$0xf]
        %v4311 = vld [vmem:[#allocation17 + $0x20] sm:$0xf]
        %v4312 = vld [vmem:[#allocation17 + $0x24] sm:$0xf]
        %v4313 = vld [vmem:[#allocation17 + $0x28] sm:$0xf]
        %v4314 = vld [vmem:[#allocation17 + $0x2c] sm:$0xf]
        %v4315 = vld [vmem:[#allocation17 + $0x30] sm:$0xf]
        %v4316 = vld [vmem:[#allocation17 + $0x34] sm:$0xf]
        %v4317 = vld [vmem:[#allocation17 + $0x38] sm:$0xf]
        %v4318 = vld [vmem:[#allocation17 + $0x3c] sm:$0xf]
        %v4335 = vunpack.c.l.b16 %v4303
        %v4336 = vunpack.c.l.b16 %v4304
        %v4337 = vunpack.c.l.b16 %v4305
        %v4338 = vunpack.c.l.b16 %v4306
        %v4339 = vunpack.c.l.b16 %v4307
        %v4340 = vunpack.c.l.b16 %v4308
        %v4341 = vunpack.c.l.b16 %v4309
        %v4342 = vunpack.c.l.b16 %v4310
        %v4343 = vunpack.c.l.b16 %v4311
        %v4344 = vunpack.c.l.b16 %v4312
        %v4345 = vunpack.c.l.b16 %v4313
        %v4346 = vunpack.c.l.b16 %v4314
        %v4347 = vunpack.c.l.b16 %v4315
        %v4348 = vunpack.c.l.b16 %v4316
        %v4349 = vunpack.c.l.b16 %v4317
        %v4350 = vunpack.c.l.b16 %v4318
        %v4351 = vpack.c.b16 %v4336, %v4335
        %v4352 = vpack.c.b16 %v4338, %v4337
        %v4353 = vpack.c.b16 %v4340, %v4339
        %v4354 = vpack.c.b16 %v4342, %v4341
        %v4355 = vpack.c.b16 %v4344, %v4343
        %v4356 = vpack.c.b16 %v4346, %v4345
        %v4357 = vpack.c.b16 %v4348, %v4347
        %v4358 = vpack.c.b16 %v4350, %v4349
        %4367 = vmatpush.bf16.msra.mxu0 %v4358
        %4368 = vmatpush.bf16.msra.mxu0 %v4357
        %4369 = vmatpush.bf16.msra.mxu0 %v4356
        %4370 = vmatpush.bf16.msra.mxu0 %v4355
        %4371 = vmatpush.bf16.msra.mxu0 %v4354
        %4372 = vmatpush.bf16.msra.mxu0 %v4353
        %4373 = vmatpush.bf16.msra.mxu0 %v4352
        %4374 = vmatpush.bf16.msra.mxu0 %v4351
        %4375 = vmatmul.bf16.gmra.mxu0 %v4302
        %v4376 = vpop.f32.mrf.mxu0
        %v4377 = vadd.f32 0.0, %v4376
        %v4378 = vpop.f32.mrf.mxu0
        %4379 = vdwg.mxu0
        %v4396 = vunpack.c.l.b16 %v4286
        %v4397 = vunpack.c.l.b16 %v4287
        %v4398 = vunpack.c.l.b16 %v4288
        %v4399 = vunpack.c.l.b16 %v4289
        %v4400 = vunpack.c.l.b16 %v4290
        %v4401 = vunpack.c.l.b16 %v4291
        %v4402 = vunpack.c.l.b16 %v4292
        %v4403 = vunpack.c.l.b16 %v4293
        %v4404 = vunpack.c.l.b16 %v4294
        %v4405 = vunpack.c.l.b16 %v4295
        %v4406 = vunpack.c.l.b16 %v4296
        %v4407 = vunpack.c.l.b16 %v4297
        %v4408 = vunpack.c.l.b16 %v4298
        %v4409 = vunpack.c.l.b16 %v4299
        %v4410 = vunpack.c.l.b16 %v4300
        %v4411 = vunpack.c.l.b16 %v4301
        %v4412 = vpack.c.b16 %v4397, %v4396
        %v4413 = vpack.c.b16 %v4399, %v4398
        %v4414 = vpack.c.b16 %v4401, %v4400
        %v4415 = vpack.c.b16 %v4403, %v4402
        %v4416 = vpack.c.b16 %v4405, %v4404
        %v4417 = vpack.c.b16 %v4407, %v4406
        %v4418 = vpack.c.b16 %v4409, %v4408
        %v4419 = vpack.c.b16 %v4411, %v4410
        %4428 = vmatpush.bf16.msra.mxu0 %v4419
        %4429 = vmatpush.bf16.msra.mxu0 %v4418
        %4430 = vmatpush.bf16.msra.mxu0 %v4417
        %4431 = vmatpush.bf16.msra.mxu0 %v4416
        %4432 = vmatpush.bf16.msra.mxu0 %v4415
        %4433 = vmatpush.bf16.msra.mxu0 %v4414
        %4434 = vmatpush.bf16.msra.mxu0 %v4413
        %4435 = vmatpush.bf16.msra.mxu0 %v4412
        %4436 = vmatmul.bf16.gmra.mxu0 %v4285
        %v4437 = vpop.f32.mrf.mxu0
        %v4438 = vadd.f32 %v4377, %v4437
        %v4439 = vpop.f32.mrf.mxu0
        %4440 = vdwg.mxu0
        %v4441 = vld [vmem:[%s15] sm:$0x1]
        %v4443 = vperm.slane %v4441, 0
        %v4445 = vadd.f32 %v4438, %v4443
        %v4446 = vld [vmem:[%s16] sm:$0x1]
        %v4447 = vld [vmem:[%s17] sm:$0x1]
        %4448 = vadd.xlane.f32.xlu0 %v4445
        %v4449 = vpop.xlane.xlu0 %4448
        %v4450 = vmul.f32 %v4449, 0.03125
        %v4451 = vmul.f32 %v4445, %v4445
        %4452 = vadd.xlane.f32.xlu0 %v4451
        %v4453 = vpop.xlane.xlu0 %4452
        %v4454 = vmul.f32 %v4453, 0.03125
        %v4455 = vmul.f32 %v4450, %v4450
        %v4456 = vsub.f32 %v4454, %v4455
        %v4457 = vsub.f32 %v4445, %v4450
        %v4458 = vadd.f32 %v4456, 1e-05
        %v4459 = vrsqrt.pop %v4458
        %v4460 = vmul.f32 %v4459, %v4458
        %v4461 = vmul.f32 %v4460, %v4459
        %v4462 = vmul.f32 0.5, %v4461
        %v4463 = vsub.f32 1.5, %v4462
        %v4464 = vmul.f32 %v4459, %v4463
        %vm4465 = vweird.f32 %v4458
        %vm4466 = vweird.f32 %v4459
        %vm4467 = vmor %vm4465, %vm4466
        %v4468 = vsel %vm4467, %v4459, %v4464
        %v4469 = vmul.f32 %v4457, %v4468
        %v4471 = vperm.slane %v4446, 0
        %v4473 = vmul.f32 %v4469, %v4471
        %v4475 = vperm.slane %v4447, 0
        %v4477 = vadd.f32 %v4473, %v4475
        %4478 = vst [vmem:[%s737] sm:$0xff] %v4477
        %s4479 = sand.u32 %s431, 1
        %s4480 = scalar_lea.sflag [#allocation4], %s4479
        %s4481 = sand.u32 %s431, 1
        %s4482 = smul.addr %s4481, 8
        %s4483 = scalar_lea.vmem [#allocation19], %s4482
        // Predicated region
        $region133: #{tpu_custom_call.1} parent=91 // pred_check
          %p4484 = pneg %p441
        $region134: #{tpu_custom_call.1} parent=91 // pred_check_branch
          %4486 = sbr.rel (%p4484) target = $region136
        $region135: #{tpu_custom_call.1} parent=91 // pred_region
          %4488 = vsyncadd %s4480, 0
          %s4489 = smul.addr %s40, 8
          %s4490 = scalar_lea.hbm %s18, %s4489
          %s4492 = sshll.u32 %s4483, 4
          %s4493 = int_to_ptr.vmem [resolvable:$true] %s4492
          %s4494 = sshll.u32 %s4490, 4
          %s4495 = int_to_ptr.hbm [resolvable:$true] %s4494
          %4497 = dma.vmem_to_hbm [thread:$0]  %s4493, 128, %s4495, %s4480
        $region136: #{tpu_custom_call.1} parent=91 // pred_fallthru
          _
      $region92: #{tpu_custom_call.1} parent=5 // pred_fallthru
        _
      %p4498 = scmp.le.s32.totalorder 2, %s35
      // Predicated region
      $region137: #{tpu_custom_call.1} parent=5 // pred_check
        %p4499 = pneg %p4498
      $region138: #{tpu_custom_call.1} parent=5 // pred_check_branch
        %4501 = sbr.rel (%p4499) target = $region140
      $region139: #{tpu_custom_call.1} parent=5 // pred_region
        %s4502 = ssub.s32 %s35, 2
        // Predicated region
        $region141: #{tpu_custom_call.1} parent=139 // pred_check
          %p4503 = pneg %p447
        $region142: #{tpu_custom_call.1} parent=139 // pred_check_branch
          %4505 = sbr.rel (%p4503) target = $region144
        $region143: #{tpu_custom_call.1} parent=139 // pred_region
          %s4506 = sand.u32 %s432, 1
          %s4507 = scalar_lea.sflag [#allocation4], %s4506
          %s4508 = sand.u32 %s432, 1
          %s4509 = smul.addr %s4508, 8
          %s4510 = scalar_lea.vmem [#allocation19], %s4509
          %4512 = dma.done %s4507, 128
        $region144: #{tpu_custom_call.1} parent=139 // pred_fallthru
          _
      $region140: #{tpu_custom_call.1} parent=5 // pred_fallthru
        _
    $region6: #{tpu_custom_call.1} parent=1 // loop_footer
      %s39 = sadd.s32 1, %s35
    $region7: #{tpu_custom_call.1} parent=1 // loop_footer_branch
      %34 = sbr.rel target = $region3
    $region8: #{tpu_custom_call.1} parent=1 // loop_exit
      _
    %4513 = vsyncpa [#allocation3], 1
    %s4514 = scalar_lea.sflag [#allocation3], 1
    %4515 = vsyncpa %s4514, 1
    %4516 = vsyncpa [#allocation6], 1
    %4517 = vsyncpa [#allocation9], 1
    %4518 = vsyncpa [#allocation12], 1
    %4519 = vsyncpa [#allocation15], 1
    %4520 = vsyncpa [#allocation18], 1
    %4521 = vsyncpa [#allocation4], 1
    %s4522 = scalar_lea.sflag [#allocation4], 1
    %4523 = vsyncpa %s4522, 1

</llo_original>
